<compile_context>
chip_gen: v7x
topology: tpu7x:2x2x1
jax: 0.10.0
libtpu: 0.0.40
codegen_flags: <defaults>
</compile_context>

<pallas_src>
import jax
import jax.numpy as jnp
from jax.experimental import pallas as pl
from jax.experimental.pallas import tpu as pltpu

D_MODEL = 512
D_FF = 2048
LN_EPS = 1e-5            # torch.nn.LayerNorm default


def _round_up(x, m):
    return (x + m - 1) // m * m


def ffn_kernel(x_ref, w1_ref, w2_ref, out_ref):
    x = x_ref[...]                                   # [bm, D] f32 (also residual)
    # Linear(d_model -> d_ff, bias=False) + ReLU. bf16 operands, f32 accumulate.
    h = jnp.dot(x.astype(jnp.bfloat16), w1_ref[...],
                preferred_element_type=jnp.float32)  # [bm, d_ff]
    h = jnp.maximum(h, 0.0)
    # Linear(d_ff -> d_model, bias=False)
    y = jnp.dot(h.astype(jnp.bfloat16), w2_ref[...],
                preferred_element_type=jnp.float32)  # [bm, D]
    # residual + LayerNorm (gamma=1, beta=0), all f32
    z = y + x
    mu = jnp.mean(z, axis=-1, keepdims=True)
    var = jnp.mean((z - mu) * (z - mu), axis=-1, keepdims=True)
    out_ref[...] = (z - mu) * jax.lax.rsqrt(var + LN_EPS)


def _pick_bm(M, block_m):
    # Floor at one MXU-height tile (256 rows); for large M keep >=2 grid steps
    # (both v7x TensorCores busy); cap at block_m.
    return min(block_m, max(256, _round_up(pl.cdiv(M, 2), 256)))


def pos_ffn(x, w1, w2, *, block_m=1024):
    """x: [B, L, d_model] f32; w1: [d_model, d_ff]; w2: [d_ff, d_model]."""
    B, L, D = x.shape
    assert D == D_MODEL
    M = B * L
    x2 = x.reshape(M, D)

    bm = _pick_bm(M, block_m)
    n_steps = pl.cdiv(M, bm)          # ragged last block; no jnp.pad round-trip

    # bf16 matmul operands (f32 accumulation happens inside the kernel).
    w1_b = w1.astype(jnp.bfloat16)
    w2_b = w2.astype(jnp.bfloat16)

    out = pl.pallas_call(
        ffn_kernel,
        out_shape=jax.ShapeDtypeStruct((M, D), jnp.float32),
        grid_spec=pltpu.PrefetchScalarGridSpec(
            num_scalar_prefetch=0,
            grid=(n_steps,),
            in_specs=[
                pl.BlockSpec((bm, D), lambda i: (i, 0)),
                pl.BlockSpec((D, D_FF), lambda i: (0, 0),      # resident weight
                             pipeline_mode=pl.Buffered(1)),
                pl.BlockSpec((D_FF, D), lambda i: (0, 0),      # resident weight
                             pipeline_mode=pl.Buffered(1)),
            ],
            out_specs=pl.BlockSpec((bm, D), lambda i: (i, 0)),
        ),
        compiler_params=pltpu.CompilerParams(
            dimension_semantics=("parallel",),
            vmem_limit_bytes=48 << 20,
        ),
    )(x2, w1_b, w2_b)
    return out[:M].reshape(B, L, D)


@jax.jit
def poswise_feed_forward(inputs, w1, w2):
    return pos_ffn(inputs, w1, w2)


# Pure-JAX f32 reference for correctness checking.
def _ref_ffn(x, w1, w2):
    y = jnp.maximum(x @ w1, 0.0) @ w2
    z = y + x
    mu = jnp.mean(z, axis=-1, keepdims=True)
    var = jnp.mean((z - mu) ** 2, axis=-1, keepdims=True)
    return (z - mu) / jnp.sqrt(var + LN_EPS)


if __name__ == "__main__":
    B, SEQ = 2, 8
    key = jax.random.PRNGKey(0)
    k_x, k_w1, k_w2 = jax.random.split(key, 3)

    inputs = jax.random.normal(k_x, (B, SEQ, D_MODEL), jnp.float32)
    # nn.Linear weights (bias=False), stored transposed so the forward is x @ W.
    w1 = (0.02 * jax.random.normal(k_w1, (D_MODEL, D_FF))).astype(jnp.float32)
    w2 = (0.02 * jax.random.normal(k_w2, (D_FF, D_MODEL))).astype(jnp.float32)

    out = poswise_feed_forward(inputs, w1, w2)
    out = jax.block_until_ready(out)

    ref = _ref_ffn(inputs, w1, w2)
    assert out.shape == (B, SEQ, D_MODEL)
    assert jnp.allclose(out, ref, atol=2e-2, rtol=2e-2), (
        float(jnp.max(jnp.abs(out - ref))))

    print("KERNEL_OK")
</pallas_src>

<mosaic_0001>
module attributes {stable_mosaic.version = 11 : i64} {
  func.func @ffn_kernel(%arg0: i32, %arg1: memref<256x512xf32, #tpu.memory_space<vmem>>, %arg2: memref<512x2048xbf16, #tpu.memory_space<vmem>>, %arg3: memref<2048x512xbf16, #tpu.memory_space<vmem>>, %arg4: memref<256x512xf32, #tpu.memory_space<vmem>>) attributes {dimension_semantics = [#tpu.dimension_semantics<parallel>], iteration_bounds = array<i64: 1>, scalar_prefetch = 0 : i64, scratch_operands = 0 : i64, tpu.core_type = #tpu.core_type<tc>, window_params = [{transform_indices = @transform_0, window_bounds = array<i64: 256, 512>}, {pipeline_mode = #tpu.pipeline_mode<synchronous>, transform_indices = @transform_1, window_bounds = array<i64: 512, 2048>}, {pipeline_mode = #tpu.pipeline_mode<synchronous>, transform_indices = @transform_2, window_bounds = array<i64: 2048, 512>}, {transform_indices = @transform_3, window_bounds = array<i64: 256, 512>}]} {
    %c0 = arith.constant 0 : index
    %c0_0 = arith.constant 0 : index
    %0 = vector.load %arg1[%c0, %c0_0] : memref<256x512xf32, #tpu.memory_space<vmem>>, vector<256x512xf32>
    %1 = arith.truncf %0 : vector<256x512xf32> to vector<256x512xbf16>
    %c0_1 = arith.constant 0 : index
    %c0_2 = arith.constant 0 : index
    %2 = vector.load %arg2[%c0_1, %c0_2] : memref<512x2048xbf16, #tpu.memory_space<vmem>>, vector<512x2048xbf16>
    %cst = arith.constant dense<0.000000e+00> : vector<256x2048xf32>
    %3 = tpu.matmul %1, %2, %cst {dimension_numbers = #tpu.dot_dimension_numbers<[1], [0], [0], [1], [0, 0, 1, 1], [], []>} : vector<256x512xbf16>, vector<512x2048xbf16>, vector<256x2048xf32> -> vector<256x2048xf32>
    %cst_3 = arith.constant 0.000000e+00 : f32
    %4 = vector.broadcast %cst_3 : f32 to vector<256x2048xf32>
    %5 = arith.maximumf %3, %4 : vector<256x2048xf32>
    %6 = arith.truncf %5 : vector<256x2048xf32> to vector<256x2048xbf16>
    %c0_4 = arith.constant 0 : index
    %c0_5 = arith.constant 0 : index
    %7 = vector.load %arg3[%c0_4, %c0_5] : memref<2048x512xbf16, #tpu.memory_space<vmem>>, vector<2048x512xbf16>
    %cst_6 = arith.constant dense<0.000000e+00> : vector<256x512xf32>
    %8 = tpu.matmul %6, %7, %cst_6 {dimension_numbers = #tpu.dot_dimension_numbers<[1], [0], [0], [1], [0, 0, 1, 1], [], []>} : vector<256x2048xbf16>, vector<2048x512xbf16>, vector<256x512xf32> -> vector<256x512xf32>
    %9 = arith.addf %8, %0 : vector<256x512xf32>
    %cst_7 = arith.constant dense<0.000000e+00> : vector<256xf32>
    %10 = vector.multi_reduction <add>, %9, %cst_7 [1] : vector<256x512xf32> to vector<256xf32>
    %11 = vector.shape_cast %10 : vector<256xf32> to vector<256x1xf32>
    %cst_8 = arith.constant 5.120000e+02 : f32
    %12 = vector.broadcast %cst_8 : f32 to vector<256x1xf32>
    %13 = arith.divf %11, %12 : vector<256x1xf32>
    %14 = vector.broadcast %13 : vector<256x1xf32> to vector<256x512xf32>
    %15 = arith.subf %9, %14 : vector<256x512xf32>
    %16 = vector.broadcast %13 : vector<256x1xf32> to vector<256x512xf32>
    %17 = arith.subf %9, %16 : vector<256x512xf32>
    %18 = arith.mulf %15, %17 : vector<256x512xf32>
    %cst_9 = arith.constant dense<0.000000e+00> : vector<256xf32>
    %19 = vector.multi_reduction <add>, %18, %cst_9 [1] : vector<256x512xf32> to vector<256xf32>
    %20 = vector.shape_cast %19 : vector<256xf32> to vector<256x1xf32>
    %cst_10 = arith.constant 5.120000e+02 : f32
    %21 = vector.broadcast %cst_10 : f32 to vector<256x1xf32>
    %22 = arith.divf %20, %21 : vector<256x1xf32>
    %23 = vector.broadcast %13 : vector<256x1xf32> to vector<256x512xf32>
    %24 = arith.subf %9, %23 : vector<256x512xf32>
    %cst_11 = arith.constant 9.99999974E-6 : f32
    %25 = vector.broadcast %cst_11 : f32 to vector<256x1xf32>
    %26 = arith.addf %22, %25 : vector<256x1xf32>
    %27 = math.rsqrt %26 : vector<256x1xf32>
    %28 = vector.broadcast %27 : vector<256x1xf32> to vector<256x512xf32>
    %29 = arith.mulf %24, %28 : vector<256x512xf32>
    %c0_12 = arith.constant 0 : index
    %c0_13 = arith.constant 0 : index
    %30 = vector.load %arg4[%c0_12, %c0_13] : memref<256x512xf32, #tpu.memory_space<vmem>>, vector<256x512xf32>
    tpu.vector_store %arg4[%c0_12, %c0_13], %29 {strides = array<i32>} : memref<256x512xf32, #tpu.memory_space<vmem>>, vector<256x512xf32>,
    return
  }
  func.func @transform_0(%arg0: i32) -> (i32, i32) {
    %c0_i32 = arith.constant 0 : i32
    %c0_i32_0 = arith.constant 0 : i32
    return %arg0, %c0_i32 : i32, i32
  }
  func.func @transform_1(%arg0: i32) -> (i32, i32) {
    %c0_i32 = arith.constant 0 : i32
    %c0_i32_0 = arith.constant 0 : i32
    %c0_i32_1 = arith.constant 0 : i32
    return %c0_i32, %c0_i32_0 : i32, i32
  }
  func.func @transform_2(%arg0: i32) -> (i32, i32) {
    %c0_i32 = arith.constant 0 : i32
    %c0_i32_0 = arith.constant 0 : i32
    %c0_i32_1 = arith.constant 0 : i32
    return %c0_i32, %c0_i32_0 : i32, i32
  }
  func.func @transform_3(%arg0: i32) -> (i32, i32) {
    %c0_i32 = arith.constant 0 : i32
    %c0_i32_0 = arith.constant 0 : i32
    return %arg0, %c0_i32 : i32, i32
  }
}

</mosaic_0001>

<llo_original>
// kernel: poswise_feed_forward.1
$region0: #{poswise_feed_forward.1}
  #allocation0 [shape = 'u32[]', space=smem, size = 0x4, offset = 0x4, fixed_abs, tag = 'smem constant byte address 0x4 - core index']
  #allocation1 [shape = 'u32[144,128]{1,0:T(1,128)}', space=vmem, size = 0x12000, scoped, tag = 'internal scratch']
  %s0 = inlined_call_operand.vmem [shape: f32[16,512], index: 0, kind: input, shape index: {}]
  %s1 = inlined_call_operand.vmem [shape: bf16[512,2048], index: 1, kind: input, shape index: {}]
  %s2 = inlined_call_operand.vmem [shape: bf16[2048,512], index: 2, kind: input, shape index: {}]
  %s3 = inlined_call_operand.hbm [shape: f32[16,512], index: 3, kind: output, shape index: {}]
  %s4 = sld [smem:[#allocation0]]
  $region22: #{poswise_feed_forward.1} parent=0
    _
  %s6 = ssub.s32 1, %s4
  %s7 = scalar_select 0, %s6, %s4
  $region1: #{poswise_feed_forward.1} parent=0
    #allocation2 [shape = 'u8[524288]{0}', space=vmem, size = 0x80000, scoped, tag = 'output window, operand 0, single buffered']
    #allocation3 [shape = 's32[1]{0}', space=sflag, size = 0x4, scoped, tag = 'scoped memory for poswise_feed_forward.1']
    %8 = vsyncpa [#allocation3], 0
    // Predicated region
    $region2: #{poswise_feed_forward.1} parent=1 // pred_check
      _
    $region3: #{poswise_feed_forward.1} parent=1 // pred_check_branch
      %10 = sbr.rel (0) target = $region5
    $region4: #{poswise_feed_forward.1} parent=1 // pred_region
      _
    $region5: #{poswise_feed_forward.1} parent=1 // pred_fallthru
      _
    // Predicated region
    $region6: #{poswise_feed_forward.1} parent=1 // pred_check
      _
    $region7: #{poswise_feed_forward.1} parent=1 // pred_check_branch
      %12 = sbr.rel (0) target = $region9
    $region8: #{poswise_feed_forward.1} parent=1 // pred_region
      _
    $region9: #{poswise_feed_forward.1} parent=1 // pred_fallthru
      _
    // Predicated region
    $region10: #{poswise_feed_forward.1} parent=1 // pred_check
      _
    $region11: #{poswise_feed_forward.1} parent=1 // pred_check_branch
      %14 = sbr.rel (0) target = $region13
    $region12: #{poswise_feed_forward.1} parent=1 // pred_region
      _
    $region13: #{poswise_feed_forward.1} parent=1 // pred_fallthru
      _
    %v15 = vld [vmem:[%s0] sm:$0xff]
    %v16 = vld [vmem:[%s0 + $0x8] sm:$0xff]
    %v17 = vld [vmem:[%s0 + $0x10] sm:$0xff]
    %v18 = vld [vmem:[%s0 + $0x18] sm:$0xff]
    %v19 = vld [vmem:[%s0 + $0x20] sm:$0xff]
    %v20 = vld [vmem:[%s0 + $0x28] sm:$0xff]
    %v21 = vld [vmem:[%s0 + $0x30] sm:$0xff]
    %v22 = vld [vmem:[%s0 + $0x38] sm:$0xff]
    %v23 = vld [vmem:[%s0 + $0x40] sm:$0xff]
    %v24 = vld [vmem:[%s0 + $0x48] sm:$0xff]
    %v25 = vld [vmem:[%s0 + $0x50] sm:$0xff]
    %v26 = vld [vmem:[%s0 + $0x58] sm:$0xff]
    %v27 = vld [vmem:[%s0 + $0x60] sm:$0xff]
    %v28 = vld [vmem:[%s0 + $0x68] sm:$0xff]
    %v29 = vld [vmem:[%s0 + $0x70] sm:$0xff]
    %v30 = vld [vmem:[%s0 + $0x78] sm:$0xff]
    %v31 = vld [vmem:[%s0 + $0x80] sm:$0xff]
    %v32 = vld [vmem:[%s0 + $0x88] sm:$0xff]
    %v33 = vld [vmem:[%s0 + $0x90] sm:$0xff]
    %v34 = vld [vmem:[%s0 + $0x98] sm:$0xff]
    %v35 = vld [vmem:[%s0 + $0xa0] sm:$0xff]
    %v36 = vld [vmem:[%s0 + $0xa8] sm:$0xff]
    %v37 = vld [vmem:[%s0 + $0xb0] sm:$0xff]
    %v38 = vld [vmem:[%s0 + $0xb8] sm:$0xff]
    %v39 = vld [vmem:[%s0 + $0xc0] sm:$0xff]
    %v40 = vld [vmem:[%s0 + $0xc8] sm:$0xff]
    %v41 = vld [vmem:[%s0 + $0xd0] sm:$0xff]
    %v42 = vld [vmem:[%s0 + $0xd8] sm:$0xff]
    %v43 = vld [vmem:[%s0 + $0xe0] sm:$0xff]
    %v44 = vld [vmem:[%s0 + $0xe8] sm:$0xff]
    %v45 = vld [vmem:[%s0 + $0xf0] sm:$0xff]
    %v46 = vld [vmem:[%s0 + $0xf8] sm:$0xff]
    %v47 = vld [vmem:[%s0 + $0x100] sm:$0xff]
    %v48 = vld [vmem:[%s0 + $0x108] sm:$0xff]
    %v49 = vld [vmem:[%s0 + $0x110] sm:$0xff]
    %v50 = vld [vmem:[%s0 + $0x118] sm:$0xff]
    %v51 = vld [vmem:[%s0 + $0x120] sm:$0xff]
    %v52 = vld [vmem:[%s0 + $0x128] sm:$0xff]
    %v53 = vld [vmem:[%s0 + $0x130] sm:$0xff]
    %v54 = vld [vmem:[%s0 + $0x138] sm:$0xff]
    %v55 = vld [vmem:[%s0 + $0x140] sm:$0xff]
    %v56 = vld [vmem:[%s0 + $0x148] sm:$0xff]
    %v57 = vld [vmem:[%s0 + $0x150] sm:$0xff]
    %v58 = vld [vmem:[%s0 + $0x158] sm:$0xff]
    %v59 = vld [vmem:[%s0 + $0x160] sm:$0xff]
    %v60 = vld [vmem:[%s0 + $0x168] sm:$0xff]
    %v61 = vld [vmem:[%s0 + $0x170] sm:$0xff]
    %v62 = vld [vmem:[%s0 + $0x178] sm:$0xff]
    %v63 = vld [vmem:[%s0 + $0x180] sm:$0xff]
    %v64 = vld [vmem:[%s0 + $0x188] sm:$0xff]
    %v65 = vld [vmem:[%s0 + $0x190] sm:$0xff]
    %v66 = vld [vmem:[%s0 + $0x198] sm:$0xff]
    %v67 = vld [vmem:[%s0 + $0x1a0] sm:$0xff]
    %v68 = vld [vmem:[%s0 + $0x1a8] sm:$0xff]
    %v69 = vld [vmem:[%s0 + $0x1b0] sm:$0xff]
    %v70 = vld [vmem:[%s0 + $0x1b8] sm:$0xff]
    %v71 = vld [vmem:[%s0 + $0x1c0] sm:$0xff]
    %v72 = vld [vmem:[%s0 + $0x1c8] sm:$0xff]
    %v73 = vld [vmem:[%s0 + $0x1d0] sm:$0xff]
    %v74 = vld [vmem:[%s0 + $0x1d8] sm:$0xff]
    %v75 = vld [vmem:[%s0 + $0x1e0] sm:$0xff]
    %v76 = vld [vmem:[%s0 + $0x1e8] sm:$0xff]
    %v77 = vld [vmem:[%s0 + $0x1f0] sm:$0xff]
    %v78 = vld [vmem:[%s0 + $0x1f8] sm:$0xff]
    %v79 = vld [vmem:[%s0 + $0x200] sm:$0xff]
    %v80 = vld [vmem:[%s0 + $0x208] sm:$0xff]
    %v81 = vld [vmem:[%s0 + $0x210] sm:$0xff]
    %v82 = vld [vmem:[%s0 + $0x218] sm:$0xff]
    %v83 = vld [vmem:[%s0 + $0x220] sm:$0xff]
    %v84 = vld [vmem:[%s0 + $0x228] sm:$0xff]
    %v85 = vld [vmem:[%s0 + $0x230] sm:$0xff]
    %v86 = vld [vmem:[%s0 + $0x238] sm:$0xff]
    %v87 = vld [vmem:[%s0 + $0x240] sm:$0xff]
    %v88 = vld [vmem:[%s0 + $0x248] sm:$0xff]
    %v89 = vld [vmem:[%s0 + $0x250] sm:$0xff]
    %v90 = vld [vmem:[%s0 + $0x258] sm:$0xff]
    %v91 = vld [vmem:[%s0 + $0x260] sm:$0xff]
    %v92 = vld [vmem:[%s0 + $0x268] sm:$0xff]
    %v93 = vld [vmem:[%s0 + $0x270] sm:$0xff]
    %v94 = vld [vmem:[%s0 + $0x278] sm:$0xff]
    %v95 = vld [vmem:[%s0 + $0x280] sm:$0xff]
    %v96 = vld [vmem:[%s0 + $0x288] sm:$0xff]
    %v97 = vld [vmem:[%s0 + $0x290] sm:$0xff]
    %v98 = vld [vmem:[%s0 + $0x298] sm:$0xff]
    %v99 = vld [vmem:[%s0 + $0x2a0] sm:$0xff]
    %v100 = vld [vmem:[%s0 + $0x2a8] sm:$0xff]
    %v101 = vld [vmem:[%s0 + $0x2b0] sm:$0xff]
    %v102 = vld [vmem:[%s0 + $0x2b8] sm:$0xff]
    %v103 = vld [vmem:[%s0 + $0x2c0] sm:$0xff]
    %v104 = vld [vmem:[%s0 + $0x2c8] sm:$0xff]
    %v105 = vld [vmem:[%s0 + $0x2d0] sm:$0xff]
    %v106 = vld [vmem:[%s0 + $0x2d8] sm:$0xff]
    %v107 = vld [vmem:[%s0 + $0x2e0] sm:$0xff]
    %v108 = vld [vmem:[%s0 + $0x2e8] sm:$0xff]
    %v109 = vld [vmem:[%s0 + $0x2f0] sm:$0xff]
    %v110 = vld [vmem:[%s0 + $0x2f8] sm:$0xff]
    %v111 = vld [vmem:[%s0 + $0x300] sm:$0xff]
    %v112 = vld [vmem:[%s0 + $0x308] sm:$0xff]
    %v113 = vld [vmem:[%s0 + $0x310] sm:$0xff]
    %v114 = vld [vmem:[%s0 + $0x318] sm:$0xff]
    %v115 = vld [vmem:[%s0 + $0x320] sm:$0xff]
    %v116 = vld [vmem:[%s0 + $0x328] sm:$0xff]
    %v117 = vld [vmem:[%s0 + $0x330] sm:$0xff]
    %v118 = vld [vmem:[%s0 + $0x338] sm:$0xff]
    %v119 = vld [vmem:[%s0 + $0x340] sm:$0xff]
    %v120 = vld [vmem:[%s0 + $0x348] sm:$0xff]
    %v121 = vld [vmem:[%s0 + $0x350] sm:$0xff]
    %v122 = vld [vmem:[%s0 + $0x358] sm:$0xff]
    %v123 = vld [vmem:[%s0 + $0x360] sm:$0xff]
    %v124 = vld [vmem:[%s0 + $0x368] sm:$0xff]
    %v125 = vld [vmem:[%s0 + $0x370] sm:$0xff]
    %v126 = vld [vmem:[%s0 + $0x378] sm:$0xff]
    %v127 = vld [vmem:[%s0 + $0x380] sm:$0xff]
    %v128 = vld [vmem:[%s0 + $0x388] sm:$0xff]
    %v129 = vld [vmem:[%s0 + $0x390] sm:$0xff]
    %v130 = vld [vmem:[%s0 + $0x398] sm:$0xff]
    %v131 = vld [vmem:[%s0 + $0x3a0] sm:$0xff]
    %v132 = vld [vmem:[%s0 + $0x3a8] sm:$0xff]
    %v133 = vld [vmem:[%s0 + $0x3b0] sm:$0xff]
    %v134 = vld [vmem:[%s0 + $0x3b8] sm:$0xff]
    %v135 = vld [vmem:[%s0 + $0x3c0] sm:$0xff]
    %v136 = vld [vmem:[%s0 + $0x3c8] sm:$0xff]
    %v137 = vld [vmem:[%s0 + $0x3d0] sm:$0xff]
    %v138 = vld [vmem:[%s0 + $0x3d8] sm:$0xff]
    %v139 = vld [vmem:[%s0 + $0x3e0] sm:$0xff]
    %v140 = vld [vmem:[%s0 + $0x3e8] sm:$0xff]
    %v141 = vld [vmem:[%s0 + $0x3f0] sm:$0xff]
    %v142 = vld [vmem:[%s0 + $0x3f8] sm:$0xff]
    %v143 = vpack.c.bf16 %v19, %v15
    %v144 = vpack.c.bf16 %v20, %v16
    %v145 = vpack.c.bf16 %v21, %v17
    %v146 = vpack.c.bf16 %v22, %v18
    %v147 = vpack.c.bf16 %v27, %v23
    %v148 = vpack.c.bf16 %v28, %v24
    %v149 = vpack.c.bf16 %v29, %v25
    %v150 = vpack.c.bf16 %v30, %v26
    %v151 = vpack.c.bf16 %v35, %v31
    %v152 = vpack.c.bf16 %v36, %v32
    %v153 = vpack.c.bf16 %v37, %v33
    %v154 = vpack.c.bf16 %v38, %v34
    %v155 = vpack.c.bf16 %v43, %v39
    %v156 = vpack.c.bf16 %v44, %v40
    %v157 = vpack.c.bf16 %v45, %v41
    %v158 = vpack.c.bf16 %v46, %v42
    %v159 = vpack.c.bf16 %v51, %v47
    %v160 = vpack.c.bf16 %v52, %v48
    %v161 = vpack.c.bf16 %v53, %v49
    %v162 = vpack.c.bf16 %v54, %v50
    %v163 = vpack.c.bf16 %v59, %v55
    %v164 = vpack.c.bf16 %v60, %v56
    %v165 = vpack.c.bf16 %v61, %v57
    %v166 = vpack.c.bf16 %v62, %v58
    %v167 = vpack.c.bf16 %v67, %v63
    %v168 = vpack.c.bf16 %v68, %v64
    %v169 = vpack.c.bf16 %v69, %v65
    %v170 = vpack.c.bf16 %v70, %v66
    %v171 = vpack.c.bf16 %v75, %v71
    %v172 = vpack.c.bf16 %v76, %v72
    %v173 = vpack.c.bf16 %v77, %v73
    %v174 = vpack.c.bf16 %v78, %v74
    %v175 = vpack.c.bf16 %v83, %v79
    %v176 = vpack.c.bf16 %v84, %v80
    %v177 = vpack.c.bf16 %v85, %v81
    %v178 = vpack.c.bf16 %v86, %v82
    %v179 = vpack.c.bf16 %v91, %v87
    %v180 = vpack.c.bf16 %v92, %v88
    %v181 = vpack.c.bf16 %v93, %v89
    %v182 = vpack.c.bf16 %v94, %v90
    %v183 = vpack.c.bf16 %v99, %v95
    %v184 = vpack.c.bf16 %v100, %v96
    %v185 = vpack.c.bf16 %v101, %v97
    %v186 = vpack.c.bf16 %v102, %v98
    %v187 = vpack.c.bf16 %v107, %v103
    %v188 = vpack.c.bf16 %v108, %v104
    %v189 = vpack.c.bf16 %v109, %v105
    %v190 = vpack.c.bf16 %v110, %v106
    %v191 = vpack.c.bf16 %v115, %v111
    %v192 = vpack.c.bf16 %v116, %v112
    %v193 = vpack.c.bf16 %v117, %v113
    %v194 = vpack.c.bf16 %v118, %v114
    %v195 = vpack.c.bf16 %v123, %v119
    %v196 = vpack.c.bf16 %v124, %v120
    %v197 = vpack.c.bf16 %v125, %v121
    %v198 = vpack.c.bf16 %v126, %v122
    %v199 = vpack.c.bf16 %v131, %v127
    %v200 = vpack.c.bf16 %v132, %v128
    %v201 = vpack.c.bf16 %v133, %v129
    %v202 = vpack.c.bf16 %v134, %v130
    %v203 = vpack.c.bf16 %v139, %v135
    %v204 = vpack.c.bf16 %v140, %v136
    %v205 = vpack.c.bf16 %v141, %v137
    %v206 = vpack.c.bf16 %v142, %v138
    %v207 = vld [vmem:[%s1] sm:$0xff]
    %v208 = vld [vmem:[%s1 + $0x8] sm:$0xff]
    %v209 = vld [vmem:[%s1 + $0x10] sm:$0xff]
    %v210 = vld [vmem:[%s1 + $0x18] sm:$0xff]
    %v211 = vld [vmem:[%s1 + $0x20] sm:$0xff]
    %v212 = vld [vmem:[%s1 + $0x28] sm:$0xff]
    %v213 = vld [vmem:[%s1 + $0x30] sm:$0xff]
    %v214 = vld [vmem:[%s1 + $0x38] sm:$0xff]
    %v215 = vld [vmem:[%s1 + $0x40] sm:$0xff]
    %v216 = vld [vmem:[%s1 + $0x48] sm:$0xff]
    %v217 = vld [vmem:[%s1 + $0x50] sm:$0xff]
    %v218 = vld [vmem:[%s1 + $0x58] sm:$0xff]
    %v219 = vld [vmem:[%s1 + $0x60] sm:$0xff]
    %v220 = vld [vmem:[%s1 + $0x68] sm:$0xff]
    %v221 = vld [vmem:[%s1 + $0x70] sm:$0xff]
    %v222 = vld [vmem:[%s1 + $0x78] sm:$0xff]
    %v223 = vld [vmem:[%s1 + $0x80] sm:$0xff]
    %v224 = vld [vmem:[%s1 + $0x88] sm:$0xff]
    %v225 = vld [vmem:[%s1 + $0x90] sm:$0xff]
    %v226 = vld [vmem:[%s1 + $0x98] sm:$0xff]
    %v227 = vld [vmem:[%s1 + $0xa0] sm:$0xff]
    %v228 = vld [vmem:[%s1 + $0xa8] sm:$0xff]
    %v229 = vld [vmem:[%s1 + $0xb0] sm:$0xff]
    %v230 = vld [vmem:[%s1 + $0xb8] sm:$0xff]
    %v231 = vld [vmem:[%s1 + $0xc0] sm:$0xff]
    %v232 = vld [vmem:[%s1 + $0xc8] sm:$0xff]
    %v233 = vld [vmem:[%s1 + $0xd0] sm:$0xff]
    %v234 = vld [vmem:[%s1 + $0xd8] sm:$0xff]
    %v235 = vld [vmem:[%s1 + $0xe0] sm:$0xff]
    %v236 = vld [vmem:[%s1 + $0xe8] sm:$0xff]
    %v237 = vld [vmem:[%s1 + $0xf0] sm:$0xff]
    %v238 = vld [vmem:[%s1 + $0xf8] sm:$0xff]
    %v239 = vld [vmem:[%s1 + $0x100] sm:$0xff]
    %v240 = vld [vmem:[%s1 + $0x108] sm:$0xff]
    %v241 = vld [vmem:[%s1 + $0x110] sm:$0xff]
    %v242 = vld [vmem:[%s1 + $0x118] sm:$0xff]
    %v243 = vld [vmem:[%s1 + $0x120] sm:$0xff]
    %v244 = vld [vmem:[%s1 + $0x128] sm:$0xff]
    %v245 = vld [vmem:[%s1 + $0x130] sm:$0xff]
    %v246 = vld [vmem:[%s1 + $0x138] sm:$0xff]
    %v247 = vld [vmem:[%s1 + $0x140] sm:$0xff]
    %v248 = vld [vmem:[%s1 + $0x148] sm:$0xff]
    %v249 = vld [vmem:[%s1 + $0x150] sm:$0xff]
    %v250 = vld [vmem:[%s1 + $0x158] sm:$0xff]
    %v251 = vld [vmem:[%s1 + $0x160] sm:$0xff]
    %v252 = vld [vmem:[%s1 + $0x168] sm:$0xff]
    %v253 = vld [vmem:[%s1 + $0x170] sm:$0xff]
    %v254 = vld [vmem:[%s1 + $0x178] sm:$0xff]
    %v255 = vld [vmem:[%s1 + $0x180] sm:$0xff]
    %v256 = vld [vmem:[%s1 + $0x188] sm:$0xff]
    %v257 = vld [vmem:[%s1 + $0x190] sm:$0xff]
    %v258 = vld [vmem:[%s1 + $0x198] sm:$0xff]
    %v259 = vld [vmem:[%s1 + $0x1a0] sm:$0xff]
    %v260 = vld [vmem:[%s1 + $0x1a8] sm:$0xff]
    %v261 = vld [vmem:[%s1 + $0x1b0] sm:$0xff]
    %v262 = vld [vmem:[%s1 + $0x1b8] sm:$0xff]
    %v263 = vld [vmem:[%s1 + $0x1c0] sm:$0xff]
    %v264 = vld [vmem:[%s1 + $0x1c8] sm:$0xff]
    %v265 = vld [vmem:[%s1 + $0x1d0] sm:$0xff]
    %v266 = vld [vmem:[%s1 + $0x1d8] sm:$0xff]
    %v267 = vld [vmem:[%s1 + $0x1e0] sm:$0xff]
    %v268 = vld [vmem:[%s1 + $0x1e8] sm:$0xff]
    %v269 = vld [vmem:[%s1 + $0x1f0] sm:$0xff]
    %v270 = vld [vmem:[%s1 + $0x1f8] sm:$0xff]
    %v271 = vld [vmem:[%s1 + $0x200] sm:$0xff]
    %v272 = vld [vmem:[%s1 + $0x208] sm:$0xff]
    %v273 = vld [vmem:[%s1 + $0x210] sm:$0xff]
    %v274 = vld [vmem:[%s1 + $0x218] sm:$0xff]
    %v275 = vld [vmem:[%s1 + $0x220] sm:$0xff]
    %v276 = vld [vmem:[%s1 + $0x228] sm:$0xff]
    %v277 = vld [vmem:[%s1 + $0x230] sm:$0xff]
    %v278 = vld [vmem:[%s1 + $0x238] sm:$0xff]
    %v279 = vld [vmem:[%s1 + $0x240] sm:$0xff]
    %v280 = vld [vmem:[%s1 + $0x248] sm:$0xff]
    %v281 = vld [vmem:[%s1 + $0x250] sm:$0xff]
    %v282 = vld [vmem:[%s1 + $0x258] sm:$0xff]
    %v283 = vld [vmem:[%s1 + $0x260] sm:$0xff]
    %v284 = vld [vmem:[%s1 + $0x268] sm:$0xff]
    %v285 = vld [vmem:[%s1 + $0x270] sm:$0xff]
    %v286 = vld [vmem:[%s1 + $0x278] sm:$0xff]
    %v287 = vld [vmem:[%s1 + $0x280] sm:$0xff]
    %v288 = vld [vmem:[%s1 + $0x288] sm:$0xff]
    %v289 = vld [vmem:[%s1 + $0x290] sm:$0xff]
    %v290 = vld [vmem:[%s1 + $0x298] sm:$0xff]
    %v291 = vld [vmem:[%s1 + $0x2a0] sm:$0xff]
    %v292 = vld [vmem:[%s1 + $0x2a8] sm:$0xff]
    %v293 = vld [vmem:[%s1 + $0x2b0] sm:$0xff]
    %v294 = vld [vmem:[%s1 + $0x2b8] sm:$0xff]
    %v295 = vld [vmem:[%s1 + $0x2c0] sm:$0xff]
    %v296 = vld [vmem:[%s1 + $0x2c8] sm:$0xff]
    %v297 = vld [vmem:[%s1 + $0x2d0] sm:$0xff]
    %v298 = vld [vmem:[%s1 + $0x2d8] sm:$0xff]
    %v299 = vld [vmem:[%s1 + $0x2e0] sm:$0xff]
    %v300 = vld [vmem:[%s1 + $0x2e8] sm:$0xff]
    %v301 = vld [vmem:[%s1 + $0x2f0] sm:$0xff]
    %v302 = vld [vmem:[%s1 + $0x2f8] sm:$0xff]
    %v303 = vld [vmem:[%s1 + $0x300] sm:$0xff]
    %v304 = vld [vmem:[%s1 + $0x308] sm:$0xff]
    %v305 = vld [vmem:[%s1 + $0x310] sm:$0xff]
    %v306 = vld [vmem:[%s1 + $0x318] sm:$0xff]
    %v307 = vld [vmem:[%s1 + $0x320] sm:$0xff]
    %v308 = vld [vmem:[%s1 + $0x328] sm:$0xff]
    %v309 = vld [vmem:[%s1 + $0x330] sm:$0xff]
    %v310 = vld [vmem:[%s1 + $0x338] sm:$0xff]
    %v311 = vld [vmem:[%s1 + $0x340] sm:$0xff]
    %v312 = vld [vmem:[%s1 + $0x348] sm:$0xff]
    %v313 = vld [vmem:[%s1 + $0x350] sm:$0xff]
    %v314 = vld [vmem:[%s1 + $0x358] sm:$0xff]
    %v315 = vld [vmem:[%s1 + $0x360] sm:$0xff]
    %v316 = vld [vmem:[%s1 + $0x368] sm:$0xff]
    %v317 = vld [vmem:[%s1 + $0x370] sm:$0xff]
    %v318 = vld [vmem:[%s1 + $0x378] sm:$0xff]
    %v319 = vld [vmem:[%s1 + $0x380] sm:$0xff]
    %v320 = vld [vmem:[%s1 + $0x388] sm:$0xff]
    %v321 = vld [vmem:[%s1 + $0x390] sm:$0xff]
    %v322 = vld [vmem:[%s1 + $0x398] sm:$0xff]
    %v323 = vld [vmem:[%s1 + $0x3a0] sm:$0xff]
    %v324 = vld [vmem:[%s1 + $0x3a8] sm:$0xff]
    %v325 = vld [vmem:[%s1 + $0x3b0] sm:$0xff]
    %v326 = vld [vmem:[%s1 + $0x3b8] sm:$0xff]
    %v327 = vld [vmem:[%s1 + $0x3c0] sm:$0xff]
    %v328 = vld [vmem:[%s1 + $0x3c8] sm:$0xff]
    %v329 = vld [vmem:[%s1 + $0x3d0] sm:$0xff]
    %v330 = vld [vmem:[%s1 + $0x3d8] sm:$0xff]
    %v331 = vld [vmem:[%s1 + $0x3e0] sm:$0xff]
    %v332 = vld [vmem:[%s1 + $0x3e8] sm:$0xff]
    %v333 = vld [vmem:[%s1 + $0x3f0] sm:$0xff]
    %v334 = vld [vmem:[%s1 + $0x3f8] sm:$0xff]
    %v335 = vld [vmem:[%s1 + $0x400] sm:$0xff]
    %v336 = vld [vmem:[%s1 + $0x408] sm:$0xff]
    %v337 = vld [vmem:[%s1 + $0x410] sm:$0xff]
    %v338 = vld [vmem:[%s1 + $0x418] sm:$0xff]
    %v339 = vld [vmem:[%s1 + $0x420] sm:$0xff]
    %v340 = vld [vmem:[%s1 + $0x428] sm:$0xff]
    %v341 = vld [vmem:[%s1 + $0x430] sm:$0xff]
    %v342 = vld [vmem:[%s1 + $0x438] sm:$0xff]
    %v343 = vld [vmem:[%s1 + $0x440] sm:$0xff]
    %v344 = vld [vmem:[%s1 + $0x448] sm:$0xff]
    %v345 = vld [vmem:[%s1 + $0x450] sm:$0xff]
    %v346 = vld [vmem:[%s1 + $0x458] sm:$0xff]
    %v347 = vld [vmem:[%s1 + $0x460] sm:$0xff]
    %v348 = vld [vmem:[%s1 + $0x468] sm:$0xff]
    %v349 = vld [vmem:[%s1 + $0x470] sm:$0xff]
    %v350 = vld [vmem:[%s1 + $0x478] sm:$0xff]
    %v351 = vld [vmem:[%s1 + $0x480] sm:$0xff]
    %v352 = vld [vmem:[%s1 + $0x488] sm:$0xff]
    %v353 = vld [vmem:[%s1 + $0x490] sm:$0xff]
    %v354 = vld [vmem:[%s1 + $0x498] sm:$0xff]
    %v355 = vld [vmem:[%s1 + $0x4a0] sm:$0xff]
    %v356 = vld [vmem:[%s1 + $0x4a8] sm:$0xff]
    %v357 = vld [vmem:[%s1 + $0x4b0] sm:$0xff]
    %v358 = vld [vmem:[%s1 + $0x4b8] sm:$0xff]
    %v359 = vld [vmem:[%s1 + $0x4c0] sm:$0xff]
    %v360 = vld [vmem:[%s1 + $0x4c8] sm:$0xff]
    %v361 = vld [vmem:[%s1 + $0x4d0] sm:$0xff]
    %v362 = vld [vmem:[%s1 + $0x4d8] sm:$0xff]
    %v363 = vld [vmem:[%s1 + $0x4e0] sm:$0xff]
    %v364 = vld [vmem:[%s1 + $0x4e8] sm:$0xff]
    %v365 = vld [vmem:[%s1 + $0x4f0] sm:$0xff]
    %v366 = vld [vmem:[%s1 + $0x4f8] sm:$0xff]
    %v367 = vld [vmem:[%s1 + $0x500] sm:$0xff]
    %v368 = vld [vmem:[%s1 + $0x508] sm:$0xff]
    %v369 = vld [vmem:[%s1 + $0x510] sm:$0xff]
    %v370 = vld [vmem:[%s1 + $0x518] sm:$0xff]
    %v371 = vld [vmem:[%s1 + $0x520] sm:$0xff]
    %v372 = vld [vmem:[%s1 + $0x528] sm:$0xff]
    %v373 = vld [vmem:[%s1 + $0x530] sm:$0xff]
    %v374 = vld [vmem:[%s1 + $0x538] sm:$0xff]
    %v375 = vld [vmem:[%s1 + $0x540] sm:$0xff]
    %v376 = vld [vmem:[%s1 + $0x548] sm:$0xff]
    %v377 = vld [vmem:[%s1 + $0x550] sm:$0xff]
    %v378 = vld [vmem:[%s1 + $0x558] sm:$0xff]
    %v379 = vld [vmem:[%s1 + $0x560] sm:$0xff]
    %v380 = vld [vmem:[%s1 + $0x568] sm:$0xff]
    %v381 = vld [vmem:[%s1 + $0x570] sm:$0xff]
    %v382 = vld [vmem:[%s1 + $0x578] sm:$0xff]
    %v383 = vld [vmem:[%s1 + $0x580] sm:$0xff]
    %v384 = vld [vmem:[%s1 + $0x588] sm:$0xff]
    %v385 = vld [vmem:[%s1 + $0x590] sm:$0xff]
    %v386 = vld [vmem:[%s1 + $0x598] sm:$0xff]
    %v387 = vld [vmem:[%s1 + $0x5a0] sm:$0xff]
    %v388 = vld [vmem:[%s1 + $0x5a8] sm:$0xff]
    %v389 = vld [vmem:[%s1 + $0x5b0] sm:$0xff]
    %v390 = vld [vmem:[%s1 + $0x5b8] sm:$0xff]
    %v391 = vld [vmem:[%s1 + $0x5c0] sm:$0xff]
    %v392 = vld [vmem:[%s1 + $0x5c8] sm:$0xff]
    %v393 = vld [vmem:[%s1 + $0x5d0] sm:$0xff]
    %v394 = vld [vmem:[%s1 + $0x5d8] sm:$0xff]
    %v395 = vld [vmem:[%s1 + $0x5e0] sm:$0xff]
    %v396 = vld [vmem:[%s1 + $0x5e8] sm:$0xff]
    %v397 = vld [vmem:[%s1 + $0x5f0] sm:$0xff]
    %v398 = vld [vmem:[%s1 + $0x5f8] sm:$0xff]
    %v399 = vld [vmem:[%s1 + $0x600] sm:$0xff]
    %v400 = vld [vmem:[%s1 + $0x608] sm:$0xff]
    %v401 = vld [vmem:[%s1 + $0x610] sm:$0xff]
    %v402 = vld [vmem:[%s1 + $0x618] sm:$0xff]
    %v403 = vld [vmem:[%s1 + $0x620] sm:$0xff]
    %v404 = vld [vmem:[%s1 + $0x628] sm:$0xff]
    %v405 = vld [vmem:[%s1 + $0x630] sm:$0xff]
    %v406 = vld [vmem:[%s1 + $0x638] sm:$0xff]
    %v407 = vld [vmem:[%s1 + $0x640] sm:$0xff]
    %v408 = vld [vmem:[%s1 + $0x648] sm:$0xff]
    %v409 = vld [vmem:[%s1 + $0x650] sm:$0xff]
    %v410 = vld [vmem:[%s1 + $0x658] sm:$0xff]
    %v411 = vld [vmem:[%s1 + $0x660] sm:$0xff]
    %v412 = vld [vmem:[%s1 + $0x668] sm:$0xff]
    %v413 = vld [vmem:[%s1 + $0x670] sm:$0xff]
    %v414 = vld [vmem:[%s1 + $0x678] sm:$0xff]
    %v415 = vld [vmem:[%s1 + $0x680] sm:$0xff]
    %v416 = vld [vmem:[%s1 + $0x688] sm:$0xff]
    %v417 = vld [vmem:[%s1 + $0x690] sm:$0xff]
    %v418 = vld [vmem:[%s1 + $0x698] sm:$0xff]
    %v419 = vld [vmem:[%s1 + $0x6a0] sm:$0xff]
    %v420 = vld [vmem:[%s1 + $0x6a8] sm:$0xff]
    %v421 = vld [vmem:[%s1 + $0x6b0] sm:$0xff]
    %v422 = vld [vmem:[%s1 + $0x6b8] sm:$0xff]
    %v423 = vld [vmem:[%s1 + $0x6c0] sm:$0xff]
    %v424 = vld [vmem:[%s1 + $0x6c8] sm:$0xff]
    %v425 = vld [vmem:[%s1 + $0x6d0] sm:$0xff]
    %v426 = vld [vmem:[%s1 + $0x6d8] sm:$0xff]
    %v427 = vld [vmem:[%s1 + $0x6e0] sm:$0xff]
    %v428 = vld [vmem:[%s1 + $0x6e8] sm:$0xff]
    %v429 = vld [vmem:[%s1 + $0x6f0] sm:$0xff]
    %v430 = vld [vmem:[%s1 + $0x6f8] sm:$0xff]
    %v431 = vld [vmem:[%s1 + $0x700] sm:$0xff]
    %v432 = vld [vmem:[%s1 + $0x708] sm:$0xff]
    %v433 = vld [vmem:[%s1 + $0x710] sm:$0xff]
    %v434 = vld [vmem:[%s1 + $0x718] sm:$0xff]
    %v435 = vld [vmem:[%s1 + $0x720] sm:$0xff]
    %v436 = vld [vmem:[%s1 + $0x728] sm:$0xff]
    %v437 = vld [vmem:[%s1 + $0x730] sm:$0xff]
    %v438 = vld [vmem:[%s1 + $0x738] sm:$0xff]
    %v439 = vld [vmem:[%s1 + $0x740] sm:$0xff]
    %v440 = vld [vmem:[%s1 + $0x748] sm:$0xff]
    %v441 = vld [vmem:[%s1 + $0x750] sm:$0xff]
    %v442 = vld [vmem:[%s1 + $0x758] sm:$0xff]
    %v443 = vld [vmem:[%s1 + $0x760] sm:$0xff]
    %v444 = vld [vmem:[%s1 + $0x768] sm:$0xff]
    %v445 = vld [vmem:[%s1 + $0x770] sm:$0xff]
    %v446 = vld [vmem:[%s1 + $0x778] sm:$0xff]
    %v447 = vld [vmem:[%s1 + $0x780] sm:$0xff]
    %v448 = vld [vmem:[%s1 + $0x788] sm:$0xff]
    %v449 = vld [vmem:[%s1 + $0x790] sm:$0xff]
    %v450 = vld [vmem:[%s1 + $0x798] sm:$0xff]
    %v451 = vld [vmem:[%s1 + $0x7a0] sm:$0xff]
    %v452 = vld [vmem:[%s1 + $0x7a8] sm:$0xff]
    %v453 = vld [vmem:[%s1 + $0x7b0] sm:$0xff]
    %v454 = vld [vmem:[%s1 + $0x7b8] sm:$0xff]
    %v455 = vld [vmem:[%s1 + $0x7c0] sm:$0xff]
    %v456 = vld [vmem:[%s1 + $0x7c8] sm:$0xff]
    %v457 = vld [vmem:[%s1 + $0x7d0] sm:$0xff]
    %v458 = vld [vmem:[%s1 + $0x7d8] sm:$0xff]
    %v459 = vld [vmem:[%s1 + $0x7e0] sm:$0xff]
    %v460 = vld [vmem:[%s1 + $0x7e8] sm:$0xff]
    %v461 = vld [vmem:[%s1 + $0x7f0] sm:$0xff]
    %v462 = vld [vmem:[%s1 + $0x7f8] sm:$0xff]
    %v463 = vld [vmem:[%s1 + $0x800] sm:$0xff]
    %v464 = vld [vmem:[%s1 + $0x808] sm:$0xff]
    %v465 = vld [vmem:[%s1 + $0x810] sm:$0xff]
    %v466 = vld [vmem:[%s1 + $0x818] sm:$0xff]
    %v467 = vld [vmem:[%s1 + $0x820] sm:$0xff]
    %v468 = vld [vmem:[%s1 + $0x828] sm:$0xff]
    %v469 = vld [vmem:[%s1 + $0x830] sm:$0xff]
    %v470 = vld [vmem:[%s1 + $0x838] sm:$0xff]
    %v471 = vld [vmem:[%s1 + $0x840] sm:$0xff]
    %v472 = vld [vmem:[%s1 + $0x848] sm:$0xff]
    %v473 = vld [vmem:[%s1 + $0x850] sm:$0xff]
    %v474 = vld [vmem:[%s1 + $0x858] sm:$0xff]
    %v475 = vld [vmem:[%s1 + $0x860] sm:$0xff]
    %v476 = vld [vmem:[%s1 + $0x868] sm:$0xff]
    %v477 = vld [vmem:[%s1 + $0x870] sm:$0xff]
    %v478 = vld [vmem:[%s1 + $0x878] sm:$0xff]
    %v479 = vld [vmem:[%s1 + $0x880] sm:$0xff]
    %v480 = vld [vmem:[%s1 + $0x888] sm:$0xff]
    %v481 = vld [vmem:[%s1 + $0x890] sm:$0xff]
    %v482 = vld [vmem:[%s1 + $0x898] sm:$0xff]
    %v483 = vld [vmem:[%s1 + $0x8a0] sm:$0xff]
    %v484 = vld [vmem:[%s1 + $0x8a8] sm:$0xff]
    %v485 = vld [vmem:[%s1 + $0x8b0] sm:$0xff]
    %v486 = vld [vmem:[%s1 + $0x8b8] sm:$0xff]
    %v487 = vld [vmem:[%s1 + $0x8c0] sm:$0xff]
    %v488 = vld [vmem:[%s1 + $0x8c8] sm:$0xff]
    %v489 = vld [vmem:[%s1 + $0x8d0] sm:$0xff]
    %v490 = vld [vmem:[%s1 + $0x8d8] sm:$0xff]
    %v491 = vld [vmem:[%s1 + $0x8e0] sm:$0xff]
    %v492 = vld [vmem:[%s1 + $0x8e8] sm:$0xff]
    %v493 = vld [vmem:[%s1 + $0x8f0] sm:$0xff]
    %v494 = vld [vmem:[%s1 + $0x8f8] sm:$0xff]
    %v495 = vld [vmem:[%s1 + $0x900] sm:$0xff]
    %v496 = vld [vmem:[%s1 + $0x908] sm:$0xff]
    %v497 = vld [vmem:[%s1 + $0x910] sm:$0xff]
    %v498 = vld [vmem:[%s1 + $0x918] sm:$0xff]
    %v499 = vld [vmem:[%s1 + $0x920] sm:$0xff]
    %v500 = vld [vmem:[%s1 + $0x928] sm:$0xff]
    %v501 = vld [vmem:[%s1 + $0x930] sm:$0xff]
    %v502 = vld [vmem:[%s1 + $0x938] sm:$0xff]
    %v503 = vld [vmem:[%s1 + $0x940] sm:$0xff]
    %v504 = vld [vmem:[%s1 + $0x948] sm:$0xff]
    %v505 = vld [vmem:[%s1 + $0x950] sm:$0xff]
    %v506 = vld [vmem:[%s1 + $0x958] sm:$0xff]
    %v507 = vld [vmem:[%s1 + $0x960] sm:$0xff]
    %v508 = vld [vmem:[%s1 + $0x968] sm:$0xff]
    %v509 = vld [vmem:[%s1 + $0x970] sm:$0xff]
    %v510 = vld [vmem:[%s1 + $0x978] sm:$0xff]
    %v511 = vld [vmem:[%s1 + $0x980] sm:$0xff]
    %v512 = vld [vmem:[%s1 + $0x988] sm:$0xff]
    %v513 = vld [vmem:[%s1 + $0x990] sm:$0xff]
    %v514 = vld [vmem:[%s1 + $0x998] sm:$0xff]
    %v515 = vld [vmem:[%s1 + $0x9a0] sm:$0xff]
    %v516 = vld [vmem:[%s1 + $0x9a8] sm:$0xff]
    %v517 = vld [vmem:[%s1 + $0x9b0] sm:$0xff]
    %v518 = vld [vmem:[%s1 + $0x9b8] sm:$0xff]
    %v519 = vld [vmem:[%s1 + $0x9c0] sm:$0xff]
    %v520 = vld [vmem:[%s1 + $0x9c8] sm:$0xff]
    %v521 = vld [vmem:[%s1 + $0x9d0] sm:$0xff]
    %v522 = vld [vmem:[%s1 + $0x9d8] sm:$0xff]
    %v523 = vld [vmem:[%s1 + $0x9e0] sm:$0xff]
    %v524 = vld [vmem:[%s1 + $0x9e8] sm:$0xff]
    %v525 = vld [vmem:[%s1 + $0x9f0] sm:$0xff]
    %v526 = vld [vmem:[%s1 + $0x9f8] sm:$0xff]
    %v527 = vld [vmem:[%s1 + $0xa00] sm:$0xff]
    %v528 = vld [vmem:[%s1 + $0xa08] sm:$0xff]
    %v529 = vld [vmem:[%s1 + $0xa10] sm:$0xff]
    %v530 = vld [vmem:[%s1 + $0xa18] sm:$0xff]
    %v531 = vld [vmem:[%s1 + $0xa20] sm:$0xff]
    %v532 = vld [vmem:[%s1 + $0xa28] sm:$0xff]
    %v533 = vld [vmem:[%s1 + $0xa30] sm:$0xff]
    %v534 = vld [vmem:[%s1 + $0xa38] sm:$0xff]
    %v535 = vld [vmem:[%s1 + $0xa40] sm:$0xff]
    %v536 = vld [vmem:[%s1 + $0xa48] sm:$0xff]
    %v537 = vld [vmem:[%s1 + $0xa50] sm:$0xff]
    %v538 = vld [vmem:[%s1 + $0xa58] sm:$0xff]
    %v539 = vld [vmem:[%s1 + $0xa60] sm:$0xff]
    %v540 = vld [vmem:[%s1 + $0xa68] sm:$0xff]
    %v541 = vld [vmem:[%s1 + $0xa70] sm:$0xff]
    %v542 = vld [vmem:[%s1 + $0xa78] sm:$0xff]
    %v543 = vld [vmem:[%s1 + $0xa80] sm:$0xff]
    %v544 = vld [vmem:[%s1 + $0xa88] sm:$0xff]
    %v545 = vld [vmem:[%s1 + $0xa90] sm:$0xff]
    %v546 = vld [vmem:[%s1 + $0xa98] sm:$0xff]
    %v547 = vld [vmem:[%s1 + $0xaa0] sm:$0xff]
    %v548 = vld [vmem:[%s1 + $0xaa8] sm:$0xff]
    %v549 = vld [vmem:[%s1 + $0xab0] sm:$0xff]
    %v550 = vld [vmem:[%s1 + $0xab8] sm:$0xff]
    %v551 = vld [vmem:[%s1 + $0xac0] sm:$0xff]
    %v552 = vld [vmem:[%s1 + $0xac8] sm:$0xff]
    %v553 = vld [vmem:[%s1 + $0xad0] sm:$0xff]
    %v554 = vld [vmem:[%s1 + $0xad8] sm:$0xff]
    %v555 = vld [vmem:[%s1 + $0xae0] sm:$0xff]
    %v556 = vld [vmem:[%s1 + $0xae8] sm:$0xff]
    %v557 = vld [vmem:[%s1 + $0xaf0] sm:$0xff]
    %v558 = vld [vmem:[%s1 + $0xaf8] sm:$0xff]
    %v559 = vld [vmem:[%s1 + $0xb00] sm:$0xff]
    %v560 = vld [vmem:[%s1 + $0xb08] sm:$0xff]
    %v561 = vld [vmem:[%s1 + $0xb10] sm:$0xff]
    %v562 = vld [vmem:[%s1 + $0xb18] sm:$0xff]
    %v563 = vld [vmem:[%s1 + $0xb20] sm:$0xff]
    %v564 = vld [vmem:[%s1 + $0xb28] sm:$0xff]
    %v565 = vld [vmem:[%s1 + $0xb30] sm:$0xff]
    %v566 = vld [vmem:[%s1 + $0xb38] sm:$0xff]
    %v567 = vld [vmem:[%s1 + $0xb40] sm:$0xff]
    %v568 = vld [vmem:[%s1 + $0xb48] sm:$0xff]
    %v569 = vld [vmem:[%s1 + $0xb50] sm:$0xff]
    %v570 = vld [vmem:[%s1 + $0xb58] sm:$0xff]
    %v571 = vld [vmem:[%s1 + $0xb60] sm:$0xff]
    %v572 = vld [vmem:[%s1 + $0xb68] sm:$0xff]
    %v573 = vld [vmem:[%s1 + $0xb70] sm:$0xff]
    %v574 = vld [vmem:[%s1 + $0xb78] sm:$0xff]
    %v575 = vld [vmem:[%s1 + $0xb80] sm:$0xff]
    %v576 = vld [vmem:[%s1 + $0xb88] sm:$0xff]
    %v577 = vld [vmem:[%s1 + $0xb90] sm:$0xff]
    %v578 = vld [vmem:[%s1 + $0xb98] sm:$0xff]
    %v579 = vld [vmem:[%s1 + $0xba0] sm:$0xff]
    %v580 = vld [vmem:[%s1 + $0xba8] sm:$0xff]
    %v581 = vld [vmem:[%s1 + $0xbb0] sm:$0xff]
    %v582 = vld [vmem:[%s1 + $0xbb8] sm:$0xff]
    %v583 = vld [vmem:[%s1 + $0xbc0] sm:$0xff]
    %v584 = vld [vmem:[%s1 + $0xbc8] sm:$0xff]
    %v585 = vld [vmem:[%s1 + $0xbd0] sm:$0xff]
    %v586 = vld [vmem:[%s1 + $0xbd8] sm:$0xff]
    %v587 = vld [vmem:[%s1 + $0xbe0] sm:$0xff]
    %v588 = vld [vmem:[%s1 + $0xbe8] sm:$0xff]
    %v589 = vld [vmem:[%s1 + $0xbf0] sm:$0xff]
    %v590 = vld [vmem:[%s1 + $0xbf8] sm:$0xff]
    %v591 = vld [vmem:[%s1 + $0xc00] sm:$0xff]
    %v592 = vld [vmem:[%s1 + $0xc08] sm:$0xff]
    %v593 = vld [vmem:[%s1 + $0xc10] sm:$0xff]
    %v594 = vld [vmem:[%s1 + $0xc18] sm:$0xff]
    %v595 = vld [vmem:[%s1 + $0xc20] sm:$0xff]
    %v596 = vld [vmem:[%s1 + $0xc28] sm:$0xff]
    %v597 = vld [vmem:[%s1 + $0xc30] sm:$0xff]
    %v598 = vld [vmem:[%s1 + $0xc38] sm:$0xff]
    %v599 = vld [vmem:[%s1 + $0xc40] sm:$0xff]
    %v600 = vld [vmem:[%s1 + $0xc48] sm:$0xff]
    %v601 = vld [vmem:[%s1 + $0xc50] sm:$0xff]
    %v602 = vld [vmem:[%s1 + $0xc58] sm:$0xff]
    %v603 = vld [vmem:[%s1 + $0xc60] sm:$0xff]
    %v604 = vld [vmem:[%s1 + $0xc68] sm:$0xff]
    %v605 = vld [vmem:[%s1 + $0xc70] sm:$0xff]
    %v606 = vld [vmem:[%s1 + $0xc78] sm:$0xff]
    %v607 = vld [vmem:[%s1 + $0xc80] sm:$0xff]
    %v608 = vld [vmem:[%s1 + $0xc88] sm:$0xff]
    %v609 = vld [vmem:[%s1 + $0xc90] sm:$0xff]
    %v610 = vld [vmem:[%s1 + $0xc98] sm:$0xff]
    %v611 = vld [vmem:[%s1 + $0xca0] sm:$0xff]
    %v612 = vld [vmem:[%s1 + $0xca8] sm:$0xff]
    %v613 = vld [vmem:[%s1 + $0xcb0] sm:$0xff]
    %v614 = vld [vmem:[%s1 + $0xcb8] sm:$0xff]
    %v615 = vld [vmem:[%s1 + $0xcc0] sm:$0xff]
    %v616 = vld [vmem:[%s1 + $0xcc8] sm:$0xff]
    %v617 = vld [vmem:[%s1 + $0xcd0] sm:$0xff]
    %v618 = vld [vmem:[%s1 + $0xcd8] sm:$0xff]
    %v619 = vld [vmem:[%s1 + $0xce0] sm:$0xff]
    %v620 = vld [vmem:[%s1 + $0xce8] sm:$0xff]
    %v621 = vld [vmem:[%s1 + $0xcf0] sm:$0xff]
    %v622 = vld [vmem:[%s1 + $0xcf8] sm:$0xff]
    %v623 = vld [vmem:[%s1 + $0xd00] sm:$0xff]
    %v624 = vld [vmem:[%s1 + $0xd08] sm:$0xff]
    %v625 = vld [vmem:[%s1 + $0xd10] sm:$0xff]
    %v626 = vld [vmem:[%s1 + $0xd18] sm:$0xff]
    %v627 = vld [vmem:[%s1 + $0xd20] sm:$0xff]
    %v628 = vld [vmem:[%s1 + $0xd28] sm:$0xff]
    %v629 = vld [vmem:[%s1 + $0xd30] sm:$0xff]
    %v630 = vld [vmem:[%s1 + $0xd38] sm:$0xff]
    %v631 = vld [vmem:[%s1 + $0xd40] sm:$0xff]
    %v632 = vld [vmem:[%s1 + $0xd48] sm:$0xff]
    %v633 = vld [vmem:[%s1 + $0xd50] sm:$0xff]
    %v634 = vld [vmem:[%s1 + $0xd58] sm:$0xff]
    %v635 = vld [vmem:[%s1 + $0xd60] sm:$0xff]
    %v636 = vld [vmem:[%s1 + $0xd68] sm:$0xff]
    %v637 = vld [vmem:[%s1 + $0xd70] sm:$0xff]
    %v638 = vld [vmem:[%s1 + $0xd78] sm:$0xff]
    %v639 = vld [vmem:[%s1 + $0xd80] sm:$0xff]
    %v640 = vld [vmem:[%s1 + $0xd88] sm:$0xff]
    %v641 = vld [vmem:[%s1 + $0xd90] sm:$0xff]
    %v642 = vld [vmem:[%s1 + $0xd98] sm:$0xff]
    %v643 = vld [vmem:[%s1 + $0xda0] sm:$0xff]
    %v644 = vld [vmem:[%s1 + $0xda8] sm:$0xff]
    %v645 = vld [vmem:[%s1 + $0xdb0] sm:$0xff]
    %v646 = vld [vmem:[%s1 + $0xdb8] sm:$0xff]
    %v647 = vld [vmem:[%s1 + $0xdc0] sm:$0xff]
    %v648 = vld [vmem:[%s1 + $0xdc8] sm:$0xff]
    %v649 = vld [vmem:[%s1 + $0xdd0] sm:$0xff]
    %v650 = vld [vmem:[%s1 + $0xdd8] sm:$0xff]
    %v651 = vld [vmem:[%s1 + $0xde0] sm:$0xff]
    %v652 = vld [vmem:[%s1 + $0xde8] sm:$0xff]
    %v653 = vld [vmem:[%s1 + $0xdf0] sm:$0xff]
    %v654 = vld [vmem:[%s1 + $0xdf8] sm:$0xff]
    %v655 = vld [vmem:[%s1 + $0xe00] sm:$0xff]
    %v656 = vld [vmem:[%s1 + $0xe08] sm:$0xff]
    %v657 = vld [vmem:[%s1 + $0xe10] sm:$0xff]
    %v658 = vld [vmem:[%s1 + $0xe18] sm:$0xff]
    %v659 = vld [vmem:[%s1 + $0xe20] sm:$0xff]
    %v660 = vld [vmem:[%s1 + $0xe28] sm:$0xff]
    %v661 = vld [vmem:[%s1 + $0xe30] sm:$0xff]
    %v662 = vld [vmem:[%s1 + $0xe38] sm:$0xff]
    %v663 = vld [vmem:[%s1 + $0xe40] sm:$0xff]
    %v664 = vld [vmem:[%s1 + $0xe48] sm:$0xff]
    %v665 = vld [vmem:[%s1 + $0xe50] sm:$0xff]
    %v666 = vld [vmem:[%s1 + $0xe58] sm:$0xff]
    %v667 = vld [vmem:[%s1 + $0xe60] sm:$0xff]
    %v668 = vld [vmem:[%s1 + $0xe68] sm:$0xff]
    %v669 = vld [vmem:[%s1 + $0xe70] sm:$0xff]
    %v670 = vld [vmem:[%s1 + $0xe78] sm:$0xff]
    %v671 = vld [vmem:[%s1 + $0xe80] sm:$0xff]
    %v672 = vld [vmem:[%s1 + $0xe88] sm:$0xff]
    %v673 = vld [vmem:[%s1 + $0xe90] sm:$0xff]
    %v674 = vld [vmem:[%s1 + $0xe98] sm:$0xff]
    %v675 = vld [vmem:[%s1 + $0xea0] sm:$0xff]
    %v676 = vld [vmem:[%s1 + $0xea8] sm:$0xff]
    %v677 = vld [vmem:[%s1 + $0xeb0] sm:$0xff]
    %v678 = vld [vmem:[%s1 + $0xeb8] sm:$0xff]
    %v679 = vld [vmem:[%s1 + $0xec0] sm:$0xff]
    %v680 = vld [vmem:[%s1 + $0xec8] sm:$0xff]
    %v681 = vld [vmem:[%s1 + $0xed0] sm:$0xff]
    %v682 = vld [vmem:[%s1 + $0xed8] sm:$0xff]
    %v683 = vld [vmem:[%s1 + $0xee0] sm:$0xff]
    %v684 = vld [vmem:[%s1 + $0xee8] sm:$0xff]
    %v685 = vld [vmem:[%s1 + $0xef0] sm:$0xff]
    %v686 = vld [vmem:[%s1 + $0xef8] sm:$0xff]
    %v687 = vld [vmem:[%s1 + $0xf00] sm:$0xff]
    %v688 = vld [vmem:[%s1 + $0xf08] sm:$0xff]
    %v689 = vld [vmem:[%s1 + $0xf10] sm:$0xff]
    %v690 = vld [vmem:[%s1 + $0xf18] sm:$0xff]
    %v691 = vld [vmem:[%s1 + $0xf20] sm:$0xff]
    %v692 = vld [vmem:[%s1 + $0xf28] sm:$0xff]
    %v693 = vld [vmem:[%s1 + $0xf30] sm:$0xff]
    %v694 = vld [vmem:[%s1 + $0xf38] sm:$0xff]
    %v695 = vld [vmem:[%s1 + $0xf40] sm:$0xff]
    %v696 = vld [vmem:[%s1 + $0xf48] sm:$0xff]
    %v697 = vld [vmem:[%s1 + $0xf50] sm:$0xff]
    %v698 = vld [vmem:[%s1 + $0xf58] sm:$0xff]
    %v699 = vld [vmem:[%s1 + $0xf60] sm:$0xff]
    %v700 = vld [vmem:[%s1 + $0xf68] sm:$0xff]
    %v701 = vld [vmem:[%s1 + $0xf70] sm:$0xff]
    %v702 = vld [vmem:[%s1 + $0xf78] sm:$0xff]
    %v703 = vld [vmem:[%s1 + $0xf80] sm:$0xff]
    %v704 = vld [vmem:[%s1 + $0xf88] sm:$0xff]
    %v705 = vld [vmem:[%s1 + $0xf90] sm:$0xff]
    %v706 = vld [vmem:[%s1 + $0xf98] sm:$0xff]
    %v707 = vld [vmem:[%s1 + $0xfa0] sm:$0xff]
    %v708 = vld [vmem:[%s1 + $0xfa8] sm:$0xff]
    %v709 = vld [vmem:[%s1 + $0xfb0] sm:$0xff]
    %v710 = vld [vmem:[%s1 + $0xfb8] sm:$0xff]
    %v711 = vld [vmem:[%s1 + $0xfc0] sm:$0xff]
    %v712 = vld [vmem:[%s1 + $0xfc8] sm:$0xff]
    %v713 = vld [vmem:[%s1 + $0xfd0] sm:$0xff]
    %v714 = vld [vmem:[%s1 + $0xfd8] sm:$0xff]
    %v715 = vld [vmem:[%s1 + $0xfe0] sm:$0xff]
    %v716 = vld [vmem:[%s1 + $0xfe8] sm:$0xff]
    %v717 = vld [vmem:[%s1 + $0xff0] sm:$0xff]
    %v718 = vld [vmem:[%s1 + $0xff8] sm:$0xff]
    %v1231 = vunpack.c.l.b16 %v207
    %v1232 = vunpack.c.h.b16 %v207
    %v1233 = vunpack.c.l.b16 %v208
    %v1234 = vunpack.c.h.b16 %v208
    %v1235 = vunpack.c.l.b16 %v209
    %v1236 = vunpack.c.h.b16 %v209
    %v1237 = vunpack.c.l.b16 %v210
    %v1238 = vunpack.c.h.b16 %v210
    %v1239 = vunpack.c.l.b16 %v211
    %v1240 = vunpack.c.h.b16 %v211
    %v1241 = vunpack.c.l.b16 %v212
    %v1242 = vunpack.c.h.b16 %v212
    %v1243 = vunpack.c.l.b16 %v213
    %v1244 = vunpack.c.h.b16 %v213
    %v1245 = vunpack.c.l.b16 %v214
    %v1246 = vunpack.c.h.b16 %v214
    %v1247 = vunpack.c.l.b16 %v215
    %v1248 = vunpack.c.h.b16 %v215
    %v1249 = vunpack.c.l.b16 %v216
    %v1250 = vunpack.c.h.b16 %v216
    %v1251 = vunpack.c.l.b16 %v217
    %v1252 = vunpack.c.h.b16 %v217
    %v1253 = vunpack.c.l.b16 %v218
    %v1254 = vunpack.c.h.b16 %v218
    %v1255 = vunpack.c.l.b16 %v219
    %v1256 = vunpack.c.h.b16 %v219
    %v1257 = vunpack.c.l.b16 %v220
    %v1258 = vunpack.c.h.b16 %v220
    %v1259 = vunpack.c.l.b16 %v221
    %v1260 = vunpack.c.h.b16 %v221
    %v1261 = vunpack.c.l.b16 %v222
    %v1262 = vunpack.c.h.b16 %v222
    %v1263 = vunpack.c.l.b16 %v223
    %v1264 = vunpack.c.h.b16 %v223
    %v1265 = vunpack.c.l.b16 %v224
    %v1266 = vunpack.c.h.b16 %v224
    %v1267 = vunpack.c.l.b16 %v225
    %v1268 = vunpack.c.h.b16 %v225
    %v1269 = vunpack.c.l.b16 %v226
    %v1270 = vunpack.c.h.b16 %v226
    %v1271 = vunpack.c.l.b16 %v227
    %v1272 = vunpack.c.h.b16 %v227
    %v1273 = vunpack.c.l.b16 %v228
    %v1274 = vunpack.c.h.b16 %v228
    %v1275 = vunpack.c.l.b16 %v229
    %v1276 = vunpack.c.h.b16 %v229
    %v1277 = vunpack.c.l.b16 %v230
    %v1278 = vunpack.c.h.b16 %v230
    %v1279 = vunpack.c.l.b16 %v231
    %v1280 = vunpack.c.h.b16 %v231
    %v1281 = vunpack.c.l.b16 %v232
    %v1282 = vunpack.c.h.b16 %v232
    %v1283 = vunpack.c.l.b16 %v233
    %v1284 = vunpack.c.h.b16 %v233
    %v1285 = vunpack.c.l.b16 %v234
    %v1286 = vunpack.c.h.b16 %v234
    %v1287 = vunpack.c.l.b16 %v235
    %v1288 = vunpack.c.h.b16 %v235
    %v1289 = vunpack.c.l.b16 %v236
    %v1290 = vunpack.c.h.b16 %v236
    %v1291 = vunpack.c.l.b16 %v237
    %v1292 = vunpack.c.h.b16 %v237
    %v1293 = vunpack.c.l.b16 %v238
    %v1294 = vunpack.c.h.b16 %v238
    %v1295 = vunpack.c.l.b16 %v239
    %v1296 = vunpack.c.h.b16 %v239
    %v1297 = vunpack.c.l.b16 %v240
    %v1298 = vunpack.c.h.b16 %v240
    %v1299 = vunpack.c.l.b16 %v241
    %v1300 = vunpack.c.h.b16 %v241
    %v1301 = vunpack.c.l.b16 %v242
    %v1302 = vunpack.c.h.b16 %v242
    %v1303 = vunpack.c.l.b16 %v243
    %v1304 = vunpack.c.h.b16 %v243
    %v1305 = vunpack.c.l.b16 %v244
    %v1306 = vunpack.c.h.b16 %v244
    %v1307 = vunpack.c.l.b16 %v245
    %v1308 = vunpack.c.h.b16 %v245
    %v1309 = vunpack.c.l.b16 %v246
    %v1310 = vunpack.c.h.b16 %v246
    %v1311 = vunpack.c.l.b16 %v247
    %v1312 = vunpack.c.h.b16 %v247
    %v1313 = vunpack.c.l.b16 %v248
    %v1314 = vunpack.c.h.b16 %v248
    %v1315 = vunpack.c.l.b16 %v249
    %v1316 = vunpack.c.h.b16 %v249
    %v1317 = vunpack.c.l.b16 %v250
    %v1318 = vunpack.c.h.b16 %v250
    %v1319 = vunpack.c.l.b16 %v251
    %v1320 = vunpack.c.h.b16 %v251
    %v1321 = vunpack.c.l.b16 %v252
    %v1322 = vunpack.c.h.b16 %v252
    %v1323 = vunpack.c.l.b16 %v253
    %v1324 = vunpack.c.h.b16 %v253
    %v1325 = vunpack.c.l.b16 %v254
    %v1326 = vunpack.c.h.b16 %v254
    %v1327 = vunpack.c.l.b16 %v255
    %v1328 = vunpack.c.h.b16 %v255
    %v1329 = vunpack.c.l.b16 %v256
    %v1330 = vunpack.c.h.b16 %v256
    %v1331 = vunpack.c.l.b16 %v257
    %v1332 = vunpack.c.h.b16 %v257
    %v1333 = vunpack.c.l.b16 %v258
    %v1334 = vunpack.c.h.b16 %v258
    %v1335 = vunpack.c.l.b16 %v259
    %v1336 = vunpack.c.h.b16 %v259
    %v1337 = vunpack.c.l.b16 %v260
    %v1338 = vunpack.c.h.b16 %v260
    %v1339 = vunpack.c.l.b16 %v261
    %v1340 = vunpack.c.h.b16 %v261
    %v1341 = vunpack.c.l.b16 %v262
    %v1342 = vunpack.c.h.b16 %v262
    %v1343 = vunpack.c.l.b16 %v263
    %v1344 = vunpack.c.h.b16 %v263
    %v1345 = vunpack.c.l.b16 %v264
    %v1346 = vunpack.c.h.b16 %v264
    %v1347 = vunpack.c.l.b16 %v265
    %v1348 = vunpack.c.h.b16 %v265
    %v1349 = vunpack.c.l.b16 %v266
    %v1350 = vunpack.c.h.b16 %v266
    %v1351 = vunpack.c.l.b16 %v267
    %v1352 = vunpack.c.h.b16 %v267
    %v1353 = vunpack.c.l.b16 %v268
    %v1354 = vunpack.c.h.b16 %v268
    %v1355 = vunpack.c.l.b16 %v269
    %v1356 = vunpack.c.h.b16 %v269
    %v1357 = vunpack.c.l.b16 %v270
    %v1358 = vunpack.c.h.b16 %v270
    %v1359 = vunpack.c.l.b16 %v271
    %v1360 = vunpack.c.h.b16 %v271
    %v1361 = vunpack.c.l.b16 %v272
    %v1362 = vunpack.c.h.b16 %v272
    %v1363 = vunpack.c.l.b16 %v273
    %v1364 = vunpack.c.h.b16 %v273
    %v1365 = vunpack.c.l.b16 %v274
    %v1366 = vunpack.c.h.b16 %v274
    %v1367 = vunpack.c.l.b16 %v275
    %v1368 = vunpack.c.h.b16 %v275
    %v1369 = vunpack.c.l.b16 %v276
    %v1370 = vunpack.c.h.b16 %v276
    %v1371 = vunpack.c.l.b16 %v277
    %v1372 = vunpack.c.h.b16 %v277
    %v1373 = vunpack.c.l.b16 %v278
    %v1374 = vunpack.c.h.b16 %v278
    %v1375 = vunpack.c.l.b16 %v279
    %v1376 = vunpack.c.h.b16 %v279
    %v1377 = vunpack.c.l.b16 %v280
    %v1378 = vunpack.c.h.b16 %v280
    %v1379 = vunpack.c.l.b16 %v281
    %v1380 = vunpack.c.h.b16 %v281
    %v1381 = vunpack.c.l.b16 %v282
    %v1382 = vunpack.c.h.b16 %v282
    %v1383 = vunpack.c.l.b16 %v283
    %v1384 = vunpack.c.h.b16 %v283
    %v1385 = vunpack.c.l.b16 %v284
    %v1386 = vunpack.c.h.b16 %v284
    %v1387 = vunpack.c.l.b16 %v285
    %v1388 = vunpack.c.h.b16 %v285
    %v1389 = vunpack.c.l.b16 %v286
    %v1390 = vunpack.c.h.b16 %v286
    %v1391 = vunpack.c.l.b16 %v287
    %v1392 = vunpack.c.h.b16 %v287
    %v1393 = vunpack.c.l.b16 %v288
    %v1394 = vunpack.c.h.b16 %v288
    %v1395 = vunpack.c.l.b16 %v289
    %v1396 = vunpack.c.h.b16 %v289
    %v1397 = vunpack.c.l.b16 %v290
    %v1398 = vunpack.c.h.b16 %v290
    %v1399 = vunpack.c.l.b16 %v291
    %v1400 = vunpack.c.h.b16 %v291
    %v1401 = vunpack.c.l.b16 %v292
    %v1402 = vunpack.c.h.b16 %v292
    %v1403 = vunpack.c.l.b16 %v293
    %v1404 = vunpack.c.h.b16 %v293
    %v1405 = vunpack.c.l.b16 %v294
    %v1406 = vunpack.c.h.b16 %v294
    %v1407 = vunpack.c.l.b16 %v295
    %v1408 = vunpack.c.h.b16 %v295
    %v1409 = vunpack.c.l.b16 %v296
    %v1410 = vunpack.c.h.b16 %v296
    %v1411 = vunpack.c.l.b16 %v297
    %v1412 = vunpack.c.h.b16 %v297
    %v1413 = vunpack.c.l.b16 %v298
    %v1414 = vunpack.c.h.b16 %v298
    %v1415 = vunpack.c.l.b16 %v299
    %v1416 = vunpack.c.h.b16 %v299
    %v1417 = vunpack.c.l.b16 %v300
    %v1418 = vunpack.c.h.b16 %v300
    %v1419 = vunpack.c.l.b16 %v301
    %v1420 = vunpack.c.h.b16 %v301
    %v1421 = vunpack.c.l.b16 %v302
    %v1422 = vunpack.c.h.b16 %v302
    %v1423 = vunpack.c.l.b16 %v303
    %v1424 = vunpack.c.h.b16 %v303
    %v1425 = vunpack.c.l.b16 %v304
    %v1426 = vunpack.c.h.b16 %v304
    %v1427 = vunpack.c.l.b16 %v305
    %v1428 = vunpack.c.h.b16 %v305
    %v1429 = vunpack.c.l.b16 %v306
    %v1430 = vunpack.c.h.b16 %v306
    %v1431 = vunpack.c.l.b16 %v307
    %v1432 = vunpack.c.h.b16 %v307
    %v1433 = vunpack.c.l.b16 %v308
    %v1434 = vunpack.c.h.b16 %v308
    %v1435 = vunpack.c.l.b16 %v309
    %v1436 = vunpack.c.h.b16 %v309
    %v1437 = vunpack.c.l.b16 %v310
    %v1438 = vunpack.c.h.b16 %v310
    %v1439 = vunpack.c.l.b16 %v311
    %v1440 = vunpack.c.h.b16 %v311
    %v1441 = vunpack.c.l.b16 %v312
    %v1442 = vunpack.c.h.b16 %v312
    %v1443 = vunpack.c.l.b16 %v313
    %v1444 = vunpack.c.h.b16 %v313
    %v1445 = vunpack.c.l.b16 %v314
    %v1446 = vunpack.c.h.b16 %v314
    %v1447 = vunpack.c.l.b16 %v315
    %v1448 = vunpack.c.h.b16 %v315
    %v1449 = vunpack.c.l.b16 %v316
    %v1450 = vunpack.c.h.b16 %v316
    %v1451 = vunpack.c.l.b16 %v317
    %v1452 = vunpack.c.h.b16 %v317
    %v1453 = vunpack.c.l.b16 %v318
    %v1454 = vunpack.c.h.b16 %v318
    %v1455 = vunpack.c.l.b16 %v319
    %v1456 = vunpack.c.h.b16 %v319
    %v1457 = vunpack.c.l.b16 %v320
    %v1458 = vunpack.c.h.b16 %v320
    %v1459 = vunpack.c.l.b16 %v321
    %v1460 = vunpack.c.h.b16 %v321
    %v1461 = vunpack.c.l.b16 %v322
    %v1462 = vunpack.c.h.b16 %v322
    %v1463 = vunpack.c.l.b16 %v323
    %v1464 = vunpack.c.h.b16 %v323
    %v1465 = vunpack.c.l.b16 %v324
    %v1466 = vunpack.c.h.b16 %v324
    %v1467 = vunpack.c.l.b16 %v325
    %v1468 = vunpack.c.h.b16 %v325
    %v1469 = vunpack.c.l.b16 %v326
    %v1470 = vunpack.c.h.b16 %v326
    %v1471 = vunpack.c.l.b16 %v327
    %v1472 = vunpack.c.h.b16 %v327
    %v1473 = vunpack.c.l.b16 %v328
    %v1474 = vunpack.c.h.b16 %v328
    %v1475 = vunpack.c.l.b16 %v329
    %v1476 = vunpack.c.h.b16 %v329
    %v1477 = vunpack.c.l.b16 %v330
    %v1478 = vunpack.c.h.b16 %v330
    %v1479 = vunpack.c.l.b16 %v331
    %v1480 = vunpack.c.h.b16 %v331
    %v1481 = vunpack.c.l.b16 %v332
    %v1482 = vunpack.c.h.b16 %v332
    %v1483 = vunpack.c.l.b16 %v333
    %v1484 = vunpack.c.h.b16 %v333
    %v1485 = vunpack.c.l.b16 %v334
    %v1486 = vunpack.c.h.b16 %v334
    %v1487 = vunpack.c.l.b16 %v335
    %v1488 = vunpack.c.h.b16 %v335
    %v1489 = vunpack.c.l.b16 %v336
    %v1490 = vunpack.c.h.b16 %v336
    %v1491 = vunpack.c.l.b16 %v337
    %v1492 = vunpack.c.h.b16 %v337
    %v1493 = vunpack.c.l.b16 %v338
    %v1494 = vunpack.c.h.b16 %v338
    %v1495 = vunpack.c.l.b16 %v339
    %v1496 = vunpack.c.h.b16 %v339
    %v1497 = vunpack.c.l.b16 %v340
    %v1498 = vunpack.c.h.b16 %v340
    %v1499 = vunpack.c.l.b16 %v341
    %v1500 = vunpack.c.h.b16 %v341
    %v1501 = vunpack.c.l.b16 %v342
    %v1502 = vunpack.c.h.b16 %v342
    %v1503 = vunpack.c.l.b16 %v343
    %v1504 = vunpack.c.h.b16 %v343
    %v1505 = vunpack.c.l.b16 %v344
    %v1506 = vunpack.c.h.b16 %v344
    %v1507 = vunpack.c.l.b16 %v345
    %v1508 = vunpack.c.h.b16 %v345
    %v1509 = vunpack.c.l.b16 %v346
    %v1510 = vunpack.c.h.b16 %v346
    %v1511 = vunpack.c.l.b16 %v347
    %v1512 = vunpack.c.h.b16 %v347
    %v1513 = vunpack.c.l.b16 %v348
    %v1514 = vunpack.c.h.b16 %v348
    %v1515 = vunpack.c.l.b16 %v349
    %v1516 = vunpack.c.h.b16 %v349
    %v1517 = vunpack.c.l.b16 %v350
    %v1518 = vunpack.c.h.b16 %v350
    %v1519 = vunpack.c.l.b16 %v351
    %v1520 = vunpack.c.h.b16 %v351
    %v1521 = vunpack.c.l.b16 %v352
    %v1522 = vunpack.c.h.b16 %v352
    %v1523 = vunpack.c.l.b16 %v353
    %v1524 = vunpack.c.h.b16 %v353
    %v1525 = vunpack.c.l.b16 %v354
    %v1526 = vunpack.c.h.b16 %v354
    %v1527 = vunpack.c.l.b16 %v355
    %v1528 = vunpack.c.h.b16 %v355
    %v1529 = vunpack.c.l.b16 %v356
    %v1530 = vunpack.c.h.b16 %v356
    %v1531 = vunpack.c.l.b16 %v357
    %v1532 = vunpack.c.h.b16 %v357
    %v1533 = vunpack.c.l.b16 %v358
    %v1534 = vunpack.c.h.b16 %v358
    %v1535 = vunpack.c.l.b16 %v359
    %v1536 = vunpack.c.h.b16 %v359
    %v1537 = vunpack.c.l.b16 %v360
    %v1538 = vunpack.c.h.b16 %v360
    %v1539 = vunpack.c.l.b16 %v361
    %v1540 = vunpack.c.h.b16 %v361
    %v1541 = vunpack.c.l.b16 %v362
    %v1542 = vunpack.c.h.b16 %v362
    %v1543 = vunpack.c.l.b16 %v363
    %v1544 = vunpack.c.h.b16 %v363
    %v1545 = vunpack.c.l.b16 %v364
    %v1546 = vunpack.c.h.b16 %v364
    %v1547 = vunpack.c.l.b16 %v365
    %v1548 = vunpack.c.h.b16 %v365
    %v1549 = vunpack.c.l.b16 %v366
    %v1550 = vunpack.c.h.b16 %v366
    %v1551 = vunpack.c.l.b16 %v367
    %v1552 = vunpack.c.h.b16 %v367
    %v1553 = vunpack.c.l.b16 %v368
    %v1554 = vunpack.c.h.b16 %v368
    %v1555 = vunpack.c.l.b16 %v369
    %v1556 = vunpack.c.h.b16 %v369
    %v1557 = vunpack.c.l.b16 %v370
    %v1558 = vunpack.c.h.b16 %v370
    %v1559 = vunpack.c.l.b16 %v371
    %v1560 = vunpack.c.h.b16 %v371
    %v1561 = vunpack.c.l.b16 %v372
    %v1562 = vunpack.c.h.b16 %v372
    %v1563 = vunpack.c.l.b16 %v373
    %v1564 = vunpack.c.h.b16 %v373
    %v1565 = vunpack.c.l.b16 %v374
    %v1566 = vunpack.c.h.b16 %v374
    %v1567 = vunpack.c.l.b16 %v375
    %v1568 = vunpack.c.h.b16 %v375
    %v1569 = vunpack.c.l.b16 %v376
    %v1570 = vunpack.c.h.b16 %v376
    %v1571 = vunpack.c.l.b16 %v377
    %v1572 = vunpack.c.h.b16 %v377
    %v1573 = vunpack.c.l.b16 %v378
    %v1574 = vunpack.c.h.b16 %v378
    %v1575 = vunpack.c.l.b16 %v379
    %v1576 = vunpack.c.h.b16 %v379
    %v1577 = vunpack.c.l.b16 %v380
    %v1578 = vunpack.c.h.b16 %v380
    %v1579 = vunpack.c.l.b16 %v381
    %v1580 = vunpack.c.h.b16 %v381
    %v1581 = vunpack.c.l.b16 %v382
    %v1582 = vunpack.c.h.b16 %v382
    %v1583 = vunpack.c.l.b16 %v383
    %v1584 = vunpack.c.h.b16 %v383
    %v1585 = vunpack.c.l.b16 %v384
    %v1586 = vunpack.c.h.b16 %v384
    %v1587 = vunpack.c.l.b16 %v385
    %v1588 = vunpack.c.h.b16 %v385
    %v1589 = vunpack.c.l.b16 %v386
    %v1590 = vunpack.c.h.b16 %v386
    %v1591 = vunpack.c.l.b16 %v387
    %v1592 = vunpack.c.h.b16 %v387
    %v1593 = vunpack.c.l.b16 %v388
    %v1594 = vunpack.c.h.b16 %v388
    %v1595 = vunpack.c.l.b16 %v389
    %v1596 = vunpack.c.h.b16 %v389
    %v1597 = vunpack.c.l.b16 %v390
    %v1598 = vunpack.c.h.b16 %v390
    %v1599 = vunpack.c.l.b16 %v391
    %v1600 = vunpack.c.h.b16 %v391
    %v1601 = vunpack.c.l.b16 %v392
    %v1602 = vunpack.c.h.b16 %v392
    %v1603 = vunpack.c.l.b16 %v393
    %v1604 = vunpack.c.h.b16 %v393
    %v1605 = vunpack.c.l.b16 %v394
    %v1606 = vunpack.c.h.b16 %v394
    %v1607 = vunpack.c.l.b16 %v395
    %v1608 = vunpack.c.h.b16 %v395
    %v1609 = vunpack.c.l.b16 %v396
    %v1610 = vunpack.c.h.b16 %v396
    %v1611 = vunpack.c.l.b16 %v397
    %v1612 = vunpack.c.h.b16 %v397
    %v1613 = vunpack.c.l.b16 %v398
    %v1614 = vunpack.c.h.b16 %v398
    %v1615 = vunpack.c.l.b16 %v399
    %v1616 = vunpack.c.h.b16 %v399
    %v1617 = vunpack.c.l.b16 %v400
    %v1618 = vunpack.c.h.b16 %v400
    %v1619 = vunpack.c.l.b16 %v401
    %v1620 = vunpack.c.h.b16 %v401
    %v1621 = vunpack.c.l.b16 %v402
    %v1622 = vunpack.c.h.b16 %v402
    %v1623 = vunpack.c.l.b16 %v403
    %v1624 = vunpack.c.h.b16 %v403
    %v1625 = vunpack.c.l.b16 %v404
    %v1626 = vunpack.c.h.b16 %v404
    %v1627 = vunpack.c.l.b16 %v405
    %v1628 = vunpack.c.h.b16 %v405
    %v1629 = vunpack.c.l.b16 %v406
    %v1630 = vunpack.c.h.b16 %v406
    %v1631 = vunpack.c.l.b16 %v407
    %v1632 = vunpack.c.h.b16 %v407
    %v1633 = vunpack.c.l.b16 %v408
    %v1634 = vunpack.c.h.b16 %v408
    %v1635 = vunpack.c.l.b16 %v409
    %v1636 = vunpack.c.h.b16 %v409
    %v1637 = vunpack.c.l.b16 %v410
    %v1638 = vunpack.c.h.b16 %v410
    %v1639 = vunpack.c.l.b16 %v411
    %v1640 = vunpack.c.h.b16 %v411
    %v1641 = vunpack.c.l.b16 %v412
    %v1642 = vunpack.c.h.b16 %v412
    %v1643 = vunpack.c.l.b16 %v413
    %v1644 = vunpack.c.h.b16 %v413
    %v1645 = vunpack.c.l.b16 %v414
    %v1646 = vunpack.c.h.b16 %v414
    %v1647 = vunpack.c.l.b16 %v415
    %v1648 = vunpack.c.h.b16 %v415
    %v1649 = vunpack.c.l.b16 %v416
    %v1650 = vunpack.c.h.b16 %v416
    %v1651 = vunpack.c.l.b16 %v417
    %v1652 = vunpack.c.h.b16 %v417
    %v1653 = vunpack.c.l.b16 %v418
    %v1654 = vunpack.c.h.b16 %v418
    %v1655 = vunpack.c.l.b16 %v419
    %v1656 = vunpack.c.h.b16 %v419
    %v1657 = vunpack.c.l.b16 %v420
    %v1658 = vunpack.c.h.b16 %v420
    %v1659 = vunpack.c.l.b16 %v421
    %v1660 = vunpack.c.h.b16 %v421
    %v1661 = vunpack.c.l.b16 %v422
    %v1662 = vunpack.c.h.b16 %v422
    %v1663 = vunpack.c.l.b16 %v423
    %v1664 = vunpack.c.h.b16 %v423
    %v1665 = vunpack.c.l.b16 %v424
    %v1666 = vunpack.c.h.b16 %v424
    %v1667 = vunpack.c.l.b16 %v425
    %v1668 = vunpack.c.h.b16 %v425
    %v1669 = vunpack.c.l.b16 %v426
    %v1670 = vunpack.c.h.b16 %v426
    %v1671 = vunpack.c.l.b16 %v427
    %v1672 = vunpack.c.h.b16 %v427
    %v1673 = vunpack.c.l.b16 %v428
    %v1674 = vunpack.c.h.b16 %v428
    %v1675 = vunpack.c.l.b16 %v429
    %v1676 = vunpack.c.h.b16 %v429
    %v1677 = vunpack.c.l.b16 %v430
    %v1678 = vunpack.c.h.b16 %v430
    %v1679 = vunpack.c.l.b16 %v431
    %v1680 = vunpack.c.h.b16 %v431
    %v1681 = vunpack.c.l.b16 %v432
    %v1682 = vunpack.c.h.b16 %v432
    %v1683 = vunpack.c.l.b16 %v433
    %v1684 = vunpack.c.h.b16 %v433
    %v1685 = vunpack.c.l.b16 %v434
    %v1686 = vunpack.c.h.b16 %v434
    %v1687 = vunpack.c.l.b16 %v435
    %v1688 = vunpack.c.h.b16 %v435
    %v1689 = vunpack.c.l.b16 %v436
    %v1690 = vunpack.c.h.b16 %v436
    %v1691 = vunpack.c.l.b16 %v437
    %v1692 = vunpack.c.h.b16 %v437
    %v1693 = vunpack.c.l.b16 %v438
    %v1694 = vunpack.c.h.b16 %v438
    %v1695 = vunpack.c.l.b16 %v439
    %v1696 = vunpack.c.h.b16 %v439
    %v1697 = vunpack.c.l.b16 %v440
    %v1698 = vunpack.c.h.b16 %v440
    %v1699 = vunpack.c.l.b16 %v441
    %v1700 = vunpack.c.h.b16 %v441
    %v1701 = vunpack.c.l.b16 %v442
    %v1702 = vunpack.c.h.b16 %v442
    %v1703 = vunpack.c.l.b16 %v443
    %v1704 = vunpack.c.h.b16 %v443
    %v1705 = vunpack.c.l.b16 %v444
    %v1706 = vunpack.c.h.b16 %v444
    %v1707 = vunpack.c.l.b16 %v445
    %v1708 = vunpack.c.h.b16 %v445
    %v1709 = vunpack.c.l.b16 %v446
    %v1710 = vunpack.c.h.b16 %v446
    %v1711 = vunpack.c.l.b16 %v447
    %v1712 = vunpack.c.h.b16 %v447
    %v1713 = vunpack.c.l.b16 %v448
    %v1714 = vunpack.c.h.b16 %v448
    %v1715 = vunpack.c.l.b16 %v449
    %v1716 = vunpack.c.h.b16 %v449
    %v1717 = vunpack.c.l.b16 %v450
    %v1718 = vunpack.c.h.b16 %v450
    %v1719 = vunpack.c.l.b16 %v451
    %v1720 = vunpack.c.h.b16 %v451
    %v1721 = vunpack.c.l.b16 %v452
    %v1722 = vunpack.c.h.b16 %v452
    %v1723 = vunpack.c.l.b16 %v453
    %v1724 = vunpack.c.h.b16 %v453
    %v1725 = vunpack.c.l.b16 %v454
    %v1726 = vunpack.c.h.b16 %v454
    %v1727 = vunpack.c.l.b16 %v455
    %v1728 = vunpack.c.h.b16 %v455
    %v1729 = vunpack.c.l.b16 %v456
    %v1730 = vunpack.c.h.b16 %v456
    %v1731 = vunpack.c.l.b16 %v457
    %v1732 = vunpack.c.h.b16 %v457
    %v1733 = vunpack.c.l.b16 %v458
    %v1734 = vunpack.c.h.b16 %v458
    %v1735 = vunpack.c.l.b16 %v459
    %v1736 = vunpack.c.h.b16 %v459
    %v1737 = vunpack.c.l.b16 %v460
    %v1738 = vunpack.c.h.b16 %v460
    %v1739 = vunpack.c.l.b16 %v461
    %v1740 = vunpack.c.h.b16 %v461
    %v1741 = vunpack.c.l.b16 %v462
    %v1742 = vunpack.c.h.b16 %v462
    %v1743 = vunpack.c.l.b16 %v463
    %v1744 = vunpack.c.h.b16 %v463
    %v1745 = vunpack.c.l.b16 %v464
    %v1746 = vunpack.c.h.b16 %v464
    %v1747 = vunpack.c.l.b16 %v465
    %v1748 = vunpack.c.h.b16 %v465
    %v1749 = vunpack.c.l.b16 %v466
    %v1750 = vunpack.c.h.b16 %v466
    %v1751 = vunpack.c.l.b16 %v467
    %v1752 = vunpack.c.h.b16 %v467
    %v1753 = vunpack.c.l.b16 %v468
    %v1754 = vunpack.c.h.b16 %v468
    %v1755 = vunpack.c.l.b16 %v469
    %v1756 = vunpack.c.h.b16 %v469
    %v1757 = vunpack.c.l.b16 %v470
    %v1758 = vunpack.c.h.b16 %v470
    %v1759 = vunpack.c.l.b16 %v471
    %v1760 = vunpack.c.h.b16 %v471
    %v1761 = vunpack.c.l.b16 %v472
    %v1762 = vunpack.c.h.b16 %v472
    %v1763 = vunpack.c.l.b16 %v473
    %v1764 = vunpack.c.h.b16 %v473
    %v1765 = vunpack.c.l.b16 %v474
    %v1766 = vunpack.c.h.b16 %v474
    %v1767 = vunpack.c.l.b16 %v475
    %v1768 = vunpack.c.h.b16 %v475
    %v1769 = vunpack.c.l.b16 %v476
    %v1770 = vunpack.c.h.b16 %v476
    %v1771 = vunpack.c.l.b16 %v477
    %v1772 = vunpack.c.h.b16 %v477
    %v1773 = vunpack.c.l.b16 %v478
    %v1774 = vunpack.c.h.b16 %v478
    %v1775 = vunpack.c.l.b16 %v479
    %v1776 = vunpack.c.h.b16 %v479
    %v1777 = vunpack.c.l.b16 %v480
    %v1778 = vunpack.c.h.b16 %v480
    %v1779 = vunpack.c.l.b16 %v481
    %v1780 = vunpack.c.h.b16 %v481
    %v1781 = vunpack.c.l.b16 %v482
    %v1782 = vunpack.c.h.b16 %v482
    %v1783 = vunpack.c.l.b16 %v483
    %v1784 = vunpack.c.h.b16 %v483
    %v1785 = vunpack.c.l.b16 %v484
    %v1786 = vunpack.c.h.b16 %v484
    %v1787 = vunpack.c.l.b16 %v485
    %v1788 = vunpack.c.h.b16 %v485
    %v1789 = vunpack.c.l.b16 %v486
    %v1790 = vunpack.c.h.b16 %v486
    %v1791 = vunpack.c.l.b16 %v487
    %v1792 = vunpack.c.h.b16 %v487
    %v1793 = vunpack.c.l.b16 %v488
    %v1794 = vunpack.c.h.b16 %v488
    %v1795 = vunpack.c.l.b16 %v489
    %v1796 = vunpack.c.h.b16 %v489
    %v1797 = vunpack.c.l.b16 %v490
    %v1798 = vunpack.c.h.b16 %v490
    %v1799 = vunpack.c.l.b16 %v491
    %v1800 = vunpack.c.h.b16 %v491
    %v1801 = vunpack.c.l.b16 %v492
    %v1802 = vunpack.c.h.b16 %v492
    %v1803 = vunpack.c.l.b16 %v493
    %v1804 = vunpack.c.h.b16 %v493
    %v1805 = vunpack.c.l.b16 %v494
    %v1806 = vunpack.c.h.b16 %v494
    %v1807 = vunpack.c.l.b16 %v495
    %v1808 = vunpack.c.h.b16 %v495
    %v1809 = vunpack.c.l.b16 %v496
    %v1810 = vunpack.c.h.b16 %v496
    %v1811 = vunpack.c.l.b16 %v497
    %v1812 = vunpack.c.h.b16 %v497
    %v1813 = vunpack.c.l.b16 %v498
    %v1814 = vunpack.c.h.b16 %v498
    %v1815 = vunpack.c.l.b16 %v499
    %v1816 = vunpack.c.h.b16 %v499
    %v1817 = vunpack.c.l.b16 %v500
    %v1818 = vunpack.c.h.b16 %v500
    %v1819 = vunpack.c.l.b16 %v501
    %v1820 = vunpack.c.h.b16 %v501
    %v1821 = vunpack.c.l.b16 %v502
    %v1822 = vunpack.c.h.b16 %v502
    %v1823 = vunpack.c.l.b16 %v503
    %v1824 = vunpack.c.h.b16 %v503
    %v1825 = vunpack.c.l.b16 %v504
    %v1826 = vunpack.c.h.b16 %v504
    %v1827 = vunpack.c.l.b16 %v505
    %v1828 = vunpack.c.h.b16 %v505
    %v1829 = vunpack.c.l.b16 %v506
    %v1830 = vunpack.c.h.b16 %v506
    %v1831 = vunpack.c.l.b16 %v507
    %v1832 = vunpack.c.h.b16 %v507
    %v1833 = vunpack.c.l.b16 %v508
    %v1834 = vunpack.c.h.b16 %v508
    %v1835 = vunpack.c.l.b16 %v509
    %v1836 = vunpack.c.h.b16 %v509
    %v1837 = vunpack.c.l.b16 %v510
    %v1838 = vunpack.c.h.b16 %v510
    %v1839 = vunpack.c.l.b16 %v511
    %v1840 = vunpack.c.h.b16 %v511
    %v1841 = vunpack.c.l.b16 %v512
    %v1842 = vunpack.c.h.b16 %v512
    %v1843 = vunpack.c.l.b16 %v513
    %v1844 = vunpack.c.h.b16 %v513
    %v1845 = vunpack.c.l.b16 %v514
    %v1846 = vunpack.c.h.b16 %v514
    %v1847 = vunpack.c.l.b16 %v515
    %v1848 = vunpack.c.h.b16 %v515
    %v1849 = vunpack.c.l.b16 %v516
    %v1850 = vunpack.c.h.b16 %v516
    %v1851 = vunpack.c.l.b16 %v517
    %v1852 = vunpack.c.h.b16 %v517
    %v1853 = vunpack.c.l.b16 %v518
    %v1854 = vunpack.c.h.b16 %v518
    %v1855 = vunpack.c.l.b16 %v519
    %v1856 = vunpack.c.h.b16 %v519
    %v1857 = vunpack.c.l.b16 %v520
    %v1858 = vunpack.c.h.b16 %v520
    %v1859 = vunpack.c.l.b16 %v521
    %v1860 = vunpack.c.h.b16 %v521
    %v1861 = vunpack.c.l.b16 %v522
    %v1862 = vunpack.c.h.b16 %v522
    %v1863 = vunpack.c.l.b16 %v523
    %v1864 = vunpack.c.h.b16 %v523
    %v1865 = vunpack.c.l.b16 %v524
    %v1866 = vunpack.c.h.b16 %v524
    %v1867 = vunpack.c.l.b16 %v525
    %v1868 = vunpack.c.h.b16 %v525
    %v1869 = vunpack.c.l.b16 %v526
    %v1870 = vunpack.c.h.b16 %v526
    %v1871 = vunpack.c.l.b16 %v527
    %v1872 = vunpack.c.h.b16 %v527
    %v1873 = vunpack.c.l.b16 %v528
    %v1874 = vunpack.c.h.b16 %v528
    %v1875 = vunpack.c.l.b16 %v529
    %v1876 = vunpack.c.h.b16 %v529
    %v1877 = vunpack.c.l.b16 %v530
    %v1878 = vunpack.c.h.b16 %v530
    %v1879 = vunpack.c.l.b16 %v531
    %v1880 = vunpack.c.h.b16 %v531
    %v1881 = vunpack.c.l.b16 %v532
    %v1882 = vunpack.c.h.b16 %v532
    %v1883 = vunpack.c.l.b16 %v533
    %v1884 = vunpack.c.h.b16 %v533
    %v1885 = vunpack.c.l.b16 %v534
    %v1886 = vunpack.c.h.b16 %v534
    %v1887 = vunpack.c.l.b16 %v535
    %v1888 = vunpack.c.h.b16 %v535
    %v1889 = vunpack.c.l.b16 %v536
    %v1890 = vunpack.c.h.b16 %v536
    %v1891 = vunpack.c.l.b16 %v537
    %v1892 = vunpack.c.h.b16 %v537
    %v1893 = vunpack.c.l.b16 %v538
    %v1894 = vunpack.c.h.b16 %v538
    %v1895 = vunpack.c.l.b16 %v539
    %v1896 = vunpack.c.h.b16 %v539
    %v1897 = vunpack.c.l.b16 %v540
    %v1898 = vunpack.c.h.b16 %v540
    %v1899 = vunpack.c.l.b16 %v541
    %v1900 = vunpack.c.h.b16 %v541
    %v1901 = vunpack.c.l.b16 %v542
    %v1902 = vunpack.c.h.b16 %v542
    %v1903 = vunpack.c.l.b16 %v543
    %v1904 = vunpack.c.h.b16 %v543
    %v1905 = vunpack.c.l.b16 %v544
    %v1906 = vunpack.c.h.b16 %v544
    %v1907 = vunpack.c.l.b16 %v545
    %v1908 = vunpack.c.h.b16 %v545
    %v1909 = vunpack.c.l.b16 %v546
    %v1910 = vunpack.c.h.b16 %v546
    %v1911 = vunpack.c.l.b16 %v547
    %v1912 = vunpack.c.h.b16 %v547
    %v1913 = vunpack.c.l.b16 %v548
    %v1914 = vunpack.c.h.b16 %v548
    %v1915 = vunpack.c.l.b16 %v549
    %v1916 = vunpack.c.h.b16 %v549
    %v1917 = vunpack.c.l.b16 %v550
    %v1918 = vunpack.c.h.b16 %v550
    %v1919 = vunpack.c.l.b16 %v551
    %v1920 = vunpack.c.h.b16 %v551
    %v1921 = vunpack.c.l.b16 %v552
    %v1922 = vunpack.c.h.b16 %v552
    %v1923 = vunpack.c.l.b16 %v553
    %v1924 = vunpack.c.h.b16 %v553
    %v1925 = vunpack.c.l.b16 %v554
    %v1926 = vunpack.c.h.b16 %v554
    %v1927 = vunpack.c.l.b16 %v555
    %v1928 = vunpack.c.h.b16 %v555
    %v1929 = vunpack.c.l.b16 %v556
    %v1930 = vunpack.c.h.b16 %v556
    %v1931 = vunpack.c.l.b16 %v557
    %v1932 = vunpack.c.h.b16 %v557
    %v1933 = vunpack.c.l.b16 %v558
    %v1934 = vunpack.c.h.b16 %v558
    %v1935 = vunpack.c.l.b16 %v559
    %v1936 = vunpack.c.h.b16 %v559
    %v1937 = vunpack.c.l.b16 %v560
    %v1938 = vunpack.c.h.b16 %v560
    %v1939 = vunpack.c.l.b16 %v561
    %v1940 = vunpack.c.h.b16 %v561
    %v1941 = vunpack.c.l.b16 %v562
    %v1942 = vunpack.c.h.b16 %v562
    %v1943 = vunpack.c.l.b16 %v563
    %v1944 = vunpack.c.h.b16 %v563
    %v1945 = vunpack.c.l.b16 %v564
    %v1946 = vunpack.c.h.b16 %v564
    %v1947 = vunpack.c.l.b16 %v565
    %v1948 = vunpack.c.h.b16 %v565
    %v1949 = vunpack.c.l.b16 %v566
    %v1950 = vunpack.c.h.b16 %v566
    %v1951 = vunpack.c.l.b16 %v567
    %v1952 = vunpack.c.h.b16 %v567
    %v1953 = vunpack.c.l.b16 %v568
    %v1954 = vunpack.c.h.b16 %v568
    %v1955 = vunpack.c.l.b16 %v569
    %v1956 = vunpack.c.h.b16 %v569
    %v1957 = vunpack.c.l.b16 %v570
    %v1958 = vunpack.c.h.b16 %v570
    %v1959 = vunpack.c.l.b16 %v571
    %v1960 = vunpack.c.h.b16 %v571
    %v1961 = vunpack.c.l.b16 %v572
    %v1962 = vunpack.c.h.b16 %v572
    %v1963 = vunpack.c.l.b16 %v573
    %v1964 = vunpack.c.h.b16 %v573
    %v1965 = vunpack.c.l.b16 %v574
    %v1966 = vunpack.c.h.b16 %v574
    %v1967 = vunpack.c.l.b16 %v575
    %v1968 = vunpack.c.h.b16 %v575
    %v1969 = vunpack.c.l.b16 %v576
    %v1970 = vunpack.c.h.b16 %v576
    %v1971 = vunpack.c.l.b16 %v577
    %v1972 = vunpack.c.h.b16 %v577
    %v1973 = vunpack.c.l.b16 %v578
    %v1974 = vunpack.c.h.b16 %v578
    %v1975 = vunpack.c.l.b16 %v579
    %v1976 = vunpack.c.h.b16 %v579
    %v1977 = vunpack.c.l.b16 %v580
    %v1978 = vunpack.c.h.b16 %v580
    %v1979 = vunpack.c.l.b16 %v581
    %v1980 = vunpack.c.h.b16 %v581
    %v1981 = vunpack.c.l.b16 %v582
    %v1982 = vunpack.c.h.b16 %v582
    %v1983 = vunpack.c.l.b16 %v583
    %v1984 = vunpack.c.h.b16 %v583
    %v1985 = vunpack.c.l.b16 %v584
    %v1986 = vunpack.c.h.b16 %v584
    %v1987 = vunpack.c.l.b16 %v585
    %v1988 = vunpack.c.h.b16 %v585
    %v1989 = vunpack.c.l.b16 %v586
    %v1990 = vunpack.c.h.b16 %v586
    %v1991 = vunpack.c.l.b16 %v587
    %v1992 = vunpack.c.h.b16 %v587
    %v1993 = vunpack.c.l.b16 %v588
    %v1994 = vunpack.c.h.b16 %v588
    %v1995 = vunpack.c.l.b16 %v589
    %v1996 = vunpack.c.h.b16 %v589
    %v1997 = vunpack.c.l.b16 %v590
    %v1998 = vunpack.c.h.b16 %v590
    %v1999 = vunpack.c.l.b16 %v591
    %v2000 = vunpack.c.h.b16 %v591
    %v2001 = vunpack.c.l.b16 %v592
    %v2002 = vunpack.c.h.b16 %v592
    %v2003 = vunpack.c.l.b16 %v593
    %v2004 = vunpack.c.h.b16 %v593
    %v2005 = vunpack.c.l.b16 %v594
    %v2006 = vunpack.c.h.b16 %v594
    %v2007 = vunpack.c.l.b16 %v595
    %v2008 = vunpack.c.h.b16 %v595
    %v2009 = vunpack.c.l.b16 %v596
    %v2010 = vunpack.c.h.b16 %v596
    %v2011 = vunpack.c.l.b16 %v597
    %v2012 = vunpack.c.h.b16 %v597
    %v2013 = vunpack.c.l.b16 %v598
    %v2014 = vunpack.c.h.b16 %v598
    %v2015 = vunpack.c.l.b16 %v599
    %v2016 = vunpack.c.h.b16 %v599
    %v2017 = vunpack.c.l.b16 %v600
    %v2018 = vunpack.c.h.b16 %v600
    %v2019 = vunpack.c.l.b16 %v601
    %v2020 = vunpack.c.h.b16 %v601
    %v2021 = vunpack.c.l.b16 %v602
    %v2022 = vunpack.c.h.b16 %v602
    %v2023 = vunpack.c.l.b16 %v603
    %v2024 = vunpack.c.h.b16 %v603
    %v2025 = vunpack.c.l.b16 %v604
    %v2026 = vunpack.c.h.b16 %v604
    %v2027 = vunpack.c.l.b16 %v605
    %v2028 = vunpack.c.h.b16 %v605
    %v2029 = vunpack.c.l.b16 %v606
    %v2030 = vunpack.c.h.b16 %v606
    %v2031 = vunpack.c.l.b16 %v607
    %v2032 = vunpack.c.h.b16 %v607
    %v2033 = vunpack.c.l.b16 %v608
    %v2034 = vunpack.c.h.b16 %v608
    %v2035 = vunpack.c.l.b16 %v609
    %v2036 = vunpack.c.h.b16 %v609
    %v2037 = vunpack.c.l.b16 %v610
    %v2038 = vunpack.c.h.b16 %v610
    %v2039 = vunpack.c.l.b16 %v611
    %v2040 = vunpack.c.h.b16 %v611
    %v2041 = vunpack.c.l.b16 %v612
    %v2042 = vunpack.c.h.b16 %v612
    %v2043 = vunpack.c.l.b16 %v613
    %v2044 = vunpack.c.h.b16 %v613
    %v2045 = vunpack.c.l.b16 %v614
    %v2046 = vunpack.c.h.b16 %v614
    %v2047 = vunpack.c.l.b16 %v615
    %v2048 = vunpack.c.h.b16 %v615
    %v2049 = vunpack.c.l.b16 %v616
    %v2050 = vunpack.c.h.b16 %v616
    %v2051 = vunpack.c.l.b16 %v617
    %v2052 = vunpack.c.h.b16 %v617
    %v2053 = vunpack.c.l.b16 %v618
    %v2054 = vunpack.c.h.b16 %v618
    %v2055 = vunpack.c.l.b16 %v619
    %v2056 = vunpack.c.h.b16 %v619
    %v2057 = vunpack.c.l.b16 %v620
    %v2058 = vunpack.c.h.b16 %v620
    %v2059 = vunpack.c.l.b16 %v621
    %v2060 = vunpack.c.h.b16 %v621
    %v2061 = vunpack.c.l.b16 %v622
    %v2062 = vunpack.c.h.b16 %v622
    %v2063 = vunpack.c.l.b16 %v623
    %v2064 = vunpack.c.h.b16 %v623
    %v2065 = vunpack.c.l.b16 %v624
    %v2066 = vunpack.c.h.b16 %v624
    %v2067 = vunpack.c.l.b16 %v625
    %v2068 = vunpack.c.h.b16 %v625
    %v2069 = vunpack.c.l.b16 %v626
    %v2070 = vunpack.c.h.b16 %v626
    %v2071 = vunpack.c.l.b16 %v627
    %v2072 = vunpack.c.h.b16 %v627
    %v2073 = vunpack.c.l.b16 %v628
    %v2074 = vunpack.c.h.b16 %v628
    %v2075 = vunpack.c.l.b16 %v629
    %v2076 = vunpack.c.h.b16 %v629
    %v2077 = vunpack.c.l.b16 %v630
    %v2078 = vunpack.c.h.b16 %v630
    %v2079 = vunpack.c.l.b16 %v631
    %v2080 = vunpack.c.h.b16 %v631
    %v2081 = vunpack.c.l.b16 %v632
    %v2082 = vunpack.c.h.b16 %v632
    %v2083 = vunpack.c.l.b16 %v633
    %v2084 = vunpack.c.h.b16 %v633
    %v2085 = vunpack.c.l.b16 %v634
    %v2086 = vunpack.c.h.b16 %v634
    %v2087 = vunpack.c.l.b16 %v635
    %v2088 = vunpack.c.h.b16 %v635
    %v2089 = vunpack.c.l.b16 %v636
    %v2090 = vunpack.c.h.b16 %v636
    %v2091 = vunpack.c.l.b16 %v637
    %v2092 = vunpack.c.h.b16 %v637
    %v2093 = vunpack.c.l.b16 %v638
    %v2094 = vunpack.c.h.b16 %v638
    %v2095 = vunpack.c.l.b16 %v639
    %v2096 = vunpack.c.h.b16 %v639
    %v2097 = vunpack.c.l.b16 %v640
    %v2098 = vunpack.c.h.b16 %v640
    %v2099 = vunpack.c.l.b16 %v641
    %v2100 = vunpack.c.h.b16 %v641
    %v2101 = vunpack.c.l.b16 %v642
    %v2102 = vunpack.c.h.b16 %v642
    %v2103 = vunpack.c.l.b16 %v643
    %v2104 = vunpack.c.h.b16 %v643
    %v2105 = vunpack.c.l.b16 %v644
    %v2106 = vunpack.c.h.b16 %v644
    %v2107 = vunpack.c.l.b16 %v645
    %v2108 = vunpack.c.h.b16 %v645
    %v2109 = vunpack.c.l.b16 %v646
    %v2110 = vunpack.c.h.b16 %v646
    %v2111 = vunpack.c.l.b16 %v647
    %v2112 = vunpack.c.h.b16 %v647
    %v2113 = vunpack.c.l.b16 %v648
    %v2114 = vunpack.c.h.b16 %v648
    %v2115 = vunpack.c.l.b16 %v649
    %v2116 = vunpack.c.h.b16 %v649
    %v2117 = vunpack.c.l.b16 %v650
    %v2118 = vunpack.c.h.b16 %v650
    %v2119 = vunpack.c.l.b16 %v651
    %v2120 = vunpack.c.h.b16 %v651
    %v2121 = vunpack.c.l.b16 %v652
    %v2122 = vunpack.c.h.b16 %v652
    %v2123 = vunpack.c.l.b16 %v653
    %v2124 = vunpack.c.h.b16 %v653
    %v2125 = vunpack.c.l.b16 %v654
    %v2126 = vunpack.c.h.b16 %v654
    %v2127 = vunpack.c.l.b16 %v655
    %v2128 = vunpack.c.h.b16 %v655
    %v2129 = vunpack.c.l.b16 %v656
    %v2130 = vunpack.c.h.b16 %v656
    %v2131 = vunpack.c.l.b16 %v657
    %v2132 = vunpack.c.h.b16 %v657
    %v2133 = vunpack.c.l.b16 %v658
    %v2134 = vunpack.c.h.b16 %v658
    %v2135 = vunpack.c.l.b16 %v659
    %v2136 = vunpack.c.h.b16 %v659
    %v2137 = vunpack.c.l.b16 %v660
    %v2138 = vunpack.c.h.b16 %v660
    %v2139 = vunpack.c.l.b16 %v661
    %v2140 = vunpack.c.h.b16 %v661
    %v2141 = vunpack.c.l.b16 %v662
    %v2142 = vunpack.c.h.b16 %v662
    %v2143 = vunpack.c.l.b16 %v663
    %v2144 = vunpack.c.h.b16 %v663
    %v2145 = vunpack.c.l.b16 %v664
    %v2146 = vunpack.c.h.b16 %v664
    %v2147 = vunpack.c.l.b16 %v665
    %v2148 = vunpack.c.h.b16 %v665
    %v2149 = vunpack.c.l.b16 %v666
    %v2150 = vunpack.c.h.b16 %v666
    %v2151 = vunpack.c.l.b16 %v667
    %v2152 = vunpack.c.h.b16 %v667
    %v2153 = vunpack.c.l.b16 %v668
    %v2154 = vunpack.c.h.b16 %v668
    %v2155 = vunpack.c.l.b16 %v669
    %v2156 = vunpack.c.h.b16 %v669
    %v2157 = vunpack.c.l.b16 %v670
    %v2158 = vunpack.c.h.b16 %v670
    %v2159 = vunpack.c.l.b16 %v671
    %v2160 = vunpack.c.h.b16 %v671
    %v2161 = vunpack.c.l.b16 %v672
    %v2162 = vunpack.c.h.b16 %v672
    %v2163 = vunpack.c.l.b16 %v673
    %v2164 = vunpack.c.h.b16 %v673
    %v2165 = vunpack.c.l.b16 %v674
    %v2166 = vunpack.c.h.b16 %v674
    %v2167 = vunpack.c.l.b16 %v675
    %v2168 = vunpack.c.h.b16 %v675
    %v2169 = vunpack.c.l.b16 %v676
    %v2170 = vunpack.c.h.b16 %v676
    %v2171 = vunpack.c.l.b16 %v677
    %v2172 = vunpack.c.h.b16 %v677
    %v2173 = vunpack.c.l.b16 %v678
    %v2174 = vunpack.c.h.b16 %v678
    %v2175 = vunpack.c.l.b16 %v679
    %v2176 = vunpack.c.h.b16 %v679
    %v2177 = vunpack.c.l.b16 %v680
    %v2178 = vunpack.c.h.b16 %v680
    %v2179 = vunpack.c.l.b16 %v681
    %v2180 = vunpack.c.h.b16 %v681
    %v2181 = vunpack.c.l.b16 %v682
    %v2182 = vunpack.c.h.b16 %v682
    %v2183 = vunpack.c.l.b16 %v683
    %v2184 = vunpack.c.h.b16 %v683
    %v2185 = vunpack.c.l.b16 %v684
    %v2186 = vunpack.c.h.b16 %v684
    %v2187 = vunpack.c.l.b16 %v685
    %v2188 = vunpack.c.h.b16 %v685
    %v2189 = vunpack.c.l.b16 %v686
    %v2190 = vunpack.c.h.b16 %v686
    %v2191 = vunpack.c.l.b16 %v687
    %v2192 = vunpack.c.h.b16 %v687
    %v2193 = vunpack.c.l.b16 %v688
    %v2194 = vunpack.c.h.b16 %v688
    %v2195 = vunpack.c.l.b16 %v689
    %v2196 = vunpack.c.h.b16 %v689
    %v2197 = vunpack.c.l.b16 %v690
    %v2198 = vunpack.c.h.b16 %v690
    %v2199 = vunpack.c.l.b16 %v691
    %v2200 = vunpack.c.h.b16 %v691
    %v2201 = vunpack.c.l.b16 %v692
    %v2202 = vunpack.c.h.b16 %v692
    %v2203 = vunpack.c.l.b16 %v693
    %v2204 = vunpack.c.h.b16 %v693
    %v2205 = vunpack.c.l.b16 %v694
    %v2206 = vunpack.c.h.b16 %v694
    %v2207 = vunpack.c.l.b16 %v695
    %v2208 = vunpack.c.h.b16 %v695
    %v2209 = vunpack.c.l.b16 %v696
    %v2210 = vunpack.c.h.b16 %v696
    %v2211 = vunpack.c.l.b16 %v697
    %v2212 = vunpack.c.h.b16 %v697
    %v2213 = vunpack.c.l.b16 %v698
    %v2214 = vunpack.c.h.b16 %v698
    %v2215 = vunpack.c.l.b16 %v699
    %v2216 = vunpack.c.h.b16 %v699
    %v2217 = vunpack.c.l.b16 %v700
    %v2218 = vunpack.c.h.b16 %v700
    %v2219 = vunpack.c.l.b16 %v701
    %v2220 = vunpack.c.h.b16 %v701
    %v2221 = vunpack.c.l.b16 %v702
    %v2222 = vunpack.c.h.b16 %v702
    %v2223 = vunpack.c.l.b16 %v703
    %v2224 = vunpack.c.h.b16 %v703
    %v2225 = vunpack.c.l.b16 %v704
    %v2226 = vunpack.c.h.b16 %v704
    %v2227 = vunpack.c.l.b16 %v705
    %v2228 = vunpack.c.h.b16 %v705
    %v2229 = vunpack.c.l.b16 %v706
    %v2230 = vunpack.c.h.b16 %v706
    %v2231 = vunpack.c.l.b16 %v707
    %v2232 = vunpack.c.h.b16 %v707
    %v2233 = vunpack.c.l.b16 %v708
    %v2234 = vunpack.c.h.b16 %v708
    %v2235 = vunpack.c.l.b16 %v709
    %v2236 = vunpack.c.h.b16 %v709
    %v2237 = vunpack.c.l.b16 %v710
    %v2238 = vunpack.c.h.b16 %v710
    %v2239 = vunpack.c.l.b16 %v711
    %v2240 = vunpack.c.h.b16 %v711
    %v2241 = vunpack.c.l.b16 %v712
    %v2242 = vunpack.c.h.b16 %v712
    %v2243 = vunpack.c.l.b16 %v713
    %v2244 = vunpack.c.h.b16 %v713
    %v2245 = vunpack.c.l.b16 %v714
    %v2246 = vunpack.c.h.b16 %v714
    %v2247 = vunpack.c.l.b16 %v715
    %v2248 = vunpack.c.h.b16 %v715
    %v2249 = vunpack.c.l.b16 %v716
    %v2250 = vunpack.c.h.b16 %v716
    %v2251 = vunpack.c.l.b16 %v717
    %v2252 = vunpack.c.h.b16 %v717
    %v2253 = vunpack.c.l.b16 %v718
    %v2254 = vunpack.c.h.b16 %v718
    %v2255 = vpack.c.b16 %v1247, %v1231
    %v2256 = vpack.c.b16 %v1248, %v1232
    %v2257 = vpack.c.b16 %v1249, %v1233
    %v2258 = vpack.c.b16 %v1250, %v1234
    %v2259 = vpack.c.b16 %v1251, %v1235
    %v2260 = vpack.c.b16 %v1252, %v1236
    %v2261 = vpack.c.b16 %v1253, %v1237
    %v2262 = vpack.c.b16 %v1254, %v1238
    %v2263 = vpack.c.b16 %v1255, %v1239
    %v2264 = vpack.c.b16 %v1256, %v1240
    %v2265 = vpack.c.b16 %v1257, %v1241
    %v2266 = vpack.c.b16 %v1258, %v1242
    %v2267 = vpack.c.b16 %v1259, %v1243
    %v2268 = vpack.c.b16 %v1260, %v1244
    %v2269 = vpack.c.b16 %v1261, %v1245
    %v2270 = vpack.c.b16 %v1262, %v1246
    %v2271 = vpack.c.b16 %v1279, %v1263
    %v2272 = vpack.c.b16 %v1280, %v1264
    %v2273 = vpack.c.b16 %v1281, %v1265
    %v2274 = vpack.c.b16 %v1282, %v1266
    %v2275 = vpack.c.b16 %v1283, %v1267
    %v2276 = vpack.c.b16 %v1284, %v1268
    %v2277 = vpack.c.b16 %v1285, %v1269
    %v2278 = vpack.c.b16 %v1286, %v1270
    %v2279 = vpack.c.b16 %v1287, %v1271
    %v2280 = vpack.c.b16 %v1288, %v1272
    %v2281 = vpack.c.b16 %v1289, %v1273
    %v2282 = vpack.c.b16 %v1290, %v1274
    %v2283 = vpack.c.b16 %v1291, %v1275
    %v2284 = vpack.c.b16 %v1292, %v1276
    %v2285 = vpack.c.b16 %v1293, %v1277
    %v2286 = vpack.c.b16 %v1294, %v1278
    %v2287 = vpack.c.b16 %v1311, %v1295
    %v2288 = vpack.c.b16 %v1312, %v1296
    %v2289 = vpack.c.b16 %v1313, %v1297
    %v2290 = vpack.c.b16 %v1314, %v1298
    %v2291 = vpack.c.b16 %v1315, %v1299
    %v2292 = vpack.c.b16 %v1316, %v1300
    %v2293 = vpack.c.b16 %v1317, %v1301
    %v2294 = vpack.c.b16 %v1318, %v1302
    %v2295 = vpack.c.b16 %v1319, %v1303
    %v2296 = vpack.c.b16 %v1320, %v1304
    %v2297 = vpack.c.b16 %v1321, %v1305
    %v2298 = vpack.c.b16 %v1322, %v1306
    %v2299 = vpack.c.b16 %v1323, %v1307
    %v2300 = vpack.c.b16 %v1324, %v1308
    %v2301 = vpack.c.b16 %v1325, %v1309
    %v2302 = vpack.c.b16 %v1326, %v1310
    %v2303 = vpack.c.b16 %v1343, %v1327
    %v2304 = vpack.c.b16 %v1344, %v1328
    %v2305 = vpack.c.b16 %v1345, %v1329
    %v2306 = vpack.c.b16 %v1346, %v1330
    %v2307 = vpack.c.b16 %v1347, %v1331
    %v2308 = vpack.c.b16 %v1348, %v1332
    %v2309 = vpack.c.b16 %v1349, %v1333
    %v2310 = vpack.c.b16 %v1350, %v1334
    %v2311 = vpack.c.b16 %v1351, %v1335
    %v2312 = vpack.c.b16 %v1352, %v1336
    %v2313 = vpack.c.b16 %v1353, %v1337
    %v2314 = vpack.c.b16 %v1354, %v1338
    %v2315 = vpack.c.b16 %v1355, %v1339
    %v2316 = vpack.c.b16 %v1356, %v1340
    %v2317 = vpack.c.b16 %v1357, %v1341
    %v2318 = vpack.c.b16 %v1358, %v1342
    %v2319 = vpack.c.b16 %v1375, %v1359
    %v2320 = vpack.c.b16 %v1376, %v1360
    %v2321 = vpack.c.b16 %v1377, %v1361
    %v2322 = vpack.c.b16 %v1378, %v1362
    %v2323 = vpack.c.b16 %v1379, %v1363
    %v2324 = vpack.c.b16 %v1380, %v1364
    %v2325 = vpack.c.b16 %v1381, %v1365
    %v2326 = vpack.c.b16 %v1382, %v1366
    %v2327 = vpack.c.b16 %v1383, %v1367
    %v2328 = vpack.c.b16 %v1384, %v1368
    %v2329 = vpack.c.b16 %v1385, %v1369
    %v2330 = vpack.c.b16 %v1386, %v1370
    %v2331 = vpack.c.b16 %v1387, %v1371
    %v2332 = vpack.c.b16 %v1388, %v1372
    %v2333 = vpack.c.b16 %v1389, %v1373
    %v2334 = vpack.c.b16 %v1390, %v1374
    %v2335 = vpack.c.b16 %v1407, %v1391
    %v2336 = vpack.c.b16 %v1408, %v1392
    %v2337 = vpack.c.b16 %v1409, %v1393
    %v2338 = vpack.c.b16 %v1410, %v1394
    %v2339 = vpack.c.b16 %v1411, %v1395
    %v2340 = vpack.c.b16 %v1412, %v1396
    %v2341 = vpack.c.b16 %v1413, %v1397
    %v2342 = vpack.c.b16 %v1414, %v1398
    %v2343 = vpack.c.b16 %v1415, %v1399
    %v2344 = vpack.c.b16 %v1416, %v1400
    %v2345 = vpack.c.b16 %v1417, %v1401
    %v2346 = vpack.c.b16 %v1418, %v1402
    %v2347 = vpack.c.b16 %v1419, %v1403
    %v2348 = vpack.c.b16 %v1420, %v1404
    %v2349 = vpack.c.b16 %v1421, %v1405
    %v2350 = vpack.c.b16 %v1422, %v1406
    %v2351 = vpack.c.b16 %v1439, %v1423
    %v2352 = vpack.c.b16 %v1440, %v1424
    %v2353 = vpack.c.b16 %v1441, %v1425
    %v2354 = vpack.c.b16 %v1442, %v1426
    %v2355 = vpack.c.b16 %v1443, %v1427
    %v2356 = vpack.c.b16 %v1444, %v1428
    %v2357 = vpack.c.b16 %v1445, %v1429
    %v2358 = vpack.c.b16 %v1446, %v1430
    %v2359 = vpack.c.b16 %v1447, %v1431
    %v2360 = vpack.c.b16 %v1448, %v1432
    %v2361 = vpack.c.b16 %v1449, %v1433
    %v2362 = vpack.c.b16 %v1450, %v1434
    %v2363 = vpack.c.b16 %v1451, %v1435
    %v2364 = vpack.c.b16 %v1452, %v1436
    %v2365 = vpack.c.b16 %v1453, %v1437
    %v2366 = vpack.c.b16 %v1454, %v1438
    %v2367 = vpack.c.b16 %v1471, %v1455
    %v2368 = vpack.c.b16 %v1472, %v1456
    %v2369 = vpack.c.b16 %v1473, %v1457
    %v2370 = vpack.c.b16 %v1474, %v1458
    %v2371 = vpack.c.b16 %v1475, %v1459
    %v2372 = vpack.c.b16 %v1476, %v1460
    %v2373 = vpack.c.b16 %v1477, %v1461
    %v2374 = vpack.c.b16 %v1478, %v1462
    %v2375 = vpack.c.b16 %v1479, %v1463
    %v2376 = vpack.c.b16 %v1480, %v1464
    %v2377 = vpack.c.b16 %v1481, %v1465
    %v2378 = vpack.c.b16 %v1482, %v1466
    %v2379 = vpack.c.b16 %v1483, %v1467
    %v2380 = vpack.c.b16 %v1484, %v1468
    %v2381 = vpack.c.b16 %v1485, %v1469
    %v2382 = vpack.c.b16 %v1486, %v1470
    %v2383 = vpack.c.b16 %v1503, %v1487
    %v2384 = vpack.c.b16 %v1504, %v1488
    %v2385 = vpack.c.b16 %v1505, %v1489
    %v2386 = vpack.c.b16 %v1506, %v1490
    %v2387 = vpack.c.b16 %v1507, %v1491
    %v2388 = vpack.c.b16 %v1508, %v1492
    %v2389 = vpack.c.b16 %v1509, %v1493
    %v2390 = vpack.c.b16 %v1510, %v1494
    %v2391 = vpack.c.b16 %v1511, %v1495
    %v2392 = vpack.c.b16 %v1512, %v1496
    %v2393 = vpack.c.b16 %v1513, %v1497
    %v2394 = vpack.c.b16 %v1514, %v1498
    %v2395 = vpack.c.b16 %v1515, %v1499
    %v2396 = vpack.c.b16 %v1516, %v1500
    %v2397 = vpack.c.b16 %v1517, %v1501
    %v2398 = vpack.c.b16 %v1518, %v1502
    %v2399 = vpack.c.b16 %v1535, %v1519
    %v2400 = vpack.c.b16 %v1536, %v1520
    %v2401 = vpack.c.b16 %v1537, %v1521
    %v2402 = vpack.c.b16 %v1538, %v1522
    %v2403 = vpack.c.b16 %v1539, %v1523
    %v2404 = vpack.c.b16 %v1540, %v1524
    %v2405 = vpack.c.b16 %v1541, %v1525
    %v2406 = vpack.c.b16 %v1542, %v1526
    %v2407 = vpack.c.b16 %v1543, %v1527
    %v2408 = vpack.c.b16 %v1544, %v1528
    %v2409 = vpack.c.b16 %v1545, %v1529
    %v2410 = vpack.c.b16 %v1546, %v1530
    %v2411 = vpack.c.b16 %v1547, %v1531
    %v2412 = vpack.c.b16 %v1548, %v1532
    %v2413 = vpack.c.b16 %v1549, %v1533
    %v2414 = vpack.c.b16 %v1550, %v1534
    %v2415 = vpack.c.b16 %v1567, %v1551
    %v2416 = vpack.c.b16 %v1568, %v1552
    %v2417 = vpack.c.b16 %v1569, %v1553
    %v2418 = vpack.c.b16 %v1570, %v1554
    %v2419 = vpack.c.b16 %v1571, %v1555
    %v2420 = vpack.c.b16 %v1572, %v1556
    %v2421 = vpack.c.b16 %v1573, %v1557
    %v2422 = vpack.c.b16 %v1574, %v1558
    %v2423 = vpack.c.b16 %v1575, %v1559
    %v2424 = vpack.c.b16 %v1576, %v1560
    %v2425 = vpack.c.b16 %v1577, %v1561
    %v2426 = vpack.c.b16 %v1578, %v1562
    %v2427 = vpack.c.b16 %v1579, %v1563
    %v2428 = vpack.c.b16 %v1580, %v1564
    %v2429 = vpack.c.b16 %v1581, %v1565
    %v2430 = vpack.c.b16 %v1582, %v1566
    %v2431 = vpack.c.b16 %v1599, %v1583
    %v2432 = vpack.c.b16 %v1600, %v1584
    %v2433 = vpack.c.b16 %v1601, %v1585
    %v2434 = vpack.c.b16 %v1602, %v1586
    %v2435 = vpack.c.b16 %v1603, %v1587
    %v2436 = vpack.c.b16 %v1604, %v1588
    %v2437 = vpack.c.b16 %v1605, %v1589
    %v2438 = vpack.c.b16 %v1606, %v1590
    %v2439 = vpack.c.b16 %v1607, %v1591
    %v2440 = vpack.c.b16 %v1608, %v1592
    %v2441 = vpack.c.b16 %v1609, %v1593
    %v2442 = vpack.c.b16 %v1610, %v1594
    %v2443 = vpack.c.b16 %v1611, %v1595
    %v2444 = vpack.c.b16 %v1612, %v1596
    %v2445 = vpack.c.b16 %v1613, %v1597
    %v2446 = vpack.c.b16 %v1614, %v1598
    %v2447 = vpack.c.b16 %v1631, %v1615
    %v2448 = vpack.c.b16 %v1632, %v1616
    %v2449 = vpack.c.b16 %v1633, %v1617
    %v2450 = vpack.c.b16 %v1634, %v1618
    %v2451 = vpack.c.b16 %v1635, %v1619
    %v2452 = vpack.c.b16 %v1636, %v1620
    %v2453 = vpack.c.b16 %v1637, %v1621
    %v2454 = vpack.c.b16 %v1638, %v1622
    %v2455 = vpack.c.b16 %v1639, %v1623
    %v2456 = vpack.c.b16 %v1640, %v1624
    %v2457 = vpack.c.b16 %v1641, %v1625
    %v2458 = vpack.c.b16 %v1642, %v1626
    %v2459 = vpack.c.b16 %v1643, %v1627
    %v2460 = vpack.c.b16 %v1644, %v1628
    %v2461 = vpack.c.b16 %v1645, %v1629
    %v2462 = vpack.c.b16 %v1646, %v1630
    %v2463 = vpack.c.b16 %v1663, %v1647
    %v2464 = vpack.c.b16 %v1664, %v1648
    %v2465 = vpack.c.b16 %v1665, %v1649
    %v2466 = vpack.c.b16 %v1666, %v1650
    %v2467 = vpack.c.b16 %v1667, %v1651
    %v2468 = vpack.c.b16 %v1668, %v1652
    %v2469 = vpack.c.b16 %v1669, %v1653
    %v2470 = vpack.c.b16 %v1670, %v1654
    %v2471 = vpack.c.b16 %v1671, %v1655
    %v2472 = vpack.c.b16 %v1672, %v1656
    %v2473 = vpack.c.b16 %v1673, %v1657
    %v2474 = vpack.c.b16 %v1674, %v1658
    %v2475 = vpack.c.b16 %v1675, %v1659
    %v2476 = vpack.c.b16 %v1676, %v1660
    %v2477 = vpack.c.b16 %v1677, %v1661
    %v2478 = vpack.c.b16 %v1678, %v1662
    %v2479 = vpack.c.b16 %v1695, %v1679
    %v2480 = vpack.c.b16 %v1696, %v1680
    %v2481 = vpack.c.b16 %v1697, %v1681
    %v2482 = vpack.c.b16 %v1698, %v1682
    %v2483 = vpack.c.b16 %v1699, %v1683
    %v2484 = vpack.c.b16 %v1700, %v1684
    %v2485 = vpack.c.b16 %v1701, %v1685
    %v2486 = vpack.c.b16 %v1702, %v1686
    %v2487 = vpack.c.b16 %v1703, %v1687
    %v2488 = vpack.c.b16 %v1704, %v1688
    %v2489 = vpack.c.b16 %v1705, %v1689
    %v2490 = vpack.c.b16 %v1706, %v1690
    %v2491 = vpack.c.b16 %v1707, %v1691
    %v2492 = vpack.c.b16 %v1708, %v1692
    %v2493 = vpack.c.b16 %v1709, %v1693
    %v2494 = vpack.c.b16 %v1710, %v1694
    %v2495 = vpack.c.b16 %v1727, %v1711
    %v2496 = vpack.c.b16 %v1728, %v1712
    %v2497 = vpack.c.b16 %v1729, %v1713
    %v2498 = vpack.c.b16 %v1730, %v1714
    %v2499 = vpack.c.b16 %v1731, %v1715
    %v2500 = vpack.c.b16 %v1732, %v1716
    %v2501 = vpack.c.b16 %v1733, %v1717
    %v2502 = vpack.c.b16 %v1734, %v1718
    %v2503 = vpack.c.b16 %v1735, %v1719
    %v2504 = vpack.c.b16 %v1736, %v1720
    %v2505 = vpack.c.b16 %v1737, %v1721
    %v2506 = vpack.c.b16 %v1738, %v1722
    %v2507 = vpack.c.b16 %v1739, %v1723
    %v2508 = vpack.c.b16 %v1740, %v1724
    %v2509 = vpack.c.b16 %v1741, %v1725
    %v2510 = vpack.c.b16 %v1742, %v1726
    %v2511 = vpack.c.b16 %v1759, %v1743
    %v2512 = vpack.c.b16 %v1760, %v1744
    %v2513 = vpack.c.b16 %v1761, %v1745
    %v2514 = vpack.c.b16 %v1762, %v1746
    %v2515 = vpack.c.b16 %v1763, %v1747
    %v2516 = vpack.c.b16 %v1764, %v1748
    %v2517 = vpack.c.b16 %v1765, %v1749
    %v2518 = vpack.c.b16 %v1766, %v1750
    %v2519 = vpack.c.b16 %v1767, %v1751
    %v2520 = vpack.c.b16 %v1768, %v1752
    %v2521 = vpack.c.b16 %v1769, %v1753
    %v2522 = vpack.c.b16 %v1770, %v1754
    %v2523 = vpack.c.b16 %v1771, %v1755
    %v2524 = vpack.c.b16 %v1772, %v1756
    %v2525 = vpack.c.b16 %v1773, %v1757
    %v2526 = vpack.c.b16 %v1774, %v1758
    %v2527 = vpack.c.b16 %v1791, %v1775
    %v2528 = vpack.c.b16 %v1792, %v1776
    %v2529 = vpack.c.b16 %v1793, %v1777
    %v2530 = vpack.c.b16 %v1794, %v1778
    %v2531 = vpack.c.b16 %v1795, %v1779
    %v2532 = vpack.c.b16 %v1796, %v1780
    %v2533 = vpack.c.b16 %v1797, %v1781
    %v2534 = vpack.c.b16 %v1798, %v1782
    %v2535 = vpack.c.b16 %v1799, %v1783
    %v2536 = vpack.c.b16 %v1800, %v1784
    %v2537 = vpack.c.b16 %v1801, %v1785
    %v2538 = vpack.c.b16 %v1802, %v1786
    %v2539 = vpack.c.b16 %v1803, %v1787
    %v2540 = vpack.c.b16 %v1804, %v1788
    %v2541 = vpack.c.b16 %v1805, %v1789
    %v2542 = vpack.c.b16 %v1806, %v1790
    %v2543 = vpack.c.b16 %v1823, %v1807
    %v2544 = vpack.c.b16 %v1824, %v1808
    %v2545 = vpack.c.b16 %v1825, %v1809
    %v2546 = vpack.c.b16 %v1826, %v1810
    %v2547 = vpack.c.b16 %v1827, %v1811
    %v2548 = vpack.c.b16 %v1828, %v1812
    %v2549 = vpack.c.b16 %v1829, %v1813
    %v2550 = vpack.c.b16 %v1830, %v1814
    %v2551 = vpack.c.b16 %v1831, %v1815
    %v2552 = vpack.c.b16 %v1832, %v1816
    %v2553 = vpack.c.b16 %v1833, %v1817
    %v2554 = vpack.c.b16 %v1834, %v1818
    %v2555 = vpack.c.b16 %v1835, %v1819
    %v2556 = vpack.c.b16 %v1836, %v1820
    %v2557 = vpack.c.b16 %v1837, %v1821
    %v2558 = vpack.c.b16 %v1838, %v1822
    %v2559 = vpack.c.b16 %v1855, %v1839
    %v2560 = vpack.c.b16 %v1856, %v1840
    %v2561 = vpack.c.b16 %v1857, %v1841
    %v2562 = vpack.c.b16 %v1858, %v1842
    %v2563 = vpack.c.b16 %v1859, %v1843
    %v2564 = vpack.c.b16 %v1860, %v1844
    %v2565 = vpack.c.b16 %v1861, %v1845
    %v2566 = vpack.c.b16 %v1862, %v1846
    %v2567 = vpack.c.b16 %v1863, %v1847
    %v2568 = vpack.c.b16 %v1864, %v1848
    %v2569 = vpack.c.b16 %v1865, %v1849
    %v2570 = vpack.c.b16 %v1866, %v1850
    %v2571 = vpack.c.b16 %v1867, %v1851
    %v2572 = vpack.c.b16 %v1868, %v1852
    %v2573 = vpack.c.b16 %v1869, %v1853
    %v2574 = vpack.c.b16 %v1870, %v1854
    %v2575 = vpack.c.b16 %v1887, %v1871
    %v2576 = vpack.c.b16 %v1888, %v1872
    %v2577 = vpack.c.b16 %v1889, %v1873
    %v2578 = vpack.c.b16 %v1890, %v1874
    %v2579 = vpack.c.b16 %v1891, %v1875
    %v2580 = vpack.c.b16 %v1892, %v1876
    %v2581 = vpack.c.b16 %v1893, %v1877
    %v2582 = vpack.c.b16 %v1894, %v1878
    %v2583 = vpack.c.b16 %v1895, %v1879
    %v2584 = vpack.c.b16 %v1896, %v1880
    %v2585 = vpack.c.b16 %v1897, %v1881
    %v2586 = vpack.c.b16 %v1898, %v1882
    %v2587 = vpack.c.b16 %v1899, %v1883
    %v2588 = vpack.c.b16 %v1900, %v1884
    %v2589 = vpack.c.b16 %v1901, %v1885
    %v2590 = vpack.c.b16 %v1902, %v1886
    %v2591 = vpack.c.b16 %v1919, %v1903
    %v2592 = vpack.c.b16 %v1920, %v1904
    %v2593 = vpack.c.b16 %v1921, %v1905
    %v2594 = vpack.c.b16 %v1922, %v1906
    %v2595 = vpack.c.b16 %v1923, %v1907
    %v2596 = vpack.c.b16 %v1924, %v1908
    %v2597 = vpack.c.b16 %v1925, %v1909
    %v2598 = vpack.c.b16 %v1926, %v1910
    %v2599 = vpack.c.b16 %v1927, %v1911
    %v2600 = vpack.c.b16 %v1928, %v1912
    %v2601 = vpack.c.b16 %v1929, %v1913
    %v2602 = vpack.c.b16 %v1930, %v1914
    %v2603 = vpack.c.b16 %v1931, %v1915
    %v2604 = vpack.c.b16 %v1932, %v1916
    %v2605 = vpack.c.b16 %v1933, %v1917
    %v2606 = vpack.c.b16 %v1934, %v1918
    %v2607 = vpack.c.b16 %v1951, %v1935
    %v2608 = vpack.c.b16 %v1952, %v1936
    %v2609 = vpack.c.b16 %v1953, %v1937
    %v2610 = vpack.c.b16 %v1954, %v1938
    %v2611 = vpack.c.b16 %v1955, %v1939
    %v2612 = vpack.c.b16 %v1956, %v1940
    %v2613 = vpack.c.b16 %v1957, %v1941
    %v2614 = vpack.c.b16 %v1958, %v1942
    %v2615 = vpack.c.b16 %v1959, %v1943
    %v2616 = vpack.c.b16 %v1960, %v1944
    %v2617 = vpack.c.b16 %v1961, %v1945
    %v2618 = vpack.c.b16 %v1962, %v1946
    %v2619 = vpack.c.b16 %v1963, %v1947
    %v2620 = vpack.c.b16 %v1964, %v1948
    %v2621 = vpack.c.b16 %v1965, %v1949
    %v2622 = vpack.c.b16 %v1966, %v1950
    %v2623 = vpack.c.b16 %v1983, %v1967
    %v2624 = vpack.c.b16 %v1984, %v1968
    %v2625 = vpack.c.b16 %v1985, %v1969
    %v2626 = vpack.c.b16 %v1986, %v1970
    %v2627 = vpack.c.b16 %v1987, %v1971
    %v2628 = vpack.c.b16 %v1988, %v1972
    %v2629 = vpack.c.b16 %v1989, %v1973
    %v2630 = vpack.c.b16 %v1990, %v1974
    %v2631 = vpack.c.b16 %v1991, %v1975
    %v2632 = vpack.c.b16 %v1992, %v1976
    %v2633 = vpack.c.b16 %v1993, %v1977
    %v2634 = vpack.c.b16 %v1994, %v1978
    %v2635 = vpack.c.b16 %v1995, %v1979
    %v2636 = vpack.c.b16 %v1996, %v1980
    %v2637 = vpack.c.b16 %v1997, %v1981
    %v2638 = vpack.c.b16 %v1998, %v1982
    %v2639 = vpack.c.b16 %v2015, %v1999
    %v2640 = vpack.c.b16 %v2016, %v2000
    %v2641 = vpack.c.b16 %v2017, %v2001
    %v2642 = vpack.c.b16 %v2018, %v2002
    %v2643 = vpack.c.b16 %v2019, %v2003
    %v2644 = vpack.c.b16 %v2020, %v2004
    %v2645 = vpack.c.b16 %v2021, %v2005
    %v2646 = vpack.c.b16 %v2022, %v2006
    %v2647 = vpack.c.b16 %v2023, %v2007
    %v2648 = vpack.c.b16 %v2024, %v2008
    %v2649 = vpack.c.b16 %v2025, %v2009
    %v2650 = vpack.c.b16 %v2026, %v2010
    %v2651 = vpack.c.b16 %v2027, %v2011
    %v2652 = vpack.c.b16 %v2028, %v2012
    %v2653 = vpack.c.b16 %v2029, %v2013
    %v2654 = vpack.c.b16 %v2030, %v2014
    %v2655 = vpack.c.b16 %v2047, %v2031
    %v2656 = vpack.c.b16 %v2048, %v2032
    %v2657 = vpack.c.b16 %v2049, %v2033
    %v2658 = vpack.c.b16 %v2050, %v2034
    %v2659 = vpack.c.b16 %v2051, %v2035
    %v2660 = vpack.c.b16 %v2052, %v2036
    %v2661 = vpack.c.b16 %v2053, %v2037
    %v2662 = vpack.c.b16 %v2054, %v2038
    %v2663 = vpack.c.b16 %v2055, %v2039
    %v2664 = vpack.c.b16 %v2056, %v2040
    %v2665 = vpack.c.b16 %v2057, %v2041
    %v2666 = vpack.c.b16 %v2058, %v2042
    %v2667 = vpack.c.b16 %v2059, %v2043
    %v2668 = vpack.c.b16 %v2060, %v2044
    %v2669 = vpack.c.b16 %v2061, %v2045
    %v2670 = vpack.c.b16 %v2062, %v2046
    %v2671 = vpack.c.b16 %v2079, %v2063
    %v2672 = vpack.c.b16 %v2080, %v2064
    %v2673 = vpack.c.b16 %v2081, %v2065
    %v2674 = vpack.c.b16 %v2082, %v2066
    %v2675 = vpack.c.b16 %v2083, %v2067
    %v2676 = vpack.c.b16 %v2084, %v2068
    %v2677 = vpack.c.b16 %v2085, %v2069
    %v2678 = vpack.c.b16 %v2086, %v2070
    %v2679 = vpack.c.b16 %v2087, %v2071
    %v2680 = vpack.c.b16 %v2088, %v2072
    %v2681 = vpack.c.b16 %v2089, %v2073
    %v2682 = vpack.c.b16 %v2090, %v2074
    %v2683 = vpack.c.b16 %v2091, %v2075
    %v2684 = vpack.c.b16 %v2092, %v2076
    %v2685 = vpack.c.b16 %v2093, %v2077
    %v2686 = vpack.c.b16 %v2094, %v2078
    %v2687 = vpack.c.b16 %v2111, %v2095
    %v2688 = vpack.c.b16 %v2112, %v2096
    %v2689 = vpack.c.b16 %v2113, %v2097
    %v2690 = vpack.c.b16 %v2114, %v2098
    %v2691 = vpack.c.b16 %v2115, %v2099
    %v2692 = vpack.c.b16 %v2116, %v2100
    %v2693 = vpack.c.b16 %v2117, %v2101
    %v2694 = vpack.c.b16 %v2118, %v2102
    %v2695 = vpack.c.b16 %v2119, %v2103
    %v2696 = vpack.c.b16 %v2120, %v2104
    %v2697 = vpack.c.b16 %v2121, %v2105
    %v2698 = vpack.c.b16 %v2122, %v2106
    %v2699 = vpack.c.b16 %v2123, %v2107
    %v2700 = vpack.c.b16 %v2124, %v2108
    %v2701 = vpack.c.b16 %v2125, %v2109
    %v2702 = vpack.c.b16 %v2126, %v2110
    %v2703 = vpack.c.b16 %v2143, %v2127
    %v2704 = vpack.c.b16 %v2144, %v2128
    %v2705 = vpack.c.b16 %v2145, %v2129
    %v2706 = vpack.c.b16 %v2146, %v2130
    %v2707 = vpack.c.b16 %v2147, %v2131
    %v2708 = vpack.c.b16 %v2148, %v2132
    %v2709 = vpack.c.b16 %v2149, %v2133
    %v2710 = vpack.c.b16 %v2150, %v2134
    %v2711 = vpack.c.b16 %v2151, %v2135
    %v2712 = vpack.c.b16 %v2152, %v2136
    %v2713 = vpack.c.b16 %v2153, %v2137
    %v2714 = vpack.c.b16 %v2154, %v2138
    %v2715 = vpack.c.b16 %v2155, %v2139
    %v2716 = vpack.c.b16 %v2156, %v2140
    %v2717 = vpack.c.b16 %v2157, %v2141
    %v2718 = vpack.c.b16 %v2158, %v2142
    %v2719 = vpack.c.b16 %v2175, %v2159
    %v2720 = vpack.c.b16 %v2176, %v2160
    %v2721 = vpack.c.b16 %v2177, %v2161
    %v2722 = vpack.c.b16 %v2178, %v2162
    %v2723 = vpack.c.b16 %v2179, %v2163
    %v2724 = vpack.c.b16 %v2180, %v2164
    %v2725 = vpack.c.b16 %v2181, %v2165
    %v2726 = vpack.c.b16 %v2182, %v2166
    %v2727 = vpack.c.b16 %v2183, %v2167
    %v2728 = vpack.c.b16 %v2184, %v2168
    %v2729 = vpack.c.b16 %v2185, %v2169
    %v2730 = vpack.c.b16 %v2186, %v2170
    %v2731 = vpack.c.b16 %v2187, %v2171
    %v2732 = vpack.c.b16 %v2188, %v2172
    %v2733 = vpack.c.b16 %v2189, %v2173
    %v2734 = vpack.c.b16 %v2190, %v2174
    %v2735 = vpack.c.b16 %v2207, %v2191
    %v2736 = vpack.c.b16 %v2208, %v2192
    %v2737 = vpack.c.b16 %v2209, %v2193
    %v2738 = vpack.c.b16 %v2210, %v2194
    %v2739 = vpack.c.b16 %v2211, %v2195
    %v2740 = vpack.c.b16 %v2212, %v2196
    %v2741 = vpack.c.b16 %v2213, %v2197
    %v2742 = vpack.c.b16 %v2214, %v2198
    %v2743 = vpack.c.b16 %v2215, %v2199
    %v2744 = vpack.c.b16 %v2216, %v2200
    %v2745 = vpack.c.b16 %v2217, %v2201
    %v2746 = vpack.c.b16 %v2218, %v2202
    %v2747 = vpack.c.b16 %v2219, %v2203
    %v2748 = vpack.c.b16 %v2220, %v2204
    %v2749 = vpack.c.b16 %v2221, %v2205
    %v2750 = vpack.c.b16 %v2222, %v2206
    %v2751 = vpack.c.b16 %v2239, %v2223
    %v2752 = vpack.c.b16 %v2240, %v2224
    %v2753 = vpack.c.b16 %v2241, %v2225
    %v2754 = vpack.c.b16 %v2242, %v2226
    %v2755 = vpack.c.b16 %v2243, %v2227
    %v2756 = vpack.c.b16 %v2244, %v2228
    %v2757 = vpack.c.b16 %v2245, %v2229
    %v2758 = vpack.c.b16 %v2246, %v2230
    %v2759 = vpack.c.b16 %v2247, %v2231
    %v2760 = vpack.c.b16 %v2248, %v2232
    %v2761 = vpack.c.b16 %v2249, %v2233
    %v2762 = vpack.c.b16 %v2250, %v2234
    %v2763 = vpack.c.b16 %v2251, %v2235
    %v2764 = vpack.c.b16 %v2252, %v2236
    %v2765 = vpack.c.b16 %v2253, %v2237
    %v2766 = vpack.c.b16 %v2254, %v2238
    %3279 = vmatprep.subr.bf16.mxu0 %v2256
    %3280 = vmatpush1.bf16.msra.mxu0 %v2255
    %3281 = vmatprep.subr.bf16.mxu0 %v2272
    %3282 = vmatpush1.bf16.msra.mxu0 %v2271
    %3283 = vmatprep.subr.bf16.mxu0 %v2288
    %3284 = vmatpush1.bf16.msra.mxu0 %v2287
    %3285 = vmatprep.subr.bf16.mxu0 %v2304
    %3286 = vmatpush1.bf16.msra.mxu0 %v2303
    %3287 = vmatprep.subr.bf16.mxu0 %v2320
    %3288 = vmatpush1.bf16.msra.mxu0 %v2319
    %3289 = vmatprep.subr.bf16.mxu0 %v2336
    %3290 = vmatpush1.bf16.msra.mxu0 %v2335
    %3291 = vmatprep.subr.bf16.mxu0 %v2352
    %3292 = vmatpush1.bf16.msra.mxu0 %v2351
    %3293 = vmatprep.subr.bf16.mxu0 %v2368
    %3294 = vmatpush1.bf16.msra.mxu0 %v2367
    %3295 = vmatprep.subr.bf16.mxu0 %v2384
    %3296 = vmatpush1.bf16.msra.mxu0 %v2383
    %3297 = vmatprep.subr.bf16.mxu0 %v2400
    %3298 = vmatpush1.bf16.msra.mxu0 %v2399
    %3299 = vmatprep.subr.bf16.mxu0 %v2416
    %3300 = vmatpush1.bf16.msra.mxu0 %v2415
    %3301 = vmatprep.subr.bf16.mxu0 %v2432
    %3302 = vmatpush1.bf16.msra.mxu0 %v2431
    %3303 = vmatprep.subr.bf16.mxu0 %v2448
    %3304 = vmatpush1.bf16.msra.mxu0 %v2447
    %3305 = vmatprep.subr.bf16.mxu0 %v2464
    %3306 = vmatpush1.bf16.msra.mxu0 %v2463
    %3307 = vmatprep.subr.bf16.mxu0 %v2480
    %3308 = vmatpush1.bf16.msra.mxu0 %v2479
    %3309 = vmatprep.subr.bf16.mxu0 %v2496
    %3310 = vmatpush1.bf16.msra.mxu0 %v2495
    %3311 = vmatprep.mubr.bf16.mxu0 %v144
    %3312 = vmatmul.mubr.bf16.gmra.mrb[0].mxu0 %v143
    %v3313 = vpop.f32.mrb[0].mxu0
    %v3314 = vadd.f32 0.0, %v3313
    %v3315 = vpop.f32.mrb[0].mxu0
    %v3316 = vadd.f32 0.0, %v3315
    %v3317 = vpop.f32.mrb[0].mxu0
    %v3318 = vadd.f32 0.0, %v3317
    %v3319 = vpop.f32.mrb[0].mxu0
    %v3320 = vadd.f32 0.0, %v3319
    %3321 = vmatprep.mubr.bf16.mxu0 %v148
    %3322 = vmatmul.mubr.bf16.gmra.mrb[0].mxu0 %v147
    %v3323 = vpop.f32.mrb[0].mxu0
    %v3324 = vadd.f32 0.0, %v3323
    %v3325 = vpop.f32.mrb[0].mxu0
    %v3326 = vadd.f32 0.0, %v3325
    %v3327 = vpop.f32.mrb[0].mxu0
    %v3328 = vadd.f32 0.0, %v3327
    %v3329 = vpop.f32.mrb[0].mxu0
    %v3330 = vadd.f32 0.0, %v3329
    %3331 = vmatprep.mubr.bf16.mxu0 %v152
    %3332 = vmatmul.mubr.bf16.gmra.mrb[0].mxu0 %v151
    %v3333 = vpop.f32.mrb[0].mxu0
    %v3334 = vadd.f32 0.0, %v3333
    %v3335 = vpop.f32.mrb[0].mxu0
    %v3336 = vadd.f32 0.0, %v3335
    %v3337 = vpop.f32.mrb[0].mxu0
    %v3338 = vadd.f32 0.0, %v3337
    %v3339 = vpop.f32.mrb[0].mxu0
    %v3340 = vadd.f32 0.0, %v3339
    %3341 = vmatprep.mubr.bf16.mxu0 %v156
    %3342 = vmatmul.mubr.bf16.gmra.mrb[0].mxu0 %v155
    %v3343 = vpop.f32.mrb[0].mxu0
    %v3344 = vadd.f32 0.0, %v3343
    %v3345 = vpop.f32.mrb[0].mxu0
    %v3346 = vadd.f32 0.0, %v3345
    %v3347 = vpop.f32.mrb[0].mxu0
    %v3348 = vadd.f32 0.0, %v3347
    %v3349 = vpop.f32.mrb[0].mxu0
    %v3350 = vadd.f32 0.0, %v3349
    %3351 = vmatprep.mubr.bf16.mxu0 %v160
    %3352 = vmatmul.mubr.bf16.gmra.mrb[0].mxu0 %v159
    %v3353 = vpop.f32.mrb[0].mxu0
    %v3354 = vadd.f32 0.0, %v3353
    %v3355 = vpop.f32.mrb[0].mxu0
    %v3356 = vadd.f32 0.0, %v3355
    %v3357 = vpop.f32.mrb[0].mxu0
    %v3358 = vadd.f32 0.0, %v3357
    %v3359 = vpop.f32.mrb[0].mxu0
    %v3360 = vadd.f32 0.0, %v3359
    %3361 = vmatprep.mubr.bf16.mxu0 %v164
    %3362 = vmatmul.mubr.bf16.gmra.mrb[0].mxu0 %v163
    %v3363 = vpop.f32.mrb[0].mxu0
    %v3364 = vadd.f32 0.0, %v3363
    %v3365 = vpop.f32.mrb[0].mxu0
    %v3366 = vadd.f32 0.0, %v3365
    %v3367 = vpop.f32.mrb[0].mxu0
    %v3368 = vadd.f32 0.0, %v3367
    %v3369 = vpop.f32.mrb[0].mxu0
    %v3370 = vadd.f32 0.0, %v3369
    %3371 = vmatprep.mubr.bf16.mxu0 %v168
    %3372 = vmatmul.mubr.bf16.gmra.mrb[0].mxu0 %v167
    %v3373 = vpop.f32.mrb[0].mxu0
    %v3374 = vadd.f32 0.0, %v3373
    %v3375 = vpop.f32.mrb[0].mxu0
    %v3376 = vadd.f32 0.0, %v3375
    %v3377 = vpop.f32.mrb[0].mxu0
    %v3378 = vadd.f32 0.0, %v3377
    %v3379 = vpop.f32.mrb[0].mxu0
    %v3380 = vadd.f32 0.0, %v3379
    %3381 = vmatprep.mubr.bf16.mxu0 %v172
    %3382 = vmatmul.mubr.bf16.gmra.mrb[0].mxu0 %v171
    %v3383 = vpop.f32.mrb[0].mxu0
    %v3384 = vadd.f32 0.0, %v3383
    %v3385 = vpop.f32.mrb[0].mxu0
    %v3386 = vadd.f32 0.0, %v3385
    %v3387 = vpop.f32.mrb[0].mxu0
    %v3388 = vadd.f32 0.0, %v3387
    %v3389 = vpop.f32.mrb[0].mxu0
    %v3390 = vadd.f32 0.0, %v3389
    %3391 = vmatprep.mubr.bf16.mxu0 %v176
    %3392 = vmatmul.mubr.bf16.gmra.mrb[0].mxu0 %v175
    %v3393 = vpop.f32.mrb[0].mxu0
    %v3394 = vadd.f32 0.0, %v3393
    %v3395 = vpop.f32.mrb[0].mxu0
    %v3396 = vadd.f32 0.0, %v3395
    %v3397 = vpop.f32.mrb[0].mxu0
    %v3398 = vadd.f32 0.0, %v3397
    %v3399 = vpop.f32.mrb[0].mxu0
    %v3400 = vadd.f32 0.0, %v3399
    %3401 = vmatprep.mubr.bf16.mxu0 %v180
    %3402 = vmatmul.mubr.bf16.gmra.mrb[0].mxu0 %v179
    %v3403 = vpop.f32.mrb[0].mxu0
    %v3404 = vadd.f32 0.0, %v3403
    %v3405 = vpop.f32.mrb[0].mxu0
    %v3406 = vadd.f32 0.0, %v3405
    %v3407 = vpop.f32.mrb[0].mxu0
    %v3408 = vadd.f32 0.0, %v3407
    %v3409 = vpop.f32.mrb[0].mxu0
    %v3410 = vadd.f32 0.0, %v3409
    %3411 = vmatprep.mubr.bf16.mxu0 %v184
    %3412 = vmatmul.mubr.bf16.gmra.mrb[0].mxu0 %v183
    %v3413 = vpop.f32.mrb[0].mxu0
    %v3414 = vadd.f32 0.0, %v3413
    %v3415 = vpop.f32.mrb[0].mxu0
    %v3416 = vadd.f32 0.0, %v3415
    %v3417 = vpop.f32.mrb[0].mxu0
    %v3418 = vadd.f32 0.0, %v3417
    %v3419 = vpop.f32.mrb[0].mxu0
    %v3420 = vadd.f32 0.0, %v3419
    %3421 = vmatprep.mubr.bf16.mxu0 %v188
    %3422 = vmatmul.mubr.bf16.gmra.mrb[0].mxu0 %v187
    %v3423 = vpop.f32.mrb[0].mxu0
    %v3424 = vadd.f32 0.0, %v3423
    %v3425 = vpop.f32.mrb[0].mxu0
    %v3426 = vadd.f32 0.0, %v3425
    %v3427 = vpop.f32.mrb[0].mxu0
    %v3428 = vadd.f32 0.0, %v3427
    %v3429 = vpop.f32.mrb[0].mxu0
    %v3430 = vadd.f32 0.0, %v3429
    %3431 = vmatprep.mubr.bf16.mxu0 %v192
    %3432 = vmatmul.mubr.bf16.gmra.mrb[0].mxu0 %v191
    %v3433 = vpop.f32.mrb[0].mxu0
    %v3434 = vadd.f32 0.0, %v3433
    %v3435 = vpop.f32.mrb[0].mxu0
    %v3436 = vadd.f32 0.0, %v3435
    %v3437 = vpop.f32.mrb[0].mxu0
    %v3438 = vadd.f32 0.0, %v3437
    %v3439 = vpop.f32.mrb[0].mxu0
    %v3440 = vadd.f32 0.0, %v3439
    %3441 = vmatprep.mubr.bf16.mxu0 %v196
    %3442 = vmatmul.mubr.bf16.gmra.mrb[0].mxu0 %v195
    %v3443 = vpop.f32.mrb[0].mxu0
    %v3444 = vadd.f32 0.0, %v3443
    %v3445 = vpop.f32.mrb[0].mxu0
    %v3446 = vadd.f32 0.0, %v3445
    %v3447 = vpop.f32.mrb[0].mxu0
    %v3448 = vadd.f32 0.0, %v3447
    %v3449 = vpop.f32.mrb[0].mxu0
    %v3450 = vadd.f32 0.0, %v3449
    %3451 = vmatprep.mubr.bf16.mxu0 %v200
    %3452 = vmatmul.mubr.bf16.gmra.mrb[0].mxu0 %v199
    %v3453 = vpop.f32.mrb[0].mxu0
    %v3454 = vadd.f32 0.0, %v3453
    %v3455 = vpop.f32.mrb[0].mxu0
    %v3456 = vadd.f32 0.0, %v3455
    %v3457 = vpop.f32.mrb[0].mxu0
    %v3458 = vadd.f32 0.0, %v3457
    %v3459 = vpop.f32.mrb[0].mxu0
    %v3460 = vadd.f32 0.0, %v3459
    %3461 = vmatprep.mubr.bf16.mxu0 %v204
    %3462 = vmatmul.mubr.bf16.gmra.mrb[0].mxu0 %v203
    %v3463 = vpop.f32.mrb[0].mxu0
    %v3464 = vadd.f32 0.0, %v3463
    %v3465 = vpop.f32.mrb[0].mxu0
    %v3466 = vadd.f32 0.0, %v3465
    %v3467 = vpop.f32.mrb[0].mxu0
    %v3468 = vadd.f32 0.0, %v3467
    %v3469 = vpop.f32.mrb[0].mxu0
    %v3470 = vadd.f32 0.0, %v3469
    %3471 = vdwg.mxu0
    %3472 = vmatprep.subr.bf16.mxu0 %v2512
    %3473 = vmatpush1.bf16.msra.mxu0 %v2511
    %3474 = vmatprep.subr.bf16.mxu0 %v2528
    %3475 = vmatpush1.bf16.msra.mxu0 %v2527
    %3476 = vmatprep.subr.bf16.mxu0 %v2544
    %3477 = vmatpush1.bf16.msra.mxu0 %v2543
    %3478 = vmatprep.subr.bf16.mxu0 %v2560
    %3479 = vmatpush1.bf16.msra.mxu0 %v2559
    %3480 = vmatprep.subr.bf16.mxu0 %v2576
    %3481 = vmatpush1.bf16.msra.mxu0 %v2575
    %3482 = vmatprep.subr.bf16.mxu0 %v2592
    %3483 = vmatpush1.bf16.msra.mxu0 %v2591
    %3484 = vmatprep.subr.bf16.mxu0 %v2608
    %3485 = vmatpush1.bf16.msra.mxu0 %v2607
    %3486 = vmatprep.subr.bf16.mxu0 %v2624
    %3487 = vmatpush1.bf16.msra.mxu0 %v2623
    %3488 = vmatprep.subr.bf16.mxu0 %v2640
    %3489 = vmatpush1.bf16.msra.mxu0 %v2639
    %3490 = vmatprep.subr.bf16.mxu0 %v2656
    %3491 = vmatpush1.bf16.msra.mxu0 %v2655
    %3492 = vmatprep.subr.bf16.mxu0 %v2672
    %3493 = vmatpush1.bf16.msra.mxu0 %v2671
    %3494 = vmatprep.subr.bf16.mxu0 %v2688
    %3495 = vmatpush1.bf16.msra.mxu0 %v2687
    %3496 = vmatprep.subr.bf16.mxu0 %v2704
    %3497 = vmatpush1.bf16.msra.mxu0 %v2703
    %3498 = vmatprep.subr.bf16.mxu0 %v2720
    %3499 = vmatpush1.bf16.msra.mxu0 %v2719
    %3500 = vmatprep.subr.bf16.mxu0 %v2736
    %3501 = vmatpush1.bf16.msra.mxu0 %v2735
    %3502 = vmatprep.subr.bf16.mxu0 %v2752
    %3503 = vmatpush1.bf16.msra.mxu0 %v2751
    %3504 = vmatprep.mubr.bf16.mxu0 %v146
    %3505 = vmatmul.mubr.bf16.gmra.mrb[0].mxu0 %v145
    %v3506 = vpop.f32.mrb[0].mxu0
    %v3507 = vadd.f32 %v3314, %v3506
    %v3508 = vpop.f32.mrb[0].mxu0
    %v3509 = vadd.f32 %v3316, %v3508
    %v3510 = vpop.f32.mrb[0].mxu0
    %v3511 = vadd.f32 %v3318, %v3510
    %v3512 = vpop.f32.mrb[0].mxu0
    %v3513 = vadd.f32 %v3320, %v3512
    %3514 = vmatprep.mubr.bf16.mxu0 %v150
    %3515 = vmatmul.mubr.bf16.gmra.mrb[0].mxu0 %v149
    %v3516 = vpop.f32.mrb[0].mxu0
    %v3517 = vadd.f32 %v3324, %v3516
    %v3518 = vpop.f32.mrb[0].mxu0
    %v3519 = vadd.f32 %v3326, %v3518
    %v3520 = vpop.f32.mrb[0].mxu0
    %v3521 = vadd.f32 %v3328, %v3520
    %v3522 = vpop.f32.mrb[0].mxu0
    %v3523 = vadd.f32 %v3330, %v3522
    %3524 = vmatprep.mubr.bf16.mxu0 %v154
    %3525 = vmatmul.mubr.bf16.gmra.mrb[0].mxu0 %v153
    %v3526 = vpop.f32.mrb[0].mxu0
    %v3527 = vadd.f32 %v3334, %v3526
    %v3528 = vpop.f32.mrb[0].mxu0
    %v3529 = vadd.f32 %v3336, %v3528
    %v3530 = vpop.f32.mrb[0].mxu0
    %v3531 = vadd.f32 %v3338, %v3530
    %v3532 = vpop.f32.mrb[0].mxu0
    %v3533 = vadd.f32 %v3340, %v3532
    %3534 = vmatprep.mubr.bf16.mxu0 %v158
    %3535 = vmatmul.mubr.bf16.gmra.mrb[0].mxu0 %v157
    %v3536 = vpop.f32.mrb[0].mxu0
    %v3537 = vadd.f32 %v3344, %v3536
    %v3538 = vpop.f32.mrb[0].mxu0
    %v3539 = vadd.f32 %v3346, %v3538
    %v3540 = vpop.f32.mrb[0].mxu0
    %v3541 = vadd.f32 %v3348, %v3540
    %v3542 = vpop.f32.mrb[0].mxu0
    %v3543 = vadd.f32 %v3350, %v3542
    %3544 = vmatprep.mubr.bf16.mxu0 %v162
    %3545 = vmatmul.mubr.bf16.gmra.mrb[0].mxu0 %v161
    %v3546 = vpop.f32.mrb[0].mxu0
    %v3547 = vadd.f32 %v3354, %v3546
    %v3548 = vpop.f32.mrb[0].mxu0
    %v3549 = vadd.f32 %v3356, %v3548
    %v3550 = vpop.f32.mrb[0].mxu0
    %v3551 = vadd.f32 %v3358, %v3550
    %v3552 = vpop.f32.mrb[0].mxu0
    %v3553 = vadd.f32 %v3360, %v3552
    %3554 = vmatprep.mubr.bf16.mxu0 %v166
    %3555 = vmatmul.mubr.bf16.gmra.mrb[0].mxu0 %v165
    %v3556 = vpop.f32.mrb[0].mxu0
    %v3557 = vadd.f32 %v3364, %v3556
    %v3558 = vpop.f32.mrb[0].mxu0
    %v3559 = vadd.f32 %v3366, %v3558
    %v3560 = vpop.f32.mrb[0].mxu0
    %v3561 = vadd.f32 %v3368, %v3560
    %v3562 = vpop.f32.mrb[0].mxu0
    %v3563 = vadd.f32 %v3370, %v3562
    %3564 = vmatprep.mubr.bf16.mxu0 %v170
    %3565 = vmatmul.mubr.bf16.gmra.mrb[0].mxu0 %v169
    %v3566 = vpop.f32.mrb[0].mxu0
    %v3567 = vadd.f32 %v3374, %v3566
    %v3568 = vpop.f32.mrb[0].mxu0
    %v3569 = vadd.f32 %v3376, %v3568
    %v3570 = vpop.f32.mrb[0].mxu0
    %v3571 = vadd.f32 %v3378, %v3570
    %v3572 = vpop.f32.mrb[0].mxu0
    %v3573 = vadd.f32 %v3380, %v3572
    %3574 = vmatprep.mubr.bf16.mxu0 %v174
    %3575 = vmatmul.mubr.bf16.gmra.mrb[0].mxu0 %v173
    %v3576 = vpop.f32.mrb[0].mxu0
    %v3577 = vadd.f32 %v3384, %v3576
    %v3578 = vpop.f32.mrb[0].mxu0
    %v3579 = vadd.f32 %v3386, %v3578
    %v3580 = vpop.f32.mrb[0].mxu0
    %v3581 = vadd.f32 %v3388, %v3580
    %v3582 = vpop.f32.mrb[0].mxu0
    %v3583 = vadd.f32 %v3390, %v3582
    %3584 = vmatprep.mubr.bf16.mxu0 %v178
    %3585 = vmatmul.mubr.bf16.gmra.mrb[0].mxu0 %v177
    %v3586 = vpop.f32.mrb[0].mxu0
    %v3587 = vadd.f32 %v3394, %v3586
    %v3588 = vpop.f32.mrb[0].mxu0
    %v3589 = vadd.f32 %v3396, %v3588
    %v3590 = vpop.f32.mrb[0].mxu0
    %v3591 = vadd.f32 %v3398, %v3590
    %v3592 = vpop.f32.mrb[0].mxu0
    %v3593 = vadd.f32 %v3400, %v3592
    %3594 = vmatprep.mubr.bf16.mxu0 %v182
    %3595 = vmatmul.mubr.bf16.gmra.mrb[0].mxu0 %v181
    %v3596 = vpop.f32.mrb[0].mxu0
    %v3597 = vadd.f32 %v3404, %v3596
    %v3598 = vpop.f32.mrb[0].mxu0
    %v3599 = vadd.f32 %v3406, %v3598
    %v3600 = vpop.f32.mrb[0].mxu0
    %v3601 = vadd.f32 %v3408, %v3600
    %v3602 = vpop.f32.mrb[0].mxu0
    %v3603 = vadd.f32 %v3410, %v3602
    %3604 = vmatprep.mubr.bf16.mxu0 %v186
    %3605 = vmatmul.mubr.bf16.gmra.mrb[0].mxu0 %v185
    %v3606 = vpop.f32.mrb[0].mxu0
    %v3607 = vadd.f32 %v3414, %v3606
    %v3608 = vpop.f32.mrb[0].mxu0
    %v3609 = vadd.f32 %v3416, %v3608
    %v3610 = vpop.f32.mrb[0].mxu0
    %v3611 = vadd.f32 %v3418, %v3610
    %v3612 = vpop.f32.mrb[0].mxu0
    %v3613 = vadd.f32 %v3420, %v3612
    %3614 = vmatprep.mubr.bf16.mxu0 %v190
    %3615 = vmatmul.mubr.bf16.gmra.mrb[0].mxu0 %v189
    %v3616 = vpop.f32.mrb[0].mxu0
    %v3617 = vadd.f32 %v3424, %v3616
    %v3618 = vpop.f32.mrb[0].mxu0
    %v3619 = vadd.f32 %v3426, %v3618
    %v3620 = vpop.f32.mrb[0].mxu0
    %v3621 = vadd.f32 %v3428, %v3620
    %v3622 = vpop.f32.mrb[0].mxu0
    %v3623 = vadd.f32 %v3430, %v3622
    %3624 = vmatprep.mubr.bf16.mxu0 %v194
    %3625 = vmatmul.mubr.bf16.gmra.mrb[0].mxu0 %v193
    %v3626 = vpop.f32.mrb[0].mxu0
    %v3627 = vadd.f32 %v3434, %v3626
    %v3628 = vpop.f32.mrb[0].mxu0
    %v3629 = vadd.f32 %v3436, %v3628
    %v3630 = vpop.f32.mrb[0].mxu0
    %v3631 = vadd.f32 %v3438, %v3630
    %v3632 = vpop.f32.mrb[0].mxu0
    %v3633 = vadd.f32 %v3440, %v3632
    %3634 = vmatprep.mubr.bf16.mxu0 %v198
    %3635 = vmatmul.mubr.bf16.gmra.mrb[0].mxu0 %v197
    %v3636 = vpop.f32.mrb[0].mxu0
    %v3637 = vadd.f32 %v3444, %v3636
    %v3638 = vpop.f32.mrb[0].mxu0
    %v3639 = vadd.f32 %v3446, %v3638
    %v3640 = vpop.f32.mrb[0].mxu0
    %v3641 = vadd.f32 %v3448, %v3640
    %v3642 = vpop.f32.mrb[0].mxu0
    %v3643 = vadd.f32 %v3450, %v3642
    %3644 = vmatprep.mubr.bf16.mxu0 %v202
    %3645 = vmatmul.mubr.bf16.gmra.mrb[0].mxu0 %v201
    %v3646 = vpop.f32.mrb[0].mxu0
    %v3647 = vadd.f32 %v3454, %v3646
    %v3648 = vpop.f32.mrb[0].mxu0
    %v3649 = vadd.f32 %v3456, %v3648
    %v3650 = vpop.f32.mrb[0].mxu0
    %v3651 = vadd.f32 %v3458, %v3650
    %v3652 = vpop.f32.mrb[0].mxu0
    %v3653 = vadd.f32 %v3460, %v3652
    %3654 = vmatprep.mubr.bf16.mxu0 %v206
    %3655 = vmatmul.mubr.bf16.gmra.mrb[0].mxu0 %v205
    %v3656 = vpop.f32.mrb[0].mxu0
    %v3657 = vadd.f32 %v3464, %v3656
    %v3658 = vpop.f32.mrb[0].mxu0
    %v3659 = vadd.f32 %v3466, %v3658
    %v3660 = vpop.f32.mrb[0].mxu0
    %v3661 = vadd.f32 %v3468, %v3660
    %v3662 = vpop.f32.mrb[0].mxu0
    %v3663 = vadd.f32 %v3470, %v3662
    %3664 = vdwg.mxu0
    %3665 = vmatprep.subr.bf16.mxu0 %v2258
    %3666 = vmatpush1.bf16.msra.mxu0 %v2257
    %3667 = vmatprep.subr.bf16.mxu0 %v2274
    %3668 = vmatpush1.bf16.msra.mxu0 %v2273
    %3669 = vmatprep.subr.bf16.mxu0 %v2290
    %3670 = vmatpush1.bf16.msra.mxu0 %v2289
    %3671 = vmatprep.subr.bf16.mxu0 %v2306
    %3672 = vmatpush1.bf16.msra.mxu0 %v2305
    %3673 = vmatprep.subr.bf16.mxu0 %v2322
    %3674 = vmatpush1.bf16.msra.mxu0 %v2321
    %3675 = vmatprep.subr.bf16.mxu0 %v2338
    %3676 = vmatpush1.bf16.msra.mxu0 %v2337
    %3677 = vmatprep.subr.bf16.mxu0 %v2354
    %3678 = vmatpush1.bf16.msra.mxu0 %v2353
    %3679 = vmatprep.subr.bf16.mxu0 %v2370
    %3680 = vmatpush1.bf16.msra.mxu0 %v2369
    %3681 = vmatprep.subr.bf16.mxu0 %v2386
    %3682 = vmatpush1.bf16.msra.mxu0 %v2385
    %3683 = vmatprep.subr.bf16.mxu0 %v2402
    %3684 = vmatpush1.bf16.msra.mxu0 %v2401
    %3685 = vmatprep.subr.bf16.mxu0 %v2418
    %3686 = vmatpush1.bf16.msra.mxu0 %v2417
    %3687 = vmatprep.subr.bf16.mxu0 %v2434
    %3688 = vmatpush1.bf16.msra.mxu0 %v2433
    %3689 = vmatprep.subr.bf16.mxu0 %v2450
    %3690 = vmatpush1.bf16.msra.mxu0 %v2449
    %3691 = vmatprep.subr.bf16.mxu0 %v2466
    %3692 = vmatpush1.bf16.msra.mxu0 %v2465
    %3693 = vmatprep.subr.bf16.mxu0 %v2482
    %3694 = vmatpush1.bf16.msra.mxu0 %v2481
    %3695 = vmatprep.subr.bf16.mxu0 %v2498
    %3696 = vmatpush1.bf16.msra.mxu0 %v2497
    %3697 = vmatprep.mubr.bf16.mxu0 %v144
    %3698 = vmatmul.mubr.bf16.gmra.mrb[0].mxu0 %v143
    %v3699 = vpop.f32.mrb[0].mxu0
    %v3700 = vadd.f32 0.0, %v3699
    %v3701 = vpop.f32.mrb[0].mxu0
    %v3702 = vadd.f32 0.0, %v3701
    %v3703 = vpop.f32.mrb[0].mxu0
    %v3704 = vadd.f32 0.0, %v3703
    %v3705 = vpop.f32.mrb[0].mxu0
    %v3706 = vadd.f32 0.0, %v3705
    %3707 = vmatprep.mubr.bf16.mxu0 %v148
    %3708 = vmatmul.mubr.bf16.gmra.mrb[0].mxu0 %v147
    %v3709 = vpop.f32.mrb[0].mxu0
    %v3710 = vadd.f32 0.0, %v3709
    %v3711 = vpop.f32.mrb[0].mxu0
    %v3712 = vadd.f32 0.0, %v3711
    %v3713 = vpop.f32.mrb[0].mxu0
    %v3714 = vadd.f32 0.0, %v3713
    %v3715 = vpop.f32.mrb[0].mxu0
    %v3716 = vadd.f32 0.0, %v3715
    %3717 = vmatprep.mubr.bf16.mxu0 %v152
    %3718 = vmatmul.mubr.bf16.gmra.mrb[0].mxu0 %v151
    %v3719 = vpop.f32.mrb[0].mxu0
    %v3720 = vadd.f32 0.0, %v3719
    %v3721 = vpop.f32.mrb[0].mxu0
    %v3722 = vadd.f32 0.0, %v3721
    %v3723 = vpop.f32.mrb[0].mxu0
    %v3724 = vadd.f32 0.0, %v3723
    %v3725 = vpop.f32.mrb[0].mxu0
    %v3726 = vadd.f32 0.0, %v3725
    %3727 = vmatprep.mubr.bf16.mxu0 %v156
    %3728 = vmatmul.mubr.bf16.gmra.mrb[0].mxu0 %v155
    %v3729 = vpop.f32.mrb[0].mxu0
    %v3730 = vadd.f32 0.0, %v3729
    %v3731 = vpop.f32.mrb[0].mxu0
    %v3732 = vadd.f32 0.0, %v3731
    %v3733 = vpop.f32.mrb[0].mxu0
    %v3734 = vadd.f32 0.0, %v3733
    %v3735 = vpop.f32.mrb[0].mxu0
    %v3736 = vadd.f32 0.0, %v3735
    %3737 = vmatprep.mubr.bf16.mxu0 %v160
    %3738 = vmatmul.mubr.bf16.gmra.mrb[0].mxu0 %v159
    %v3739 = vpop.f32.mrb[0].mxu0
    %v3740 = vadd.f32 0.0, %v3739
    %v3741 = vpop.f32.mrb[0].mxu0
    %v3742 = vadd.f32 0.0, %v3741
    %v3743 = vpop.f32.mrb[0].mxu0
    %v3744 = vadd.f32 0.0, %v3743
    %v3745 = vpop.f32.mrb[0].mxu0
    %v3746 = vadd.f32 0.0, %v3745
    %3747 = vmatprep.mubr.bf16.mxu0 %v164
    %3748 = vmatmul.mubr.bf16.gmra.mrb[0].mxu0 %v163
    %v3749 = vpop.f32.mrb[0].mxu0
    %v3750 = vadd.f32 0.0, %v3749
    %v3751 = vpop.f32.mrb[0].mxu0
    %v3752 = vadd.f32 0.0, %v3751
    %v3753 = vpop.f32.mrb[0].mxu0
    %v3754 = vadd.f32 0.0, %v3753
    %v3755 = vpop.f32.mrb[0].mxu0
    %v3756 = vadd.f32 0.0, %v3755
    %3757 = vmatprep.mubr.bf16.mxu0 %v168
    %3758 = vmatmul.mubr.bf16.gmra.mrb[0].mxu0 %v167
    %v3759 = vpop.f32.mrb[0].mxu0
    %v3760 = vadd.f32 0.0, %v3759
    %v3761 = vpop.f32.mrb[0].mxu0
    %v3762 = vadd.f32 0.0, %v3761
    %v3763 = vpop.f32.mrb[0].mxu0
    %v3764 = vadd.f32 0.0, %v3763
    %v3765 = vpop.f32.mrb[0].mxu0
    %v3766 = vadd.f32 0.0, %v3765
    %3767 = vmatprep.mubr.bf16.mxu0 %v172
    %3768 = vmatmul.mubr.bf16.gmra.mrb[0].mxu0 %v171
    %v3769 = vpop.f32.mrb[0].mxu0
    %v3770 = vadd.f32 0.0, %v3769
    %v3771 = vpop.f32.mrb[0].mxu0
    %v3772 = vadd.f32 0.0, %v3771
    %v3773 = vpop.f32.mrb[0].mxu0
    %v3774 = vadd.f32 0.0, %v3773
    %v3775 = vpop.f32.mrb[0].mxu0
    %v3776 = vadd.f32 0.0, %v3775
    %3777 = vmatprep.mubr.bf16.mxu0 %v176
    %3778 = vmatmul.mubr.bf16.gmra.mrb[0].mxu0 %v175
    %v3779 = vpop.f32.mrb[0].mxu0
    %v3780 = vadd.f32 0.0, %v3779
    %v3781 = vpop.f32.mrb[0].mxu0
    %v3782 = vadd.f32 0.0, %v3781
    %v3783 = vpop.f32.mrb[0].mxu0
    %v3784 = vadd.f32 0.0, %v3783
    %v3785 = vpop.f32.mrb[0].mxu0
    %v3786 = vadd.f32 0.0, %v3785
    %3787 = vmatprep.mubr.bf16.mxu0 %v180
    %3788 = vmatmul.mubr.bf16.gmra.mrb[0].mxu0 %v179
    %v3789 = vpop.f32.mrb[0].mxu0
    %v3790 = vadd.f32 0.0, %v3789
    %v3791 = vpop.f32.mrb[0].mxu0
    %v3792 = vadd.f32 0.0, %v3791
    %v3793 = vpop.f32.mrb[0].mxu0
    %v3794 = vadd.f32 0.0, %v3793
    %v3795 = vpop.f32.mrb[0].mxu0
    %v3796 = vadd.f32 0.0, %v3795
    %3797 = vmatprep.mubr.bf16.mxu0 %v184
    %3798 = vmatmul.mubr.bf16.gmra.mrb[0].mxu0 %v183
    %v3799 = vpop.f32.mrb[0].mxu0
    %v3800 = vadd.f32 0.0, %v3799
    %v3801 = vpop.f32.mrb[0].mxu0
    %v3802 = vadd.f32 0.0, %v3801
    %v3803 = vpop.f32.mrb[0].mxu0
    %v3804 = vadd.f32 0.0, %v3803
    %v3805 = vpop.f32.mrb[0].mxu0
    %v3806 = vadd.f32 0.0, %v3805
    %3807 = vmatprep.mubr.bf16.mxu0 %v188
    %3808 = vmatmul.mubr.bf16.gmra.mrb[0].mxu0 %v187
    %v3809 = vpop.f32.mrb[0].mxu0
    %v3810 = vadd.f32 0.0, %v3809
    %v3811 = vpop.f32.mrb[0].mxu0
    %v3812 = vadd.f32 0.0, %v3811
    %v3813 = vpop.f32.mrb[0].mxu0
    %v3814 = vadd.f32 0.0, %v3813
    %v3815 = vpop.f32.mrb[0].mxu0
    %v3816 = vadd.f32 0.0, %v3815
    %3817 = vmatprep.mubr.bf16.mxu0 %v192
    %3818 = vmatmul.mubr.bf16.gmra.mrb[0].mxu0 %v191
    %v3819 = vpop.f32.mrb[0].mxu0
    %v3820 = vadd.f32 0.0, %v3819
    %v3821 = vpop.f32.mrb[0].mxu0
    %v3822 = vadd.f32 0.0, %v3821
    %v3823 = vpop.f32.mrb[0].mxu0
    %v3824 = vadd.f32 0.0, %v3823
    %v3825 = vpop.f32.mrb[0].mxu0
    %v3826 = vadd.f32 0.0, %v3825
    %3827 = vmatprep.mubr.bf16.mxu0 %v196
    %3828 = vmatmul.mubr.bf16.gmra.mrb[0].mxu0 %v195
    %v3829 = vpop.f32.mrb[0].mxu0
    %v3830 = vadd.f32 0.0, %v3829
    %v3831 = vpop.f32.mrb[0].mxu0
    %v3832 = vadd.f32 0.0, %v3831
    %v3833 = vpop.f32.mrb[0].mxu0
    %v3834 = vadd.f32 0.0, %v3833
    %v3835 = vpop.f32.mrb[0].mxu0
    %v3836 = vadd.f32 0.0, %v3835
    %3837 = vmatprep.mubr.bf16.mxu0 %v200
    %3838 = vmatmul.mubr.bf16.gmra.mrb[0].mxu0 %v199
    %v3839 = vpop.f32.mrb[0].mxu0
    %v3840 = vadd.f32 0.0, %v3839
    %v3841 = vpop.f32.mrb[0].mxu0
    %v3842 = vadd.f32 0.0, %v3841
    %v3843 = vpop.f32.mrb[0].mxu0
    %v3844 = vadd.f32 0.0, %v3843
    %v3845 = vpop.f32.mrb[0].mxu0
    %v3846 = vadd.f32 0.0, %v3845
    %3847 = vmatprep.mubr.bf16.mxu0 %v204
    %3848 = vmatmul.mubr.bf16.gmra.mrb[0].mxu0 %v203
    %v3849 = vpop.f32.mrb[0].mxu0
    %v3850 = vadd.f32 0.0, %v3849
    %v3851 = vpop.f32.mrb[0].mxu0
    %v3852 = vadd.f32 0.0, %v3851
    %v3853 = vpop.f32.mrb[0].mxu0
    %v3854 = vadd.f32 0.0, %v3853
    %v3855 = vpop.f32.mrb[0].mxu0
    %v3856 = vadd.f32 0.0, %v3855
    %3857 = vdwg.mxu0
    %3858 = vmatprep.subr.bf16.mxu0 %v2514
    %3859 = vmatpush1.bf16.msra.mxu0 %v2513
    %3860 = vmatprep.subr.bf16.mxu0 %v2530
    %3861 = vmatpush1.bf16.msra.mxu0 %v2529
    %3862 = vmatprep.subr.bf16.mxu0 %v2546
    %3863 = vmatpush1.bf16.msra.mxu0 %v2545
    %3864 = vmatprep.subr.bf16.mxu0 %v2562
    %3865 = vmatpush1.bf16.msra.mxu0 %v2561
    %3866 = vmatprep.subr.bf16.mxu0 %v2578
    %3867 = vmatpush1.bf16.msra.mxu0 %v2577
    %3868 = vmatprep.subr.bf16.mxu0 %v2594
    %3869 = vmatpush1.bf16.msra.mxu0 %v2593
    %3870 = vmatprep.subr.bf16.mxu0 %v2610
    %3871 = vmatpush1.bf16.msra.mxu0 %v2609
    %3872 = vmatprep.subr.bf16.mxu0 %v2626
    %3873 = vmatpush1.bf16.msra.mxu0 %v2625
    %3874 = vmatprep.subr.bf16.mxu0 %v2642
    %3875 = vmatpush1.bf16.msra.mxu0 %v2641
    %3876 = vmatprep.subr.bf16.mxu0 %v2658
    %3877 = vmatpush1.bf16.msra.mxu0 %v2657
    %3878 = vmatprep.subr.bf16.mxu0 %v2674
    %3879 = vmatpush1.bf16.msra.mxu0 %v2673
    %3880 = vmatprep.subr.bf16.mxu0 %v2690
    %3881 = vmatpush1.bf16.msra.mxu0 %v2689
    %3882 = vmatprep.subr.bf16.mxu0 %v2706
    %3883 = vmatpush1.bf16.msra.mxu0 %v2705
    %3884 = vmatprep.subr.bf16.mxu0 %v2722
    %3885 = vmatpush1.bf16.msra.mxu0 %v2721
    %3886 = vmatprep.subr.bf16.mxu0 %v2738
    %3887 = vmatpush1.bf16.msra.mxu0 %v2737
    %3888 = vmatprep.subr.bf16.mxu0 %v2754
    %3889 = vmatpush1.bf16.msra.mxu0 %v2753
    %3890 = vmatprep.mubr.bf16.mxu0 %v146
    %3891 = vmatmul.mubr.bf16.gmra.mrb[0].mxu0 %v145
    %v3892 = vpop.f32.mrb[0].mxu0
    %v3893 = vadd.f32 %v3700, %v3892
    %v3894 = vpop.f32.mrb[0].mxu0
    %v3895 = vadd.f32 %v3702, %v3894
    %v3896 = vpop.f32.mrb[0].mxu0
    %v3897 = vadd.f32 %v3704, %v3896
    %v3898 = vpop.f32.mrb[0].mxu0
    %v3899 = vadd.f32 %v3706, %v3898
    %3900 = vmatprep.mubr.bf16.mxu0 %v150
    %3901 = vmatmul.mubr.bf16.gmra.mrb[0].mxu0 %v149
    %v3902 = vpop.f32.mrb[0].mxu0
    %v3903 = vadd.f32 %v3710, %v3902
    %v3904 = vpop.f32.mrb[0].mxu0
    %v3905 = vadd.f32 %v3712, %v3904
    %v3906 = vpop.f32.mrb[0].mxu0
    %v3907 = vadd.f32 %v3714, %v3906
    %v3908 = vpop.f32.mrb[0].mxu0
    %v3909 = vadd.f32 %v3716, %v3908
    %3910 = vmatprep.mubr.bf16.mxu0 %v154
    %3911 = vmatmul.mubr.bf16.gmra.mrb[0].mxu0 %v153
    %v3912 = vpop.f32.mrb[0].mxu0
    %v3913 = vadd.f32 %v3720, %v3912
    %v3914 = vpop.f32.mrb[0].mxu0
    %v3915 = vadd.f32 %v3722, %v3914
    %v3916 = vpop.f32.mrb[0].mxu0
    %v3917 = vadd.f32 %v3724, %v3916
    %v3918 = vpop.f32.mrb[0].mxu0
    %v3919 = vadd.f32 %v3726, %v3918
    %3920 = vmatprep.mubr.bf16.mxu0 %v158
    %3921 = vmatmul.mubr.bf16.gmra.mrb[0].mxu0 %v157
    %v3922 = vpop.f32.mrb[0].mxu0
    %v3923 = vadd.f32 %v3730, %v3922
    %v3924 = vpop.f32.mrb[0].mxu0
    %v3925 = vadd.f32 %v3732, %v3924
    %v3926 = vpop.f32.mrb[0].mxu0
    %v3927 = vadd.f32 %v3734, %v3926
    %v3928 = vpop.f32.mrb[0].mxu0
    %v3929 = vadd.f32 %v3736, %v3928
    %3930 = vmatprep.mubr.bf16.mxu0 %v162
    %3931 = vmatmul.mubr.bf16.gmra.mrb[0].mxu0 %v161
    %v3932 = vpop.f32.mrb[0].mxu0
    %v3933 = vadd.f32 %v3740, %v3932
    %v3934 = vpop.f32.mrb[0].mxu0
    %v3935 = vadd.f32 %v3742, %v3934
    %v3936 = vpop.f32.mrb[0].mxu0
    %v3937 = vadd.f32 %v3744, %v3936
    %v3938 = vpop.f32.mrb[0].mxu0
    %v3939 = vadd.f32 %v3746, %v3938
    %3940 = vmatprep.mubr.bf16.mxu0 %v166
    %3941 = vmatmul.mubr.bf16.gmra.mrb[0].mxu0 %v165
    %v3942 = vpop.f32.mrb[0].mxu0
    %v3943 = vadd.f32 %v3750, %v3942
    %v3944 = vpop.f32.mrb[0].mxu0
    %v3945 = vadd.f32 %v3752, %v3944
    %v3946 = vpop.f32.mrb[0].mxu0
    %v3947 = vadd.f32 %v3754, %v3946
    %v3948 = vpop.f32.mrb[0].mxu0
    %v3949 = vadd.f32 %v3756, %v3948
    %3950 = vmatprep.mubr.bf16.mxu0 %v170
    %3951 = vmatmul.mubr.bf16.gmra.mrb[0].mxu0 %v169
    %v3952 = vpop.f32.mrb[0].mxu0
    %v3953 = vadd.f32 %v3760, %v3952
    %v3954 = vpop.f32.mrb[0].mxu0
    %v3955 = vadd.f32 %v3762, %v3954
    %v3956 = vpop.f32.mrb[0].mxu0
    %v3957 = vadd.f32 %v3764, %v3956
    %v3958 = vpop.f32.mrb[0].mxu0
    %v3959 = vadd.f32 %v3766, %v3958
    %3960 = vmatprep.mubr.bf16.mxu0 %v174
    %3961 = vmatmul.mubr.bf16.gmra.mrb[0].mxu0 %v173
    %v3962 = vpop.f32.mrb[0].mxu0
    %v3963 = vadd.f32 %v3770, %v3962
    %v3964 = vpop.f32.mrb[0].mxu0
    %v3965 = vadd.f32 %v3772, %v3964
    %v3966 = vpop.f32.mrb[0].mxu0
    %v3967 = vadd.f32 %v3774, %v3966
    %v3968 = vpop.f32.mrb[0].mxu0
    %v3969 = vadd.f32 %v3776, %v3968
    %3970 = vmatprep.mubr.bf16.mxu0 %v178
    %3971 = vmatmul.mubr.bf16.gmra.mrb[0].mxu0 %v177
    %v3972 = vpop.f32.mrb[0].mxu0
    %v3973 = vadd.f32 %v3780, %v3972
    %v3974 = vpop.f32.mrb[0].mxu0
    %v3975 = vadd.f32 %v3782, %v3974
    %v3976 = vpop.f32.mrb[0].mxu0
    %v3977 = vadd.f32 %v3784, %v3976
    %v3978 = vpop.f32.mrb[0].mxu0
    %v3979 = vadd.f32 %v3786, %v3978
    %3980 = vmatprep.mubr.bf16.mxu0 %v182
    %3981 = vmatmul.mubr.bf16.gmra.mrb[0].mxu0 %v181
    %v3982 = vpop.f32.mrb[0].mxu0
    %v3983 = vadd.f32 %v3790, %v3982
    %v3984 = vpop.f32.mrb[0].mxu0
    %v3985 = vadd.f32 %v3792, %v3984
    %v3986 = vpop.f32.mrb[0].mxu0
    %v3987 = vadd.f32 %v3794, %v3986
    %v3988 = vpop.f32.mrb[0].mxu0
    %v3989 = vadd.f32 %v3796, %v3988
    %3990 = vmatprep.mubr.bf16.mxu0 %v186
    %3991 = vmatmul.mubr.bf16.gmra.mrb[0].mxu0 %v185
    %v3992 = vpop.f32.mrb[0].mxu0
    %v3993 = vadd.f32 %v3800, %v3992
    %v3994 = vpop.f32.mrb[0].mxu0
    %v3995 = vadd.f32 %v3802, %v3994
    %v3996 = vpop.f32.mrb[0].mxu0
    %v3997 = vadd.f32 %v3804, %v3996
    %v3998 = vpop.f32.mrb[0].mxu0
    %v3999 = vadd.f32 %v3806, %v3998
    %4000 = vmatprep.mubr.bf16.mxu0 %v190
    %4001 = vmatmul.mubr.bf16.gmra.mrb[0].mxu0 %v189
    %v4002 = vpop.f32.mrb[0].mxu0
    %v4003 = vadd.f32 %v3810, %v4002
    %v4004 = vpop.f32.mrb[0].mxu0
    %v4005 = vadd.f32 %v3812, %v4004
    %v4006 = vpop.f32.mrb[0].mxu0
    %v4007 = vadd.f32 %v3814, %v4006
    %v4008 = vpop.f32.mrb[0].mxu0
    %v4009 = vadd.f32 %v3816, %v4008
    %4010 = vmatprep.mubr.bf16.mxu0 %v194
    %4011 = vmatmul.mubr.bf16.gmra.mrb[0].mxu0 %v193
    %v4012 = vpop.f32.mrb[0].mxu0
    %v4013 = vadd.f32 %v3820, %v4012
    %v4014 = vpop.f32.mrb[0].mxu0
    %v4015 = vadd.f32 %v3822, %v4014
    %v4016 = vpop.f32.mrb[0].mxu0
    %v4017 = vadd.f32 %v3824, %v4016
    %v4018 = vpop.f32.mrb[0].mxu0
    %v4019 = vadd.f32 %v3826, %v4018
    %4020 = vmatprep.mubr.bf16.mxu0 %v198
    %4021 = vmatmul.mubr.bf16.gmra.mrb[0].mxu0 %v197
    %v4022 = vpop.f32.mrb[0].mxu0
    %v4023 = vadd.f32 %v3830, %v4022
    %v4024 = vpop.f32.mrb[0].mxu0
    %v4025 = vadd.f32 %v3832, %v4024
    %v4026 = vpop.f32.mrb[0].mxu0
    %v4027 = vadd.f32 %v3834, %v4026
    %v4028 = vpop.f32.mrb[0].mxu0
    %v4029 = vadd.f32 %v3836, %v4028
    %4030 = vmatprep.mubr.bf16.mxu0 %v202
    %4031 = vmatmul.mubr.bf16.gmra.mrb[0].mxu0 %v201
    %v4032 = vpop.f32.mrb[0].mxu0
    %v4033 = vadd.f32 %v3840, %v4032
    %v4034 = vpop.f32.mrb[0].mxu0
    %v4035 = vadd.f32 %v3842, %v4034
    %v4036 = vpop.f32.mrb[0].mxu0
    %v4037 = vadd.f32 %v3844, %v4036
    %v4038 = vpop.f32.mrb[0].mxu0
    %v4039 = vadd.f32 %v3846, %v4038
    %4040 = vmatprep.mubr.bf16.mxu0 %v206
    %4041 = vmatmul.mubr.bf16.gmra.mrb[0].mxu0 %v205
    %v4042 = vpop.f32.mrb[0].mxu0
    %v4043 = vadd.f32 %v3850, %v4042
    %v4044 = vpop.f32.mrb[0].mxu0
    %v4045 = vadd.f32 %v3852, %v4044
    %v4046 = vpop.f32.mrb[0].mxu0
    %v4047 = vadd.f32 %v3854, %v4046
    %v4048 = vpop.f32.mrb[0].mxu0
    %v4049 = vadd.f32 %v3856, %v4048
    %4050 = vdwg.mxu0
    %4051 = vmatprep.subr.bf16.mxu0 %v2260
    %4052 = vmatpush1.bf16.msra.mxu0 %v2259
    %4053 = vmatprep.subr.bf16.mxu0 %v2276
    %4054 = vmatpush1.bf16.msra.mxu0 %v2275
    %4055 = vmatprep.subr.bf16.mxu0 %v2292
    %4056 = vmatpush1.bf16.msra.mxu0 %v2291
    %4057 = vmatprep.subr.bf16.mxu0 %v2308
    %4058 = vmatpush1.bf16.msra.mxu0 %v2307
    %4059 = vmatprep.subr.bf16.mxu0 %v2324
    %4060 = vmatpush1.bf16.msra.mxu0 %v2323
    %4061 = vmatprep.subr.bf16.mxu0 %v2340
    %4062 = vmatpush1.bf16.msra.mxu0 %v2339
    %4063 = vmatprep.subr.bf16.mxu0 %v2356
    %4064 = vmatpush1.bf16.msra.mxu0 %v2355
    %4065 = vmatprep.subr.bf16.mxu0 %v2372
    %4066 = vmatpush1.bf16.msra.mxu0 %v2371
    %4067 = vmatprep.subr.bf16.mxu0 %v2388
    %4068 = vmatpush1.bf16.msra.mxu0 %v2387
    %4069 = vmatprep.subr.bf16.mxu0 %v2404
    %4070 = vmatpush1.bf16.msra.mxu0 %v2403
    %4071 = vmatprep.subr.bf16.mxu0 %v2420
    %4072 = vmatpush1.bf16.msra.mxu0 %v2419
    %4073 = vmatprep.subr.bf16.mxu0 %v2436
    %4074 = vmatpush1.bf16.msra.mxu0 %v2435
    %4075 = vmatprep.subr.bf16.mxu0 %v2452
    %4076 = vmatpush1.bf16.msra.mxu0 %v2451
    %4077 = vmatprep.subr.bf16.mxu0 %v2468
    %4078 = vmatpush1.bf16.msra.mxu0 %v2467
    %4079 = vmatprep.subr.bf16.mxu0 %v2484
    %4080 = vmatpush1.bf16.msra.mxu0 %v2483
    %4081 = vmatprep.subr.bf16.mxu0 %v2500
    %4082 = vmatpush1.bf16.msra.mxu0 %v2499
    %4083 = vmatprep.mubr.bf16.mxu0 %v144
    %4084 = vmatmul.mubr.bf16.gmra.mrb[0].mxu0 %v143
    %v4085 = vpop.f32.mrb[0].mxu0
    %v4086 = vadd.f32 0.0, %v4085
    %v4087 = vpop.f32.mrb[0].mxu0
    %v4088 = vadd.f32 0.0, %v4087
    %v4089 = vpop.f32.mrb[0].mxu0
    %v4090 = vadd.f32 0.0, %v4089
    %v4091 = vpop.f32.mrb[0].mxu0
    %v4092 = vadd.f32 0.0, %v4091
    %4093 = vmatprep.mubr.bf16.mxu0 %v148
    %4094 = vmatmul.mubr.bf16.gmra.mrb[0].mxu0 %v147
    %v4095 = vpop.f32.mrb[0].mxu0
    %v4096 = vadd.f32 0.0, %v4095
    %v4097 = vpop.f32.mrb[0].mxu0
    %v4098 = vadd.f32 0.0, %v4097
    %v4099 = vpop.f32.mrb[0].mxu0
    %v4100 = vadd.f32 0.0, %v4099
    %v4101 = vpop.f32.mrb[0].mxu0
    %v4102 = vadd.f32 0.0, %v4101
    %4103 = vmatprep.mubr.bf16.mxu0 %v152
    %4104 = vmatmul.mubr.bf16.gmra.mrb[0].mxu0 %v151
    %v4105 = vpop.f32.mrb[0].mxu0
    %v4106 = vadd.f32 0.0, %v4105
    %v4107 = vpop.f32.mrb[0].mxu0
    %v4108 = vadd.f32 0.0, %v4107
    %v4109 = vpop.f32.mrb[0].mxu0
    %v4110 = vadd.f32 0.0, %v4109
    %v4111 = vpop.f32.mrb[0].mxu0
    %v4112 = vadd.f32 0.0, %v4111
    %4113 = vmatprep.mubr.bf16.mxu0 %v156
    %4114 = vmatmul.mubr.bf16.gmra.mrb[0].mxu0 %v155
    %v4115 = vpop.f32.mrb[0].mxu0
    %v4116 = vadd.f32 0.0, %v4115
    %v4117 = vpop.f32.mrb[0].mxu0
    %v4118 = vadd.f32 0.0, %v4117
    %v4119 = vpop.f32.mrb[0].mxu0
    %v4120 = vadd.f32 0.0, %v4119
    %v4121 = vpop.f32.mrb[0].mxu0
    %v4122 = vadd.f32 0.0, %v4121
    %4123 = vmatprep.mubr.bf16.mxu0 %v160
    %4124 = vmatmul.mubr.bf16.gmra.mrb[0].mxu0 %v159
    %v4125 = vpop.f32.mrb[0].mxu0
    %v4126 = vadd.f32 0.0, %v4125
    %v4127 = vpop.f32.mrb[0].mxu0
    %v4128 = vadd.f32 0.0, %v4127
    %v4129 = vpop.f32.mrb[0].mxu0
    %v4130 = vadd.f32 0.0, %v4129
    %v4131 = vpop.f32.mrb[0].mxu0
    %v4132 = vadd.f32 0.0, %v4131
    %4133 = vmatprep.mubr.bf16.mxu0 %v164
    %4134 = vmatmul.mubr.bf16.gmra.mrb[0].mxu0 %v163
    %v4135 = vpop.f32.mrb[0].mxu0
    %v4136 = vadd.f32 0.0, %v4135
    %v4137 = vpop.f32.mrb[0].mxu0
    %v4138 = vadd.f32 0.0, %v4137
    %v4139 = vpop.f32.mrb[0].mxu0
    %v4140 = vadd.f32 0.0, %v4139
    %v4141 = vpop.f32.mrb[0].mxu0
    %v4142 = vadd.f32 0.0, %v4141
    %4143 = vmatprep.mubr.bf16.mxu0 %v168
    %4144 = vmatmul.mubr.bf16.gmra.mrb[0].mxu0 %v167
    %v4145 = vpop.f32.mrb[0].mxu0
    %v4146 = vadd.f32 0.0, %v4145
    %v4147 = vpop.f32.mrb[0].mxu0
    %v4148 = vadd.f32 0.0, %v4147
    %v4149 = vpop.f32.mrb[0].mxu0
    %v4150 = vadd.f32 0.0, %v4149
    %v4151 = vpop.f32.mrb[0].mxu0
    %v4152 = vadd.f32 0.0, %v4151
    %4153 = vmatprep.mubr.bf16.mxu0 %v172
    %4154 = vmatmul.mubr.bf16.gmra.mrb[0].mxu0 %v171
    %v4155 = vpop.f32.mrb[0].mxu0
    %v4156 = vadd.f32 0.0, %v4155
    %v4157 = vpop.f32.mrb[0].mxu0
    %v4158 = vadd.f32 0.0, %v4157
    %v4159 = vpop.f32.mrb[0].mxu0
    %v4160 = vadd.f32 0.0, %v4159
    %v4161 = vpop.f32.mrb[0].mxu0
    %v4162 = vadd.f32 0.0, %v4161
    %4163 = vmatprep.mubr.bf16.mxu0 %v176
    %4164 = vmatmul.mubr.bf16.gmra.mrb[0].mxu0 %v175
    %v4165 = vpop.f32.mrb[0].mxu0
    %v4166 = vadd.f32 0.0, %v4165
    %v4167 = vpop.f32.mrb[0].mxu0
    %v4168 = vadd.f32 0.0, %v4167
    %v4169 = vpop.f32.mrb[0].mxu0
    %v4170 = vadd.f32 0.0, %v4169
    %v4171 = vpop.f32.mrb[0].mxu0
    %v4172 = vadd.f32 0.0, %v4171
    %4173 = vmatprep.mubr.bf16.mxu0 %v180
    %4174 = vmatmul.mubr.bf16.gmra.mrb[0].mxu0 %v179
    %v4175 = vpop.f32.mrb[0].mxu0
    %v4176 = vadd.f32 0.0, %v4175
    %v4177 = vpop.f32.mrb[0].mxu0
    %v4178 = vadd.f32 0.0, %v4177
    %v4179 = vpop.f32.mrb[0].mxu0
    %v4180 = vadd.f32 0.0, %v4179
    %v4181 = vpop.f32.mrb[0].mxu0
    %v4182 = vadd.f32 0.0, %v4181
    %4183 = vmatprep.mubr.bf16.mxu0 %v184
    %4184 = vmatmul.mubr.bf16.gmra.mrb[0].mxu0 %v183
    %v4185 = vpop.f32.mrb[0].mxu0
    %v4186 = vadd.f32 0.0, %v4185
    %v4187 = vpop.f32.mrb[0].mxu0
    %v4188 = vadd.f32 0.0, %v4187
    %v4189 = vpop.f32.mrb[0].mxu0
    %v4190 = vadd.f32 0.0, %v4189
    %v4191 = vpop.f32.mrb[0].mxu0
    %v4192 = vadd.f32 0.0, %v4191
    %4193 = vmatprep.mubr.bf16.mxu0 %v188
    %4194 = vmatmul.mubr.bf16.gmra.mrb[0].mxu0 %v187
    %v4195 = vpop.f32.mrb[0].mxu0
    %v4196 = vadd.f32 0.0, %v4195
    %v4197 = vpop.f32.mrb[0].mxu0
    %v4198 = vadd.f32 0.0, %v4197
    %v4199 = vpop.f32.mrb[0].mxu0
    %v4200 = vadd.f32 0.0, %v4199
    %v4201 = vpop.f32.mrb[0].mxu0
    %v4202 = vadd.f32 0.0, %v4201
    %4203 = vmatprep.mubr.bf16.mxu0 %v192
    %4204 = vmatmul.mubr.bf16.gmra.mrb[0].mxu0 %v191
    %v4205 = vpop.f32.mrb[0].mxu0
    %v4206 = vadd.f32 0.0, %v4205
    %v4207 = vpop.f32.mrb[0].mxu0
    %v4208 = vadd.f32 0.0, %v4207
    %v4209 = vpop.f32.mrb[0].mxu0
    %v4210 = vadd.f32 0.0, %v4209
    %v4211 = vpop.f32.mrb[0].mxu0
    %v4212 = vadd.f32 0.0, %v4211
    %4213 = vmatprep.mubr.bf16.mxu0 %v196
    %4214 = vmatmul.mubr.bf16.gmra.mrb[0].mxu0 %v195
    %v4215 = vpop.f32.mrb[0].mxu0
    %v4216 = vadd.f32 0.0, %v4215
    %v4217 = vpop.f32.mrb[0].mxu0
    %v4218 = vadd.f32 0.0, %v4217
    %v4219 = vpop.f32.mrb[0].mxu0
    %v4220 = vadd.f32 0.0, %v4219
    %v4221 = vpop.f32.mrb[0].mxu0
    %v4222 = vadd.f32 0.0, %v4221
    %4223 = vmatprep.mubr.bf16.mxu0 %v200
    %4224 = vmatmul.mubr.bf16.gmra.mrb[0].mxu0 %v199
    %v4225 = vpop.f32.mrb[0].mxu0
    %v4226 = vadd.f32 0.0, %v4225
    %v4227 = vpop.f32.mrb[0].mxu0
    %v4228 = vadd.f32 0.0, %v4227
    %v4229 = vpop.f32.mrb[0].mxu0
    %v4230 = vadd.f32 0.0, %v4229
    %v4231 = vpop.f32.mrb[0].mxu0
    %v4232 = vadd.f32 0.0, %v4231
    %4233 = vmatprep.mubr.bf16.mxu0 %v204
    %4234 = vmatmul.mubr.bf16.gmra.mrb[0].mxu0 %v203
    %v4235 = vpop.f32.mrb[0].mxu0
    %v4236 = vadd.f32 0.0, %v4235
    %v4237 = vpop.f32.mrb[0].mxu0
    %v4238 = vadd.f32 0.0, %v4237
    %v4239 = vpop.f32.mrb[0].mxu0
    %v4240 = vadd.f32 0.0, %v4239
    %v4241 = vpop.f32.mrb[0].mxu0
    %v4242 = vadd.f32 0.0, %v4241
    %4243 = vdwg.mxu0
    %4244 = vmatprep.subr.bf16.mxu0 %v2516
    %4245 = vmatpush1.bf16.msra.mxu0 %v2515
    %4246 = vmatprep.subr.bf16.mxu0 %v2532
    %4247 = vmatpush1.bf16.msra.mxu0 %v2531
    %4248 = vmatprep.subr.bf16.mxu0 %v2548
    %4249 = vmatpush1.bf16.msra.mxu0 %v2547
    %4250 = vmatprep.subr.bf16.mxu0 %v2564
    %4251 = vmatpush1.bf16.msra.mxu0 %v2563
    %4252 = vmatprep.subr.bf16.mxu0 %v2580
    %4253 = vmatpush1.bf16.msra.mxu0 %v2579
    %4254 = vmatprep.subr.bf16.mxu0 %v2596
    %4255 = vmatpush1.bf16.msra.mxu0 %v2595
    %4256 = vmatprep.subr.bf16.mxu0 %v2612
    %4257 = vmatpush1.bf16.msra.mxu0 %v2611
    %4258 = vmatprep.subr.bf16.mxu0 %v2628
    %4259 = vmatpush1.bf16.msra.mxu0 %v2627
    %4260 = vmatprep.subr.bf16.mxu0 %v2644
    %4261 = vmatpush1.bf16.msra.mxu0 %v2643
    %4262 = vmatprep.subr.bf16.mxu0 %v2660
    %4263 = vmatpush1.bf16.msra.mxu0 %v2659
    %4264 = vmatprep.subr.bf16.mxu0 %v2676
    %4265 = vmatpush1.bf16.msra.mxu0 %v2675
    %4266 = vmatprep.subr.bf16.mxu0 %v2692
    %4267 = vmatpush1.bf16.msra.mxu0 %v2691
    %4268 = vmatprep.subr.bf16.mxu0 %v2708
    %4269 = vmatpush1.bf16.msra.mxu0 %v2707
    %4270 = vmatprep.subr.bf16.mxu0 %v2724
    %4271 = vmatpush1.bf16.msra.mxu0 %v2723
    %4272 = vmatprep.subr.bf16.mxu0 %v2740
    %4273 = vmatpush1.bf16.msra.mxu0 %v2739
    %4274 = vmatprep.subr.bf16.mxu0 %v2756
    %4275 = vmatpush1.bf16.msra.mxu0 %v2755
    %4276 = vmatprep.mubr.bf16.mxu0 %v146
    %4277 = vmatmul.mubr.bf16.gmra.mrb[0].mxu0 %v145
    %v4278 = vpop.f32.mrb[0].mxu0
    %v4279 = vadd.f32 %v4086, %v4278
    %v4280 = vpop.f32.mrb[0].mxu0
    %v4281 = vadd.f32 %v4088, %v4280
    %v4282 = vpop.f32.mrb[0].mxu0
    %v4283 = vadd.f32 %v4090, %v4282
    %v4284 = vpop.f32.mrb[0].mxu0
    %v4285 = vadd.f32 %v4092, %v4284
    %4286 = vmatprep.mubr.bf16.mxu0 %v150
    %4287 = vmatmul.mubr.bf16.gmra.mrb[0].mxu0 %v149
    %v4288 = vpop.f32.mrb[0].mxu0
    %v4289 = vadd.f32 %v4096, %v4288
    %v4290 = vpop.f32.mrb[0].mxu0
    %v4291 = vadd.f32 %v4098, %v4290
    %v4292 = vpop.f32.mrb[0].mxu0
    %v4293 = vadd.f32 %v4100, %v4292
    %v4294 = vpop.f32.mrb[0].mxu0
    %v4295 = vadd.f32 %v4102, %v4294
    %4296 = vmatprep.mubr.bf16.mxu0 %v154
    %4297 = vmatmul.mubr.bf16.gmra.mrb[0].mxu0 %v153
    %v4298 = vpop.f32.mrb[0].mxu0
    %v4299 = vadd.f32 %v4106, %v4298
    %v4300 = vpop.f32.mrb[0].mxu0
    %v4301 = vadd.f32 %v4108, %v4300
    %v4302 = vpop.f32.mrb[0].mxu0
    %v4303 = vadd.f32 %v4110, %v4302
    %v4304 = vpop.f32.mrb[0].mxu0
    %v4305 = vadd.f32 %v4112, %v4304
    %4306 = vmatprep.mubr.bf16.mxu0 %v158
    %4307 = vmatmul.mubr.bf16.gmra.mrb[0].mxu0 %v157
    %v4308 = vpop.f32.mrb[0].mxu0
    %v4309 = vadd.f32 %v4116, %v4308
    %v4310 = vpop.f32.mrb[0].mxu0
    %v4311 = vadd.f32 %v4118, %v4310
    %v4312 = vpop.f32.mrb[0].mxu0
    %v4313 = vadd.f32 %v4120, %v4312
    %v4314 = vpop.f32.mrb[0].mxu0
    %v4315 = vadd.f32 %v4122, %v4314
    %4316 = vmatprep.mubr.bf16.mxu0 %v162
    %4317 = vmatmul.mubr.bf16.gmra.mrb[0].mxu0 %v161
    %v4318 = vpop.f32.mrb[0].mxu0
    %v4319 = vadd.f32 %v4126, %v4318
    %v4320 = vpop.f32.mrb[0].mxu0
    %v4321 = vadd.f32 %v4128, %v4320
    %v4322 = vpop.f32.mrb[0].mxu0
    %v4323 = vadd.f32 %v4130, %v4322
    %v4324 = vpop.f32.mrb[0].mxu0
    %v4325 = vadd.f32 %v4132, %v4324
    %4326 = vmatprep.mubr.bf16.mxu0 %v166
    %4327 = vmatmul.mubr.bf16.gmra.mrb[0].mxu0 %v165
    %v4328 = vpop.f32.mrb[0].mxu0
    %v4329 = vadd.f32 %v4136, %v4328
    %v4330 = vpop.f32.mrb[0].mxu0
    %v4331 = vadd.f32 %v4138, %v4330
    %v4332 = vpop.f32.mrb[0].mxu0
    %v4333 = vadd.f32 %v4140, %v4332
    %v4334 = vpop.f32.mrb[0].mxu0
    %v4335 = vadd.f32 %v4142, %v4334
    %4336 = vmatprep.mubr.bf16.mxu0 %v170
    %4337 = vmatmul.mubr.bf16.gmra.mrb[0].mxu0 %v169
    %v4338 = vpop.f32.mrb[0].mxu0
    %v4339 = vadd.f32 %v4146, %v4338
    %v4340 = vpop.f32.mrb[0].mxu0
    %v4341 = vadd.f32 %v4148, %v4340
    %v4342 = vpop.f32.mrb[0].mxu0
    %v4343 = vadd.f32 %v4150, %v4342
    %v4344 = vpop.f32.mrb[0].mxu0
    %v4345 = vadd.f32 %v4152, %v4344
    %4346 = vmatprep.mubr.bf16.mxu0 %v174
    %4347 = vmatmul.mubr.bf16.gmra.mrb[0].mxu0 %v173
    %v4348 = vpop.f32.mrb[0].mxu0
    %v4349 = vadd.f32 %v4156, %v4348
    %v4350 = vpop.f32.mrb[0].mxu0
    %v4351 = vadd.f32 %v4158, %v4350
    %v4352 = vpop.f32.mrb[0].mxu0
    %v4353 = vadd.f32 %v4160, %v4352
    %v4354 = vpop.f32.mrb[0].mxu0
    %v4355 = vadd.f32 %v4162, %v4354
    %4356 = vmatprep.mubr.bf16.mxu0 %v178
    %4357 = vmatmul.mubr.bf16.gmra.mrb[0].mxu0 %v177
    %v4358 = vpop.f32.mrb[0].mxu0
    %v4359 = vadd.f32 %v4166, %v4358
    %v4360 = vpop.f32.mrb[0].mxu0
    %v4361 = vadd.f32 %v4168, %v4360
    %v4362 = vpop.f32.mrb[0].mxu0
    %v4363 = vadd.f32 %v4170, %v4362
    %v4364 = vpop.f32.mrb[0].mxu0
    %v4365 = vadd.f32 %v4172, %v4364
    %4366 = vmatprep.mubr.bf16.mxu0 %v182
    %4367 = vmatmul.mubr.bf16.gmra.mrb[0].mxu0 %v181
    %v4368 = vpop.f32.mrb[0].mxu0
    %v4369 = vadd.f32 %v4176, %v4368
    %v4370 = vpop.f32.mrb[0].mxu0
    %v4371 = vadd.f32 %v4178, %v4370
    %v4372 = vpop.f32.mrb[0].mxu0
    %v4373 = vadd.f32 %v4180, %v4372
    %v4374 = vpop.f32.mrb[0].mxu0
    %v4375 = vadd.f32 %v4182, %v4374
    %4376 = vmatprep.mubr.bf16.mxu0 %v186
    %4377 = vmatmul.mubr.bf16.gmra.mrb[0].mxu0 %v185
    %v4378 = vpop.f32.mrb[0].mxu0
    %v4379 = vadd.f32 %v4186, %v4378
    %v4380 = vpop.f32.mrb[0].mxu0
    %v4381 = vadd.f32 %v4188, %v4380
    %v4382 = vpop.f32.mrb[0].mxu0
    %v4383 = vadd.f32 %v4190, %v4382
    %v4384 = vpop.f32.mrb[0].mxu0
    %v4385 = vadd.f32 %v4192, %v4384
    %4386 = vmatprep.mubr.bf16.mxu0 %v190
    %4387 = vmatmul.mubr.bf16.gmra.mrb[0].mxu0 %v189
    %v4388 = vpop.f32.mrb[0].mxu0
    %v4389 = vadd.f32 %v4196, %v4388
    %v4390 = vpop.f32.mrb[0].mxu0
    %v4391 = vadd.f32 %v4198, %v4390
    %v4392 = vpop.f32.mrb[0].mxu0
    %v4393 = vadd.f32 %v4200, %v4392
    %v4394 = vpop.f32.mrb[0].mxu0
    %v4395 = vadd.f32 %v4202, %v4394
    %4396 = vmatprep.mubr.bf16.mxu0 %v194
    %4397 = vmatmul.mubr.bf16.gmra.mrb[0].mxu0 %v193
    %v4398 = vpop.f32.mrb[0].mxu0
    %v4399 = vadd.f32 %v4206, %v4398
    %v4400 = vpop.f32.mrb[0].mxu0
    %v4401 = vadd.f32 %v4208, %v4400
    %v4402 = vpop.f32.mrb[0].mxu0
    %v4403 = vadd.f32 %v4210, %v4402
    %v4404 = vpop.f32.mrb[0].mxu0
    %v4405 = vadd.f32 %v4212, %v4404
    %4406 = vmatprep.mubr.bf16.mxu0 %v198
    %4407 = vmatmul.mubr.bf16.gmra.mrb[0].mxu0 %v197
    %v4408 = vpop.f32.mrb[0].mxu0
    %v4409 = vadd.f32 %v4216, %v4408
    %v4410 = vpop.f32.mrb[0].mxu0
    %v4411 = vadd.f32 %v4218, %v4410
    %v4412 = vpop.f32.mrb[0].mxu0
    %v4413 = vadd.f32 %v4220, %v4412
    %v4414 = vpop.f32.mrb[0].mxu0
    %v4415 = vadd.f32 %v4222, %v4414
    %4416 = vmatprep.mubr.bf16.mxu0 %v202
    %4417 = vmatmul.mubr.bf16.gmra.mrb[0].mxu0 %v201
    %v4418 = vpop.f32.mrb[0].mxu0
    %v4419 = vadd.f32 %v4226, %v4418
    %v4420 = vpop.f32.mrb[0].mxu0
    %v4421 = vadd.f32 %v4228, %v4420
    %v4422 = vpop.f32.mrb[0].mxu0
    %v4423 = vadd.f32 %v4230, %v4422
    %v4424 = vpop.f32.mrb[0].mxu0
    %v4425 = vadd.f32 %v4232, %v4424
    %4426 = vmatprep.mubr.bf16.mxu0 %v206
    %4427 = vmatmul.mubr.bf16.gmra.mrb[0].mxu0 %v205
    %v4428 = vpop.f32.mrb[0].mxu0
    %v4429 = vadd.f32 %v4236, %v4428
    %v4430 = vpop.f32.mrb[0].mxu0
    %v4431 = vadd.f32 %v4238, %v4430
    %v4432 = vpop.f32.mrb[0].mxu0
    %v4433 = vadd.f32 %v4240, %v4432
    %v4434 = vpop.f32.mrb[0].mxu0
    %v4435 = vadd.f32 %v4242, %v4434
    %4436 = vdwg.mxu0
    %4437 = vmatprep.subr.bf16.mxu0 %v2262
    %4438 = vmatpush1.bf16.msra.mxu0 %v2261
    %4439 = vmatprep.subr.bf16.mxu0 %v2278
    %4440 = vmatpush1.bf16.msra.mxu0 %v2277
    %4441 = vmatprep.subr.bf16.mxu0 %v2294
    %4442 = vmatpush1.bf16.msra.mxu0 %v2293
    %4443 = vmatprep.subr.bf16.mxu0 %v2310
    %4444 = vmatpush1.bf16.msra.mxu0 %v2309
    %4445 = vmatprep.subr.bf16.mxu0 %v2326
    %4446 = vmatpush1.bf16.msra.mxu0 %v2325
    %4447 = vmatprep.subr.bf16.mxu0 %v2342
    %4448 = vmatpush1.bf16.msra.mxu0 %v2341
    %4449 = vmatprep.subr.bf16.mxu0 %v2358
    %4450 = vmatpush1.bf16.msra.mxu0 %v2357
    %4451 = vmatprep.subr.bf16.mxu0 %v2374
    %4452 = vmatpush1.bf16.msra.mxu0 %v2373
    %4453 = vmatprep.subr.bf16.mxu0 %v2390
    %4454 = vmatpush1.bf16.msra.mxu0 %v2389
    %4455 = vmatprep.subr.bf16.mxu0 %v2406
    %4456 = vmatpush1.bf16.msra.mxu0 %v2405
    %4457 = vmatprep.subr.bf16.mxu0 %v2422
    %4458 = vmatpush1.bf16.msra.mxu0 %v2421
    %4459 = vmatprep.subr.bf16.mxu0 %v2438
    %4460 = vmatpush1.bf16.msra.mxu0 %v2437
    %4461 = vmatprep.subr.bf16.mxu0 %v2454
    %4462 = vmatpush1.bf16.msra.mxu0 %v2453
    %4463 = vmatprep.subr.bf16.mxu0 %v2470
    %4464 = vmatpush1.bf16.msra.mxu0 %v2469
    %4465 = vmatprep.subr.bf16.mxu0 %v2486
    %4466 = vmatpush1.bf16.msra.mxu0 %v2485
    %4467 = vmatprep.subr.bf16.mxu0 %v2502
    %4468 = vmatpush1.bf16.msra.mxu0 %v2501
    %4469 = vmatprep.mubr.bf16.mxu0 %v144
    %4470 = vmatmul.mubr.bf16.gmra.mrb[0].mxu0 %v143
    %v4471 = vpop.f32.mrb[0].mxu0
    %v4472 = vadd.f32 0.0, %v4471
    %v4473 = vpop.f32.mrb[0].mxu0
    %v4474 = vadd.f32 0.0, %v4473
    %v4475 = vpop.f32.mrb[0].mxu0
    %v4476 = vadd.f32 0.0, %v4475
    %v4477 = vpop.f32.mrb[0].mxu0
    %v4478 = vadd.f32 0.0, %v4477
    %4479 = vmatprep.mubr.bf16.mxu0 %v148
    %4480 = vmatmul.mubr.bf16.gmra.mrb[0].mxu0 %v147
    %v4481 = vpop.f32.mrb[0].mxu0
    %v4482 = vadd.f32 0.0, %v4481
    %v4483 = vpop.f32.mrb[0].mxu0
    %v4484 = vadd.f32 0.0, %v4483
    %v4485 = vpop.f32.mrb[0].mxu0
    %v4486 = vadd.f32 0.0, %v4485
    %v4487 = vpop.f32.mrb[0].mxu0
    %v4488 = vadd.f32 0.0, %v4487
    %4489 = vmatprep.mubr.bf16.mxu0 %v152
    %4490 = vmatmul.mubr.bf16.gmra.mrb[0].mxu0 %v151
    %v4491 = vpop.f32.mrb[0].mxu0
    %v4492 = vadd.f32 0.0, %v4491
    %v4493 = vpop.f32.mrb[0].mxu0
    %v4494 = vadd.f32 0.0, %v4493
    %v4495 = vpop.f32.mrb[0].mxu0
    %v4496 = vadd.f32 0.0, %v4495
    %v4497 = vpop.f32.mrb[0].mxu0
    %v4498 = vadd.f32 0.0, %v4497
    %4499 = vmatprep.mubr.bf16.mxu0 %v156
    %4500 = vmatmul.mubr.bf16.gmra.mrb[0].mxu0 %v155
    %v4501 = vpop.f32.mrb[0].mxu0
    %v4502 = vadd.f32 0.0, %v4501
    %v4503 = vpop.f32.mrb[0].mxu0
    %v4504 = vadd.f32 0.0, %v4503
    %v4505 = vpop.f32.mrb[0].mxu0
    %v4506 = vadd.f32 0.0, %v4505
    %v4507 = vpop.f32.mrb[0].mxu0
    %v4508 = vadd.f32 0.0, %v4507
    %4509 = vmatprep.mubr.bf16.mxu0 %v160
    %4510 = vmatmul.mubr.bf16.gmra.mrb[0].mxu0 %v159
    %v4511 = vpop.f32.mrb[0].mxu0
    %v4512 = vadd.f32 0.0, %v4511
    %v4513 = vpop.f32.mrb[0].mxu0
    %v4514 = vadd.f32 0.0, %v4513
    %v4515 = vpop.f32.mrb[0].mxu0
    %v4516 = vadd.f32 0.0, %v4515
    %v4517 = vpop.f32.mrb[0].mxu0
    %v4518 = vadd.f32 0.0, %v4517
    %4519 = vmatprep.mubr.bf16.mxu0 %v164
    %4520 = vmatmul.mubr.bf16.gmra.mrb[0].mxu0 %v163
    %v4521 = vpop.f32.mrb[0].mxu0
    %v4522 = vadd.f32 0.0, %v4521
    %v4523 = vpop.f32.mrb[0].mxu0
    %v4524 = vadd.f32 0.0, %v4523
    %v4525 = vpop.f32.mrb[0].mxu0
    %v4526 = vadd.f32 0.0, %v4525
    %v4527 = vpop.f32.mrb[0].mxu0
    %v4528 = vadd.f32 0.0, %v4527
    %4529 = vmatprep.mubr.bf16.mxu0 %v168
    %4530 = vmatmul.mubr.bf16.gmra.mrb[0].mxu0 %v167
    %v4531 = vpop.f32.mrb[0].mxu0
    %v4532 = vadd.f32 0.0, %v4531
    %v4533 = vpop.f32.mrb[0].mxu0
    %v4534 = vadd.f32 0.0, %v4533
    %v4535 = vpop.f32.mrb[0].mxu0
    %v4536 = vadd.f32 0.0, %v4535
    %v4537 = vpop.f32.mrb[0].mxu0
    %v4538 = vadd.f32 0.0, %v4537
    %4539 = vmatprep.mubr.bf16.mxu0 %v172
    %4540 = vmatmul.mubr.bf16.gmra.mrb[0].mxu0 %v171
    %v4541 = vpop.f32.mrb[0].mxu0
    %v4542 = vadd.f32 0.0, %v4541
    %v4543 = vpop.f32.mrb[0].mxu0
    %v4544 = vadd.f32 0.0, %v4543
    %v4545 = vpop.f32.mrb[0].mxu0
    %v4546 = vadd.f32 0.0, %v4545
    %v4547 = vpop.f32.mrb[0].mxu0
    %v4548 = vadd.f32 0.0, %v4547
    %4549 = vmatprep.mubr.bf16.mxu0 %v176
    %4550 = vmatmul.mubr.bf16.gmra.mrb[0].mxu0 %v175
    %v4551 = vpop.f32.mrb[0].mxu0
    %v4552 = vadd.f32 0.0, %v4551
    %v4553 = vpop.f32.mrb[0].mxu0
    %v4554 = vadd.f32 0.0, %v4553
    %v4555 = vpop.f32.mrb[0].mxu0
    %v4556 = vadd.f32 0.0, %v4555
    %v4557 = vpop.f32.mrb[0].mxu0
    %v4558 = vadd.f32 0.0, %v4557
    %4559 = vmatprep.mubr.bf16.mxu0 %v180
    %4560 = vmatmul.mubr.bf16.gmra.mrb[0].mxu0 %v179
    %v4561 = vpop.f32.mrb[0].mxu0
    %v4562 = vadd.f32 0.0, %v4561
    %v4563 = vpop.f32.mrb[0].mxu0
    %v4564 = vadd.f32 0.0, %v4563
    %v4565 = vpop.f32.mrb[0].mxu0
    %v4566 = vadd.f32 0.0, %v4565
    %v4567 = vpop.f32.mrb[0].mxu0
    %v4568 = vadd.f32 0.0, %v4567
    %4569 = vmatprep.mubr.bf16.mxu0 %v184
    %4570 = vmatmul.mubr.bf16.gmra.mrb[0].mxu0 %v183
    %v4571 = vpop.f32.mrb[0].mxu0
    %v4572 = vadd.f32 0.0, %v4571
    %v4573 = vpop.f32.mrb[0].mxu0
    %v4574 = vadd.f32 0.0, %v4573
    %v4575 = vpop.f32.mrb[0].mxu0
    %v4576 = vadd.f32 0.0, %v4575
    %v4577 = vpop.f32.mrb[0].mxu0
    %v4578 = vadd.f32 0.0, %v4577
    %4579 = vmatprep.mubr.bf16.mxu0 %v188
    %4580 = vmatmul.mubr.bf16.gmra.mrb[0].mxu0 %v187
    %v4581 = vpop.f32.mrb[0].mxu0
    %v4582 = vadd.f32 0.0, %v4581
    %v4583 = vpop.f32.mrb[0].mxu0
    %v4584 = vadd.f32 0.0, %v4583
    %v4585 = vpop.f32.mrb[0].mxu0
    %v4586 = vadd.f32 0.0, %v4585
    %v4587 = vpop.f32.mrb[0].mxu0
    %v4588 = vadd.f32 0.0, %v4587
    %4589 = vmatprep.mubr.bf16.mxu0 %v192
    %4590 = vmatmul.mubr.bf16.gmra.mrb[0].mxu0 %v191
    %v4591 = vpop.f32.mrb[0].mxu0
    %v4592 = vadd.f32 0.0, %v4591
    %v4593 = vpop.f32.mrb[0].mxu0
    %v4594 = vadd.f32 0.0, %v4593
    %v4595 = vpop.f32.mrb[0].mxu0
    %v4596 = vadd.f32 0.0, %v4595
    %v4597 = vpop.f32.mrb[0].mxu0
    %v4598 = vadd.f32 0.0, %v4597
    %4599 = vmatprep.mubr.bf16.mxu0 %v196
    %4600 = vmatmul.mubr.bf16.gmra.mrb[0].mxu0 %v195
    %v4601 = vpop.f32.mrb[0].mxu0
    %v4602 = vadd.f32 0.0, %v4601
    %v4603 = vpop.f32.mrb[0].mxu0
    %v4604 = vadd.f32 0.0, %v4603
    %v4605 = vpop.f32.mrb[0].mxu0
    %v4606 = vadd.f32 0.0, %v4605
    %v4607 = vpop.f32.mrb[0].mxu0
    %v4608 = vadd.f32 0.0, %v4607
    %4609 = vmatprep.mubr.bf16.mxu0 %v200
    %4610 = vmatmul.mubr.bf16.gmra.mrb[0].mxu0 %v199
    %v4611 = vpop.f32.mrb[0].mxu0
    %v4612 = vadd.f32 0.0, %v4611
    %v4613 = vpop.f32.mrb[0].mxu0
    %v4614 = vadd.f32 0.0, %v4613
    %v4615 = vpop.f32.mrb[0].mxu0
    %v4616 = vadd.f32 0.0, %v4615
    %v4617 = vpop.f32.mrb[0].mxu0
    %v4618 = vadd.f32 0.0, %v4617
    %4619 = vmatprep.mubr.bf16.mxu0 %v204
    %4620 = vmatmul.mubr.bf16.gmra.mrb[0].mxu0 %v203
    %v4621 = vpop.f32.mrb[0].mxu0
    %v4622 = vadd.f32 0.0, %v4621
    %v4623 = vpop.f32.mrb[0].mxu0
    %v4624 = vadd.f32 0.0, %v4623
    %v4625 = vpop.f32.mrb[0].mxu0
    %v4626 = vadd.f32 0.0, %v4625
    %v4627 = vpop.f32.mrb[0].mxu0
    %v4628 = vadd.f32 0.0, %v4627
    %4629 = vdwg.mxu0
    %4630 = vmatprep.subr.bf16.mxu0 %v2518
    %4631 = vmatpush1.bf16.msra.mxu0 %v2517
    %4632 = vmatprep.subr.bf16.mxu0 %v2534
    %4633 = vmatpush1.bf16.msra.mxu0 %v2533
    %4634 = vmatprep.subr.bf16.mxu0 %v2550
    %4635 = vmatpush1.bf16.msra.mxu0 %v2549
    %4636 = vmatprep.subr.bf16.mxu0 %v2566
    %4637 = vmatpush1.bf16.msra.mxu0 %v2565
    %4638 = vmatprep.subr.bf16.mxu0 %v2582
    %4639 = vmatpush1.bf16.msra.mxu0 %v2581
    %4640 = vmatprep.subr.bf16.mxu0 %v2598
    %4641 = vmatpush1.bf16.msra.mxu0 %v2597
    %4642 = vmatprep.subr.bf16.mxu0 %v2614
    %4643 = vmatpush1.bf16.msra.mxu0 %v2613
    %4644 = vmatprep.subr.bf16.mxu0 %v2630
    %4645 = vmatpush1.bf16.msra.mxu0 %v2629
    %4646 = vmatprep.subr.bf16.mxu0 %v2646
    %4647 = vmatpush1.bf16.msra.mxu0 %v2645
    %4648 = vmatprep.subr.bf16.mxu0 %v2662
    %4649 = vmatpush1.bf16.msra.mxu0 %v2661
    %4650 = vmatprep.subr.bf16.mxu0 %v2678
    %4651 = vmatpush1.bf16.msra.mxu0 %v2677
    %4652 = vmatprep.subr.bf16.mxu0 %v2694
    %4653 = vmatpush1.bf16.msra.mxu0 %v2693
    %4654 = vmatprep.subr.bf16.mxu0 %v2710
    %4655 = vmatpush1.bf16.msra.mxu0 %v2709
    %4656 = vmatprep.subr.bf16.mxu0 %v2726
    %4657 = vmatpush1.bf16.msra.mxu0 %v2725
    %4658 = vmatprep.subr.bf16.mxu0 %v2742
    %4659 = vmatpush1.bf16.msra.mxu0 %v2741
    %4660 = vmatprep.subr.bf16.mxu0 %v2758
    %4661 = vmatpush1.bf16.msra.mxu0 %v2757
    %4662 = vmatprep.mubr.bf16.mxu0 %v146
    %4663 = vmatmul.mubr.bf16.gmra.mrb[0].mxu0 %v145
    %v4664 = vpop.f32.mrb[0].mxu0
    %v4665 = vadd.f32 %v4472, %v4664
    %v4666 = vpop.f32.mrb[0].mxu0
    %v4667 = vadd.f32 %v4474, %v4666
    %v4668 = vpop.f32.mrb[0].mxu0
    %v4669 = vadd.f32 %v4476, %v4668
    %v4670 = vpop.f32.mrb[0].mxu0
    %v4671 = vadd.f32 %v4478, %v4670
    %4672 = vmatprep.mubr.bf16.mxu0 %v150
    %4673 = vmatmul.mubr.bf16.gmra.mrb[0].mxu0 %v149
    %v4674 = vpop.f32.mrb[0].mxu0
    %v4675 = vadd.f32 %v4482, %v4674
    %v4676 = vpop.f32.mrb[0].mxu0
    %v4677 = vadd.f32 %v4484, %v4676
    %v4678 = vpop.f32.mrb[0].mxu0
    %v4679 = vadd.f32 %v4486, %v4678
    %v4680 = vpop.f32.mrb[0].mxu0
    %v4681 = vadd.f32 %v4488, %v4680
    %4682 = vmatprep.mubr.bf16.mxu0 %v154
    %4683 = vmatmul.mubr.bf16.gmra.mrb[0].mxu0 %v153
    %v4684 = vpop.f32.mrb[0].mxu0
    %v4685 = vadd.f32 %v4492, %v4684
    %v4686 = vpop.f32.mrb[0].mxu0
    %v4687 = vadd.f32 %v4494, %v4686
    %v4688 = vpop.f32.mrb[0].mxu0
    %v4689 = vadd.f32 %v4496, %v4688
    %v4690 = vpop.f32.mrb[0].mxu0
    %v4691 = vadd.f32 %v4498, %v4690
    %4692 = vmatprep.mubr.bf16.mxu0 %v158
    %4693 = vmatmul.mubr.bf16.gmra.mrb[0].mxu0 %v157
    %v4694 = vpop.f32.mrb[0].mxu0
    %v4695 = vadd.f32 %v4502, %v4694
    %v4696 = vpop.f32.mrb[0].mxu0
    %v4697 = vadd.f32 %v4504, %v4696
    %v4698 = vpop.f32.mrb[0].mxu0
    %v4699 = vadd.f32 %v4506, %v4698
    %v4700 = vpop.f32.mrb[0].mxu0
    %v4701 = vadd.f32 %v4508, %v4700
    %4702 = vmatprep.mubr.bf16.mxu0 %v162
    %4703 = vmatmul.mubr.bf16.gmra.mrb[0].mxu0 %v161
    %v4704 = vpop.f32.mrb[0].mxu0
    %v4705 = vadd.f32 %v4512, %v4704
    %v4706 = vpop.f32.mrb[0].mxu0
    %v4707 = vadd.f32 %v4514, %v4706
    %v4708 = vpop.f32.mrb[0].mxu0
    %v4709 = vadd.f32 %v4516, %v4708
    %v4710 = vpop.f32.mrb[0].mxu0
    %v4711 = vadd.f32 %v4518, %v4710
    %4712 = vmatprep.mubr.bf16.mxu0 %v166
    %4713 = vmatmul.mubr.bf16.gmra.mrb[0].mxu0 %v165
    %v4714 = vpop.f32.mrb[0].mxu0
    %v4715 = vadd.f32 %v4522, %v4714
    %v4716 = vpop.f32.mrb[0].mxu0
    %v4717 = vadd.f32 %v4524, %v4716
    %v4718 = vpop.f32.mrb[0].mxu0
    %v4719 = vadd.f32 %v4526, %v4718
    %v4720 = vpop.f32.mrb[0].mxu0
    %v4721 = vadd.f32 %v4528, %v4720
    %4722 = vmatprep.mubr.bf16.mxu0 %v170
    %4723 = vmatmul.mubr.bf16.gmra.mrb[0].mxu0 %v169
    %v4724 = vpop.f32.mrb[0].mxu0
    %v4725 = vadd.f32 %v4532, %v4724
    %v4726 = vpop.f32.mrb[0].mxu0
    %v4727 = vadd.f32 %v4534, %v4726
    %v4728 = vpop.f32.mrb[0].mxu0
    %v4729 = vadd.f32 %v4536, %v4728
    %v4730 = vpop.f32.mrb[0].mxu0
    %v4731 = vadd.f32 %v4538, %v4730
    %4732 = vmatprep.mubr.bf16.mxu0 %v174
    %4733 = vmatmul.mubr.bf16.gmra.mrb[0].mxu0 %v173
    %v4734 = vpop.f32.mrb[0].mxu0
    %v4735 = vadd.f32 %v4542, %v4734
    %v4736 = vpop.f32.mrb[0].mxu0
    %v4737 = vadd.f32 %v4544, %v4736
    %v4738 = vpop.f32.mrb[0].mxu0
    %v4739 = vadd.f32 %v4546, %v4738
    %v4740 = vpop.f32.mrb[0].mxu0
    %v4741 = vadd.f32 %v4548, %v4740
    %4742 = vmatprep.mubr.bf16.mxu0 %v178
    %4743 = vmatmul.mubr.bf16.gmra.mrb[0].mxu0 %v177
    %v4744 = vpop.f32.mrb[0].mxu0
    %v4745 = vadd.f32 %v4552, %v4744
    %v4746 = vpop.f32.mrb[0].mxu0
    %v4747 = vadd.f32 %v4554, %v4746
    %v4748 = vpop.f32.mrb[0].mxu0
    %v4749 = vadd.f32 %v4556, %v4748
    %v4750 = vpop.f32.mrb[0].mxu0
    %v4751 = vadd.f32 %v4558, %v4750
    %4752 = vmatprep.mubr.bf16.mxu0 %v182
    %4753 = vmatmul.mubr.bf16.gmra.mrb[0].mxu0 %v181
    %v4754 = vpop.f32.mrb[0].mxu0
    %v4755 = vadd.f32 %v4562, %v4754
    %v4756 = vpop.f32.mrb[0].mxu0
    %v4757 = vadd.f32 %v4564, %v4756
    %v4758 = vpop.f32.mrb[0].mxu0
    %v4759 = vadd.f32 %v4566, %v4758
    %v4760 = vpop.f32.mrb[0].mxu0
    %v4761 = vadd.f32 %v4568, %v4760
    %4762 = vmatprep.mubr.bf16.mxu0 %v186
    %4763 = vmatmul.mubr.bf16.gmra.mrb[0].mxu0 %v185
    %v4764 = vpop.f32.mrb[0].mxu0
    %v4765 = vadd.f32 %v4572, %v4764
    %v4766 = vpop.f32.mrb[0].mxu0
    %v4767 = vadd.f32 %v4574, %v4766
    %v4768 = vpop.f32.mrb[0].mxu0
    %v4769 = vadd.f32 %v4576, %v4768
    %v4770 = vpop.f32.mrb[0].mxu0
    %v4771 = vadd.f32 %v4578, %v4770
    %4772 = vmatprep.mubr.bf16.mxu0 %v190
    %4773 = vmatmul.mubr.bf16.gmra.mrb[0].mxu0 %v189
    %v4774 = vpop.f32.mrb[0].mxu0
    %v4775 = vadd.f32 %v4582, %v4774
    %v4776 = vpop.f32.mrb[0].mxu0
    %v4777 = vadd.f32 %v4584, %v4776
    %v4778 = vpop.f32.mrb[0].mxu0
    %v4779 = vadd.f32 %v4586, %v4778
    %v4780 = vpop.f32.mrb[0].mxu0
    %v4781 = vadd.f32 %v4588, %v4780
    %4782 = vmatprep.mubr.bf16.mxu0 %v194
    %4783 = vmatmul.mubr.bf16.gmra.mrb[0].mxu0 %v193
    %v4784 = vpop.f32.mrb[0].mxu0
    %v4785 = vadd.f32 %v4592, %v4784
    %v4786 = vpop.f32.mrb[0].mxu0
    %v4787 = vadd.f32 %v4594, %v4786
    %v4788 = vpop.f32.mrb[0].mxu0
    %v4789 = vadd.f32 %v4596, %v4788
    %v4790 = vpop.f32.mrb[0].mxu0
    %v4791 = vadd.f32 %v4598, %v4790
    %4792 = vmatprep.mubr.bf16.mxu0 %v198
    %4793 = vmatmul.mubr.bf16.gmra.mrb[0].mxu0 %v197
    %v4794 = vpop.f32.mrb[0].mxu0
    %v4795 = vadd.f32 %v4602, %v4794
    %v4796 = vpop.f32.mrb[0].mxu0
    %v4797 = vadd.f32 %v4604, %v4796
    %v4798 = vpop.f32.mrb[0].mxu0
    %v4799 = vadd.f32 %v4606, %v4798
    %v4800 = vpop.f32.mrb[0].mxu0
    %v4801 = vadd.f32 %v4608, %v4800
    %4802 = vmatprep.mubr.bf16.mxu0 %v202
    %4803 = vmatmul.mubr.bf16.gmra.mrb[0].mxu0 %v201
    %v4804 = vpop.f32.mrb[0].mxu0
    %v4805 = vadd.f32 %v4612, %v4804
    %v4806 = vpop.f32.mrb[0].mxu0
    %v4807 = vadd.f32 %v4614, %v4806
    %v4808 = vpop.f32.mrb[0].mxu0
    %v4809 = vadd.f32 %v4616, %v4808
    %v4810 = vpop.f32.mrb[0].mxu0
    %v4811 = vadd.f32 %v4618, %v4810
    %4812 = vmatprep.mubr.bf16.mxu0 %v206
    %4813 = vmatmul.mubr.bf16.gmra.mrb[0].mxu0 %v205
    %v4814 = vpop.f32.mrb[0].mxu0
    %v4815 = vadd.f32 %v4622, %v4814
    %v4816 = vpop.f32.mrb[0].mxu0
    %v4817 = vadd.f32 %v4624, %v4816
    %v4818 = vpop.f32.mrb[0].mxu0
    %v4819 = vadd.f32 %v4626, %v4818
    %v4820 = vpop.f32.mrb[0].mxu0
    %v4821 = vadd.f32 %v4628, %v4820
    %4822 = vdwg.mxu0
    %4823 = vmatprep.subr.bf16.mxu0 %v2264
    %4824 = vmatpush1.bf16.msra.mxu0 %v2263
    %4825 = vmatprep.subr.bf16.mxu0 %v2280
    %4826 = vmatpush1.bf16.msra.mxu0 %v2279
    %4827 = vmatprep.subr.bf16.mxu0 %v2296
    %4828 = vmatpush1.bf16.msra.mxu0 %v2295
    %4829 = vmatprep.subr.bf16.mxu0 %v2312
    %4830 = vmatpush1.bf16.msra.mxu0 %v2311
    %4831 = vmatprep.subr.bf16.mxu0 %v2328
    %4832 = vmatpush1.bf16.msra.mxu0 %v2327
    %4833 = vmatprep.subr.bf16.mxu0 %v2344
    %4834 = vmatpush1.bf16.msra.mxu0 %v2343
    %4835 = vmatprep.subr.bf16.mxu0 %v2360
    %4836 = vmatpush1.bf16.msra.mxu0 %v2359
    %4837 = vmatprep.subr.bf16.mxu0 %v2376
    %4838 = vmatpush1.bf16.msra.mxu0 %v2375
    %4839 = vmatprep.subr.bf16.mxu0 %v2392
    %4840 = vmatpush1.bf16.msra.mxu0 %v2391
    %4841 = vmatprep.subr.bf16.mxu0 %v2408
    %4842 = vmatpush1.bf16.msra.mxu0 %v2407
    %4843 = vmatprep.subr.bf16.mxu0 %v2424
    %4844 = vmatpush1.bf16.msra.mxu0 %v2423
    %4845 = vmatprep.subr.bf16.mxu0 %v2440
    %4846 = vmatpush1.bf16.msra.mxu0 %v2439
    %4847 = vmatprep.subr.bf16.mxu0 %v2456
    %4848 = vmatpush1.bf16.msra.mxu0 %v2455
    %4849 = vmatprep.subr.bf16.mxu0 %v2472
    %4850 = vmatpush1.bf16.msra.mxu0 %v2471
    %4851 = vmatprep.subr.bf16.mxu0 %v2488
    %4852 = vmatpush1.bf16.msra.mxu0 %v2487
    %4853 = vmatprep.subr.bf16.mxu0 %v2504
    %4854 = vmatpush1.bf16.msra.mxu0 %v2503
    %4855 = vmatprep.mubr.bf16.mxu0 %v144
    %4856 = vmatmul.mubr.bf16.gmra.mrb[0].mxu0 %v143
    %v4857 = vpop.f32.mrb[0].mxu0
    %v4858 = vadd.f32 0.0, %v4857
    %v4859 = vpop.f32.mrb[0].mxu0
    %v4860 = vadd.f32 0.0, %v4859
    %v4861 = vpop.f32.mrb[0].mxu0
    %v4862 = vadd.f32 0.0, %v4861
    %v4863 = vpop.f32.mrb[0].mxu0
    %v4864 = vadd.f32 0.0, %v4863
    %4865 = vmatprep.mubr.bf16.mxu0 %v148
    %4866 = vmatmul.mubr.bf16.gmra.mrb[0].mxu0 %v147
    %v4867 = vpop.f32.mrb[0].mxu0
    %v4868 = vadd.f32 0.0, %v4867
    %v4869 = vpop.f32.mrb[0].mxu0
    %v4870 = vadd.f32 0.0, %v4869
    %v4871 = vpop.f32.mrb[0].mxu0
    %v4872 = vadd.f32 0.0, %v4871
    %v4873 = vpop.f32.mrb[0].mxu0
    %v4874 = vadd.f32 0.0, %v4873
    %4875 = vmatprep.mubr.bf16.mxu0 %v152
    %4876 = vmatmul.mubr.bf16.gmra.mrb[0].mxu0 %v151
    %v4877 = vpop.f32.mrb[0].mxu0
    %v4878 = vadd.f32 0.0, %v4877
    %v4879 = vpop.f32.mrb[0].mxu0
    %v4880 = vadd.f32 0.0, %v4879
    %v4881 = vpop.f32.mrb[0].mxu0
    %v4882 = vadd.f32 0.0, %v4881
    %v4883 = vpop.f32.mrb[0].mxu0
    %v4884 = vadd.f32 0.0, %v4883
    %4885 = vmatprep.mubr.bf16.mxu0 %v156
    %4886 = vmatmul.mubr.bf16.gmra.mrb[0].mxu0 %v155
    %v4887 = vpop.f32.mrb[0].mxu0
    %v4888 = vadd.f32 0.0, %v4887
    %v4889 = vpop.f32.mrb[0].mxu0
    %v4890 = vadd.f32 0.0, %v4889
    %v4891 = vpop.f32.mrb[0].mxu0
    %v4892 = vadd.f32 0.0, %v4891
    %v4893 = vpop.f32.mrb[0].mxu0
    %v4894 = vadd.f32 0.0, %v4893
    %4895 = vmatprep.mubr.bf16.mxu0 %v160
    %4896 = vmatmul.mubr.bf16.gmra.mrb[0].mxu0 %v159
    %v4897 = vpop.f32.mrb[0].mxu0
    %v4898 = vadd.f32 0.0, %v4897
    %v4899 = vpop.f32.mrb[0].mxu0
    %v4900 = vadd.f32 0.0, %v4899
    %v4901 = vpop.f32.mrb[0].mxu0
    %v4902 = vadd.f32 0.0, %v4901
    %v4903 = vpop.f32.mrb[0].mxu0
    %v4904 = vadd.f32 0.0, %v4903
    %4905 = vmatprep.mubr.bf16.mxu0 %v164
    %4906 = vmatmul.mubr.bf16.gmra.mrb[0].mxu0 %v163
    %v4907 = vpop.f32.mrb[0].mxu0
    %v4908 = vadd.f32 0.0, %v4907
    %v4909 = vpop.f32.mrb[0].mxu0
    %v4910 = vadd.f32 0.0, %v4909
    %v4911 = vpop.f32.mrb[0].mxu0
    %v4912 = vadd.f32 0.0, %v4911
    %v4913 = vpop.f32.mrb[0].mxu0
    %v4914 = vadd.f32 0.0, %v4913
    %4915 = vmatprep.mubr.bf16.mxu0 %v168
    %4916 = vmatmul.mubr.bf16.gmra.mrb[0].mxu0 %v167
    %v4917 = vpop.f32.mrb[0].mxu0
    %v4918 = vadd.f32 0.0, %v4917
    %v4919 = vpop.f32.mrb[0].mxu0
    %v4920 = vadd.f32 0.0, %v4919
    %v4921 = vpop.f32.mrb[0].mxu0
    %v4922 = vadd.f32 0.0, %v4921
    %v4923 = vpop.f32.mrb[0].mxu0
    %v4924 = vadd.f32 0.0, %v4923
    %4925 = vmatprep.mubr.bf16.mxu0 %v172
    %4926 = vmatmul.mubr.bf16.gmra.mrb[0].mxu0 %v171
    %v4927 = vpop.f32.mrb[0].mxu0
    %v4928 = vadd.f32 0.0, %v4927
    %v4929 = vpop.f32.mrb[0].mxu0
    %v4930 = vadd.f32 0.0, %v4929
    %v4931 = vpop.f32.mrb[0].mxu0
    %v4932 = vadd.f32 0.0, %v4931
    %v4933 = vpop.f32.mrb[0].mxu0
    %v4934 = vadd.f32 0.0, %v4933
    %4935 = vmatprep.mubr.bf16.mxu0 %v176
    %4936 = vmatmul.mubr.bf16.gmra.mrb[0].mxu0 %v175
    %v4937 = vpop.f32.mrb[0].mxu0
    %v4938 = vadd.f32 0.0, %v4937
    %v4939 = vpop.f32.mrb[0].mxu0
    %v4940 = vadd.f32 0.0, %v4939
    %v4941 = vpop.f32.mrb[0].mxu0
    %v4942 = vadd.f32 0.0, %v4941
    %v4943 = vpop.f32.mrb[0].mxu0
    %v4944 = vadd.f32 0.0, %v4943
    %4945 = vmatprep.mubr.bf16.mxu0 %v180
    %4946 = vmatmul.mubr.bf16.gmra.mrb[0].mxu0 %v179
    %v4947 = vpop.f32.mrb[0].mxu0
    %v4948 = vadd.f32 0.0, %v4947
    %v4949 = vpop.f32.mrb[0].mxu0
    %v4950 = vadd.f32 0.0, %v4949
    %v4951 = vpop.f32.mrb[0].mxu0
    %v4952 = vadd.f32 0.0, %v4951
    %v4953 = vpop.f32.mrb[0].mxu0
    %v4954 = vadd.f32 0.0, %v4953
    %4955 = vmatprep.mubr.bf16.mxu0 %v184
    %4956 = vmatmul.mubr.bf16.gmra.mrb[0].mxu0 %v183
    %v4957 = vpop.f32.mrb[0].mxu0
    %v4958 = vadd.f32 0.0, %v4957
    %v4959 = vpop.f32.mrb[0].mxu0
    %v4960 = vadd.f32 0.0, %v4959
    %v4961 = vpop.f32.mrb[0].mxu0
    %v4962 = vadd.f32 0.0, %v4961
    %v4963 = vpop.f32.mrb[0].mxu0
    %v4964 = vadd.f32 0.0, %v4963
    %4965 = vmatprep.mubr.bf16.mxu0 %v188
    %4966 = vmatmul.mubr.bf16.gmra.mrb[0].mxu0 %v187
    %v4967 = vpop.f32.mrb[0].mxu0
    %v4968 = vadd.f32 0.0, %v4967
    %v4969 = vpop.f32.mrb[0].mxu0
    %v4970 = vadd.f32 0.0, %v4969
    %v4971 = vpop.f32.mrb[0].mxu0
    %v4972 = vadd.f32 0.0, %v4971
    %v4973 = vpop.f32.mrb[0].mxu0
    %v4974 = vadd.f32 0.0, %v4973
    %4975 = vmatprep.mubr.bf16.mxu0 %v192
    %4976 = vmatmul.mubr.bf16.gmra.mrb[0].mxu0 %v191
    %v4977 = vpop.f32.mrb[0].mxu0
    %v4978 = vadd.f32 0.0, %v4977
    %v4979 = vpop.f32.mrb[0].mxu0
    %v4980 = vadd.f32 0.0, %v4979
    %v4981 = vpop.f32.mrb[0].mxu0
    %v4982 = vadd.f32 0.0, %v4981
    %v4983 = vpop.f32.mrb[0].mxu0
    %v4984 = vadd.f32 0.0, %v4983
    %4985 = vmatprep.mubr.bf16.mxu0 %v196
    %4986 = vmatmul.mubr.bf16.gmra.mrb[0].mxu0 %v195
    %v4987 = vpop.f32.mrb[0].mxu0
    %v4988 = vadd.f32 0.0, %v4987
    %v4989 = vpop.f32.mrb[0].mxu0
    %v4990 = vadd.f32 0.0, %v4989
    %v4991 = vpop.f32.mrb[0].mxu0
    %v4992 = vadd.f32 0.0, %v4991
    %v4993 = vpop.f32.mrb[0].mxu0
    %v4994 = vadd.f32 0.0, %v4993
    %4995 = vmatprep.mubr.bf16.mxu0 %v200
    %4996 = vmatmul.mubr.bf16.gmra.mrb[0].mxu0 %v199
    %v4997 = vpop.f32.mrb[0].mxu0
    %v4998 = vadd.f32 0.0, %v4997
    %v4999 = vpop.f32.mrb[0].mxu0
    %v5000 = vadd.f32 0.0, %v4999
    %v5001 = vpop.f32.mrb[0].mxu0
    %v5002 = vadd.f32 0.0, %v5001
    %v5003 = vpop.f32.mrb[0].mxu0
    %v5004 = vadd.f32 0.0, %v5003
    %5005 = vmatprep.mubr.bf16.mxu0 %v204
    %5006 = vmatmul.mubr.bf16.gmra.mrb[0].mxu0 %v203
    %v5007 = vpop.f32.mrb[0].mxu0
    %v5008 = vadd.f32 0.0, %v5007
    %v5009 = vpop.f32.mrb[0].mxu0
    %v5010 = vadd.f32 0.0, %v5009
    %v5011 = vpop.f32.mrb[0].mxu0
    %v5012 = vadd.f32 0.0, %v5011
    %v5013 = vpop.f32.mrb[0].mxu0
    %v5014 = vadd.f32 0.0, %v5013
    %5015 = vdwg.mxu0
    %5016 = vmatprep.subr.bf16.mxu0 %v2520
    %5017 = vmatpush1.bf16.msra.mxu0 %v2519
    %5018 = vmatprep.subr.bf16.mxu0 %v2536
    %5019 = vmatpush1.bf16.msra.mxu0 %v2535
    %5020 = vmatprep.subr.bf16.mxu0 %v2552
    %5021 = vmatpush1.bf16.msra.mxu0 %v2551
    %5022 = vmatprep.subr.bf16.mxu0 %v2568
    %5023 = vmatpush1.bf16.msra.mxu0 %v2567
    %5024 = vmatprep.subr.bf16.mxu0 %v2584
    %5025 = vmatpush1.bf16.msra.mxu0 %v2583
    %5026 = vmatprep.subr.bf16.mxu0 %v2600
    %5027 = vmatpush1.bf16.msra.mxu0 %v2599
    %5028 = vmatprep.subr.bf16.mxu0 %v2616
    %5029 = vmatpush1.bf16.msra.mxu0 %v2615
    %5030 = vmatprep.subr.bf16.mxu0 %v2632
    %5031 = vmatpush1.bf16.msra.mxu0 %v2631
    %5032 = vmatprep.subr.bf16.mxu0 %v2648
    %5033 = vmatpush1.bf16.msra.mxu0 %v2647
    %5034 = vmatprep.subr.bf16.mxu0 %v2664
    %5035 = vmatpush1.bf16.msra.mxu0 %v2663
    %5036 = vmatprep.subr.bf16.mxu0 %v2680
    %5037 = vmatpush1.bf16.msra.mxu0 %v2679
    %5038 = vmatprep.subr.bf16.mxu0 %v2696
    %5039 = vmatpush1.bf16.msra.mxu0 %v2695
    %5040 = vmatprep.subr.bf16.mxu0 %v2712
    %5041 = vmatpush1.bf16.msra.mxu0 %v2711
    %5042 = vmatprep.subr.bf16.mxu0 %v2728
    %5043 = vmatpush1.bf16.msra.mxu0 %v2727
    %5044 = vmatprep.subr.bf16.mxu0 %v2744
    %5045 = vmatpush1.bf16.msra.mxu0 %v2743
    %5046 = vmatprep.subr.bf16.mxu0 %v2760
    %5047 = vmatpush1.bf16.msra.mxu0 %v2759
    %5048 = vmatprep.mubr.bf16.mxu0 %v146
    %5049 = vmatmul.mubr.bf16.gmra.mrb[0].mxu0 %v145
    %v5050 = vpop.f32.mrb[0].mxu0
    %v5051 = vadd.f32 %v4858, %v5050
    %v5052 = vpop.f32.mrb[0].mxu0
    %v5053 = vadd.f32 %v4860, %v5052
    %v5054 = vpop.f32.mrb[0].mxu0
    %v5055 = vadd.f32 %v4862, %v5054
    %v5056 = vpop.f32.mrb[0].mxu0
    %v5057 = vadd.f32 %v4864, %v5056
    %5058 = vmatprep.mubr.bf16.mxu0 %v150
    %5059 = vmatmul.mubr.bf16.gmra.mrb[0].mxu0 %v149
    %v5060 = vpop.f32.mrb[0].mxu0
    %v5061 = vadd.f32 %v4868, %v5060
    %v5062 = vpop.f32.mrb[0].mxu0
    %v5063 = vadd.f32 %v4870, %v5062
    %v5064 = vpop.f32.mrb[0].mxu0
    %v5065 = vadd.f32 %v4872, %v5064
    %v5066 = vpop.f32.mrb[0].mxu0
    %v5067 = vadd.f32 %v4874, %v5066
    %5068 = vmatprep.mubr.bf16.mxu0 %v154
    %5069 = vmatmul.mubr.bf16.gmra.mrb[0].mxu0 %v153
    %v5070 = vpop.f32.mrb[0].mxu0
    %v5071 = vadd.f32 %v4878, %v5070
    %v5072 = vpop.f32.mrb[0].mxu0
    %v5073 = vadd.f32 %v4880, %v5072
    %v5074 = vpop.f32.mrb[0].mxu0
    %v5075 = vadd.f32 %v4882, %v5074
    %v5076 = vpop.f32.mrb[0].mxu0
    %v5077 = vadd.f32 %v4884, %v5076
    %5078 = vmatprep.mubr.bf16.mxu0 %v158
    %5079 = vmatmul.mubr.bf16.gmra.mrb[0].mxu0 %v157
    %v5080 = vpop.f32.mrb[0].mxu0
    %v5081 = vadd.f32 %v4888, %v5080
    %v5082 = vpop.f32.mrb[0].mxu0
    %v5083 = vadd.f32 %v4890, %v5082
    %v5084 = vpop.f32.mrb[0].mxu0
    %v5085 = vadd.f32 %v4892, %v5084
    %v5086 = vpop.f32.mrb[0].mxu0
    %v5087 = vadd.f32 %v4894, %v5086
    %5088 = vmatprep.mubr.bf16.mxu0 %v162
    %5089 = vmatmul.mubr.bf16.gmra.mrb[0].mxu0 %v161
    %v5090 = vpop.f32.mrb[0].mxu0
    %v5091 = vadd.f32 %v4898, %v5090
    %v5092 = vpop.f32.mrb[0].mxu0
    %v5093 = vadd.f32 %v4900, %v5092
    %v5094 = vpop.f32.mrb[0].mxu0
    %v5095 = vadd.f32 %v4902, %v5094
    %v5096 = vpop.f32.mrb[0].mxu0
    %v5097 = vadd.f32 %v4904, %v5096
    %5098 = vmatprep.mubr.bf16.mxu0 %v166
    %5099 = vmatmul.mubr.bf16.gmra.mrb[0].mxu0 %v165
    %v5100 = vpop.f32.mrb[0].mxu0
    %v5101 = vadd.f32 %v4908, %v5100
    %v5102 = vpop.f32.mrb[0].mxu0
    %v5103 = vadd.f32 %v4910, %v5102
    %v5104 = vpop.f32.mrb[0].mxu0
    %v5105 = vadd.f32 %v4912, %v5104
    %v5106 = vpop.f32.mrb[0].mxu0
    %v5107 = vadd.f32 %v4914, %v5106
    %5108 = vmatprep.mubr.bf16.mxu0 %v170
    %5109 = vmatmul.mubr.bf16.gmra.mrb[0].mxu0 %v169
    %v5110 = vpop.f32.mrb[0].mxu0
    %v5111 = vadd.f32 %v4918, %v5110
    %v5112 = vpop.f32.mrb[0].mxu0
    %v5113 = vadd.f32 %v4920, %v5112
    %v5114 = vpop.f32.mrb[0].mxu0
    %v5115 = vadd.f32 %v4922, %v5114
    %v5116 = vpop.f32.mrb[0].mxu0
    %v5117 = vadd.f32 %v4924, %v5116
    %5118 = vmatprep.mubr.bf16.mxu0 %v174
    %5119 = vmatmul.mubr.bf16.gmra.mrb[0].mxu0 %v173
    %v5120 = vpop.f32.mrb[0].mxu0
    %v5121 = vadd.f32 %v4928, %v5120
    %v5122 = vpop.f32.mrb[0].mxu0
    %v5123 = vadd.f32 %v4930, %v5122
    %v5124 = vpop.f32.mrb[0].mxu0
    %v5125 = vadd.f32 %v4932, %v5124
    %v5126 = vpop.f32.mrb[0].mxu0
    %v5127 = vadd.f32 %v4934, %v5126
    %5128 = vmatprep.mubr.bf16.mxu0 %v178
    %5129 = vmatmul.mubr.bf16.gmra.mrb[0].mxu0 %v177
    %v5130 = vpop.f32.mrb[0].mxu0
    %v5131 = vadd.f32 %v4938, %v5130
    %v5132 = vpop.f32.mrb[0].mxu0
    %v5133 = vadd.f32 %v4940, %v5132
    %v5134 = vpop.f32.mrb[0].mxu0
    %v5135 = vadd.f32 %v4942, %v5134
    %v5136 = vpop.f32.mrb[0].mxu0
    %v5137 = vadd.f32 %v4944, %v5136
    %5138 = vmatprep.mubr.bf16.mxu0 %v182
    %5139 = vmatmul.mubr.bf16.gmra.mrb[0].mxu0 %v181
    %v5140 = vpop.f32.mrb[0].mxu0
    %v5141 = vadd.f32 %v4948, %v5140
    %v5142 = vpop.f32.mrb[0].mxu0
    %v5143 = vadd.f32 %v4950, %v5142
    %v5144 = vpop.f32.mrb[0].mxu0
    %v5145 = vadd.f32 %v4952, %v5144
    %v5146 = vpop.f32.mrb[0].mxu0
    %v5147 = vadd.f32 %v4954, %v5146
    %5148 = vmatprep.mubr.bf16.mxu0 %v186
    %5149 = vmatmul.mubr.bf16.gmra.mrb[0].mxu0 %v185
    %v5150 = vpop.f32.mrb[0].mxu0
    %v5151 = vadd.f32 %v4958, %v5150
    %v5152 = vpop.f32.mrb[0].mxu0
    %v5153 = vadd.f32 %v4960, %v5152
    %v5154 = vpop.f32.mrb[0].mxu0
    %v5155 = vadd.f32 %v4962, %v5154
    %v5156 = vpop.f32.mrb[0].mxu0
    %v5157 = vadd.f32 %v4964, %v5156
    %5158 = vmatprep.mubr.bf16.mxu0 %v190
    %5159 = vmatmul.mubr.bf16.gmra.mrb[0].mxu0 %v189
    %v5160 = vpop.f32.mrb[0].mxu0
    %v5161 = vadd.f32 %v4968, %v5160
    %v5162 = vpop.f32.mrb[0].mxu0
    %v5163 = vadd.f32 %v4970, %v5162
    %v5164 = vpop.f32.mrb[0].mxu0
    %v5165 = vadd.f32 %v4972, %v5164
    %v5166 = vpop.f32.mrb[0].mxu0
    %v5167 = vadd.f32 %v4974, %v5166
    %5168 = vmatprep.mubr.bf16.mxu0 %v194
    %5169 = vmatmul.mubr.bf16.gmra.mrb[0].mxu0 %v193
    %v5170 = vpop.f32.mrb[0].mxu0
    %v5171 = vadd.f32 %v4978, %v5170
    %v5172 = vpop.f32.mrb[0].mxu0
    %v5173 = vadd.f32 %v4980, %v5172
    %v5174 = vpop.f32.mrb[0].mxu0
    %v5175 = vadd.f32 %v4982, %v5174
    %v5176 = vpop.f32.mrb[0].mxu0
    %v5177 = vadd.f32 %v4984, %v5176
    %5178 = vmatprep.mubr.bf16.mxu0 %v198
    %5179 = vmatmul.mubr.bf16.gmra.mrb[0].mxu0 %v197
    %v5180 = vpop.f32.mrb[0].mxu0
    %v5181 = vadd.f32 %v4988, %v5180
    %v5182 = vpop.f32.mrb[0].mxu0
    %v5183 = vadd.f32 %v4990, %v5182
    %v5184 = vpop.f32.mrb[0].mxu0
    %v5185 = vadd.f32 %v4992, %v5184
    %v5186 = vpop.f32.mrb[0].mxu0
    %v5187 = vadd.f32 %v4994, %v5186
    %5188 = vmatprep.mubr.bf16.mxu0 %v202
    %5189 = vmatmul.mubr.bf16.gmra.mrb[0].mxu0 %v201
    %v5190 = vpop.f32.mrb[0].mxu0
    %v5191 = vadd.f32 %v4998, %v5190
    %v5192 = vpop.f32.mrb[0].mxu0
    %v5193 = vadd.f32 %v5000, %v5192
    %v5194 = vpop.f32.mrb[0].mxu0
    %v5195 = vadd.f32 %v5002, %v5194
    %v5196 = vpop.f32.mrb[0].mxu0
    %v5197 = vadd.f32 %v5004, %v5196
    %5198 = vmatprep.mubr.bf16.mxu0 %v206
    %5199 = vmatmul.mubr.bf16.gmra.mrb[0].mxu0 %v205
    %v5200 = vpop.f32.mrb[0].mxu0
    %v5201 = vadd.f32 %v5008, %v5200
    %v5202 = vpop.f32.mrb[0].mxu0
    %v5203 = vadd.f32 %v5010, %v5202
    %v5204 = vpop.f32.mrb[0].mxu0
    %v5205 = vadd.f32 %v5012, %v5204
    %v5206 = vpop.f32.mrb[0].mxu0
    %v5207 = vadd.f32 %v5014, %v5206
    %5208 = vdwg.mxu0
    %5209 = vmatprep.subr.bf16.mxu0 %v2266
    %5210 = vmatpush1.bf16.msra.mxu0 %v2265
    %5211 = vmatprep.subr.bf16.mxu0 %v2282
    %5212 = vmatpush1.bf16.msra.mxu0 %v2281
    %5213 = vmatprep.subr.bf16.mxu0 %v2298
    %5214 = vmatpush1.bf16.msra.mxu0 %v2297
    %5215 = vmatprep.subr.bf16.mxu0 %v2314
    %5216 = vmatpush1.bf16.msra.mxu0 %v2313
    %5217 = vmatprep.subr.bf16.mxu0 %v2330
    %5218 = vmatpush1.bf16.msra.mxu0 %v2329
    %5219 = vmatprep.subr.bf16.mxu0 %v2346
    %5220 = vmatpush1.bf16.msra.mxu0 %v2345
    %5221 = vmatprep.subr.bf16.mxu0 %v2362
    %5222 = vmatpush1.bf16.msra.mxu0 %v2361
    %5223 = vmatprep.subr.bf16.mxu0 %v2378
    %5224 = vmatpush1.bf16.msra.mxu0 %v2377
    %5225 = vmatprep.subr.bf16.mxu0 %v2394
    %5226 = vmatpush1.bf16.msra.mxu0 %v2393
    %5227 = vmatprep.subr.bf16.mxu0 %v2410
    %5228 = vmatpush1.bf16.msra.mxu0 %v2409
    %5229 = vmatprep.subr.bf16.mxu0 %v2426
    %5230 = vmatpush1.bf16.msra.mxu0 %v2425
    %5231 = vmatprep.subr.bf16.mxu0 %v2442
    %5232 = vmatpush1.bf16.msra.mxu0 %v2441
    %5233 = vmatprep.subr.bf16.mxu0 %v2458
    %5234 = vmatpush1.bf16.msra.mxu0 %v2457
    %5235 = vmatprep.subr.bf16.mxu0 %v2474
    %5236 = vmatpush1.bf16.msra.mxu0 %v2473
    %5237 = vmatprep.subr.bf16.mxu0 %v2490
    %5238 = vmatpush1.bf16.msra.mxu0 %v2489
    %5239 = vmatprep.subr.bf16.mxu0 %v2506
    %5240 = vmatpush1.bf16.msra.mxu0 %v2505
    %5241 = vmatprep.mubr.bf16.mxu0 %v144
    %5242 = vmatmul.mubr.bf16.gmra.mrb[0].mxu0 %v143
    %v5243 = vpop.f32.mrb[0].mxu0
    %v5244 = vadd.f32 0.0, %v5243
    %v5245 = vpop.f32.mrb[0].mxu0
    %v5246 = vadd.f32 0.0, %v5245
    %v5247 = vpop.f32.mrb[0].mxu0
    %v5248 = vadd.f32 0.0, %v5247
    %v5249 = vpop.f32.mrb[0].mxu0
    %v5250 = vadd.f32 0.0, %v5249
    %5251 = vmatprep.mubr.bf16.mxu0 %v148
    %5252 = vmatmul.mubr.bf16.gmra.mrb[0].mxu0 %v147
    %v5253 = vpop.f32.mrb[0].mxu0
    %v5254 = vadd.f32 0.0, %v5253
    %v5255 = vpop.f32.mrb[0].mxu0
    %v5256 = vadd.f32 0.0, %v5255
    %v5257 = vpop.f32.mrb[0].mxu0
    %v5258 = vadd.f32 0.0, %v5257
    %v5259 = vpop.f32.mrb[0].mxu0
    %v5260 = vadd.f32 0.0, %v5259
    %5261 = vmatprep.mubr.bf16.mxu0 %v152
    %5262 = vmatmul.mubr.bf16.gmra.mrb[0].mxu0 %v151
    %v5263 = vpop.f32.mrb[0].mxu0
    %v5264 = vadd.f32 0.0, %v5263
    %v5265 = vpop.f32.mrb[0].mxu0
    %v5266 = vadd.f32 0.0, %v5265
    %v5267 = vpop.f32.mrb[0].mxu0
    %v5268 = vadd.f32 0.0, %v5267
    %v5269 = vpop.f32.mrb[0].mxu0
    %v5270 = vadd.f32 0.0, %v5269
    %5271 = vmatprep.mubr.bf16.mxu0 %v156
    %5272 = vmatmul.mubr.bf16.gmra.mrb[0].mxu0 %v155
    %v5273 = vpop.f32.mrb[0].mxu0
    %v5274 = vadd.f32 0.0, %v5273
    %v5275 = vpop.f32.mrb[0].mxu0
    %v5276 = vadd.f32 0.0, %v5275
    %v5277 = vpop.f32.mrb[0].mxu0
    %v5278 = vadd.f32 0.0, %v5277
    %v5279 = vpop.f32.mrb[0].mxu0
    %v5280 = vadd.f32 0.0, %v5279
    %5281 = vmatprep.mubr.bf16.mxu0 %v160
    %5282 = vmatmul.mubr.bf16.gmra.mrb[0].mxu0 %v159
    %v5283 = vpop.f32.mrb[0].mxu0
    %v5284 = vadd.f32 0.0, %v5283
    %v5285 = vpop.f32.mrb[0].mxu0
    %v5286 = vadd.f32 0.0, %v5285
    %v5287 = vpop.f32.mrb[0].mxu0
    %v5288 = vadd.f32 0.0, %v5287
    %v5289 = vpop.f32.mrb[0].mxu0
    %v5290 = vadd.f32 0.0, %v5289
    %5291 = vmatprep.mubr.bf16.mxu0 %v164
    %5292 = vmatmul.mubr.bf16.gmra.mrb[0].mxu0 %v163
    %v5293 = vpop.f32.mrb[0].mxu0
    %v5294 = vadd.f32 0.0, %v5293
    %v5295 = vpop.f32.mrb[0].mxu0
    %v5296 = vadd.f32 0.0, %v5295
    %v5297 = vpop.f32.mrb[0].mxu0
    %v5298 = vadd.f32 0.0, %v5297
    %v5299 = vpop.f32.mrb[0].mxu0
    %v5300 = vadd.f32 0.0, %v5299
    %5301 = vmatprep.mubr.bf16.mxu0 %v168
    %5302 = vmatmul.mubr.bf16.gmra.mrb[0].mxu0 %v167
    %v5303 = vpop.f32.mrb[0].mxu0
    %v5304 = vadd.f32 0.0, %v5303
    %v5305 = vpop.f32.mrb[0].mxu0
    %v5306 = vadd.f32 0.0, %v5305
    %v5307 = vpop.f32.mrb[0].mxu0
    %v5308 = vadd.f32 0.0, %v5307
    %v5309 = vpop.f32.mrb[0].mxu0
    %v5310 = vadd.f32 0.0, %v5309
    %5311 = vmatprep.mubr.bf16.mxu0 %v172
    %5312 = vmatmul.mubr.bf16.gmra.mrb[0].mxu0 %v171
    %v5313 = vpop.f32.mrb[0].mxu0
    %v5314 = vadd.f32 0.0, %v5313
    %v5315 = vpop.f32.mrb[0].mxu0
    %v5316 = vadd.f32 0.0, %v5315
    %v5317 = vpop.f32.mrb[0].mxu0
    %v5318 = vadd.f32 0.0, %v5317
    %v5319 = vpop.f32.mrb[0].mxu0
    %v5320 = vadd.f32 0.0, %v5319
    %5321 = vmatprep.mubr.bf16.mxu0 %v176
    %5322 = vmatmul.mubr.bf16.gmra.mrb[0].mxu0 %v175
    %v5323 = vpop.f32.mrb[0].mxu0
    %v5324 = vadd.f32 0.0, %v5323
    %v5325 = vpop.f32.mrb[0].mxu0
    %v5326 = vadd.f32 0.0, %v5325
    %v5327 = vpop.f32.mrb[0].mxu0
    %v5328 = vadd.f32 0.0, %v5327
    %v5329 = vpop.f32.mrb[0].mxu0
    %v5330 = vadd.f32 0.0, %v5329
    %5331 = vmatprep.mubr.bf16.mxu0 %v180
    %5332 = vmatmul.mubr.bf16.gmra.mrb[0].mxu0 %v179
    %v5333 = vpop.f32.mrb[0].mxu0
    %v5334 = vadd.f32 0.0, %v5333
    %v5335 = vpop.f32.mrb[0].mxu0
    %v5336 = vadd.f32 0.0, %v5335
    %v5337 = vpop.f32.mrb[0].mxu0
    %v5338 = vadd.f32 0.0, %v5337
    %v5339 = vpop.f32.mrb[0].mxu0
    %v5340 = vadd.f32 0.0, %v5339
    %5341 = vmatprep.mubr.bf16.mxu0 %v184
    %5342 = vmatmul.mubr.bf16.gmra.mrb[0].mxu0 %v183
    %v5343 = vpop.f32.mrb[0].mxu0
    %v5344 = vadd.f32 0.0, %v5343
    %v5345 = vpop.f32.mrb[0].mxu0
    %v5346 = vadd.f32 0.0, %v5345
    %v5347 = vpop.f32.mrb[0].mxu0
    %v5348 = vadd.f32 0.0, %v5347
    %v5349 = vpop.f32.mrb[0].mxu0
    %v5350 = vadd.f32 0.0, %v5349
    %5351 = vmatprep.mubr.bf16.mxu0 %v188
    %5352 = vmatmul.mubr.bf16.gmra.mrb[0].mxu0 %v187
    %v5353 = vpop.f32.mrb[0].mxu0
    %v5354 = vadd.f32 0.0, %v5353
    %v5355 = vpop.f32.mrb[0].mxu0
    %v5356 = vadd.f32 0.0, %v5355
    %v5357 = vpop.f32.mrb[0].mxu0
    %v5358 = vadd.f32 0.0, %v5357
    %v5359 = vpop.f32.mrb[0].mxu0
    %v5360 = vadd.f32 0.0, %v5359
    %5361 = vmatprep.mubr.bf16.mxu0 %v192
    %5362 = vmatmul.mubr.bf16.gmra.mrb[0].mxu0 %v191
    %v5363 = vpop.f32.mrb[0].mxu0
    %v5364 = vadd.f32 0.0, %v5363
    %v5365 = vpop.f32.mrb[0].mxu0
    %v5366 = vadd.f32 0.0, %v5365
    %v5367 = vpop.f32.mrb[0].mxu0
    %v5368 = vadd.f32 0.0, %v5367
    %v5369 = vpop.f32.mrb[0].mxu0
    %v5370 = vadd.f32 0.0, %v5369
    %5371 = vmatprep.mubr.bf16.mxu0 %v196
    %5372 = vmatmul.mubr.bf16.gmra.mrb[0].mxu0 %v195
    %v5373 = vpop.f32.mrb[0].mxu0
    %v5374 = vadd.f32 0.0, %v5373
    %v5375 = vpop.f32.mrb[0].mxu0
    %v5376 = vadd.f32 0.0, %v5375
    %v5377 = vpop.f32.mrb[0].mxu0
    %v5378 = vadd.f32 0.0, %v5377
    %v5379 = vpop.f32.mrb[0].mxu0
    %v5380 = vadd.f32 0.0, %v5379
    %5381 = vmatprep.mubr.bf16.mxu0 %v200
    %5382 = vmatmul.mubr.bf16.gmra.mrb[0].mxu0 %v199
    %v5383 = vpop.f32.mrb[0].mxu0
    %v5384 = vadd.f32 0.0, %v5383
    %v5385 = vpop.f32.mrb[0].mxu0
    %v5386 = vadd.f32 0.0, %v5385
    %v5387 = vpop.f32.mrb[0].mxu0
    %v5388 = vadd.f32 0.0, %v5387
    %v5389 = vpop.f32.mrb[0].mxu0
    %v5390 = vadd.f32 0.0, %v5389
    %5391 = vmatprep.mubr.bf16.mxu0 %v204
    %5392 = vmatmul.mubr.bf16.gmra.mrb[0].mxu0 %v203
    %v5393 = vpop.f32.mrb[0].mxu0
    %v5394 = vadd.f32 0.0, %v5393
    %v5395 = vpop.f32.mrb[0].mxu0
    %v5396 = vadd.f32 0.0, %v5395
    %v5397 = vpop.f32.mrb[0].mxu0
    %v5398 = vadd.f32 0.0, %v5397
    %v5399 = vpop.f32.mrb[0].mxu0
    %v5400 = vadd.f32 0.0, %v5399
    %5401 = vdwg.mxu0
    %5402 = vmatprep.subr.bf16.mxu0 %v2522
    %5403 = vmatpush1.bf16.msra.mxu0 %v2521
    %5404 = vmatprep.subr.bf16.mxu0 %v2538
    %5405 = vmatpush1.bf16.msra.mxu0 %v2537
    %5406 = vmatprep.subr.bf16.mxu0 %v2554
    %5407 = vmatpush1.bf16.msra.mxu0 %v2553
    %5408 = vmatprep.subr.bf16.mxu0 %v2570
    %5409 = vmatpush1.bf16.msra.mxu0 %v2569
    %5410 = vmatprep.subr.bf16.mxu0 %v2586
    %5411 = vmatpush1.bf16.msra.mxu0 %v2585
    %5412 = vmatprep.subr.bf16.mxu0 %v2602
    %5413 = vmatpush1.bf16.msra.mxu0 %v2601
    %5414 = vmatprep.subr.bf16.mxu0 %v2618
    %5415 = vmatpush1.bf16.msra.mxu0 %v2617
    %5416 = vmatprep.subr.bf16.mxu0 %v2634
    %5417 = vmatpush1.bf16.msra.mxu0 %v2633
    %5418 = vmatprep.subr.bf16.mxu0 %v2650
    %5419 = vmatpush1.bf16.msra.mxu0 %v2649
    %5420 = vmatprep.subr.bf16.mxu0 %v2666
    %5421 = vmatpush1.bf16.msra.mxu0 %v2665
    %5422 = vmatprep.subr.bf16.mxu0 %v2682
    %5423 = vmatpush1.bf16.msra.mxu0 %v2681
    %5424 = vmatprep.subr.bf16.mxu0 %v2698
    %5425 = vmatpush1.bf16.msra.mxu0 %v2697
    %5426 = vmatprep.subr.bf16.mxu0 %v2714
    %5427 = vmatpush1.bf16.msra.mxu0 %v2713
    %5428 = vmatprep.subr.bf16.mxu0 %v2730
    %5429 = vmatpush1.bf16.msra.mxu0 %v2729
    %5430 = vmatprep.subr.bf16.mxu0 %v2746
    %5431 = vmatpush1.bf16.msra.mxu0 %v2745
    %5432 = vmatprep.subr.bf16.mxu0 %v2762
    %5433 = vmatpush1.bf16.msra.mxu0 %v2761
    %5434 = vmatprep.mubr.bf16.mxu0 %v146
    %5435 = vmatmul.mubr.bf16.gmra.mrb[0].mxu0 %v145
    %v5436 = vpop.f32.mrb[0].mxu0
    %v5437 = vadd.f32 %v5244, %v5436
    %v5438 = vpop.f32.mrb[0].mxu0
    %v5439 = vadd.f32 %v5246, %v5438
    %v5440 = vpop.f32.mrb[0].mxu0
    %v5441 = vadd.f32 %v5248, %v5440
    %v5442 = vpop.f32.mrb[0].mxu0
    %v5443 = vadd.f32 %v5250, %v5442
    %5444 = vmatprep.mubr.bf16.mxu0 %v150
    %5445 = vmatmul.mubr.bf16.gmra.mrb[0].mxu0 %v149
    %v5446 = vpop.f32.mrb[0].mxu0
    %v5447 = vadd.f32 %v5254, %v5446
    %v5448 = vpop.f32.mrb[0].mxu0
    %v5449 = vadd.f32 %v5256, %v5448
    %v5450 = vpop.f32.mrb[0].mxu0
    %v5451 = vadd.f32 %v5258, %v5450
    %v5452 = vpop.f32.mrb[0].mxu0
    %v5453 = vadd.f32 %v5260, %v5452
    %5454 = vmatprep.mubr.bf16.mxu0 %v154
    %5455 = vmatmul.mubr.bf16.gmra.mrb[0].mxu0 %v153
    %v5456 = vpop.f32.mrb[0].mxu0
    %v5457 = vadd.f32 %v5264, %v5456
    %v5458 = vpop.f32.mrb[0].mxu0
    %v5459 = vadd.f32 %v5266, %v5458
    %v5460 = vpop.f32.mrb[0].mxu0
    %v5461 = vadd.f32 %v5268, %v5460
    %v5462 = vpop.f32.mrb[0].mxu0
    %v5463 = vadd.f32 %v5270, %v5462
    %5464 = vmatprep.mubr.bf16.mxu0 %v158
    %5465 = vmatmul.mubr.bf16.gmra.mrb[0].mxu0 %v157
    %v5466 = vpop.f32.mrb[0].mxu0
    %v5467 = vadd.f32 %v5274, %v5466
    %v5468 = vpop.f32.mrb[0].mxu0
    %v5469 = vadd.f32 %v5276, %v5468
    %v5470 = vpop.f32.mrb[0].mxu0
    %v5471 = vadd.f32 %v5278, %v5470
    %v5472 = vpop.f32.mrb[0].mxu0
    %v5473 = vadd.f32 %v5280, %v5472
    %5474 = vmatprep.mubr.bf16.mxu0 %v162
    %5475 = vmatmul.mubr.bf16.gmra.mrb[0].mxu0 %v161
    %v5476 = vpop.f32.mrb[0].mxu0
    %v5477 = vadd.f32 %v5284, %v5476
    %v5478 = vpop.f32.mrb[0].mxu0
    %v5479 = vadd.f32 %v5286, %v5478
    %v5480 = vpop.f32.mrb[0].mxu0
    %v5481 = vadd.f32 %v5288, %v5480
    %v5482 = vpop.f32.mrb[0].mxu0
    %v5483 = vadd.f32 %v5290, %v5482
    %5484 = vmatprep.mubr.bf16.mxu0 %v166
    %5485 = vmatmul.mubr.bf16.gmra.mrb[0].mxu0 %v165
    %v5486 = vpop.f32.mrb[0].mxu0
    %v5487 = vadd.f32 %v5294, %v5486
    %v5488 = vpop.f32.mrb[0].mxu0
    %v5489 = vadd.f32 %v5296, %v5488
    %v5490 = vpop.f32.mrb[0].mxu0
    %v5491 = vadd.f32 %v5298, %v5490
    %v5492 = vpop.f32.mrb[0].mxu0
    %v5493 = vadd.f32 %v5300, %v5492
    %5494 = vmatprep.mubr.bf16.mxu0 %v170
    %5495 = vmatmul.mubr.bf16.gmra.mrb[0].mxu0 %v169
    %v5496 = vpop.f32.mrb[0].mxu0
    %v5497 = vadd.f32 %v5304, %v5496
    %v5498 = vpop.f32.mrb[0].mxu0
    %v5499 = vadd.f32 %v5306, %v5498
    %v5500 = vpop.f32.mrb[0].mxu0
    %v5501 = vadd.f32 %v5308, %v5500
    %v5502 = vpop.f32.mrb[0].mxu0
    %v5503 = vadd.f32 %v5310, %v5502
    %5504 = vmatprep.mubr.bf16.mxu0 %v174
    %5505 = vmatmul.mubr.bf16.gmra.mrb[0].mxu0 %v173
    %v5506 = vpop.f32.mrb[0].mxu0
    %v5507 = vadd.f32 %v5314, %v5506
    %v5508 = vpop.f32.mrb[0].mxu0
    %v5509 = vadd.f32 %v5316, %v5508
    %v5510 = vpop.f32.mrb[0].mxu0
    %v5511 = vadd.f32 %v5318, %v5510
    %v5512 = vpop.f32.mrb[0].mxu0
    %v5513 = vadd.f32 %v5320, %v5512
    %5514 = vmatprep.mubr.bf16.mxu0 %v178
    %5515 = vmatmul.mubr.bf16.gmra.mrb[0].mxu0 %v177
    %v5516 = vpop.f32.mrb[0].mxu0
    %v5517 = vadd.f32 %v5324, %v5516
    %v5518 = vpop.f32.mrb[0].mxu0
    %v5519 = vadd.f32 %v5326, %v5518
    %v5520 = vpop.f32.mrb[0].mxu0
    %v5521 = vadd.f32 %v5328, %v5520
    %v5522 = vpop.f32.mrb[0].mxu0
    %v5523 = vadd.f32 %v5330, %v5522
    %5524 = vmatprep.mubr.bf16.mxu0 %v182
    %5525 = vmatmul.mubr.bf16.gmra.mrb[0].mxu0 %v181
    %v5526 = vpop.f32.mrb[0].mxu0
    %v5527 = vadd.f32 %v5334, %v5526
    %v5528 = vpop.f32.mrb[0].mxu0
    %v5529 = vadd.f32 %v5336, %v5528
    %v5530 = vpop.f32.mrb[0].mxu0
    %v5531 = vadd.f32 %v5338, %v5530
    %v5532 = vpop.f32.mrb[0].mxu0
    %v5533 = vadd.f32 %v5340, %v5532
    %5534 = vmatprep.mubr.bf16.mxu0 %v186
    %5535 = vmatmul.mubr.bf16.gmra.mrb[0].mxu0 %v185
    %v5536 = vpop.f32.mrb[0].mxu0
    %v5537 = vadd.f32 %v5344, %v5536
    %v5538 = vpop.f32.mrb[0].mxu0
    %v5539 = vadd.f32 %v5346, %v5538
    %v5540 = vpop.f32.mrb[0].mxu0
    %v5541 = vadd.f32 %v5348, %v5540
    %v5542 = vpop.f32.mrb[0].mxu0
    %v5543 = vadd.f32 %v5350, %v5542
    %5544 = vmatprep.mubr.bf16.mxu0 %v190
    %5545 = vmatmul.mubr.bf16.gmra.mrb[0].mxu0 %v189
    %v5546 = vpop.f32.mrb[0].mxu0
    %v5547 = vadd.f32 %v5354, %v5546
    %v5548 = vpop.f32.mrb[0].mxu0
    %v5549 = vadd.f32 %v5356, %v5548
    %v5550 = vpop.f32.mrb[0].mxu0
    %v5551 = vadd.f32 %v5358, %v5550
    %v5552 = vpop.f32.mrb[0].mxu0
    %v5553 = vadd.f32 %v5360, %v5552
    %5554 = vmatprep.mubr.bf16.mxu0 %v194
    %5555 = vmatmul.mubr.bf16.gmra.mrb[0].mxu0 %v193
    %v5556 = vpop.f32.mrb[0].mxu0
    %v5557 = vadd.f32 %v5364, %v5556
    %v5558 = vpop.f32.mrb[0].mxu0
    %v5559 = vadd.f32 %v5366, %v5558
    %v5560 = vpop.f32.mrb[0].mxu0
    %v5561 = vadd.f32 %v5368, %v5560
    %v5562 = vpop.f32.mrb[0].mxu0
    %v5563 = vadd.f32 %v5370, %v5562
    %5564 = vmatprep.mubr.bf16.mxu0 %v198
    %5565 = vmatmul.mubr.bf16.gmra.mrb[0].mxu0 %v197
    %v5566 = vpop.f32.mrb[0].mxu0
    %v5567 = vadd.f32 %v5374, %v5566
    %v5568 = vpop.f32.mrb[0].mxu0
    %v5569 = vadd.f32 %v5376, %v5568
    %v5570 = vpop.f32.mrb[0].mxu0
    %v5571 = vadd.f32 %v5378, %v5570
    %v5572 = vpop.f32.mrb[0].mxu0
    %v5573 = vadd.f32 %v5380, %v5572
    %5574 = vmatprep.mubr.bf16.mxu0 %v202
    %5575 = vmatmul.mubr.bf16.gmra.mrb[0].mxu0 %v201
    %v5576 = vpop.f32.mrb[0].mxu0
    %v5577 = vadd.f32 %v5384, %v5576
    %v5578 = vpop.f32.mrb[0].mxu0
    %v5579 = vadd.f32 %v5386, %v5578
    %v5580 = vpop.f32.mrb[0].mxu0
    %v5581 = vadd.f32 %v5388, %v5580
    %v5582 = vpop.f32.mrb[0].mxu0
    %v5583 = vadd.f32 %v5390, %v5582
    %5584 = vmatprep.mubr.bf16.mxu0 %v206
    %5585 = vmatmul.mubr.bf16.gmra.mrb[0].mxu0 %v205
    %v5586 = vpop.f32.mrb[0].mxu0
    %v5587 = vadd.f32 %v5394, %v5586
    %v5588 = vpop.f32.mrb[0].mxu0
    %v5589 = vadd.f32 %v5396, %v5588
    %v5590 = vpop.f32.mrb[0].mxu0
    %v5591 = vadd.f32 %v5398, %v5590
    %v5592 = vpop.f32.mrb[0].mxu0
    %v5593 = vadd.f32 %v5400, %v5592
    %5594 = vdwg.mxu0
    %5595 = vmatprep.subr.bf16.mxu0 %v2268
    %5596 = vmatpush1.bf16.msra.mxu0 %v2267
    %5597 = vmatprep.subr.bf16.mxu0 %v2284
    %5598 = vmatpush1.bf16.msra.mxu0 %v2283
    %5599 = vmatprep.subr.bf16.mxu0 %v2300
    %5600 = vmatpush1.bf16.msra.mxu0 %v2299
    %5601 = vmatprep.subr.bf16.mxu0 %v2316
    %5602 = vmatpush1.bf16.msra.mxu0 %v2315
    %5603 = vmatprep.subr.bf16.mxu0 %v2332
    %5604 = vmatpush1.bf16.msra.mxu0 %v2331
    %5605 = vmatprep.subr.bf16.mxu0 %v2348
    %5606 = vmatpush1.bf16.msra.mxu0 %v2347
    %5607 = vmatprep.subr.bf16.mxu0 %v2364
    %5608 = vmatpush1.bf16.msra.mxu0 %v2363
    %5609 = vmatprep.subr.bf16.mxu0 %v2380
    %5610 = vmatpush1.bf16.msra.mxu0 %v2379
    %5611 = vmatprep.subr.bf16.mxu0 %v2396
    %5612 = vmatpush1.bf16.msra.mxu0 %v2395
    %5613 = vmatprep.subr.bf16.mxu0 %v2412
    %5614 = vmatpush1.bf16.msra.mxu0 %v2411
    %5615 = vmatprep.subr.bf16.mxu0 %v2428
    %5616 = vmatpush1.bf16.msra.mxu0 %v2427
    %5617 = vmatprep.subr.bf16.mxu0 %v2444
    %5618 = vmatpush1.bf16.msra.mxu0 %v2443
    %5619 = vmatprep.subr.bf16.mxu0 %v2460
    %5620 = vmatpush1.bf16.msra.mxu0 %v2459
    %5621 = vmatprep.subr.bf16.mxu0 %v2476
    %5622 = vmatpush1.bf16.msra.mxu0 %v2475
    %5623 = vmatprep.subr.bf16.mxu0 %v2492
    %5624 = vmatpush1.bf16.msra.mxu0 %v2491
    %5625 = vmatprep.subr.bf16.mxu0 %v2508
    %5626 = vmatpush1.bf16.msra.mxu0 %v2507
    %5627 = vmatprep.mubr.bf16.mxu0 %v144
    %5628 = vmatmul.mubr.bf16.gmra.mrb[0].mxu0 %v143
    %v5629 = vpop.f32.mrb[0].mxu0
    %v5630 = vadd.f32 0.0, %v5629
    %v5631 = vpop.f32.mrb[0].mxu0
    %v5632 = vadd.f32 0.0, %v5631
    %v5633 = vpop.f32.mrb[0].mxu0
    %v5634 = vadd.f32 0.0, %v5633
    %v5635 = vpop.f32.mrb[0].mxu0
    %v5636 = vadd.f32 0.0, %v5635
    %5637 = vmatprep.mubr.bf16.mxu0 %v148
    %5638 = vmatmul.mubr.bf16.gmra.mrb[0].mxu0 %v147
    %v5639 = vpop.f32.mrb[0].mxu0
    %v5640 = vadd.f32 0.0, %v5639
    %v5641 = vpop.f32.mrb[0].mxu0
    %v5642 = vadd.f32 0.0, %v5641
    %v5643 = vpop.f32.mrb[0].mxu0
    %v5644 = vadd.f32 0.0, %v5643
    %v5645 = vpop.f32.mrb[0].mxu0
    %v5646 = vadd.f32 0.0, %v5645
    %5647 = vmatprep.mubr.bf16.mxu0 %v152
    %5648 = vmatmul.mubr.bf16.gmra.mrb[0].mxu0 %v151
    %v5649 = vpop.f32.mrb[0].mxu0
    %v5650 = vadd.f32 0.0, %v5649
    %v5651 = vpop.f32.mrb[0].mxu0
    %v5652 = vadd.f32 0.0, %v5651
    %v5653 = vpop.f32.mrb[0].mxu0
    %v5654 = vadd.f32 0.0, %v5653
    %v5655 = vpop.f32.mrb[0].mxu0
    %v5656 = vadd.f32 0.0, %v5655
    %5657 = vmatprep.mubr.bf16.mxu0 %v156
    %5658 = vmatmul.mubr.bf16.gmra.mrb[0].mxu0 %v155
    %v5659 = vpop.f32.mrb[0].mxu0
    %v5660 = vadd.f32 0.0, %v5659
    %v5661 = vpop.f32.mrb[0].mxu0
    %v5662 = vadd.f32 0.0, %v5661
    %v5663 = vpop.f32.mrb[0].mxu0
    %v5664 = vadd.f32 0.0, %v5663
    %v5665 = vpop.f32.mrb[0].mxu0
    %v5666 = vadd.f32 0.0, %v5665
    %5667 = vmatprep.mubr.bf16.mxu0 %v160
    %5668 = vmatmul.mubr.bf16.gmra.mrb[0].mxu0 %v159
    %v5669 = vpop.f32.mrb[0].mxu0
    %v5670 = vadd.f32 0.0, %v5669
    %v5671 = vpop.f32.mrb[0].mxu0
    %v5672 = vadd.f32 0.0, %v5671
    %v5673 = vpop.f32.mrb[0].mxu0
    %v5674 = vadd.f32 0.0, %v5673
    %v5675 = vpop.f32.mrb[0].mxu0
    %v5676 = vadd.f32 0.0, %v5675
    %5677 = vmatprep.mubr.bf16.mxu0 %v164
    %5678 = vmatmul.mubr.bf16.gmra.mrb[0].mxu0 %v163
    %v5679 = vpop.f32.mrb[0].mxu0
    %v5680 = vadd.f32 0.0, %v5679
    %v5681 = vpop.f32.mrb[0].mxu0
    %v5682 = vadd.f32 0.0, %v5681
    %v5683 = vpop.f32.mrb[0].mxu0
    %v5684 = vadd.f32 0.0, %v5683
    %v5685 = vpop.f32.mrb[0].mxu0
    %v5686 = vadd.f32 0.0, %v5685
    %5687 = vmatprep.mubr.bf16.mxu0 %v168
    %5688 = vmatmul.mubr.bf16.gmra.mrb[0].mxu0 %v167
    %v5689 = vpop.f32.mrb[0].mxu0
    %v5690 = vadd.f32 0.0, %v5689
    %v5691 = vpop.f32.mrb[0].mxu0
    %v5692 = vadd.f32 0.0, %v5691
    %v5693 = vpop.f32.mrb[0].mxu0
    %v5694 = vadd.f32 0.0, %v5693
    %v5695 = vpop.f32.mrb[0].mxu0
    %v5696 = vadd.f32 0.0, %v5695
    %5697 = vmatprep.mubr.bf16.mxu0 %v172
    %5698 = vmatmul.mubr.bf16.gmra.mrb[0].mxu0 %v171
    %v5699 = vpop.f32.mrb[0].mxu0
    %v5700 = vadd.f32 0.0, %v5699
    %v5701 = vpop.f32.mrb[0].mxu0
    %v5702 = vadd.f32 0.0, %v5701
    %v5703 = vpop.f32.mrb[0].mxu0
    %v5704 = vadd.f32 0.0, %v5703
    %v5705 = vpop.f32.mrb[0].mxu0
    %v5706 = vadd.f32 0.0, %v5705
    %5707 = vmatprep.mubr.bf16.mxu0 %v176
    %5708 = vmatmul.mubr.bf16.gmra.mrb[0].mxu0 %v175
    %v5709 = vpop.f32.mrb[0].mxu0
    %v5710 = vadd.f32 0.0, %v5709
    %v5711 = vpop.f32.mrb[0].mxu0
    %v5712 = vadd.f32 0.0, %v5711
    %v5713 = vpop.f32.mrb[0].mxu0
    %v5714 = vadd.f32 0.0, %v5713
    %v5715 = vpop.f32.mrb[0].mxu0
    %v5716 = vadd.f32 0.0, %v5715
    %5717 = vmatprep.mubr.bf16.mxu0 %v180
    %5718 = vmatmul.mubr.bf16.gmra.mrb[0].mxu0 %v179
    %v5719 = vpop.f32.mrb[0].mxu0
    %v5720 = vadd.f32 0.0, %v5719
    %v5721 = vpop.f32.mrb[0].mxu0
    %v5722 = vadd.f32 0.0, %v5721
    %v5723 = vpop.f32.mrb[0].mxu0
    %v5724 = vadd.f32 0.0, %v5723
    %v5725 = vpop.f32.mrb[0].mxu0
    %v5726 = vadd.f32 0.0, %v5725
    %5727 = vmatprep.mubr.bf16.mxu0 %v184
    %5728 = vmatmul.mubr.bf16.gmra.mrb[0].mxu0 %v183
    %v5729 = vpop.f32.mrb[0].mxu0
    %v5730 = vadd.f32 0.0, %v5729
    %v5731 = vpop.f32.mrb[0].mxu0
    %v5732 = vadd.f32 0.0, %v5731
    %v5733 = vpop.f32.mrb[0].mxu0
    %v5734 = vadd.f32 0.0, %v5733
    %v5735 = vpop.f32.mrb[0].mxu0
    %v5736 = vadd.f32 0.0, %v5735
    %5737 = vmatprep.mubr.bf16.mxu0 %v188
    %5738 = vmatmul.mubr.bf16.gmra.mrb[0].mxu0 %v187
    %v5739 = vpop.f32.mrb[0].mxu0
    %v5740 = vadd.f32 0.0, %v5739
    %v5741 = vpop.f32.mrb[0].mxu0
    %v5742 = vadd.f32 0.0, %v5741
    %v5743 = vpop.f32.mrb[0].mxu0
    %v5744 = vadd.f32 0.0, %v5743
    %v5745 = vpop.f32.mrb[0].mxu0
    %v5746 = vadd.f32 0.0, %v5745
    %5747 = vmatprep.mubr.bf16.mxu0 %v192
    %5748 = vmatmul.mubr.bf16.gmra.mrb[0].mxu0 %v191
    %v5749 = vpop.f32.mrb[0].mxu0
    %v5750 = vadd.f32 0.0, %v5749
    %v5751 = vpop.f32.mrb[0].mxu0
    %v5752 = vadd.f32 0.0, %v5751
    %v5753 = vpop.f32.mrb[0].mxu0
    %v5754 = vadd.f32 0.0, %v5753
    %v5755 = vpop.f32.mrb[0].mxu0
    %v5756 = vadd.f32 0.0, %v5755
    %5757 = vmatprep.mubr.bf16.mxu0 %v196
    %5758 = vmatmul.mubr.bf16.gmra.mrb[0].mxu0 %v195
    %v5759 = vpop.f32.mrb[0].mxu0
    %v5760 = vadd.f32 0.0, %v5759
    %v5761 = vpop.f32.mrb[0].mxu0
    %v5762 = vadd.f32 0.0, %v5761
    %v5763 = vpop.f32.mrb[0].mxu0
    %v5764 = vadd.f32 0.0, %v5763
    %v5765 = vpop.f32.mrb[0].mxu0
    %v5766 = vadd.f32 0.0, %v5765
    %5767 = vmatprep.mubr.bf16.mxu0 %v200
    %5768 = vmatmul.mubr.bf16.gmra.mrb[0].mxu0 %v199
    %v5769 = vpop.f32.mrb[0].mxu0
    %v5770 = vadd.f32 0.0, %v5769
    %v5771 = vpop.f32.mrb[0].mxu0
    %v5772 = vadd.f32 0.0, %v5771
    %v5773 = vpop.f32.mrb[0].mxu0
    %v5774 = vadd.f32 0.0, %v5773
    %v5775 = vpop.f32.mrb[0].mxu0
    %v5776 = vadd.f32 0.0, %v5775
    %5777 = vmatprep.mubr.bf16.mxu0 %v204
    %5778 = vmatmul.mubr.bf16.gmra.mrb[0].mxu0 %v203
    %v5779 = vpop.f32.mrb[0].mxu0
    %v5780 = vadd.f32 0.0, %v5779
    %v5781 = vpop.f32.mrb[0].mxu0
    %v5782 = vadd.f32 0.0, %v5781
    %v5783 = vpop.f32.mrb[0].mxu0
    %v5784 = vadd.f32 0.0, %v5783
    %v5785 = vpop.f32.mrb[0].mxu0
    %v5786 = vadd.f32 0.0, %v5785
    %5787 = vdwg.mxu0
    %5788 = vmatprep.subr.bf16.mxu0 %v2524
    %5789 = vmatpush1.bf16.msra.mxu0 %v2523
    %5790 = vmatprep.subr.bf16.mxu0 %v2540
    %5791 = vmatpush1.bf16.msra.mxu0 %v2539
    %5792 = vmatprep.subr.bf16.mxu0 %v2556
    %5793 = vmatpush1.bf16.msra.mxu0 %v2555
    %5794 = vmatprep.subr.bf16.mxu0 %v2572
    %5795 = vmatpush1.bf16.msra.mxu0 %v2571
    %5796 = vmatprep.subr.bf16.mxu0 %v2588
    %5797 = vmatpush1.bf16.msra.mxu0 %v2587
    %5798 = vmatprep.subr.bf16.mxu0 %v2604
    %5799 = vmatpush1.bf16.msra.mxu0 %v2603
    %5800 = vmatprep.subr.bf16.mxu0 %v2620
    %5801 = vmatpush1.bf16.msra.mxu0 %v2619
    %5802 = vmatprep.subr.bf16.mxu0 %v2636
    %5803 = vmatpush1.bf16.msra.mxu0 %v2635
    %5804 = vmatprep.subr.bf16.mxu0 %v2652
    %5805 = vmatpush1.bf16.msra.mxu0 %v2651
    %5806 = vmatprep.subr.bf16.mxu0 %v2668
    %5807 = vmatpush1.bf16.msra.mxu0 %v2667
    %5808 = vmatprep.subr.bf16.mxu0 %v2684
    %5809 = vmatpush1.bf16.msra.mxu0 %v2683
    %5810 = vmatprep.subr.bf16.mxu0 %v2700
    %5811 = vmatpush1.bf16.msra.mxu0 %v2699
    %5812 = vmatprep.subr.bf16.mxu0 %v2716
    %5813 = vmatpush1.bf16.msra.mxu0 %v2715
    %5814 = vmatprep.subr.bf16.mxu0 %v2732
    %5815 = vmatpush1.bf16.msra.mxu0 %v2731
    %5816 = vmatprep.subr.bf16.mxu0 %v2748
    %5817 = vmatpush1.bf16.msra.mxu0 %v2747
    %5818 = vmatprep.subr.bf16.mxu0 %v2764
    %5819 = vmatpush1.bf16.msra.mxu0 %v2763
    %5820 = vmatprep.mubr.bf16.mxu0 %v146
    %5821 = vmatmul.mubr.bf16.gmra.mrb[0].mxu0 %v145
    %v5822 = vpop.f32.mrb[0].mxu0
    %v5823 = vadd.f32 %v5630, %v5822
    %v5824 = vpop.f32.mrb[0].mxu0
    %v5825 = vadd.f32 %v5632, %v5824
    %v5826 = vpop.f32.mrb[0].mxu0
    %v5827 = vadd.f32 %v5634, %v5826
    %v5828 = vpop.f32.mrb[0].mxu0
    %v5829 = vadd.f32 %v5636, %v5828
    %5830 = vmatprep.mubr.bf16.mxu0 %v150
    %5831 = vmatmul.mubr.bf16.gmra.mrb[0].mxu0 %v149
    %v5832 = vpop.f32.mrb[0].mxu0
    %v5833 = vadd.f32 %v5640, %v5832
    %v5834 = vpop.f32.mrb[0].mxu0
    %v5835 = vadd.f32 %v5642, %v5834
    %v5836 = vpop.f32.mrb[0].mxu0
    %v5837 = vadd.f32 %v5644, %v5836
    %v5838 = vpop.f32.mrb[0].mxu0
    %v5839 = vadd.f32 %v5646, %v5838
    %5840 = vmatprep.mubr.bf16.mxu0 %v154
    %5841 = vmatmul.mubr.bf16.gmra.mrb[0].mxu0 %v153
    %v5842 = vpop.f32.mrb[0].mxu0
    %v5843 = vadd.f32 %v5650, %v5842
    %v5844 = vpop.f32.mrb[0].mxu0
    %v5845 = vadd.f32 %v5652, %v5844
    %v5846 = vpop.f32.mrb[0].mxu0
    %v5847 = vadd.f32 %v5654, %v5846
    %v5848 = vpop.f32.mrb[0].mxu0
    %v5849 = vadd.f32 %v5656, %v5848
    %5850 = vmatprep.mubr.bf16.mxu0 %v158
    %5851 = vmatmul.mubr.bf16.gmra.mrb[0].mxu0 %v157
    %v5852 = vpop.f32.mrb[0].mxu0
    %v5853 = vadd.f32 %v5660, %v5852
    %v5854 = vpop.f32.mrb[0].mxu0
    %v5855 = vadd.f32 %v5662, %v5854
    %v5856 = vpop.f32.mrb[0].mxu0
    %v5857 = vadd.f32 %v5664, %v5856
    %v5858 = vpop.f32.mrb[0].mxu0
    %v5859 = vadd.f32 %v5666, %v5858
    %5860 = vmatprep.mubr.bf16.mxu0 %v162
    %5861 = vmatmul.mubr.bf16.gmra.mrb[0].mxu0 %v161
    %v5862 = vpop.f32.mrb[0].mxu0
    %v5863 = vadd.f32 %v5670, %v5862
    %v5864 = vpop.f32.mrb[0].mxu0
    %v5865 = vadd.f32 %v5672, %v5864
    %v5866 = vpop.f32.mrb[0].mxu0
    %v5867 = vadd.f32 %v5674, %v5866
    %v5868 = vpop.f32.mrb[0].mxu0
    %v5869 = vadd.f32 %v5676, %v5868
    %5870 = vmatprep.mubr.bf16.mxu0 %v166
    %5871 = vmatmul.mubr.bf16.gmra.mrb[0].mxu0 %v165
    %v5872 = vpop.f32.mrb[0].mxu0
    %v5873 = vadd.f32 %v5680, %v5872
    %v5874 = vpop.f32.mrb[0].mxu0
    %v5875 = vadd.f32 %v5682, %v5874
    %v5876 = vpop.f32.mrb[0].mxu0
    %v5877 = vadd.f32 %v5684, %v5876
    %v5878 = vpop.f32.mrb[0].mxu0
    %v5879 = vadd.f32 %v5686, %v5878
    %5880 = vmatprep.mubr.bf16.mxu0 %v170
    %5881 = vmatmul.mubr.bf16.gmra.mrb[0].mxu0 %v169
    %v5882 = vpop.f32.mrb[0].mxu0
    %v5883 = vadd.f32 %v5690, %v5882
    %v5884 = vpop.f32.mrb[0].mxu0
    %v5885 = vadd.f32 %v5692, %v5884
    %v5886 = vpop.f32.mrb[0].mxu0
    %v5887 = vadd.f32 %v5694, %v5886
    %v5888 = vpop.f32.mrb[0].mxu0
    %v5889 = vadd.f32 %v5696, %v5888
    %5890 = vmatprep.mubr.bf16.mxu0 %v174
    %5891 = vmatmul.mubr.bf16.gmra.mrb[0].mxu0 %v173
    %v5892 = vpop.f32.mrb[0].mxu0
    %v5893 = vadd.f32 %v5700, %v5892
    %v5894 = vpop.f32.mrb[0].mxu0
    %v5895 = vadd.f32 %v5702, %v5894
    %v5896 = vpop.f32.mrb[0].mxu0
    %v5897 = vadd.f32 %v5704, %v5896
    %v5898 = vpop.f32.mrb[0].mxu0
    %v5899 = vadd.f32 %v5706, %v5898
    %5900 = vmatprep.mubr.bf16.mxu0 %v178
    %5901 = vmatmul.mubr.bf16.gmra.mrb[0].mxu0 %v177
    %v5902 = vpop.f32.mrb[0].mxu0
    %v5903 = vadd.f32 %v5710, %v5902
    %v5904 = vpop.f32.mrb[0].mxu0
    %v5905 = vadd.f32 %v5712, %v5904
    %v5906 = vpop.f32.mrb[0].mxu0
    %v5907 = vadd.f32 %v5714, %v5906
    %v5908 = vpop.f32.mrb[0].mxu0
    %v5909 = vadd.f32 %v5716, %v5908
    %5910 = vmatprep.mubr.bf16.mxu0 %v182
    %5911 = vmatmul.mubr.bf16.gmra.mrb[0].mxu0 %v181
    %v5912 = vpop.f32.mrb[0].mxu0
    %v5913 = vadd.f32 %v5720, %v5912
    %v5914 = vpop.f32.mrb[0].mxu0
    %v5915 = vadd.f32 %v5722, %v5914
    %v5916 = vpop.f32.mrb[0].mxu0
    %v5917 = vadd.f32 %v5724, %v5916
    %v5918 = vpop.f32.mrb[0].mxu0
    %v5919 = vadd.f32 %v5726, %v5918
    %5920 = vmatprep.mubr.bf16.mxu0 %v186
    %5921 = vmatmul.mubr.bf16.gmra.mrb[0].mxu0 %v185
    %v5922 = vpop.f32.mrb[0].mxu0
    %v5923 = vadd.f32 %v5730, %v5922
    %v5924 = vpop.f32.mrb[0].mxu0
    %v5925 = vadd.f32 %v5732, %v5924
    %v5926 = vpop.f32.mrb[0].mxu0
    %v5927 = vadd.f32 %v5734, %v5926
    %v5928 = vpop.f32.mrb[0].mxu0
    %v5929 = vadd.f32 %v5736, %v5928
    %5930 = vmatprep.mubr.bf16.mxu0 %v190
    %5931 = vmatmul.mubr.bf16.gmra.mrb[0].mxu0 %v189
    %v5932 = vpop.f32.mrb[0].mxu0
    %v5933 = vadd.f32 %v5740, %v5932
    %v5934 = vpop.f32.mrb[0].mxu0
    %v5935 = vadd.f32 %v5742, %v5934
    %v5936 = vpop.f32.mrb[0].mxu0
    %v5937 = vadd.f32 %v5744, %v5936
    %v5938 = vpop.f32.mrb[0].mxu0
    %v5939 = vadd.f32 %v5746, %v5938
    %5940 = vmatprep.mubr.bf16.mxu0 %v194
    %5941 = vmatmul.mubr.bf16.gmra.mrb[0].mxu0 %v193
    %v5942 = vpop.f32.mrb[0].mxu0
    %v5943 = vadd.f32 %v5750, %v5942
    %v5944 = vpop.f32.mrb[0].mxu0
    %v5945 = vadd.f32 %v5752, %v5944
    %v5946 = vpop.f32.mrb[0].mxu0
    %v5947 = vadd.f32 %v5754, %v5946
    %v5948 = vpop.f32.mrb[0].mxu0
    %v5949 = vadd.f32 %v5756, %v5948
    %5950 = vmatprep.mubr.bf16.mxu0 %v198
    %5951 = vmatmul.mubr.bf16.gmra.mrb[0].mxu0 %v197
    %v5952 = vpop.f32.mrb[0].mxu0
    %v5953 = vadd.f32 %v5760, %v5952
    %v5954 = vpop.f32.mrb[0].mxu0
    %v5955 = vadd.f32 %v5762, %v5954
    %v5956 = vpop.f32.mrb[0].mxu0
    %v5957 = vadd.f32 %v5764, %v5956
    %v5958 = vpop.f32.mrb[0].mxu0
    %v5959 = vadd.f32 %v5766, %v5958
    %5960 = vmatprep.mubr.bf16.mxu0 %v202
    %5961 = vmatmul.mubr.bf16.gmra.mrb[0].mxu0 %v201
    %v5962 = vpop.f32.mrb[0].mxu0
    %v5963 = vadd.f32 %v5770, %v5962
    %v5964 = vpop.f32.mrb[0].mxu0
    %v5965 = vadd.f32 %v5772, %v5964
    %v5966 = vpop.f32.mrb[0].mxu0
    %v5967 = vadd.f32 %v5774, %v5966
    %v5968 = vpop.f32.mrb[0].mxu0
    %v5969 = vadd.f32 %v5776, %v5968
    %5970 = vmatprep.mubr.bf16.mxu0 %v206
    %5971 = vmatmul.mubr.bf16.gmra.mrb[0].mxu0 %v205
    %v5972 = vpop.f32.mrb[0].mxu0
    %v5973 = vadd.f32 %v5780, %v5972
    %v5974 = vpop.f32.mrb[0].mxu0
    %v5975 = vadd.f32 %v5782, %v5974
    %v5976 = vpop.f32.mrb[0].mxu0
    %v5977 = vadd.f32 %v5784, %v5976
    %v5978 = vpop.f32.mrb[0].mxu0
    %v5979 = vadd.f32 %v5786, %v5978
    %5980 = vdwg.mxu0
    %5981 = vmatprep.subr.bf16.mxu0 %v2270
    %5982 = vmatpush1.bf16.msra.mxu0 %v2269
    %5983 = vmatprep.subr.bf16.mxu0 %v2286
    %5984 = vmatpush1.bf16.msra.mxu0 %v2285
    %5985 = vmatprep.subr.bf16.mxu0 %v2302
    %5986 = vmatpush1.bf16.msra.mxu0 %v2301
    %5987 = vmatprep.subr.bf16.mxu0 %v2318
    %5988 = vmatpush1.bf16.msra.mxu0 %v2317
    %5989 = vmatprep.subr.bf16.mxu0 %v2334
    %5990 = vmatpush1.bf16.msra.mxu0 %v2333
    %5991 = vmatprep.subr.bf16.mxu0 %v2350
    %5992 = vmatpush1.bf16.msra.mxu0 %v2349
    %5993 = vmatprep.subr.bf16.mxu0 %v2366
    %5994 = vmatpush1.bf16.msra.mxu0 %v2365
    %5995 = vmatprep.subr.bf16.mxu0 %v2382
    %5996 = vmatpush1.bf16.msra.mxu0 %v2381
    %5997 = vmatprep.subr.bf16.mxu0 %v2398
    %5998 = vmatpush1.bf16.msra.mxu0 %v2397
    %5999 = vmatprep.subr.bf16.mxu0 %v2414
    %6000 = vmatpush1.bf16.msra.mxu0 %v2413
    %6001 = vmatprep.subr.bf16.mxu0 %v2430
    %6002 = vmatpush1.bf16.msra.mxu0 %v2429
    %6003 = vmatprep.subr.bf16.mxu0 %v2446
    %6004 = vmatpush1.bf16.msra.mxu0 %v2445
    %6005 = vmatprep.subr.bf16.mxu0 %v2462
    %6006 = vmatpush1.bf16.msra.mxu0 %v2461
    %6007 = vmatprep.subr.bf16.mxu0 %v2478
    %6008 = vmatpush1.bf16.msra.mxu0 %v2477
    %6009 = vmatprep.subr.bf16.mxu0 %v2494
    %6010 = vmatpush1.bf16.msra.mxu0 %v2493
    %6011 = vmatprep.subr.bf16.mxu0 %v2510
    %6012 = vmatpush1.bf16.msra.mxu0 %v2509
    %6013 = vmatprep.mubr.bf16.mxu0 %v144
    %6014 = vmatmul.mubr.bf16.gmra.mrb[0].mxu0 %v143
    %v6015 = vpop.f32.mrb[0].mxu0
    %v6016 = vadd.f32 0.0, %v6015
    %v6017 = vpop.f32.mrb[0].mxu0
    %v6018 = vadd.f32 0.0, %v6017
    %v6019 = vpop.f32.mrb[0].mxu0
    %v6020 = vadd.f32 0.0, %v6019
    %v6021 = vpop.f32.mrb[0].mxu0
    %v6022 = vadd.f32 0.0, %v6021
    %6023 = vmatprep.mubr.bf16.mxu0 %v148
    %6024 = vmatmul.mubr.bf16.gmra.mrb[0].mxu0 %v147
    %v6025 = vpop.f32.mrb[0].mxu0
    %v6026 = vadd.f32 0.0, %v6025
    %v6027 = vpop.f32.mrb[0].mxu0
    %v6028 = vadd.f32 0.0, %v6027
    %v6029 = vpop.f32.mrb[0].mxu0
    %v6030 = vadd.f32 0.0, %v6029
    %v6031 = vpop.f32.mrb[0].mxu0
    %v6032 = vadd.f32 0.0, %v6031
    %6033 = vmatprep.mubr.bf16.mxu0 %v152
    %6034 = vmatmul.mubr.bf16.gmra.mrb[0].mxu0 %v151
    %v6035 = vpop.f32.mrb[0].mxu0
    %v6036 = vadd.f32 0.0, %v6035
    %v6037 = vpop.f32.mrb[0].mxu0
    %v6038 = vadd.f32 0.0, %v6037
    %v6039 = vpop.f32.mrb[0].mxu0
    %v6040 = vadd.f32 0.0, %v6039
    %v6041 = vpop.f32.mrb[0].mxu0
    %v6042 = vadd.f32 0.0, %v6041
    %6043 = vmatprep.mubr.bf16.mxu0 %v156
    %6044 = vmatmul.mubr.bf16.gmra.mrb[0].mxu0 %v155
    %v6045 = vpop.f32.mrb[0].mxu0
    %v6046 = vadd.f32 0.0, %v6045
    %v6047 = vpop.f32.mrb[0].mxu0
    %v6048 = vadd.f32 0.0, %v6047
    %v6049 = vpop.f32.mrb[0].mxu0
    %v6050 = vadd.f32 0.0, %v6049
    %v6051 = vpop.f32.mrb[0].mxu0
    %v6052 = vadd.f32 0.0, %v6051
    %6053 = vmatprep.mubr.bf16.mxu0 %v160
    %6054 = vmatmul.mubr.bf16.gmra.mrb[0].mxu0 %v159
    %v6055 = vpop.f32.mrb[0].mxu0
    %v6056 = vadd.f32 0.0, %v6055
    %v6057 = vpop.f32.mrb[0].mxu0
    %v6058 = vadd.f32 0.0, %v6057
    %v6059 = vpop.f32.mrb[0].mxu0
    %v6060 = vadd.f32 0.0, %v6059
    %v6061 = vpop.f32.mrb[0].mxu0
    %v6062 = vadd.f32 0.0, %v6061
    %6063 = vmatprep.mubr.bf16.mxu0 %v164
    %6064 = vmatmul.mubr.bf16.gmra.mrb[0].mxu0 %v163
    %v6065 = vpop.f32.mrb[0].mxu0
    %v6066 = vadd.f32 0.0, %v6065
    %v6067 = vpop.f32.mrb[0].mxu0
    %v6068 = vadd.f32 0.0, %v6067
    %v6069 = vpop.f32.mrb[0].mxu0
    %v6070 = vadd.f32 0.0, %v6069
    %v6071 = vpop.f32.mrb[0].mxu0
    %v6072 = vadd.f32 0.0, %v6071
    %6073 = vmatprep.mubr.bf16.mxu0 %v168
    %6074 = vmatmul.mubr.bf16.gmra.mrb[0].mxu0 %v167
    %v6075 = vpop.f32.mrb[0].mxu0
    %v6076 = vadd.f32 0.0, %v6075
    %v6077 = vpop.f32.mrb[0].mxu0
    %v6078 = vadd.f32 0.0, %v6077
    %v6079 = vpop.f32.mrb[0].mxu0
    %v6080 = vadd.f32 0.0, %v6079
    %v6081 = vpop.f32.mrb[0].mxu0
    %v6082 = vadd.f32 0.0, %v6081
    %6083 = vmatprep.mubr.bf16.mxu0 %v172
    %6084 = vmatmul.mubr.bf16.gmra.mrb[0].mxu0 %v171
    %v6085 = vpop.f32.mrb[0].mxu0
    %v6086 = vadd.f32 0.0, %v6085
    %v6087 = vpop.f32.mrb[0].mxu0
    %v6088 = vadd.f32 0.0, %v6087
    %v6089 = vpop.f32.mrb[0].mxu0
    %v6090 = vadd.f32 0.0, %v6089
    %v6091 = vpop.f32.mrb[0].mxu0
    %v6092 = vadd.f32 0.0, %v6091
    %6093 = vmatprep.mubr.bf16.mxu0 %v176
    %6094 = vmatmul.mubr.bf16.gmra.mrb[0].mxu0 %v175
    %v6095 = vpop.f32.mrb[0].mxu0
    %v6096 = vadd.f32 0.0, %v6095
    %v6097 = vpop.f32.mrb[0].mxu0
    %v6098 = vadd.f32 0.0, %v6097
    %v6099 = vpop.f32.mrb[0].mxu0
    %v6100 = vadd.f32 0.0, %v6099
    %v6101 = vpop.f32.mrb[0].mxu0
    %v6102 = vadd.f32 0.0, %v6101
    %6103 = vmatprep.mubr.bf16.mxu0 %v180
    %6104 = vmatmul.mubr.bf16.gmra.mrb[0].mxu0 %v179
    %v6105 = vpop.f32.mrb[0].mxu0
    %v6106 = vadd.f32 0.0, %v6105
    %v6107 = vpop.f32.mrb[0].mxu0
    %v6108 = vadd.f32 0.0, %v6107
    %v6109 = vpop.f32.mrb[0].mxu0
    %v6110 = vadd.f32 0.0, %v6109
    %v6111 = vpop.f32.mrb[0].mxu0
    %v6112 = vadd.f32 0.0, %v6111
    %6113 = vmatprep.mubr.bf16.mxu0 %v184
    %6114 = vmatmul.mubr.bf16.gmra.mrb[0].mxu0 %v183
    %v6115 = vpop.f32.mrb[0].mxu0
    %v6116 = vadd.f32 0.0, %v6115
    %v6117 = vpop.f32.mrb[0].mxu0
    %v6118 = vadd.f32 0.0, %v6117
    %v6119 = vpop.f32.mrb[0].mxu0
    %v6120 = vadd.f32 0.0, %v6119
    %v6121 = vpop.f32.mrb[0].mxu0
    %v6122 = vadd.f32 0.0, %v6121
    %6123 = vmatprep.mubr.bf16.mxu0 %v188
    %6124 = vmatmul.mubr.bf16.gmra.mrb[0].mxu0 %v187
    %v6125 = vpop.f32.mrb[0].mxu0
    %v6126 = vadd.f32 0.0, %v6125
    %v6127 = vpop.f32.mrb[0].mxu0
    %v6128 = vadd.f32 0.0, %v6127
    %v6129 = vpop.f32.mrb[0].mxu0
    %v6130 = vadd.f32 0.0, %v6129
    %v6131 = vpop.f32.mrb[0].mxu0
    %v6132 = vadd.f32 0.0, %v6131
    %6133 = vmatprep.mubr.bf16.mxu0 %v192
    %6134 = vmatmul.mubr.bf16.gmra.mrb[0].mxu0 %v191
    %v6135 = vpop.f32.mrb[0].mxu0
    %v6136 = vadd.f32 0.0, %v6135
    %v6137 = vpop.f32.mrb[0].mxu0
    %v6138 = vadd.f32 0.0, %v6137
    %v6139 = vpop.f32.mrb[0].mxu0
    %v6140 = vadd.f32 0.0, %v6139
    %v6141 = vpop.f32.mrb[0].mxu0
    %v6142 = vadd.f32 0.0, %v6141
    %6143 = vmatprep.mubr.bf16.mxu0 %v196
    %6144 = vmatmul.mubr.bf16.gmra.mrb[0].mxu0 %v195
    %v6145 = vpop.f32.mrb[0].mxu0
    %v6146 = vadd.f32 0.0, %v6145
    %v6147 = vpop.f32.mrb[0].mxu0
    %v6148 = vadd.f32 0.0, %v6147
    %v6149 = vpop.f32.mrb[0].mxu0
    %v6150 = vadd.f32 0.0, %v6149
    %v6151 = vpop.f32.mrb[0].mxu0
    %v6152 = vadd.f32 0.0, %v6151
    %6153 = vmatprep.mubr.bf16.mxu0 %v200
    %6154 = vmatmul.mubr.bf16.gmra.mrb[0].mxu0 %v199
    %v6155 = vpop.f32.mrb[0].mxu0
    %v6156 = vadd.f32 0.0, %v6155
    %v6157 = vpop.f32.mrb[0].mxu0
    %v6158 = vadd.f32 0.0, %v6157
    %v6159 = vpop.f32.mrb[0].mxu0
    %v6160 = vadd.f32 0.0, %v6159
    %v6161 = vpop.f32.mrb[0].mxu0
    %v6162 = vadd.f32 0.0, %v6161
    %6163 = vmatprep.mubr.bf16.mxu0 %v204
    %6164 = vmatmul.mubr.bf16.gmra.mrb[0].mxu0 %v203
    %v6165 = vpop.f32.mrb[0].mxu0
    %v6166 = vadd.f32 0.0, %v6165
    %v6167 = vpop.f32.mrb[0].mxu0
    %v6168 = vadd.f32 0.0, %v6167
    %v6169 = vpop.f32.mrb[0].mxu0
    %v6170 = vadd.f32 0.0, %v6169
    %v6171 = vpop.f32.mrb[0].mxu0
    %v6172 = vadd.f32 0.0, %v6171
    %6173 = vdwg.mxu0
    %6174 = vmatprep.subr.bf16.mxu0 %v2526
    %6175 = vmatpush1.bf16.msra.mxu0 %v2525
    %6176 = vmatprep.subr.bf16.mxu0 %v2542
    %6177 = vmatpush1.bf16.msra.mxu0 %v2541
    %6178 = vmatprep.subr.bf16.mxu0 %v2558
    %6179 = vmatpush1.bf16.msra.mxu0 %v2557
    %6180 = vmatprep.subr.bf16.mxu0 %v2574
    %6181 = vmatpush1.bf16.msra.mxu0 %v2573
    %6182 = vmatprep.subr.bf16.mxu0 %v2590
    %6183 = vmatpush1.bf16.msra.mxu0 %v2589
    %6184 = vmatprep.subr.bf16.mxu0 %v2606
    %6185 = vmatpush1.bf16.msra.mxu0 %v2605
    %6186 = vmatprep.subr.bf16.mxu0 %v2622
    %6187 = vmatpush1.bf16.msra.mxu0 %v2621
    %6188 = vmatprep.subr.bf16.mxu0 %v2638
    %6189 = vmatpush1.bf16.msra.mxu0 %v2637
    %6190 = vmatprep.subr.bf16.mxu0 %v2654
    %6191 = vmatpush1.bf16.msra.mxu0 %v2653
    %6192 = vmatprep.subr.bf16.mxu0 %v2670
    %6193 = vmatpush1.bf16.msra.mxu0 %v2669
    %6194 = vmatprep.subr.bf16.mxu0 %v2686
    %6195 = vmatpush1.bf16.msra.mxu0 %v2685
    %6196 = vmatprep.subr.bf16.mxu0 %v2702
    %6197 = vmatpush1.bf16.msra.mxu0 %v2701
    %6198 = vmatprep.subr.bf16.mxu0 %v2718
    %6199 = vmatpush1.bf16.msra.mxu0 %v2717
    %6200 = vmatprep.subr.bf16.mxu0 %v2734
    %6201 = vmatpush1.bf16.msra.mxu0 %v2733
    %6202 = vmatprep.subr.bf16.mxu0 %v2750
    %6203 = vmatpush1.bf16.msra.mxu0 %v2749
    %6204 = vmatprep.subr.bf16.mxu0 %v2766
    %6205 = vmatpush1.bf16.msra.mxu0 %v2765
    %6206 = vmatprep.mubr.bf16.mxu0 %v146
    %6207 = vmatmul.mubr.bf16.gmra.mrb[0].mxu0 %v145
    %v6208 = vpop.f32.mrb[0].mxu0
    %v6209 = vadd.f32 %v6016, %v6208
    %v6210 = vpop.f32.mrb[0].mxu0
    %v6211 = vadd.f32 %v6018, %v6210
    %v6212 = vpop.f32.mrb[0].mxu0
    %v6213 = vadd.f32 %v6020, %v6212
    %v6214 = vpop.f32.mrb[0].mxu0
    %v6215 = vadd.f32 %v6022, %v6214
    %6216 = vmatprep.mubr.bf16.mxu0 %v150
    %6217 = vmatmul.mubr.bf16.gmra.mrb[0].mxu0 %v149
    %v6218 = vpop.f32.mrb[0].mxu0
    %v6219 = vadd.f32 %v6026, %v6218
    %v6220 = vpop.f32.mrb[0].mxu0
    %v6221 = vadd.f32 %v6028, %v6220
    %v6222 = vpop.f32.mrb[0].mxu0
    %v6223 = vadd.f32 %v6030, %v6222
    %v6224 = vpop.f32.mrb[0].mxu0
    %v6225 = vadd.f32 %v6032, %v6224
    %6226 = vmatprep.mubr.bf16.mxu0 %v154
    %6227 = vmatmul.mubr.bf16.gmra.mrb[0].mxu0 %v153
    %v6228 = vpop.f32.mrb[0].mxu0
    %v6229 = vadd.f32 %v6036, %v6228
    %v6230 = vpop.f32.mrb[0].mxu0
    %v6231 = vadd.f32 %v6038, %v6230
    %v6232 = vpop.f32.mrb[0].mxu0
    %v6233 = vadd.f32 %v6040, %v6232
    %v6234 = vpop.f32.mrb[0].mxu0
    %v6235 = vadd.f32 %v6042, %v6234
    %6236 = vmatprep.mubr.bf16.mxu0 %v158
    %6237 = vmatmul.mubr.bf16.gmra.mrb[0].mxu0 %v157
    %v6238 = vpop.f32.mrb[0].mxu0
    %v6239 = vadd.f32 %v6046, %v6238
    %v6240 = vpop.f32.mrb[0].mxu0
    %v6241 = vadd.f32 %v6048, %v6240
    %v6242 = vpop.f32.mrb[0].mxu0
    %v6243 = vadd.f32 %v6050, %v6242
    %v6244 = vpop.f32.mrb[0].mxu0
    %v6245 = vadd.f32 %v6052, %v6244
    %6246 = vmatprep.mubr.bf16.mxu0 %v162
    %6247 = vmatmul.mubr.bf16.gmra.mrb[0].mxu0 %v161
    %v6248 = vpop.f32.mrb[0].mxu0
    %v6249 = vadd.f32 %v6056, %v6248
    %v6250 = vpop.f32.mrb[0].mxu0
    %v6251 = vadd.f32 %v6058, %v6250
    %v6252 = vpop.f32.mrb[0].mxu0
    %v6253 = vadd.f32 %v6060, %v6252
    %v6254 = vpop.f32.mrb[0].mxu0
    %v6255 = vadd.f32 %v6062, %v6254
    %6256 = vmatprep.mubr.bf16.mxu0 %v166
    %6257 = vmatmul.mubr.bf16.gmra.mrb[0].mxu0 %v165
    %v6258 = vpop.f32.mrb[0].mxu0
    %v6259 = vadd.f32 %v6066, %v6258
    %v6260 = vpop.f32.mrb[0].mxu0
    %v6261 = vadd.f32 %v6068, %v6260
    %v6262 = vpop.f32.mrb[0].mxu0
    %v6263 = vadd.f32 %v6070, %v6262
    %v6264 = vpop.f32.mrb[0].mxu0
    %v6265 = vadd.f32 %v6072, %v6264
    %6266 = vmatprep.mubr.bf16.mxu0 %v170
    %6267 = vmatmul.mubr.bf16.gmra.mrb[0].mxu0 %v169
    %v6268 = vpop.f32.mrb[0].mxu0
    %v6269 = vadd.f32 %v6076, %v6268
    %v6270 = vpop.f32.mrb[0].mxu0
    %v6271 = vadd.f32 %v6078, %v6270
    %v6272 = vpop.f32.mrb[0].mxu0
    %v6273 = vadd.f32 %v6080, %v6272
    %v6274 = vpop.f32.mrb[0].mxu0
    %v6275 = vadd.f32 %v6082, %v6274
    %6276 = vmatprep.mubr.bf16.mxu0 %v174
    %6277 = vmatmul.mubr.bf16.gmra.mrb[0].mxu0 %v173
    %v6278 = vpop.f32.mrb[0].mxu0
    %v6279 = vadd.f32 %v6086, %v6278
    %v6280 = vpop.f32.mrb[0].mxu0
    %v6281 = vadd.f32 %v6088, %v6280
    %v6282 = vpop.f32.mrb[0].mxu0
    %v6283 = vadd.f32 %v6090, %v6282
    %v6284 = vpop.f32.mrb[0].mxu0
    %v6285 = vadd.f32 %v6092, %v6284
    %6286 = vmatprep.mubr.bf16.mxu0 %v178
    %6287 = vmatmul.mubr.bf16.gmra.mrb[0].mxu0 %v177
    %v6288 = vpop.f32.mrb[0].mxu0
    %v6289 = vadd.f32 %v6096, %v6288
    %v6290 = vpop.f32.mrb[0].mxu0
    %v6291 = vadd.f32 %v6098, %v6290
    %v6292 = vpop.f32.mrb[0].mxu0
    %v6293 = vadd.f32 %v6100, %v6292
    %v6294 = vpop.f32.mrb[0].mxu0
    %v6295 = vadd.f32 %v6102, %v6294
    %6296 = vmatprep.mubr.bf16.mxu0 %v182
    %6297 = vmatmul.mubr.bf16.gmra.mrb[0].mxu0 %v181
    %v6298 = vpop.f32.mrb[0].mxu0
    %v6299 = vadd.f32 %v6106, %v6298
    %v6300 = vpop.f32.mrb[0].mxu0
    %v6301 = vadd.f32 %v6108, %v6300
    %v6302 = vpop.f32.mrb[0].mxu0
    %v6303 = vadd.f32 %v6110, %v6302
    %v6304 = vpop.f32.mrb[0].mxu0
    %v6305 = vadd.f32 %v6112, %v6304
    %6306 = vmatprep.mubr.bf16.mxu0 %v186
    %6307 = vmatmul.mubr.bf16.gmra.mrb[0].mxu0 %v185
    %v6308 = vpop.f32.mrb[0].mxu0
    %v6309 = vadd.f32 %v6116, %v6308
    %v6310 = vpop.f32.mrb[0].mxu0
    %v6311 = vadd.f32 %v6118, %v6310
    %v6312 = vpop.f32.mrb[0].mxu0
    %v6313 = vadd.f32 %v6120, %v6312
    %v6314 = vpop.f32.mrb[0].mxu0
    %v6315 = vadd.f32 %v6122, %v6314
    %6316 = vmatprep.mubr.bf16.mxu0 %v190
    %6317 = vmatmul.mubr.bf16.gmra.mrb[0].mxu0 %v189
    %v6318 = vpop.f32.mrb[0].mxu0
    %v6319 = vadd.f32 %v6126, %v6318
    %v6320 = vpop.f32.mrb[0].mxu0
    %v6321 = vadd.f32 %v6128, %v6320
    %v6322 = vpop.f32.mrb[0].mxu0
    %v6323 = vadd.f32 %v6130, %v6322
    %v6324 = vpop.f32.mrb[0].mxu0
    %v6325 = vadd.f32 %v6132, %v6324
    %6326 = vmatprep.mubr.bf16.mxu0 %v194
    %6327 = vmatmul.mubr.bf16.gmra.mrb[0].mxu0 %v193
    %v6328 = vpop.f32.mrb[0].mxu0
    %v6329 = vadd.f32 %v6136, %v6328
    %v6330 = vpop.f32.mrb[0].mxu0
    %v6331 = vadd.f32 %v6138, %v6330
    %v6332 = vpop.f32.mrb[0].mxu0
    %v6333 = vadd.f32 %v6140, %v6332
    %v6334 = vpop.f32.mrb[0].mxu0
    %v6335 = vadd.f32 %v6142, %v6334
    %6336 = vmatprep.mubr.bf16.mxu0 %v198
    %6337 = vmatmul.mubr.bf16.gmra.mrb[0].mxu0 %v197
    %v6338 = vpop.f32.mrb[0].mxu0
    %v6339 = vadd.f32 %v6146, %v6338
    %v6340 = vpop.f32.mrb[0].mxu0
    %v6341 = vadd.f32 %v6148, %v6340
    %v6342 = vpop.f32.mrb[0].mxu0
    %v6343 = vadd.f32 %v6150, %v6342
    %v6344 = vpop.f32.mrb[0].mxu0
    %v6345 = vadd.f32 %v6152, %v6344
    %6346 = vmatprep.mubr.bf16.mxu0 %v202
    %6347 = vmatmul.mubr.bf16.gmra.mrb[0].mxu0 %v201
    %v6348 = vpop.f32.mrb[0].mxu0
    %v6349 = vadd.f32 %v6156, %v6348
    %v6350 = vpop.f32.mrb[0].mxu0
    %v6351 = vadd.f32 %v6158, %v6350
    %v6352 = vpop.f32.mrb[0].mxu0
    %v6353 = vadd.f32 %v6160, %v6352
    %v6354 = vpop.f32.mrb[0].mxu0
    %v6355 = vadd.f32 %v6162, %v6354
    %6356 = vmatprep.mubr.bf16.mxu0 %v206
    %6357 = vmatmul.mubr.bf16.gmra.mrb[0].mxu0 %v205
    %v6358 = vpop.f32.mrb[0].mxu0
    %v6359 = vadd.f32 %v6166, %v6358
    %v6360 = vpop.f32.mrb[0].mxu0
    %v6361 = vadd.f32 %v6168, %v6360
    %v6362 = vpop.f32.mrb[0].mxu0
    %v6363 = vadd.f32 %v6170, %v6362
    %v6364 = vpop.f32.mrb[0].mxu0
    %v6365 = vadd.f32 %v6172, %v6364
    %6366 = vdwg.mxu0
    %v6367 = vmax.f32 %v3507, 0.0
    %v6368 = vmax.f32 %v3509, 0.0
    %v6369 = vmax.f32 %v3893, 0.0
    %v6370 = vmax.f32 %v3895, 0.0
    %v6371 = vmax.f32 %v4279, 0.0
    %v6372 = vmax.f32 %v4281, 0.0
    %v6373 = vmax.f32 %v4665, 0.0
    %v6374 = vmax.f32 %v4667, 0.0
    %v6375 = vmax.f32 %v5051, 0.0
    %v6376 = vmax.f32 %v5053, 0.0
    %v6377 = vmax.f32 %v5437, 0.0
    %v6378 = vmax.f32 %v5439, 0.0
    %v6379 = vmax.f32 %v5823, 0.0
    %v6380 = vmax.f32 %v5825, 0.0
    %v6381 = vmax.f32 %v6209, 0.0
    %v6382 = vmax.f32 %v6211, 0.0
    %v6383 = vmax.f32 %v3511, 0.0
    %v6384 = vmax.f32 %v3513, 0.0
    %v6385 = vmax.f32 %v3897, 0.0
    %v6386 = vmax.f32 %v3899, 0.0
    %v6387 = vmax.f32 %v4283, 0.0
    %v6388 = vmax.f32 %v4285, 0.0
    %v6389 = vmax.f32 %v4669, 0.0
    %v6390 = vmax.f32 %v4671, 0.0
    %v6391 = vmax.f32 %v5055, 0.0
    %v6392 = vmax.f32 %v5057, 0.0
    %v6393 = vmax.f32 %v5441, 0.0
    %v6394 = vmax.f32 %v5443, 0.0
    %v6395 = vmax.f32 %v5827, 0.0
    %v6396 = vmax.f32 %v5829, 0.0
    %v6397 = vmax.f32 %v6213, 0.0
    %v6398 = vmax.f32 %v6215, 0.0
    %v6399 = vmax.f32 %v3517, 0.0
    %v6400 = vmax.f32 %v3519, 0.0
    %v6401 = vmax.f32 %v3903, 0.0
    %v6402 = vmax.f32 %v3905, 0.0
    %v6403 = vmax.f32 %v4289, 0.0
    %v6404 = vmax.f32 %v4291, 0.0
    %v6405 = vmax.f32 %v4675, 0.0
    %v6406 = vmax.f32 %v4677, 0.0
    %v6407 = vmax.f32 %v5061, 0.0
    %v6408 = vmax.f32 %v5063, 0.0
    %v6409 = vmax.f32 %v5447, 0.0
    %v6410 = vmax.f32 %v5449, 0.0
    %v6411 = vmax.f32 %v5833, 0.0
    %v6412 = vmax.f32 %v5835, 0.0
    %v6413 = vmax.f32 %v6219, 0.0
    %v6414 = vmax.f32 %v6221, 0.0
    %v6415 = vmax.f32 %v3521, 0.0
    %v6416 = vmax.f32 %v3523, 0.0
    %v6417 = vmax.f32 %v3907, 0.0
    %v6418 = vmax.f32 %v3909, 0.0
    %v6419 = vmax.f32 %v4293, 0.0
    %v6420 = vmax.f32 %v4295, 0.0
    %v6421 = vmax.f32 %v4679, 0.0
    %v6422 = vmax.f32 %v4681, 0.0
    %v6423 = vmax.f32 %v5065, 0.0
    %v6424 = vmax.f32 %v5067, 0.0
    %v6425 = vmax.f32 %v5451, 0.0
    %v6426 = vmax.f32 %v5453, 0.0
    %v6427 = vmax.f32 %v5837, 0.0
    %v6428 = vmax.f32 %v5839, 0.0
    %v6429 = vmax.f32 %v6223, 0.0
    %v6430 = vmax.f32 %v6225, 0.0
    %v6431 = vmax.f32 %v3527, 0.0
    %v6432 = vmax.f32 %v3529, 0.0
    %v6433 = vmax.f32 %v3913, 0.0
    %v6434 = vmax.f32 %v3915, 0.0
    %v6435 = vmax.f32 %v4299, 0.0
    %v6436 = vmax.f32 %v4301, 0.0
    %v6437 = vmax.f32 %v4685, 0.0
    %v6438 = vmax.f32 %v4687, 0.0
    %v6439 = vmax.f32 %v5071, 0.0
    %v6440 = vmax.f32 %v5073, 0.0
    %v6441 = vmax.f32 %v5457, 0.0
    %v6442 = vmax.f32 %v5459, 0.0
    %v6443 = vmax.f32 %v5843, 0.0
    %v6444 = vmax.f32 %v5845, 0.0
    %v6445 = vmax.f32 %v6229, 0.0
    %v6446 = vmax.f32 %v6231, 0.0
    %v6447 = vmax.f32 %v3531, 0.0
    %v6448 = vmax.f32 %v3533, 0.0
    %v6449 = vmax.f32 %v3917, 0.0
    %v6450 = vmax.f32 %v3919, 0.0
    %v6451 = vmax.f32 %v4303, 0.0
    %v6452 = vmax.f32 %v4305, 0.0
    %v6453 = vmax.f32 %v4689, 0.0
    %v6454 = vmax.f32 %v4691, 0.0
    %v6455 = vmax.f32 %v5075, 0.0
    %v6456 = vmax.f32 %v5077, 0.0
    %v6457 = vmax.f32 %v5461, 0.0
    %v6458 = vmax.f32 %v5463, 0.0
    %v6459 = vmax.f32 %v5847, 0.0
    %v6460 = vmax.f32 %v5849, 0.0
    %v6461 = vmax.f32 %v6233, 0.0
    %v6462 = vmax.f32 %v6235, 0.0
    %v6463 = vmax.f32 %v3537, 0.0
    %v6464 = vmax.f32 %v3539, 0.0
    %v6465 = vmax.f32 %v3923, 0.0
    %v6466 = vmax.f32 %v3925, 0.0
    %v6467 = vmax.f32 %v4309, 0.0
    %v6468 = vmax.f32 %v4311, 0.0
    %v6469 = vmax.f32 %v4695, 0.0
    %v6470 = vmax.f32 %v4697, 0.0
    %v6471 = vmax.f32 %v5081, 0.0
    %v6472 = vmax.f32 %v5083, 0.0
    %v6473 = vmax.f32 %v5467, 0.0
    %v6474 = vmax.f32 %v5469, 0.0
    %v6475 = vmax.f32 %v5853, 0.0
    %v6476 = vmax.f32 %v5855, 0.0
    %v6477 = vmax.f32 %v6239, 0.0
    %v6478 = vmax.f32 %v6241, 0.0
    %v6479 = vmax.f32 %v3541, 0.0
    %v6480 = vmax.f32 %v3543, 0.0
    %v6481 = vmax.f32 %v3927, 0.0
    %v6482 = vmax.f32 %v3929, 0.0
    %v6483 = vmax.f32 %v4313, 0.0
    %v6484 = vmax.f32 %v4315, 0.0
    %v6485 = vmax.f32 %v4699, 0.0
    %v6486 = vmax.f32 %v4701, 0.0
    %v6487 = vmax.f32 %v5085, 0.0
    %v6488 = vmax.f32 %v5087, 0.0
    %v6489 = vmax.f32 %v5471, 0.0
    %v6490 = vmax.f32 %v5473, 0.0
    %v6491 = vmax.f32 %v5857, 0.0
    %v6492 = vmax.f32 %v5859, 0.0
    %v6493 = vmax.f32 %v6243, 0.0
    %v6494 = vmax.f32 %v6245, 0.0
    %v6495 = vmax.f32 %v3547, 0.0
    %v6496 = vmax.f32 %v3549, 0.0
    %v6497 = vmax.f32 %v3933, 0.0
    %v6498 = vmax.f32 %v3935, 0.0
    %v6499 = vmax.f32 %v4319, 0.0
    %v6500 = vmax.f32 %v4321, 0.0
    %v6501 = vmax.f32 %v4705, 0.0
    %v6502 = vmax.f32 %v4707, 0.0
    %v6503 = vmax.f32 %v5091, 0.0
    %v6504 = vmax.f32 %v5093, 0.0
    %v6505 = vmax.f32 %v5477, 0.0
    %v6506 = vmax.f32 %v5479, 0.0
    %v6507 = vmax.f32 %v5863, 0.0
    %v6508 = vmax.f32 %v5865, 0.0
    %v6509 = vmax.f32 %v6249, 0.0
    %v6510 = vmax.f32 %v6251, 0.0
    %v6511 = vmax.f32 %v3551, 0.0
    %v6512 = vmax.f32 %v3553, 0.0
    %v6513 = vmax.f32 %v3937, 0.0
    %v6514 = vmax.f32 %v3939, 0.0
    %v6515 = vmax.f32 %v4323, 0.0
    %v6516 = vmax.f32 %v4325, 0.0
    %v6517 = vmax.f32 %v4709, 0.0
    %v6518 = vmax.f32 %v4711, 0.0
    %v6519 = vmax.f32 %v5095, 0.0
    %v6520 = vmax.f32 %v5097, 0.0
    %v6521 = vmax.f32 %v5481, 0.0
    %v6522 = vmax.f32 %v5483, 0.0
    %v6523 = vmax.f32 %v5867, 0.0
    %v6524 = vmax.f32 %v5869, 0.0
    %v6525 = vmax.f32 %v6253, 0.0
    %v6526 = vmax.f32 %v6255, 0.0
    %v6527 = vmax.f32 %v3557, 0.0
    %v6528 = vmax.f32 %v3559, 0.0
    %v6529 = vmax.f32 %v3943, 0.0
    %v6530 = vmax.f32 %v3945, 0.0
    %v6531 = vmax.f32 %v4329, 0.0
    %v6532 = vmax.f32 %v4331, 0.0
    %v6533 = vmax.f32 %v4715, 0.0
    %v6534 = vmax.f32 %v4717, 0.0
    %v6535 = vmax.f32 %v5101, 0.0
    %v6536 = vmax.f32 %v5103, 0.0
    %v6537 = vmax.f32 %v5487, 0.0
    %v6538 = vmax.f32 %v5489, 0.0
    %v6539 = vmax.f32 %v5873, 0.0
    %v6540 = vmax.f32 %v5875, 0.0
    %v6541 = vmax.f32 %v6259, 0.0
    %v6542 = vmax.f32 %v6261, 0.0
    %v6543 = vmax.f32 %v3561, 0.0
    %v6544 = vmax.f32 %v3563, 0.0
    %v6545 = vmax.f32 %v3947, 0.0
    %v6546 = vmax.f32 %v3949, 0.0
    %v6547 = vmax.f32 %v4333, 0.0
    %v6548 = vmax.f32 %v4335, 0.0
    %v6549 = vmax.f32 %v4719, 0.0
    %v6550 = vmax.f32 %v4721, 0.0
    %v6551 = vmax.f32 %v5105, 0.0
    %v6552 = vmax.f32 %v5107, 0.0
    %v6553 = vmax.f32 %v5491, 0.0
    %v6554 = vmax.f32 %v5493, 0.0
    %v6555 = vmax.f32 %v5877, 0.0
    %v6556 = vmax.f32 %v5879, 0.0
    %v6557 = vmax.f32 %v6263, 0.0
    %v6558 = vmax.f32 %v6265, 0.0
    %v6559 = vmax.f32 %v3567, 0.0
    %v6560 = vmax.f32 %v3569, 0.0
    %v6561 = vmax.f32 %v3953, 0.0
    %v6562 = vmax.f32 %v3955, 0.0
    %v6563 = vmax.f32 %v4339, 0.0
    %v6564 = vmax.f32 %v4341, 0.0
    %v6565 = vmax.f32 %v4725, 0.0
    %v6566 = vmax.f32 %v4727, 0.0
    %v6567 = vmax.f32 %v5111, 0.0
    %v6568 = vmax.f32 %v5113, 0.0
    %v6569 = vmax.f32 %v5497, 0.0
    %v6570 = vmax.f32 %v5499, 0.0
    %v6571 = vmax.f32 %v5883, 0.0
    %v6572 = vmax.f32 %v5885, 0.0
    %v6573 = vmax.f32 %v6269, 0.0
    %v6574 = vmax.f32 %v6271, 0.0
    %v6575 = vmax.f32 %v3571, 0.0
    %v6576 = vmax.f32 %v3573, 0.0
    %v6577 = vmax.f32 %v3957, 0.0
    %v6578 = vmax.f32 %v3959, 0.0
    %v6579 = vmax.f32 %v4343, 0.0
    %v6580 = vmax.f32 %v4345, 0.0
    %v6581 = vmax.f32 %v4729, 0.0
    %v6582 = vmax.f32 %v4731, 0.0
    %v6583 = vmax.f32 %v5115, 0.0
    %v6584 = vmax.f32 %v5117, 0.0
    %v6585 = vmax.f32 %v5501, 0.0
    %v6586 = vmax.f32 %v5503, 0.0
    %v6587 = vmax.f32 %v5887, 0.0
    %v6588 = vmax.f32 %v5889, 0.0
    %v6589 = vmax.f32 %v6273, 0.0
    %v6590 = vmax.f32 %v6275, 0.0
    %v6591 = vmax.f32 %v3577, 0.0
    %v6592 = vmax.f32 %v3579, 0.0
    %v6593 = vmax.f32 %v3963, 0.0
    %v6594 = vmax.f32 %v3965, 0.0
    %v6595 = vmax.f32 %v4349, 0.0
    %v6596 = vmax.f32 %v4351, 0.0
    %v6597 = vmax.f32 %v4735, 0.0
    %v6598 = vmax.f32 %v4737, 0.0
    %v6599 = vmax.f32 %v5121, 0.0
    %v6600 = vmax.f32 %v5123, 0.0
    %v6601 = vmax.f32 %v5507, 0.0
    %v6602 = vmax.f32 %v5509, 0.0
    %v6603 = vmax.f32 %v5893, 0.0
    %v6604 = vmax.f32 %v5895, 0.0
    %v6605 = vmax.f32 %v6279, 0.0
    %v6606 = vmax.f32 %v6281, 0.0
    %v6607 = vmax.f32 %v3581, 0.0
    %v6608 = vmax.f32 %v3583, 0.0
    %v6609 = vmax.f32 %v3967, 0.0
    %v6610 = vmax.f32 %v3969, 0.0
    %v6611 = vmax.f32 %v4353, 0.0
    %v6612 = vmax.f32 %v4355, 0.0
    %v6613 = vmax.f32 %v4739, 0.0
    %v6614 = vmax.f32 %v4741, 0.0
    %v6615 = vmax.f32 %v5125, 0.0
    %v6616 = vmax.f32 %v5127, 0.0
    %v6617 = vmax.f32 %v5511, 0.0
    %v6618 = vmax.f32 %v5513, 0.0
    %v6619 = vmax.f32 %v5897, 0.0
    %v6620 = vmax.f32 %v5899, 0.0
    %v6621 = vmax.f32 %v6283, 0.0
    %v6622 = vmax.f32 %v6285, 0.0
    %v6623 = vmax.f32 %v3587, 0.0
    %v6624 = vmax.f32 %v3589, 0.0
    %v6625 = vmax.f32 %v3973, 0.0
    %v6626 = vmax.f32 %v3975, 0.0
    %v6627 = vmax.f32 %v4359, 0.0
    %v6628 = vmax.f32 %v4361, 0.0
    %v6629 = vmax.f32 %v4745, 0.0
    %v6630 = vmax.f32 %v4747, 0.0
    %v6631 = vmax.f32 %v5131, 0.0
    %v6632 = vmax.f32 %v5133, 0.0
    %v6633 = vmax.f32 %v5517, 0.0
    %v6634 = vmax.f32 %v5519, 0.0
    %v6635 = vmax.f32 %v5903, 0.0
    %v6636 = vmax.f32 %v5905, 0.0
    %v6637 = vmax.f32 %v6289, 0.0
    %v6638 = vmax.f32 %v6291, 0.0
    %v6639 = vmax.f32 %v3591, 0.0
    %v6640 = vmax.f32 %v3593, 0.0
    %v6641 = vmax.f32 %v3977, 0.0
    %v6642 = vmax.f32 %v3979, 0.0
    %v6643 = vmax.f32 %v4363, 0.0
    %v6644 = vmax.f32 %v4365, 0.0
    %v6645 = vmax.f32 %v4749, 0.0
    %v6646 = vmax.f32 %v4751, 0.0
    %v6647 = vmax.f32 %v5135, 0.0
    %v6648 = vmax.f32 %v5137, 0.0
    %v6649 = vmax.f32 %v5521, 0.0
    %v6650 = vmax.f32 %v5523, 0.0
    %v6651 = vmax.f32 %v5907, 0.0
    %v6652 = vmax.f32 %v5909, 0.0
    %v6653 = vmax.f32 %v6293, 0.0
    %v6654 = vmax.f32 %v6295, 0.0
    %v6655 = vmax.f32 %v3597, 0.0
    %v6656 = vmax.f32 %v3599, 0.0
    %v6657 = vmax.f32 %v3983, 0.0
    %v6658 = vmax.f32 %v3985, 0.0
    %v6659 = vmax.f32 %v4369, 0.0
    %v6660 = vmax.f32 %v4371, 0.0
    %v6661 = vmax.f32 %v4755, 0.0
    %v6662 = vmax.f32 %v4757, 0.0
    %v6663 = vmax.f32 %v5141, 0.0
    %v6664 = vmax.f32 %v5143, 0.0
    %v6665 = vmax.f32 %v5527, 0.0
    %v6666 = vmax.f32 %v5529, 0.0
    %v6667 = vmax.f32 %v5913, 0.0
    %v6668 = vmax.f32 %v5915, 0.0
    %v6669 = vmax.f32 %v6299, 0.0
    %v6670 = vmax.f32 %v6301, 0.0
    %v6671 = vmax.f32 %v3601, 0.0
    %v6672 = vmax.f32 %v3603, 0.0
    %v6673 = vmax.f32 %v3987, 0.0
    %v6674 = vmax.f32 %v3989, 0.0
    %v6675 = vmax.f32 %v4373, 0.0
    %v6676 = vmax.f32 %v4375, 0.0
    %v6677 = vmax.f32 %v4759, 0.0
    %v6678 = vmax.f32 %v4761, 0.0
    %v6679 = vmax.f32 %v5145, 0.0
    %v6680 = vmax.f32 %v5147, 0.0
    %v6681 = vmax.f32 %v5531, 0.0
    %v6682 = vmax.f32 %v5533, 0.0
    %v6683 = vmax.f32 %v5917, 0.0
    %v6684 = vmax.f32 %v5919, 0.0
    %v6685 = vmax.f32 %v6303, 0.0
    %v6686 = vmax.f32 %v6305, 0.0
    %v6687 = vmax.f32 %v3607, 0.0
    %v6688 = vmax.f32 %v3609, 0.0
    %v6689 = vmax.f32 %v3993, 0.0
    %v6690 = vmax.f32 %v3995, 0.0
    %v6691 = vmax.f32 %v4379, 0.0
    %v6692 = vmax.f32 %v4381, 0.0
    %v6693 = vmax.f32 %v4765, 0.0
    %v6694 = vmax.f32 %v4767, 0.0
    %v6695 = vmax.f32 %v5151, 0.0
    %v6696 = vmax.f32 %v5153, 0.0
    %v6697 = vmax.f32 %v5537, 0.0
    %v6698 = vmax.f32 %v5539, 0.0
    %v6699 = vmax.f32 %v5923, 0.0
    %v6700 = vmax.f32 %v5925, 0.0
    %v6701 = vmax.f32 %v6309, 0.0
    %v6702 = vmax.f32 %v6311, 0.0
    %v6703 = vmax.f32 %v3611, 0.0
    %v6704 = vmax.f32 %v3613, 0.0
    %v6705 = vmax.f32 %v3997, 0.0
    %v6706 = vmax.f32 %v3999, 0.0
    %v6707 = vmax.f32 %v4383, 0.0
    %v6708 = vmax.f32 %v4385, 0.0
    %v6709 = vmax.f32 %v4769, 0.0
    %v6710 = vmax.f32 %v4771, 0.0
    %v6711 = vmax.f32 %v5155, 0.0
    %v6712 = vmax.f32 %v5157, 0.0
    %v6713 = vmax.f32 %v5541, 0.0
    %v6714 = vmax.f32 %v5543, 0.0
    %v6715 = vmax.f32 %v5927, 0.0
    %v6716 = vmax.f32 %v5929, 0.0
    %v6717 = vmax.f32 %v6313, 0.0
    %v6718 = vmax.f32 %v6315, 0.0
    %v6719 = vmax.f32 %v3617, 0.0
    %v6720 = vmax.f32 %v3619, 0.0
    %v6721 = vmax.f32 %v4003, 0.0
    %v6722 = vmax.f32 %v4005, 0.0
    %v6723 = vmax.f32 %v4389, 0.0
    %v6724 = vmax.f32 %v4391, 0.0
    %v6725 = vmax.f32 %v4775, 0.0
    %v6726 = vmax.f32 %v4777, 0.0
    %v6727 = vmax.f32 %v5161, 0.0
    %v6728 = vmax.f32 %v5163, 0.0
    %v6729 = vmax.f32 %v5547, 0.0
    %v6730 = vmax.f32 %v5549, 0.0
    %v6731 = vmax.f32 %v5933, 0.0
    %v6732 = vmax.f32 %v5935, 0.0
    %v6733 = vmax.f32 %v6319, 0.0
    %v6734 = vmax.f32 %v6321, 0.0
    %v6735 = vmax.f32 %v3621, 0.0
    %v6736 = vmax.f32 %v3623, 0.0
    %v6737 = vmax.f32 %v4007, 0.0
    %v6738 = vmax.f32 %v4009, 0.0
    %v6739 = vmax.f32 %v4393, 0.0
    %v6740 = vmax.f32 %v4395, 0.0
    %v6741 = vmax.f32 %v4779, 0.0
    %v6742 = vmax.f32 %v4781, 0.0
    %v6743 = vmax.f32 %v5165, 0.0
    %v6744 = vmax.f32 %v5167, 0.0
    %v6745 = vmax.f32 %v5551, 0.0
    %v6746 = vmax.f32 %v5553, 0.0
    %v6747 = vmax.f32 %v5937, 0.0
    %v6748 = vmax.f32 %v5939, 0.0
    %v6749 = vmax.f32 %v6323, 0.0
    %v6750 = vmax.f32 %v6325, 0.0
    %v6751 = vmax.f32 %v3627, 0.0
    %v6752 = vmax.f32 %v3629, 0.0
    %v6753 = vmax.f32 %v4013, 0.0
    %v6754 = vmax.f32 %v4015, 0.0
    %v6755 = vmax.f32 %v4399, 0.0
    %v6756 = vmax.f32 %v4401, 0.0
    %v6757 = vmax.f32 %v4785, 0.0
    %v6758 = vmax.f32 %v4787, 0.0
    %v6759 = vmax.f32 %v5171, 0.0
    %v6760 = vmax.f32 %v5173, 0.0
    %v6761 = vmax.f32 %v5557, 0.0
    %v6762 = vmax.f32 %v5559, 0.0
    %v6763 = vmax.f32 %v5943, 0.0
    %v6764 = vmax.f32 %v5945, 0.0
    %v6765 = vmax.f32 %v6329, 0.0
    %v6766 = vmax.f32 %v6331, 0.0
    %v6767 = vmax.f32 %v3631, 0.0
    %v6768 = vmax.f32 %v3633, 0.0
    %v6769 = vmax.f32 %v4017, 0.0
    %v6770 = vmax.f32 %v4019, 0.0
    %v6771 = vmax.f32 %v4403, 0.0
    %v6772 = vmax.f32 %v4405, 0.0
    %v6773 = vmax.f32 %v4789, 0.0
    %v6774 = vmax.f32 %v4791, 0.0
    %v6775 = vmax.f32 %v5175, 0.0
    %v6776 = vmax.f32 %v5177, 0.0
    %v6777 = vmax.f32 %v5561, 0.0
    %v6778 = vmax.f32 %v5563, 0.0
    %v6779 = vmax.f32 %v5947, 0.0
    %v6780 = vmax.f32 %v5949, 0.0
    %v6781 = vmax.f32 %v6333, 0.0
    %v6782 = vmax.f32 %v6335, 0.0
    %v6783 = vmax.f32 %v3637, 0.0
    %v6784 = vmax.f32 %v3639, 0.0
    %v6785 = vmax.f32 %v4023, 0.0
    %v6786 = vmax.f32 %v4025, 0.0
    %v6787 = vmax.f32 %v4409, 0.0
    %v6788 = vmax.f32 %v4411, 0.0
    %v6789 = vmax.f32 %v4795, 0.0
    %v6790 = vmax.f32 %v4797, 0.0
    %v6791 = vmax.f32 %v5181, 0.0
    %v6792 = vmax.f32 %v5183, 0.0
    %v6793 = vmax.f32 %v5567, 0.0
    %v6794 = vmax.f32 %v5569, 0.0
    %v6795 = vmax.f32 %v5953, 0.0
    %v6796 = vmax.f32 %v5955, 0.0
    %v6797 = vmax.f32 %v6339, 0.0
    %v6798 = vmax.f32 %v6341, 0.0
    %v6799 = vmax.f32 %v3641, 0.0
    %v6800 = vmax.f32 %v3643, 0.0
    %v6801 = vmax.f32 %v4027, 0.0
    %v6802 = vmax.f32 %v4029, 0.0
    %v6803 = vmax.f32 %v4413, 0.0
    %v6804 = vmax.f32 %v4415, 0.0
    %v6805 = vmax.f32 %v4799, 0.0
    %v6806 = vmax.f32 %v4801, 0.0
    %v6807 = vmax.f32 %v5185, 0.0
    %v6808 = vmax.f32 %v5187, 0.0
    %v6809 = vmax.f32 %v5571, 0.0
    %v6810 = vmax.f32 %v5573, 0.0
    %v6811 = vmax.f32 %v5957, 0.0
    %v6812 = vmax.f32 %v5959, 0.0
    %v6813 = vmax.f32 %v6343, 0.0
    %v6814 = vmax.f32 %v6345, 0.0
    %v6815 = vmax.f32 %v3647, 0.0
    %v6816 = vmax.f32 %v3649, 0.0
    %v6817 = vmax.f32 %v4033, 0.0
    %v6818 = vmax.f32 %v4035, 0.0
    %v6819 = vmax.f32 %v4419, 0.0
    %v6820 = vmax.f32 %v4421, 0.0
    %v6821 = vmax.f32 %v4805, 0.0
    %v6822 = vmax.f32 %v4807, 0.0
    %v6823 = vmax.f32 %v5191, 0.0
    %v6824 = vmax.f32 %v5193, 0.0
    %v6825 = vmax.f32 %v5577, 0.0
    %v6826 = vmax.f32 %v5579, 0.0
    %v6827 = vmax.f32 %v5963, 0.0
    %v6828 = vmax.f32 %v5965, 0.0
    %v6829 = vmax.f32 %v6349, 0.0
    %v6830 = vmax.f32 %v6351, 0.0
    %v6831 = vmax.f32 %v3651, 0.0
    %v6832 = vmax.f32 %v3653, 0.0
    %v6833 = vmax.f32 %v4037, 0.0
    %v6834 = vmax.f32 %v4039, 0.0
    %v6835 = vmax.f32 %v4423, 0.0
    %v6836 = vmax.f32 %v4425, 0.0
    %v6837 = vmax.f32 %v4809, 0.0
    %v6838 = vmax.f32 %v4811, 0.0
    %v6839 = vmax.f32 %v5195, 0.0
    %v6840 = vmax.f32 %v5197, 0.0
    %v6841 = vmax.f32 %v5581, 0.0
    %v6842 = vmax.f32 %v5583, 0.0
    %v6843 = vmax.f32 %v5967, 0.0
    %v6844 = vmax.f32 %v5969, 0.0
    %v6845 = vmax.f32 %v6353, 0.0
    %v6846 = vmax.f32 %v6355, 0.0
    %v6847 = vmax.f32 %v3657, 0.0
    %v6848 = vmax.f32 %v3659, 0.0
    %v6849 = vmax.f32 %v4043, 0.0
    %v6850 = vmax.f32 %v4045, 0.0
    %v6851 = vmax.f32 %v4429, 0.0
    %v6852 = vmax.f32 %v4431, 0.0
    %v6853 = vmax.f32 %v4815, 0.0
    %v6854 = vmax.f32 %v4817, 0.0
    %v6855 = vmax.f32 %v5201, 0.0
    %v6856 = vmax.f32 %v5203, 0.0
    %v6857 = vmax.f32 %v5587, 0.0
    %v6858 = vmax.f32 %v5589, 0.0
    %v6859 = vmax.f32 %v5973, 0.0
    %v6860 = vmax.f32 %v5975, 0.0
    %v6861 = vmax.f32 %v6359, 0.0
    %v6862 = vmax.f32 %v6361, 0.0
    %v6863 = vmax.f32 %v3661, 0.0
    %v6864 = vmax.f32 %v3663, 0.0
    %v6865 = vmax.f32 %v4047, 0.0
    %v6866 = vmax.f32 %v4049, 0.0
    %v6867 = vmax.f32 %v4433, 0.0
    %v6868 = vmax.f32 %v4435, 0.0
    %v6869 = vmax.f32 %v4819, 0.0
    %v6870 = vmax.f32 %v4821, 0.0
    %v6871 = vmax.f32 %v5205, 0.0
    %v6872 = vmax.f32 %v5207, 0.0
    %v6873 = vmax.f32 %v5591, 0.0
    %v6874 = vmax.f32 %v5593, 0.0
    %v6875 = vmax.f32 %v5977, 0.0
    %v6876 = vmax.f32 %v5979, 0.0
    %v6877 = vmax.f32 %v6363, 0.0
    %v6878 = vmax.f32 %v6365, 0.0
    %v6879 = vpack.c.bf16 %v6383, %v6367
    %v6880 = vpack.c.bf16 %v6384, %v6368
    %v6881 = vpack.c.bf16 %v6385, %v6369
    %v6882 = vpack.c.bf16 %v6386, %v6370
    %v6883 = vpack.c.bf16 %v6387, %v6371
    %v6884 = vpack.c.bf16 %v6388, %v6372
    %v6885 = vpack.c.bf16 %v6389, %v6373
    %v6886 = vpack.c.bf16 %v6390, %v6374
    %v6887 = vpack.c.bf16 %v6391, %v6375
    %v6888 = vpack.c.bf16 %v6392, %v6376
    %v6889 = vpack.c.bf16 %v6393, %v6377
    %v6890 = vpack.c.bf16 %v6394, %v6378
    %v6891 = vpack.c.bf16 %v6395, %v6379
    %v6892 = vpack.c.bf16 %v6396, %v6380
    %v6893 = vpack.c.bf16 %v6397, %v6381
    %v6894 = vpack.c.bf16 %v6398, %v6382
    %v6895 = vpack.c.bf16 %v6415, %v6399
    %v6896 = vpack.c.bf16 %v6416, %v6400
    %v6897 = vpack.c.bf16 %v6417, %v6401
    %v6898 = vpack.c.bf16 %v6418, %v6402
    %v6899 = vpack.c.bf16 %v6419, %v6403
    %v6900 = vpack.c.bf16 %v6420, %v6404
    %v6901 = vpack.c.bf16 %v6421, %v6405
    %v6902 = vpack.c.bf16 %v6422, %v6406
    %v6903 = vpack.c.bf16 %v6423, %v6407
    %v6904 = vpack.c.bf16 %v6424, %v6408
    %v6905 = vpack.c.bf16 %v6425, %v6409
    %v6906 = vpack.c.bf16 %v6426, %v6410
    %v6907 = vpack.c.bf16 %v6427, %v6411
    %v6908 = vpack.c.bf16 %v6428, %v6412
    %v6909 = vpack.c.bf16 %v6429, %v6413
    %v6910 = vpack.c.bf16 %v6430, %v6414
    %v6911 = vpack.c.bf16 %v6447, %v6431
    %v6912 = vpack.c.bf16 %v6448, %v6432
    %v6913 = vpack.c.bf16 %v6449, %v6433
    %v6914 = vpack.c.bf16 %v6450, %v6434
    %v6915 = vpack.c.bf16 %v6451, %v6435
    %v6916 = vpack.c.bf16 %v6452, %v6436
    %v6917 = vpack.c.bf16 %v6453, %v6437
    %v6918 = vpack.c.bf16 %v6454, %v6438
    %v6919 = vpack.c.bf16 %v6455, %v6439
    %v6920 = vpack.c.bf16 %v6456, %v6440
    %v6921 = vpack.c.bf16 %v6457, %v6441
    %v6922 = vpack.c.bf16 %v6458, %v6442
    %v6923 = vpack.c.bf16 %v6459, %v6443
    %v6924 = vpack.c.bf16 %v6460, %v6444
    %v6925 = vpack.c.bf16 %v6461, %v6445
    %v6926 = vpack.c.bf16 %v6462, %v6446
    %v6927 = vpack.c.bf16 %v6479, %v6463
    %v6928 = vpack.c.bf16 %v6480, %v6464
    %v6929 = vpack.c.bf16 %v6481, %v6465
    %v6930 = vpack.c.bf16 %v6482, %v6466
    %v6931 = vpack.c.bf16 %v6483, %v6467
    %v6932 = vpack.c.bf16 %v6484, %v6468
    %v6933 = vpack.c.bf16 %v6485, %v6469
    %v6934 = vpack.c.bf16 %v6486, %v6470
    %v6935 = vpack.c.bf16 %v6487, %v6471
    %v6936 = vpack.c.bf16 %v6488, %v6472
    %v6937 = vpack.c.bf16 %v6489, %v6473
    %v6938 = vpack.c.bf16 %v6490, %v6474
    %v6939 = vpack.c.bf16 %v6491, %v6475
    %v6940 = vpack.c.bf16 %v6492, %v6476
    %v6941 = vpack.c.bf16 %v6493, %v6477
    %v6942 = vpack.c.bf16 %v6494, %v6478
    %v6943 = vpack.c.bf16 %v6511, %v6495
    %v6944 = vpack.c.bf16 %v6512, %v6496
    %v6945 = vpack.c.bf16 %v6513, %v6497
    %v6946 = vpack.c.bf16 %v6514, %v6498
    %v6947 = vpack.c.bf16 %v6515, %v6499
    %v6948 = vpack.c.bf16 %v6516, %v6500
    %v6949 = vpack.c.bf16 %v6517, %v6501
    %v6950 = vpack.c.bf16 %v6518, %v6502
    %v6951 = vpack.c.bf16 %v6519, %v6503
    %v6952 = vpack.c.bf16 %v6520, %v6504
    %v6953 = vpack.c.bf16 %v6521, %v6505
    %v6954 = vpack.c.bf16 %v6522, %v6506
    %v6955 = vpack.c.bf16 %v6523, %v6507
    %v6956 = vpack.c.bf16 %v6524, %v6508
    %v6957 = vpack.c.bf16 %v6525, %v6509
    %v6958 = vpack.c.bf16 %v6526, %v6510
    %v6959 = vpack.c.bf16 %v6543, %v6527
    %v6960 = vpack.c.bf16 %v6544, %v6528
    %v6961 = vpack.c.bf16 %v6545, %v6529
    %v6962 = vpack.c.bf16 %v6546, %v6530
    %v6963 = vpack.c.bf16 %v6547, %v6531
    %v6964 = vpack.c.bf16 %v6548, %v6532
    %v6965 = vpack.c.bf16 %v6549, %v6533
    %v6966 = vpack.c.bf16 %v6550, %v6534
    %v6967 = vpack.c.bf16 %v6551, %v6535
    %v6968 = vpack.c.bf16 %v6552, %v6536
    %v6969 = vpack.c.bf16 %v6553, %v6537
    %v6970 = vpack.c.bf16 %v6554, %v6538
    %v6971 = vpack.c.bf16 %v6555, %v6539
    %v6972 = vpack.c.bf16 %v6556, %v6540
    %v6973 = vpack.c.bf16 %v6557, %v6541
    %v6974 = vpack.c.bf16 %v6558, %v6542
    %v6975 = vpack.c.bf16 %v6575, %v6559
    %v6976 = vpack.c.bf16 %v6576, %v6560
    %v6977 = vpack.c.bf16 %v6577, %v6561
    %v6978 = vpack.c.bf16 %v6578, %v6562
    %v6979 = vpack.c.bf16 %v6579, %v6563
    %v6980 = vpack.c.bf16 %v6580, %v6564
    %v6981 = vpack.c.bf16 %v6581, %v6565
    %v6982 = vpack.c.bf16 %v6582, %v6566
    %v6983 = vpack.c.bf16 %v6583, %v6567
    %v6984 = vpack.c.bf16 %v6584, %v6568
    %v6985 = vpack.c.bf16 %v6585, %v6569
    %v6986 = vpack.c.bf16 %v6586, %v6570
    %v6987 = vpack.c.bf16 %v6587, %v6571
    %v6988 = vpack.c.bf16 %v6588, %v6572
    %v6989 = vpack.c.bf16 %v6589, %v6573
    %v6990 = vpack.c.bf16 %v6590, %v6574
    %v6991 = vpack.c.bf16 %v6607, %v6591
    %v6992 = vpack.c.bf16 %v6608, %v6592
    %v6993 = vpack.c.bf16 %v6609, %v6593
    %v6994 = vpack.c.bf16 %v6610, %v6594
    %v6995 = vpack.c.bf16 %v6611, %v6595
    %v6996 = vpack.c.bf16 %v6612, %v6596
    %v6997 = vpack.c.bf16 %v6613, %v6597
    %v6998 = vpack.c.bf16 %v6614, %v6598
    %v6999 = vpack.c.bf16 %v6615, %v6599
    %v7000 = vpack.c.bf16 %v6616, %v6600
    %v7001 = vpack.c.bf16 %v6617, %v6601
    %v7002 = vpack.c.bf16 %v6618, %v6602
    %v7003 = vpack.c.bf16 %v6619, %v6603
    %v7004 = vpack.c.bf16 %v6620, %v6604
    %v7005 = vpack.c.bf16 %v6621, %v6605
    %v7006 = vpack.c.bf16 %v6622, %v6606
    %v7007 = vpack.c.bf16 %v6639, %v6623
    %v7008 = vpack.c.bf16 %v6640, %v6624
    %v7009 = vpack.c.bf16 %v6641, %v6625
    %v7010 = vpack.c.bf16 %v6642, %v6626
    %v7011 = vpack.c.bf16 %v6643, %v6627
    %v7012 = vpack.c.bf16 %v6644, %v6628
    %v7013 = vpack.c.bf16 %v6645, %v6629
    %v7014 = vpack.c.bf16 %v6646, %v6630
    %v7015 = vpack.c.bf16 %v6647, %v6631
    %v7016 = vpack.c.bf16 %v6648, %v6632
    %v7017 = vpack.c.bf16 %v6649, %v6633
    %v7018 = vpack.c.bf16 %v6650, %v6634
    %v7019 = vpack.c.bf16 %v6651, %v6635
    %v7020 = vpack.c.bf16 %v6652, %v6636
    %v7021 = vpack.c.bf16 %v6653, %v6637
    %v7022 = vpack.c.bf16 %v6654, %v6638
    %v7023 = vpack.c.bf16 %v6671, %v6655
    %v7024 = vpack.c.bf16 %v6672, %v6656
    %v7025 = vpack.c.bf16 %v6673, %v6657
    %v7026 = vpack.c.bf16 %v6674, %v6658
    %v7027 = vpack.c.bf16 %v6675, %v6659
    %v7028 = vpack.c.bf16 %v6676, %v6660
    %v7029 = vpack.c.bf16 %v6677, %v6661
    %v7030 = vpack.c.bf16 %v6678, %v6662
    %v7031 = vpack.c.bf16 %v6679, %v6663
    %v7032 = vpack.c.bf16 %v6680, %v6664
    %v7033 = vpack.c.bf16 %v6681, %v6665
    %v7034 = vpack.c.bf16 %v6682, %v6666
    %v7035 = vpack.c.bf16 %v6683, %v6667
    %v7036 = vpack.c.bf16 %v6684, %v6668
    %v7037 = vpack.c.bf16 %v6685, %v6669
    %v7038 = vpack.c.bf16 %v6686, %v6670
    %v7039 = vpack.c.bf16 %v6703, %v6687
    %v7040 = vpack.c.bf16 %v6704, %v6688
    %v7041 = vpack.c.bf16 %v6705, %v6689
    %v7042 = vpack.c.bf16 %v6706, %v6690
    %v7043 = vpack.c.bf16 %v6707, %v6691
    %v7044 = vpack.c.bf16 %v6708, %v6692
    %v7045 = vpack.c.bf16 %v6709, %v6693
    %v7046 = vpack.c.bf16 %v6710, %v6694
    %v7047 = vpack.c.bf16 %v6711, %v6695
    %v7048 = vpack.c.bf16 %v6712, %v6696
    %v7049 = vpack.c.bf16 %v6713, %v6697
    %v7050 = vpack.c.bf16 %v6714, %v6698
    %v7051 = vpack.c.bf16 %v6715, %v6699
    %v7052 = vpack.c.bf16 %v6716, %v6700
    %v7053 = vpack.c.bf16 %v6717, %v6701
    %v7054 = vpack.c.bf16 %v6718, %v6702
    %v7055 = vpack.c.bf16 %v6735, %v6719
    %v7056 = vpack.c.bf16 %v6736, %v6720
    %v7057 = vpack.c.bf16 %v6737, %v6721
    %v7058 = vpack.c.bf16 %v6738, %v6722
    %v7059 = vpack.c.bf16 %v6739, %v6723
    %v7060 = vpack.c.bf16 %v6740, %v6724
    %v7061 = vpack.c.bf16 %v6741, %v6725
    %v7062 = vpack.c.bf16 %v6742, %v6726
    %v7063 = vpack.c.bf16 %v6743, %v6727
    %v7064 = vpack.c.bf16 %v6744, %v6728
    %v7065 = vpack.c.bf16 %v6745, %v6729
    %v7066 = vpack.c.bf16 %v6746, %v6730
    %v7067 = vpack.c.bf16 %v6747, %v6731
    %v7068 = vpack.c.bf16 %v6748, %v6732
    %v7069 = vpack.c.bf16 %v6749, %v6733
    %v7070 = vpack.c.bf16 %v6750, %v6734
    %v7071 = vpack.c.bf16 %v6767, %v6751
    %v7072 = vpack.c.bf16 %v6768, %v6752
    %v7073 = vpack.c.bf16 %v6769, %v6753
    %v7074 = vpack.c.bf16 %v6770, %v6754
    %v7075 = vpack.c.bf16 %v6771, %v6755
    %v7076 = vpack.c.bf16 %v6772, %v6756
    %v7077 = vpack.c.bf16 %v6773, %v6757
    %v7078 = vpack.c.bf16 %v6774, %v6758
    %v7079 = vpack.c.bf16 %v6775, %v6759
    %v7080 = vpack.c.bf16 %v6776, %v6760
    %v7081 = vpack.c.bf16 %v6777, %v6761
    %v7082 = vpack.c.bf16 %v6778, %v6762
    %v7083 = vpack.c.bf16 %v6779, %v6763
    %v7084 = vpack.c.bf16 %v6780, %v6764
    %v7085 = vpack.c.bf16 %v6781, %v6765
    %v7086 = vpack.c.bf16 %v6782, %v6766
    %v7087 = vpack.c.bf16 %v6799, %v6783
    %v7088 = vpack.c.bf16 %v6800, %v6784
    %v7089 = vpack.c.bf16 %v6801, %v6785
    %v7090 = vpack.c.bf16 %v6802, %v6786
    %v7091 = vpack.c.bf16 %v6803, %v6787
    %v7092 = vpack.c.bf16 %v6804, %v6788
    %v7093 = vpack.c.bf16 %v6805, %v6789
    %v7094 = vpack.c.bf16 %v6806, %v6790
    %v7095 = vpack.c.bf16 %v6807, %v6791
    %v7096 = vpack.c.bf16 %v6808, %v6792
    %v7097 = vpack.c.bf16 %v6809, %v6793
    %v7098 = vpack.c.bf16 %v6810, %v6794
    %v7099 = vpack.c.bf16 %v6811, %v6795
    %v7100 = vpack.c.bf16 %v6812, %v6796
    %v7101 = vpack.c.bf16 %v6813, %v6797
    %v7102 = vpack.c.bf16 %v6814, %v6798
    %v7103 = vpack.c.bf16 %v6831, %v6815
    %v7104 = vpack.c.bf16 %v6832, %v6816
    %v7105 = vpack.c.bf16 %v6833, %v6817
    %v7106 = vpack.c.bf16 %v6834, %v6818
    %v7107 = vpack.c.bf16 %v6835, %v6819
    %v7108 = vpack.c.bf16 %v6836, %v6820
    %v7109 = vpack.c.bf16 %v6837, %v6821
    %v7110 = vpack.c.bf16 %v6838, %v6822
    %v7111 = vpack.c.bf16 %v6839, %v6823
    %v7112 = vpack.c.bf16 %v6840, %v6824
    %v7113 = vpack.c.bf16 %v6841, %v6825
    %v7114 = vpack.c.bf16 %v6842, %v6826
    %v7115 = vpack.c.bf16 %v6843, %v6827
    %v7116 = vpack.c.bf16 %v6844, %v6828
    %v7117 = vpack.c.bf16 %v6845, %v6829
    %v7118 = vpack.c.bf16 %v6846, %v6830
    %v7119 = vpack.c.bf16 %v6863, %v6847
    %v7120 = vpack.c.bf16 %v6864, %v6848
    %v7121 = vpack.c.bf16 %v6865, %v6849
    %v7122 = vpack.c.bf16 %v6866, %v6850
    %v7123 = vpack.c.bf16 %v6867, %v6851
    %v7124 = vpack.c.bf16 %v6868, %v6852
    %v7125 = vpack.c.bf16 %v6869, %v6853
    %v7126 = vpack.c.bf16 %v6870, %v6854
    %v7127 = vpack.c.bf16 %v6871, %v6855
    %v7128 = vpack.c.bf16 %v6872, %v6856
    %v7129 = vpack.c.bf16 %v6873, %v6857
    %v7130 = vpack.c.bf16 %v6874, %v6858
    %v7131 = vpack.c.bf16 %v6875, %v6859
    %v7132 = vpack.c.bf16 %v6876, %v6860
    %v7133 = vpack.c.bf16 %v6877, %v6861
    %v7134 = vpack.c.bf16 %v6878, %v6862
    %v7135 = vld [vmem:[%s2] sm:$0xff]
    %v7136 = vld [vmem:[%s2 + $0x8] sm:$0xff]
    %v7137 = vld [vmem:[%s2 + $0x10] sm:$0xff]
    %v7138 = vld [vmem:[%s2 + $0x18] sm:$0xff]
    %v7139 = vld [vmem:[%s2 + $0x20] sm:$0xff]
    %v7140 = vld [vmem:[%s2 + $0x28] sm:$0xff]
    %v7141 = vld [vmem:[%s2 + $0x30] sm:$0xff]
    %v7142 = vld [vmem:[%s2 + $0x38] sm:$0xff]
    %v7143 = vld [vmem:[%s2 + $0x40] sm:$0xff]
    %v7144 = vld [vmem:[%s2 + $0x48] sm:$0xff]
    %v7145 = vld [vmem:[%s2 + $0x50] sm:$0xff]
    %v7146 = vld [vmem:[%s2 + $0x58] sm:$0xff]
    %v7147 = vld [vmem:[%s2 + $0x60] sm:$0xff]
    %v7148 = vld [vmem:[%s2 + $0x68] sm:$0xff]
    %v7149 = vld [vmem:[%s2 + $0x70] sm:$0xff]
    %v7150 = vld [vmem:[%s2 + $0x78] sm:$0xff]
    %v7151 = vld [vmem:[%s2 + $0x80] sm:$0xff]
    %v7152 = vld [vmem:[%s2 + $0x88] sm:$0xff]
    %v7153 = vld [vmem:[%s2 + $0x90] sm:$0xff]
    %v7154 = vld [vmem:[%s2 + $0x98] sm:$0xff]
    %v7155 = vld [vmem:[%s2 + $0xa0] sm:$0xff]
    %v7156 = vld [vmem:[%s2 + $0xa8] sm:$0xff]
    %v7157 = vld [vmem:[%s2 + $0xb0] sm:$0xff]
    %v7158 = vld [vmem:[%s2 + $0xb8] sm:$0xff]
    %v7159 = vld [vmem:[%s2 + $0xc0] sm:$0xff]
    %v7160 = vld [vmem:[%s2 + $0xc8] sm:$0xff]
    %v7161 = vld [vmem:[%s2 + $0xd0] sm:$0xff]
    %v7162 = vld [vmem:[%s2 + $0xd8] sm:$0xff]
    %v7163 = vld [vmem:[%s2 + $0xe0] sm:$0xff]
    %v7164 = vld [vmem:[%s2 + $0xe8] sm:$0xff]
    %v7165 = vld [vmem:[%s2 + $0xf0] sm:$0xff]
    %v7166 = vld [vmem:[%s2 + $0xf8] sm:$0xff]
    %v7167 = vld [vmem:[%s2 + $0x100] sm:$0xff]
    %v7168 = vld [vmem:[%s2 + $0x108] sm:$0xff]
    %v7169 = vld [vmem:[%s2 + $0x110] sm:$0xff]
    %v7170 = vld [vmem:[%s2 + $0x118] sm:$0xff]
    %v7171 = vld [vmem:[%s2 + $0x120] sm:$0xff]
    %v7172 = vld [vmem:[%s2 + $0x128] sm:$0xff]
    %v7173 = vld [vmem:[%s2 + $0x130] sm:$0xff]
    %v7174 = vld [vmem:[%s2 + $0x138] sm:$0xff]
    %v7175 = vld [vmem:[%s2 + $0x140] sm:$0xff]
    %v7176 = vld [vmem:[%s2 + $0x148] sm:$0xff]
    %v7177 = vld [vmem:[%s2 + $0x150] sm:$0xff]
    %v7178 = vld [vmem:[%s2 + $0x158] sm:$0xff]
    %v7179 = vld [vmem:[%s2 + $0x160] sm:$0xff]
    %v7180 = vld [vmem:[%s2 + $0x168] sm:$0xff]
    %v7181 = vld [vmem:[%s2 + $0x170] sm:$0xff]
    %v7182 = vld [vmem:[%s2 + $0x178] sm:$0xff]
    %v7183 = vld [vmem:[%s2 + $0x180] sm:$0xff]
    %v7184 = vld [vmem:[%s2 + $0x188] sm:$0xff]
    %v7185 = vld [vmem:[%s2 + $0x190] sm:$0xff]
    %v7186 = vld [vmem:[%s2 + $0x198] sm:$0xff]
    %v7187 = vld [vmem:[%s2 + $0x1a0] sm:$0xff]
    %v7188 = vld [vmem:[%s2 + $0x1a8] sm:$0xff]
    %v7189 = vld [vmem:[%s2 + $0x1b0] sm:$0xff]
    %v7190 = vld [vmem:[%s2 + $0x1b8] sm:$0xff]
    %v7191 = vld [vmem:[%s2 + $0x1c0] sm:$0xff]
    %v7192 = vld [vmem:[%s2 + $0x1c8] sm:$0xff]
    %v7193 = vld [vmem:[%s2 + $0x1d0] sm:$0xff]
    %v7194 = vld [vmem:[%s2 + $0x1d8] sm:$0xff]
    %v7195 = vld [vmem:[%s2 + $0x1e0] sm:$0xff]
    %v7196 = vld [vmem:[%s2 + $0x1e8] sm:$0xff]
    %v7197 = vld [vmem:[%s2 + $0x1f0] sm:$0xff]
    %v7198 = vld [vmem:[%s2 + $0x1f8] sm:$0xff]
    %v7199 = vld [vmem:[%s2 + $0x200] sm:$0xff]
    %v7200 = vld [vmem:[%s2 + $0x208] sm:$0xff]
    %v7201 = vld [vmem:[%s2 + $0x210] sm:$0xff]
    %v7202 = vld [vmem:[%s2 + $0x218] sm:$0xff]
    %v7203 = vld [vmem:[%s2 + $0x220] sm:$0xff]
    %v7204 = vld [vmem:[%s2 + $0x228] sm:$0xff]
    %v7205 = vld [vmem:[%s2 + $0x230] sm:$0xff]
    %v7206 = vld [vmem:[%s2 + $0x238] sm:$0xff]
    %v7207 = vld [vmem:[%s2 + $0x240] sm:$0xff]
    %v7208 = vld [vmem:[%s2 + $0x248] sm:$0xff]
    %v7209 = vld [vmem:[%s2 + $0x250] sm:$0xff]
    %v7210 = vld [vmem:[%s2 + $0x258] sm:$0xff]
    %v7211 = vld [vmem:[%s2 + $0x260] sm:$0xff]
    %v7212 = vld [vmem:[%s2 + $0x268] sm:$0xff]
    %v7213 = vld [vmem:[%s2 + $0x270] sm:$0xff]
    %v7214 = vld [vmem:[%s2 + $0x278] sm:$0xff]
    %v7215 = vld [vmem:[%s2 + $0x280] sm:$0xff]
    %v7216 = vld [vmem:[%s2 + $0x288] sm:$0xff]
    %v7217 = vld [vmem:[%s2 + $0x290] sm:$0xff]
    %v7218 = vld [vmem:[%s2 + $0x298] sm:$0xff]
    %v7219 = vld [vmem:[%s2 + $0x2a0] sm:$0xff]
    %v7220 = vld [vmem:[%s2 + $0x2a8] sm:$0xff]
    %v7221 = vld [vmem:[%s2 + $0x2b0] sm:$0xff]
    %v7222 = vld [vmem:[%s2 + $0x2b8] sm:$0xff]
    %v7223 = vld [vmem:[%s2 + $0x2c0] sm:$0xff]
    %v7224 = vld [vmem:[%s2 + $0x2c8] sm:$0xff]
    %v7225 = vld [vmem:[%s2 + $0x2d0] sm:$0xff]
    %v7226 = vld [vmem:[%s2 + $0x2d8] sm:$0xff]
    %v7227 = vld [vmem:[%s2 + $0x2e0] sm:$0xff]
    %v7228 = vld [vmem:[%s2 + $0x2e8] sm:$0xff]
    %v7229 = vld [vmem:[%s2 + $0x2f0] sm:$0xff]
    %v7230 = vld [vmem:[%s2 + $0x2f8] sm:$0xff]
    %v7231 = vld [vmem:[%s2 + $0x300] sm:$0xff]
    %v7232 = vld [vmem:[%s2 + $0x308] sm:$0xff]
    %v7233 = vld [vmem:[%s2 + $0x310] sm:$0xff]
    %v7234 = vld [vmem:[%s2 + $0x318] sm:$0xff]
    %v7235 = vld [vmem:[%s2 + $0x320] sm:$0xff]
    %v7236 = vld [vmem:[%s2 + $0x328] sm:$0xff]
    %v7237 = vld [vmem:[%s2 + $0x330] sm:$0xff]
    %v7238 = vld [vmem:[%s2 + $0x338] sm:$0xff]
    %v7239 = vld [vmem:[%s2 + $0x340] sm:$0xff]
    %v7240 = vld [vmem:[%s2 + $0x348] sm:$0xff]
    %v7241 = vld [vmem:[%s2 + $0x350] sm:$0xff]
    %v7242 = vld [vmem:[%s2 + $0x358] sm:$0xff]
    %v7243 = vld [vmem:[%s2 + $0x360] sm:$0xff]
    %v7244 = vld [vmem:[%s2 + $0x368] sm:$0xff]
    %v7245 = vld [vmem:[%s2 + $0x370] sm:$0xff]
    %v7246 = vld [vmem:[%s2 + $0x378] sm:$0xff]
    %v7247 = vld [vmem:[%s2 + $0x380] sm:$0xff]
    %v7248 = vld [vmem:[%s2 + $0x388] sm:$0xff]
    %v7249 = vld [vmem:[%s2 + $0x390] sm:$0xff]
    %v7250 = vld [vmem:[%s2 + $0x398] sm:$0xff]
    %v7251 = vld [vmem:[%s2 + $0x3a0] sm:$0xff]
    %v7252 = vld [vmem:[%s2 + $0x3a8] sm:$0xff]
    %v7253 = vld [vmem:[%s2 + $0x3b0] sm:$0xff]
    %v7254 = vld [vmem:[%s2 + $0x3b8] sm:$0xff]
    %v7255 = vld [vmem:[%s2 + $0x3c0] sm:$0xff]
    %v7256 = vld [vmem:[%s2 + $0x3c8] sm:$0xff]
    %v7257 = vld [vmem:[%s2 + $0x3d0] sm:$0xff]
    %v7258 = vld [vmem:[%s2 + $0x3d8] sm:$0xff]
    %v7259 = vld [vmem:[%s2 + $0x3e0] sm:$0xff]
    %v7260 = vld [vmem:[%s2 + $0x3e8] sm:$0xff]
    %v7261 = vld [vmem:[%s2 + $0x3f0] sm:$0xff]
    %v7262 = vld [vmem:[%s2 + $0x3f8] sm:$0xff]
    %v7263 = vld [vmem:[%s2 + $0x400] sm:$0xff]
    %v7264 = vld [vmem:[%s2 + $0x408] sm:$0xff]
    %v7265 = vld [vmem:[%s2 + $0x410] sm:$0xff]
    %v7266 = vld [vmem:[%s2 + $0x418] sm:$0xff]
    %v7267 = vld [vmem:[%s2 + $0x420] sm:$0xff]
    %v7268 = vld [vmem:[%s2 + $0x428] sm:$0xff]
    %v7269 = vld [vmem:[%s2 + $0x430] sm:$0xff]
    %v7270 = vld [vmem:[%s2 + $0x438] sm:$0xff]
    %v7271 = vld [vmem:[%s2 + $0x440] sm:$0xff]
    %v7272 = vld [vmem:[%s2 + $0x448] sm:$0xff]
    %v7273 = vld [vmem:[%s2 + $0x450] sm:$0xff]
    %v7274 = vld [vmem:[%s2 + $0x458] sm:$0xff]
    %v7275 = vld [vmem:[%s2 + $0x460] sm:$0xff]
    %v7276 = vld [vmem:[%s2 + $0x468] sm:$0xff]
    %v7277 = vld [vmem:[%s2 + $0x470] sm:$0xff]
    %v7278 = vld [vmem:[%s2 + $0x478] sm:$0xff]
    %v7279 = vld [vmem:[%s2 + $0x480] sm:$0xff]
    %v7280 = vld [vmem:[%s2 + $0x488] sm:$0xff]
    %v7281 = vld [vmem:[%s2 + $0x490] sm:$0xff]
    %v7282 = vld [vmem:[%s2 + $0x498] sm:$0xff]
    %v7283 = vld [vmem:[%s2 + $0x4a0] sm:$0xff]
    %v7284 = vld [vmem:[%s2 + $0x4a8] sm:$0xff]
    %v7285 = vld [vmem:[%s2 + $0x4b0] sm:$0xff]
    %v7286 = vld [vmem:[%s2 + $0x4b8] sm:$0xff]
    %v7287 = vld [vmem:[%s2 + $0x4c0] sm:$0xff]
    %v7288 = vld [vmem:[%s2 + $0x4c8] sm:$0xff]
    %v7289 = vld [vmem:[%s2 + $0x4d0] sm:$0xff]
    %v7290 = vld [vmem:[%s2 + $0x4d8] sm:$0xff]
    %v7291 = vld [vmem:[%s2 + $0x4e0] sm:$0xff]
    %v7292 = vld [vmem:[%s2 + $0x4e8] sm:$0xff]
    %v7293 = vld [vmem:[%s2 + $0x4f0] sm:$0xff]
    %v7294 = vld [vmem:[%s2 + $0x4f8] sm:$0xff]
    %v7295 = vld [vmem:[%s2 + $0x500] sm:$0xff]
    %v7296 = vld [vmem:[%s2 + $0x508] sm:$0xff]
    %v7297 = vld [vmem:[%s2 + $0x510] sm:$0xff]
    %v7298 = vld [vmem:[%s2 + $0x518] sm:$0xff]
    %v7299 = vld [vmem:[%s2 + $0x520] sm:$0xff]
    %v7300 = vld [vmem:[%s2 + $0x528] sm:$0xff]
    %v7301 = vld [vmem:[%s2 + $0x530] sm:$0xff]
    %v7302 = vld [vmem:[%s2 + $0x538] sm:$0xff]
    %v7303 = vld [vmem:[%s2 + $0x540] sm:$0xff]
    %v7304 = vld [vmem:[%s2 + $0x548] sm:$0xff]
    %v7305 = vld [vmem:[%s2 + $0x550] sm:$0xff]
    %v7306 = vld [vmem:[%s2 + $0x558] sm:$0xff]
    %v7307 = vld [vmem:[%s2 + $0x560] sm:$0xff]
    %v7308 = vld [vmem:[%s2 + $0x568] sm:$0xff]
    %v7309 = vld [vmem:[%s2 + $0x570] sm:$0xff]
    %v7310 = vld [vmem:[%s2 + $0x578] sm:$0xff]
    %v7311 = vld [vmem:[%s2 + $0x580] sm:$0xff]
    %v7312 = vld [vmem:[%s2 + $0x588] sm:$0xff]
    %v7313 = vld [vmem:[%s2 + $0x590] sm:$0xff]
    %v7314 = vld [vmem:[%s2 + $0x598] sm:$0xff]
    %v7315 = vld [vmem:[%s2 + $0x5a0] sm:$0xff]
    %v7316 = vld [vmem:[%s2 + $0x5a8] sm:$0xff]
    %v7317 = vld [vmem:[%s2 + $0x5b0] sm:$0xff]
    %v7318 = vld [vmem:[%s2 + $0x5b8] sm:$0xff]
    %v7319 = vld [vmem:[%s2 + $0x5c0] sm:$0xff]
    %v7320 = vld [vmem:[%s2 + $0x5c8] sm:$0xff]
    %v7321 = vld [vmem:[%s2 + $0x5d0] sm:$0xff]
    %v7322 = vld [vmem:[%s2 + $0x5d8] sm:$0xff]
    %v7323 = vld [vmem:[%s2 + $0x5e0] sm:$0xff]
    %v7324 = vld [vmem:[%s2 + $0x5e8] sm:$0xff]
    %v7325 = vld [vmem:[%s2 + $0x5f0] sm:$0xff]
    %v7326 = vld [vmem:[%s2 + $0x5f8] sm:$0xff]
    %v7327 = vld [vmem:[%s2 + $0x600] sm:$0xff]
    %v7328 = vld [vmem:[%s2 + $0x608] sm:$0xff]
    %v7329 = vld [vmem:[%s2 + $0x610] sm:$0xff]
    %v7330 = vld [vmem:[%s2 + $0x618] sm:$0xff]
    %v7331 = vld [vmem:[%s2 + $0x620] sm:$0xff]
    %v7332 = vld [vmem:[%s2 + $0x628] sm:$0xff]
    %v7333 = vld [vmem:[%s2 + $0x630] sm:$0xff]
    %v7334 = vld [vmem:[%s2 + $0x638] sm:$0xff]
    %v7335 = vld [vmem:[%s2 + $0x640] sm:$0xff]
    %v7336 = vld [vmem:[%s2 + $0x648] sm:$0xff]
    %v7337 = vld [vmem:[%s2 + $0x650] sm:$0xff]
    %v7338 = vld [vmem:[%s2 + $0x658] sm:$0xff]
    %v7339 = vld [vmem:[%s2 + $0x660] sm:$0xff]
    %v7340 = vld [vmem:[%s2 + $0x668] sm:$0xff]
    %v7341 = vld [vmem:[%s2 + $0x670] sm:$0xff]
    %v7342 = vld [vmem:[%s2 + $0x678] sm:$0xff]
    %v7343 = vld [vmem:[%s2 + $0x680] sm:$0xff]
    %v7344 = vld [vmem:[%s2 + $0x688] sm:$0xff]
    %v7345 = vld [vmem:[%s2 + $0x690] sm:$0xff]
    %v7346 = vld [vmem:[%s2 + $0x698] sm:$0xff]
    %v7347 = vld [vmem:[%s2 + $0x6a0] sm:$0xff]
    %v7348 = vld [vmem:[%s2 + $0x6a8] sm:$0xff]
    %v7349 = vld [vmem:[%s2 + $0x6b0] sm:$0xff]
    %v7350 = vld [vmem:[%s2 + $0x6b8] sm:$0xff]
    %v7351 = vld [vmem:[%s2 + $0x6c0] sm:$0xff]
    %v7352 = vld [vmem:[%s2 + $0x6c8] sm:$0xff]
    %v7353 = vld [vmem:[%s2 + $0x6d0] sm:$0xff]
    %v7354 = vld [vmem:[%s2 + $0x6d8] sm:$0xff]
    %v7355 = vld [vmem:[%s2 + $0x6e0] sm:$0xff]
    %v7356 = vld [vmem:[%s2 + $0x6e8] sm:$0xff]
    %v7357 = vld [vmem:[%s2 + $0x6f0] sm:$0xff]
    %v7358 = vld [vmem:[%s2 + $0x6f8] sm:$0xff]
    %v7359 = vld [vmem:[%s2 + $0x700] sm:$0xff]
    %v7360 = vld [vmem:[%s2 + $0x708] sm:$0xff]
    %v7361 = vld [vmem:[%s2 + $0x710] sm:$0xff]
    %v7362 = vld [vmem:[%s2 + $0x718] sm:$0xff]
    %v7363 = vld [vmem:[%s2 + $0x720] sm:$0xff]
    %v7364 = vld [vmem:[%s2 + $0x728] sm:$0xff]
    %v7365 = vld [vmem:[%s2 + $0x730] sm:$0xff]
    %v7366 = vld [vmem:[%s2 + $0x738] sm:$0xff]
    %v7367 = vld [vmem:[%s2 + $0x740] sm:$0xff]
    %v7368 = vld [vmem:[%s2 + $0x748] sm:$0xff]
    %v7369 = vld [vmem:[%s2 + $0x750] sm:$0xff]
    %v7370 = vld [vmem:[%s2 + $0x758] sm:$0xff]
    %v7371 = vld [vmem:[%s2 + $0x760] sm:$0xff]
    %v7372 = vld [vmem:[%s2 + $0x768] sm:$0xff]
    %v7373 = vld [vmem:[%s2 + $0x770] sm:$0xff]
    %v7374 = vld [vmem:[%s2 + $0x778] sm:$0xff]
    %v7375 = vld [vmem:[%s2 + $0x780] sm:$0xff]
    %v7376 = vld [vmem:[%s2 + $0x788] sm:$0xff]
    %v7377 = vld [vmem:[%s2 + $0x790] sm:$0xff]
    %v7378 = vld [vmem:[%s2 + $0x798] sm:$0xff]
    %v7379 = vld [vmem:[%s2 + $0x7a0] sm:$0xff]
    %v7380 = vld [vmem:[%s2 + $0x7a8] sm:$0xff]
    %v7381 = vld [vmem:[%s2 + $0x7b0] sm:$0xff]
    %v7382 = vld [vmem:[%s2 + $0x7b8] sm:$0xff]
    %v7383 = vld [vmem:[%s2 + $0x7c0] sm:$0xff]
    %v7384 = vld [vmem:[%s2 + $0x7c8] sm:$0xff]
    %v7385 = vld [vmem:[%s2 + $0x7d0] sm:$0xff]
    %v7386 = vld [vmem:[%s2 + $0x7d8] sm:$0xff]
    %v7387 = vld [vmem:[%s2 + $0x7e0] sm:$0xff]
    %v7388 = vld [vmem:[%s2 + $0x7e8] sm:$0xff]
    %v7389 = vld [vmem:[%s2 + $0x7f0] sm:$0xff]
    %v7390 = vld [vmem:[%s2 + $0x7f8] sm:$0xff]
    %v7391 = vld [vmem:[%s2 + $0x800] sm:$0xff]
    %v7392 = vld [vmem:[%s2 + $0x808] sm:$0xff]
    %v7393 = vld [vmem:[%s2 + $0x810] sm:$0xff]
    %v7394 = vld [vmem:[%s2 + $0x818] sm:$0xff]
    %v7395 = vld [vmem:[%s2 + $0x820] sm:$0xff]
    %v7396 = vld [vmem:[%s2 + $0x828] sm:$0xff]
    %v7397 = vld [vmem:[%s2 + $0x830] sm:$0xff]
    %v7398 = vld [vmem:[%s2 + $0x838] sm:$0xff]
    %v7399 = vld [vmem:[%s2 + $0x840] sm:$0xff]
    %v7400 = vld [vmem:[%s2 + $0x848] sm:$0xff]
    %v7401 = vld [vmem:[%s2 + $0x850] sm:$0xff]
    %v7402 = vld [vmem:[%s2 + $0x858] sm:$0xff]
    %v7403 = vld [vmem:[%s2 + $0x860] sm:$0xff]
    %v7404 = vld [vmem:[%s2 + $0x868] sm:$0xff]
    %v7405 = vld [vmem:[%s2 + $0x870] sm:$0xff]
    %v7406 = vld [vmem:[%s2 + $0x878] sm:$0xff]
    %v7407 = vld [vmem:[%s2 + $0x880] sm:$0xff]
    %v7408 = vld [vmem:[%s2 + $0x888] sm:$0xff]
    %v7409 = vld [vmem:[%s2 + $0x890] sm:$0xff]
    %v7410 = vld [vmem:[%s2 + $0x898] sm:$0xff]
    %v7411 = vld [vmem:[%s2 + $0x8a0] sm:$0xff]
    %v7412 = vld [vmem:[%s2 + $0x8a8] sm:$0xff]
    %v7413 = vld [vmem:[%s2 + $0x8b0] sm:$0xff]
    %v7414 = vld [vmem:[%s2 + $0x8b8] sm:$0xff]
    %v7415 = vld [vmem:[%s2 + $0x8c0] sm:$0xff]
    %v7416 = vld [vmem:[%s2 + $0x8c8] sm:$0xff]
    %v7417 = vld [vmem:[%s2 + $0x8d0] sm:$0xff]
    %v7418 = vld [vmem:[%s2 + $0x8d8] sm:$0xff]
    %v7419 = vld [vmem:[%s2 + $0x8e0] sm:$0xff]
    %v7420 = vld [vmem:[%s2 + $0x8e8] sm:$0xff]
    %v7421 = vld [vmem:[%s2 + $0x8f0] sm:$0xff]
    %v7422 = vld [vmem:[%s2 + $0x8f8] sm:$0xff]
    %v7423 = vld [vmem:[%s2 + $0x900] sm:$0xff]
    %v7424 = vld [vmem:[%s2 + $0x908] sm:$0xff]
    %v7425 = vld [vmem:[%s2 + $0x910] sm:$0xff]
    %v7426 = vld [vmem:[%s2 + $0x918] sm:$0xff]
    %v7427 = vld [vmem:[%s2 + $0x920] sm:$0xff]
    %v7428 = vld [vmem:[%s2 + $0x928] sm:$0xff]
    %v7429 = vld [vmem:[%s2 + $0x930] sm:$0xff]
    %v7430 = vld [vmem:[%s2 + $0x938] sm:$0xff]
    %v7431 = vld [vmem:[%s2 + $0x940] sm:$0xff]
    %v7432 = vld [vmem:[%s2 + $0x948] sm:$0xff]
    %v7433 = vld [vmem:[%s2 + $0x950] sm:$0xff]
    %v7434 = vld [vmem:[%s2 + $0x958] sm:$0xff]
    %v7435 = vld [vmem:[%s2 + $0x960] sm:$0xff]
    %v7436 = vld [vmem:[%s2 + $0x968] sm:$0xff]
    %v7437 = vld [vmem:[%s2 + $0x970] sm:$0xff]
    %v7438 = vld [vmem:[%s2 + $0x978] sm:$0xff]
    %v7439 = vld [vmem:[%s2 + $0x980] sm:$0xff]
    %v7440 = vld [vmem:[%s2 + $0x988] sm:$0xff]
    %v7441 = vld [vmem:[%s2 + $0x990] sm:$0xff]
    %v7442 = vld [vmem:[%s2 + $0x998] sm:$0xff]
    %v7443 = vld [vmem:[%s2 + $0x9a0] sm:$0xff]
    %v7444 = vld [vmem:[%s2 + $0x9a8] sm:$0xff]
    %v7445 = vld [vmem:[%s2 + $0x9b0] sm:$0xff]
    %v7446 = vld [vmem:[%s2 + $0x9b8] sm:$0xff]
    %v7447 = vld [vmem:[%s2 + $0x9c0] sm:$0xff]
    %v7448 = vld [vmem:[%s2 + $0x9c8] sm:$0xff]
    %v7449 = vld [vmem:[%s2 + $0x9d0] sm:$0xff]
    %v7450 = vld [vmem:[%s2 + $0x9d8] sm:$0xff]
    %v7451 = vld [vmem:[%s2 + $0x9e0] sm:$0xff]
    %v7452 = vld [vmem:[%s2 + $0x9e8] sm:$0xff]
    %v7453 = vld [vmem:[%s2 + $0x9f0] sm:$0xff]
    %v7454 = vld [vmem:[%s2 + $0x9f8] sm:$0xff]
    %v7455 = vld [vmem:[%s2 + $0xa00] sm:$0xff]
    %v7456 = vld [vmem:[%s2 + $0xa08] sm:$0xff]
    %v7457 = vld [vmem:[%s2 + $0xa10] sm:$0xff]
    %v7458 = vld [vmem:[%s2 + $0xa18] sm:$0xff]
    %v7459 = vld [vmem:[%s2 + $0xa20] sm:$0xff]
    %v7460 = vld [vmem:[%s2 + $0xa28] sm:$0xff]
    %v7461 = vld [vmem:[%s2 + $0xa30] sm:$0xff]
    %v7462 = vld [vmem:[%s2 + $0xa38] sm:$0xff]
    %v7463 = vld [vmem:[%s2 + $0xa40] sm:$0xff]
    %v7464 = vld [vmem:[%s2 + $0xa48] sm:$0xff]
    %v7465 = vld [vmem:[%s2 + $0xa50] sm:$0xff]
    %v7466 = vld [vmem:[%s2 + $0xa58] sm:$0xff]
    %v7467 = vld [vmem:[%s2 + $0xa60] sm:$0xff]
    %v7468 = vld [vmem:[%s2 + $0xa68] sm:$0xff]
    %v7469 = vld [vmem:[%s2 + $0xa70] sm:$0xff]
    %v7470 = vld [vmem:[%s2 + $0xa78] sm:$0xff]
    %v7471 = vld [vmem:[%s2 + $0xa80] sm:$0xff]
    %v7472 = vld [vmem:[%s2 + $0xa88] sm:$0xff]
    %v7473 = vld [vmem:[%s2 + $0xa90] sm:$0xff]
    %v7474 = vld [vmem:[%s2 + $0xa98] sm:$0xff]
    %v7475 = vld [vmem:[%s2 + $0xaa0] sm:$0xff]
    %v7476 = vld [vmem:[%s2 + $0xaa8] sm:$0xff]
    %v7477 = vld [vmem:[%s2 + $0xab0] sm:$0xff]
    %v7478 = vld [vmem:[%s2 + $0xab8] sm:$0xff]
    %v7479 = vld [vmem:[%s2 + $0xac0] sm:$0xff]
    %v7480 = vld [vmem:[%s2 + $0xac8] sm:$0xff]
    %v7481 = vld [vmem:[%s2 + $0xad0] sm:$0xff]
    %v7482 = vld [vmem:[%s2 + $0xad8] sm:$0xff]
    %v7483 = vld [vmem:[%s2 + $0xae0] sm:$0xff]
    %v7484 = vld [vmem:[%s2 + $0xae8] sm:$0xff]
    %v7485 = vld [vmem:[%s2 + $0xaf0] sm:$0xff]
    %v7486 = vld [vmem:[%s2 + $0xaf8] sm:$0xff]
    %v7487 = vld [vmem:[%s2 + $0xb00] sm:$0xff]
    %v7488 = vld [vmem:[%s2 + $0xb08] sm:$0xff]
    %v7489 = vld [vmem:[%s2 + $0xb10] sm:$0xff]
    %v7490 = vld [vmem:[%s2 + $0xb18] sm:$0xff]
    %v7491 = vld [vmem:[%s2 + $0xb20] sm:$0xff]
    %v7492 = vld [vmem:[%s2 + $0xb28] sm:$0xff]
    %v7493 = vld [vmem:[%s2 + $0xb30] sm:$0xff]
    %v7494 = vld [vmem:[%s2 + $0xb38] sm:$0xff]
    %v7495 = vld [vmem:[%s2 + $0xb40] sm:$0xff]
    %v7496 = vld [vmem:[%s2 + $0xb48] sm:$0xff]
    %v7497 = vld [vmem:[%s2 + $0xb50] sm:$0xff]
    %v7498 = vld [vmem:[%s2 + $0xb58] sm:$0xff]
    %v7499 = vld [vmem:[%s2 + $0xb60] sm:$0xff]
    %v7500 = vld [vmem:[%s2 + $0xb68] sm:$0xff]
    %v7501 = vld [vmem:[%s2 + $0xb70] sm:$0xff]
    %v7502 = vld [vmem:[%s2 + $0xb78] sm:$0xff]
    %v7503 = vld [vmem:[%s2 + $0xb80] sm:$0xff]
    %v7504 = vld [vmem:[%s2 + $0xb88] sm:$0xff]
    %v7505 = vld [vmem:[%s2 + $0xb90] sm:$0xff]
    %v7506 = vld [vmem:[%s2 + $0xb98] sm:$0xff]
    %v7507 = vld [vmem:[%s2 + $0xba0] sm:$0xff]
    %v7508 = vld [vmem:[%s2 + $0xba8] sm:$0xff]
    %v7509 = vld [vmem:[%s2 + $0xbb0] sm:$0xff]
    %v7510 = vld [vmem:[%s2 + $0xbb8] sm:$0xff]
    %v7511 = vld [vmem:[%s2 + $0xbc0] sm:$0xff]
    %v7512 = vld [vmem:[%s2 + $0xbc8] sm:$0xff]
    %v7513 = vld [vmem:[%s2 + $0xbd0] sm:$0xff]
    %v7514 = vld [vmem:[%s2 + $0xbd8] sm:$0xff]
    %v7515 = vld [vmem:[%s2 + $0xbe0] sm:$0xff]
    %v7516 = vld [vmem:[%s2 + $0xbe8] sm:$0xff]
    %v7517 = vld [vmem:[%s2 + $0xbf0] sm:$0xff]
    %v7518 = vld [vmem:[%s2 + $0xbf8] sm:$0xff]
    %v7519 = vld [vmem:[%s2 + $0xc00] sm:$0xff]
    %v7520 = vld [vmem:[%s2 + $0xc08] sm:$0xff]
    %v7521 = vld [vmem:[%s2 + $0xc10] sm:$0xff]
    %v7522 = vld [vmem:[%s2 + $0xc18] sm:$0xff]
    %v7523 = vld [vmem:[%s2 + $0xc20] sm:$0xff]
    %v7524 = vld [vmem:[%s2 + $0xc28] sm:$0xff]
    %v7525 = vld [vmem:[%s2 + $0xc30] sm:$0xff]
    %v7526 = vld [vmem:[%s2 + $0xc38] sm:$0xff]
    %v7527 = vld [vmem:[%s2 + $0xc40] sm:$0xff]
    %v7528 = vld [vmem:[%s2 + $0xc48] sm:$0xff]
    %v7529 = vld [vmem:[%s2 + $0xc50] sm:$0xff]
    %v7530 = vld [vmem:[%s2 + $0xc58] sm:$0xff]
    %v7531 = vld [vmem:[%s2 + $0xc60] sm:$0xff]
    %v7532 = vld [vmem:[%s2 + $0xc68] sm:$0xff]
    %v7533 = vld [vmem:[%s2 + $0xc70] sm:$0xff]
    %v7534 = vld [vmem:[%s2 + $0xc78] sm:$0xff]
    %v7535 = vld [vmem:[%s2 + $0xc80] sm:$0xff]
    %v7536 = vld [vmem:[%s2 + $0xc88] sm:$0xff]
    %v7537 = vld [vmem:[%s2 + $0xc90] sm:$0xff]
    %v7538 = vld [vmem:[%s2 + $0xc98] sm:$0xff]
    %v7539 = vld [vmem:[%s2 + $0xca0] sm:$0xff]
    %v7540 = vld [vmem:[%s2 + $0xca8] sm:$0xff]
    %v7541 = vld [vmem:[%s2 + $0xcb0] sm:$0xff]
    %v7542 = vld [vmem:[%s2 + $0xcb8] sm:$0xff]
    %v7543 = vld [vmem:[%s2 + $0xcc0] sm:$0xff]
    %v7544 = vld [vmem:[%s2 + $0xcc8] sm:$0xff]
    %v7545 = vld [vmem:[%s2 + $0xcd0] sm:$0xff]
    %v7546 = vld [vmem:[%s2 + $0xcd8] sm:$0xff]
    %v7547 = vld [vmem:[%s2 + $0xce0] sm:$0xff]
    %v7548 = vld [vmem:[%s2 + $0xce8] sm:$0xff]
    %v7549 = vld [vmem:[%s2 + $0xcf0] sm:$0xff]
    %v7550 = vld [vmem:[%s2 + $0xcf8] sm:$0xff]
    %v7551 = vld [vmem:[%s2 + $0xd00] sm:$0xff]
    %v7552 = vld [vmem:[%s2 + $0xd08] sm:$0xff]
    %v7553 = vld [vmem:[%s2 + $0xd10] sm:$0xff]
    %v7554 = vld [vmem:[%s2 + $0xd18] sm:$0xff]
    %v7555 = vld [vmem:[%s2 + $0xd20] sm:$0xff]
    %v7556 = vld [vmem:[%s2 + $0xd28] sm:$0xff]
    %v7557 = vld [vmem:[%s2 + $0xd30] sm:$0xff]
    %v7558 = vld [vmem:[%s2 + $0xd38] sm:$0xff]
    %v7559 = vld [vmem:[%s2 + $0xd40] sm:$0xff]
    %v7560 = vld [vmem:[%s2 + $0xd48] sm:$0xff]
    %v7561 = vld [vmem:[%s2 + $0xd50] sm:$0xff]
    %v7562 = vld [vmem:[%s2 + $0xd58] sm:$0xff]
    %v7563 = vld [vmem:[%s2 + $0xd60] sm:$0xff]
    %v7564 = vld [vmem:[%s2 + $0xd68] sm:$0xff]
    %v7565 = vld [vmem:[%s2 + $0xd70] sm:$0xff]
    %v7566 = vld [vmem:[%s2 + $0xd78] sm:$0xff]
    %v7567 = vld [vmem:[%s2 + $0xd80] sm:$0xff]
    %v7568 = vld [vmem:[%s2 + $0xd88] sm:$0xff]
    %v7569 = vld [vmem:[%s2 + $0xd90] sm:$0xff]
    %v7570 = vld [vmem:[%s2 + $0xd98] sm:$0xff]
    %v7571 = vld [vmem:[%s2 + $0xda0] sm:$0xff]
    %v7572 = vld [vmem:[%s2 + $0xda8] sm:$0xff]
    %v7573 = vld [vmem:[%s2 + $0xdb0] sm:$0xff]
    %v7574 = vld [vmem:[%s2 + $0xdb8] sm:$0xff]
    %v7575 = vld [vmem:[%s2 + $0xdc0] sm:$0xff]
    %v7576 = vld [vmem:[%s2 + $0xdc8] sm:$0xff]
    %v7577 = vld [vmem:[%s2 + $0xdd0] sm:$0xff]
    %v7578 = vld [vmem:[%s2 + $0xdd8] sm:$0xff]
    %v7579 = vld [vmem:[%s2 + $0xde0] sm:$0xff]
    %v7580 = vld [vmem:[%s2 + $0xde8] sm:$0xff]
    %v7581 = vld [vmem:[%s2 + $0xdf0] sm:$0xff]
    %v7582 = vld [vmem:[%s2 + $0xdf8] sm:$0xff]
    %v7583 = vld [vmem:[%s2 + $0xe00] sm:$0xff]
    %v7584 = vld [vmem:[%s2 + $0xe08] sm:$0xff]
    %v7585 = vld [vmem:[%s2 + $0xe10] sm:$0xff]
    %v7586 = vld [vmem:[%s2 + $0xe18] sm:$0xff]
    %v7587 = vld [vmem:[%s2 + $0xe20] sm:$0xff]
    %v7588 = vld [vmem:[%s2 + $0xe28] sm:$0xff]
    %v7589 = vld [vmem:[%s2 + $0xe30] sm:$0xff]
    %v7590 = vld [vmem:[%s2 + $0xe38] sm:$0xff]
    %v7591 = vld [vmem:[%s2 + $0xe40] sm:$0xff]
    %v7592 = vld [vmem:[%s2 + $0xe48] sm:$0xff]
    %v7593 = vld [vmem:[%s2 + $0xe50] sm:$0xff]
    %v7594 = vld [vmem:[%s2 + $0xe58] sm:$0xff]
    %v7595 = vld [vmem:[%s2 + $0xe60] sm:$0xff]
    %v7596 = vld [vmem:[%s2 + $0xe68] sm:$0xff]
    %v7597 = vld [vmem:[%s2 + $0xe70] sm:$0xff]
    %v7598 = vld [vmem:[%s2 + $0xe78] sm:$0xff]
    %v7599 = vld [vmem:[%s2 + $0xe80] sm:$0xff]
    %v7600 = vld [vmem:[%s2 + $0xe88] sm:$0xff]
    %v7601 = vld [vmem:[%s2 + $0xe90] sm:$0xff]
    %v7602 = vld [vmem:[%s2 + $0xe98] sm:$0xff]
    %v7603 = vld [vmem:[%s2 + $0xea0] sm:$0xff]
    %v7604 = vld [vmem:[%s2 + $0xea8] sm:$0xff]
    %v7605 = vld [vmem:[%s2 + $0xeb0] sm:$0xff]
    %v7606 = vld [vmem:[%s2 + $0xeb8] sm:$0xff]
    %v7607 = vld [vmem:[%s2 + $0xec0] sm:$0xff]
    %v7608 = vld [vmem:[%s2 + $0xec8] sm:$0xff]
    %v7609 = vld [vmem:[%s2 + $0xed0] sm:$0xff]
    %v7610 = vld [vmem:[%s2 + $0xed8] sm:$0xff]
    %v7611 = vld [vmem:[%s2 + $0xee0] sm:$0xff]
    %v7612 = vld [vmem:[%s2 + $0xee8] sm:$0xff]
    %v7613 = vld [vmem:[%s2 + $0xef0] sm:$0xff]
    %v7614 = vld [vmem:[%s2 + $0xef8] sm:$0xff]
    %v7615 = vld [vmem:[%s2 + $0xf00] sm:$0xff]
    %v7616 = vld [vmem:[%s2 + $0xf08] sm:$0xff]
    %v7617 = vld [vmem:[%s2 + $0xf10] sm:$0xff]
    %v7618 = vld [vmem:[%s2 + $0xf18] sm:$0xff]
    %v7619 = vld [vmem:[%s2 + $0xf20] sm:$0xff]
    %v7620 = vld [vmem:[%s2 + $0xf28] sm:$0xff]
    %v7621 = vld [vmem:[%s2 + $0xf30] sm:$0xff]
    %v7622 = vld [vmem:[%s2 + $0xf38] sm:$0xff]
    %v7623 = vld [vmem:[%s2 + $0xf40] sm:$0xff]
    %v7624 = vld [vmem:[%s2 + $0xf48] sm:$0xff]
    %v7625 = vld [vmem:[%s2 + $0xf50] sm:$0xff]
    %v7626 = vld [vmem:[%s2 + $0xf58] sm:$0xff]
    %v7627 = vld [vmem:[%s2 + $0xf60] sm:$0xff]
    %v7628 = vld [vmem:[%s2 + $0xf68] sm:$0xff]
    %v7629 = vld [vmem:[%s2 + $0xf70] sm:$0xff]
    %v7630 = vld [vmem:[%s2 + $0xf78] sm:$0xff]
    %v7631 = vld [vmem:[%s2 + $0xf80] sm:$0xff]
    %v7632 = vld [vmem:[%s2 + $0xf88] sm:$0xff]
    %v7633 = vld [vmem:[%s2 + $0xf90] sm:$0xff]
    %v7634 = vld [vmem:[%s2 + $0xf98] sm:$0xff]
    %v7635 = vld [vmem:[%s2 + $0xfa0] sm:$0xff]
    %v7636 = vld [vmem:[%s2 + $0xfa8] sm:$0xff]
    %v7637 = vld [vmem:[%s2 + $0xfb0] sm:$0xff]
    %v7638 = vld [vmem:[%s2 + $0xfb8] sm:$0xff]
    %v7639 = vld [vmem:[%s2 + $0xfc0] sm:$0xff]
    %v7640 = vld [vmem:[%s2 + $0xfc8] sm:$0xff]
    %v7641 = vld [vmem:[%s2 + $0xfd0] sm:$0xff]
    %v7642 = vld [vmem:[%s2 + $0xfd8] sm:$0xff]
    %v7643 = vld [vmem:[%s2 + $0xfe0] sm:$0xff]
    %v7644 = vld [vmem:[%s2 + $0xfe8] sm:$0xff]
    %v7645 = vld [vmem:[%s2 + $0xff0] sm:$0xff]
    %v7646 = vld [vmem:[%s2 + $0xff8] sm:$0xff]
    %v8159 = vunpack.c.l.b16 %v7135
    %v8160 = vunpack.c.h.b16 %v7135
    %v8161 = vunpack.c.l.b16 %v7136
    %v8162 = vunpack.c.h.b16 %v7136
    %v8163 = vunpack.c.l.b16 %v7137
    %v8164 = vunpack.c.h.b16 %v7137
    %v8165 = vunpack.c.l.b16 %v7138
    %v8166 = vunpack.c.h.b16 %v7138
    %v8167 = vunpack.c.l.b16 %v7139
    %v8168 = vunpack.c.h.b16 %v7139
    %v8169 = vunpack.c.l.b16 %v7140
    %v8170 = vunpack.c.h.b16 %v7140
    %v8171 = vunpack.c.l.b16 %v7141
    %v8172 = vunpack.c.h.b16 %v7141
    %v8173 = vunpack.c.l.b16 %v7142
    %v8174 = vunpack.c.h.b16 %v7142
    %v8175 = vunpack.c.l.b16 %v7143
    %v8176 = vunpack.c.h.b16 %v7143
    %v8177 = vunpack.c.l.b16 %v7144
    %v8178 = vunpack.c.h.b16 %v7144
    %v8179 = vunpack.c.l.b16 %v7145
    %v8180 = vunpack.c.h.b16 %v7145
    %v8181 = vunpack.c.l.b16 %v7146
    %v8182 = vunpack.c.h.b16 %v7146
    %v8183 = vunpack.c.l.b16 %v7147
    %v8184 = vunpack.c.h.b16 %v7147
    %v8185 = vunpack.c.l.b16 %v7148
    %v8186 = vunpack.c.h.b16 %v7148
    %v8187 = vunpack.c.l.b16 %v7149
    %v8188 = vunpack.c.h.b16 %v7149
    %v8189 = vunpack.c.l.b16 %v7150
    %v8190 = vunpack.c.h.b16 %v7150
    %v8191 = vunpack.c.l.b16 %v7151
    %v8192 = vunpack.c.h.b16 %v7151
    %v8193 = vunpack.c.l.b16 %v7152
    %v8194 = vunpack.c.h.b16 %v7152
    %v8195 = vunpack.c.l.b16 %v7153
    %v8196 = vunpack.c.h.b16 %v7153
    %v8197 = vunpack.c.l.b16 %v7154
    %v8198 = vunpack.c.h.b16 %v7154
    %v8199 = vunpack.c.l.b16 %v7155
    %v8200 = vunpack.c.h.b16 %v7155
    %v8201 = vunpack.c.l.b16 %v7156
    %v8202 = vunpack.c.h.b16 %v7156
    %v8203 = vunpack.c.l.b16 %v7157
    %v8204 = vunpack.c.h.b16 %v7157
    %v8205 = vunpack.c.l.b16 %v7158
    %v8206 = vunpack.c.h.b16 %v7158
    %v8207 = vunpack.c.l.b16 %v7159
    %v8208 = vunpack.c.h.b16 %v7159
    %v8209 = vunpack.c.l.b16 %v7160
    %v8210 = vunpack.c.h.b16 %v7160
    %v8211 = vunpack.c.l.b16 %v7161
    %v8212 = vunpack.c.h.b16 %v7161
    %v8213 = vunpack.c.l.b16 %v7162
    %v8214 = vunpack.c.h.b16 %v7162
    %v8215 = vunpack.c.l.b16 %v7163
    %v8216 = vunpack.c.h.b16 %v7163
    %v8217 = vunpack.c.l.b16 %v7164
    %v8218 = vunpack.c.h.b16 %v7164
    %v8219 = vunpack.c.l.b16 %v7165
    %v8220 = vunpack.c.h.b16 %v7165
    %v8221 = vunpack.c.l.b16 %v7166
    %v8222 = vunpack.c.h.b16 %v7166
    %v8223 = vunpack.c.l.b16 %v7167
    %v8224 = vunpack.c.h.b16 %v7167
    %v8225 = vunpack.c.l.b16 %v7168
    %v8226 = vunpack.c.h.b16 %v7168
    %v8227 = vunpack.c.l.b16 %v7169
    %v8228 = vunpack.c.h.b16 %v7169
    %v8229 = vunpack.c.l.b16 %v7170
    %v8230 = vunpack.c.h.b16 %v7170
    %v8231 = vunpack.c.l.b16 %v7171
    %v8232 = vunpack.c.h.b16 %v7171
    %v8233 = vunpack.c.l.b16 %v7172
    %v8234 = vunpack.c.h.b16 %v7172
    %v8235 = vunpack.c.l.b16 %v7173
    %v8236 = vunpack.c.h.b16 %v7173
    %v8237 = vunpack.c.l.b16 %v7174
    %v8238 = vunpack.c.h.b16 %v7174
    %v8239 = vunpack.c.l.b16 %v7175
    %v8240 = vunpack.c.h.b16 %v7175
    %v8241 = vunpack.c.l.b16 %v7176
    %v8242 = vunpack.c.h.b16 %v7176
    %v8243 = vunpack.c.l.b16 %v7177
    %v8244 = vunpack.c.h.b16 %v7177
    %v8245 = vunpack.c.l.b16 %v7178
    %v8246 = vunpack.c.h.b16 %v7178
    %v8247 = vunpack.c.l.b16 %v7179
    %v8248 = vunpack.c.h.b16 %v7179
    %v8249 = vunpack.c.l.b16 %v7180
    %v8250 = vunpack.c.h.b16 %v7180
    %v8251 = vunpack.c.l.b16 %v7181
    %v8252 = vunpack.c.h.b16 %v7181
    %v8253 = vunpack.c.l.b16 %v7182
    %v8254 = vunpack.c.h.b16 %v7182
    %v8255 = vunpack.c.l.b16 %v7183
    %v8256 = vunpack.c.h.b16 %v7183
    %v8257 = vunpack.c.l.b16 %v7184
    %v8258 = vunpack.c.h.b16 %v7184
    %v8259 = vunpack.c.l.b16 %v7185
    %v8260 = vunpack.c.h.b16 %v7185
    %v8261 = vunpack.c.l.b16 %v7186
    %v8262 = vunpack.c.h.b16 %v7186
    %v8263 = vunpack.c.l.b16 %v7187
    %v8264 = vunpack.c.h.b16 %v7187
    %v8265 = vunpack.c.l.b16 %v7188
    %v8266 = vunpack.c.h.b16 %v7188
    %v8267 = vunpack.c.l.b16 %v7189
    %v8268 = vunpack.c.h.b16 %v7189
    %v8269 = vunpack.c.l.b16 %v7190
    %v8270 = vunpack.c.h.b16 %v7190
    %v8271 = vunpack.c.l.b16 %v7191
    %v8272 = vunpack.c.h.b16 %v7191
    %v8273 = vunpack.c.l.b16 %v7192
    %v8274 = vunpack.c.h.b16 %v7192
    %v8275 = vunpack.c.l.b16 %v7193
    %v8276 = vunpack.c.h.b16 %v7193
    %v8277 = vunpack.c.l.b16 %v7194
    %v8278 = vunpack.c.h.b16 %v7194
    %v8279 = vunpack.c.l.b16 %v7195
    %v8280 = vunpack.c.h.b16 %v7195
    %v8281 = vunpack.c.l.b16 %v7196
    %v8282 = vunpack.c.h.b16 %v7196
    %v8283 = vunpack.c.l.b16 %v7197
    %v8284 = vunpack.c.h.b16 %v7197
    %v8285 = vunpack.c.l.b16 %v7198
    %v8286 = vunpack.c.h.b16 %v7198
    %v8287 = vunpack.c.l.b16 %v7199
    %v8288 = vunpack.c.h.b16 %v7199
    %v8289 = vunpack.c.l.b16 %v7200
    %v8290 = vunpack.c.h.b16 %v7200
    %v8291 = vunpack.c.l.b16 %v7201
    %v8292 = vunpack.c.h.b16 %v7201
    %v8293 = vunpack.c.l.b16 %v7202
    %v8294 = vunpack.c.h.b16 %v7202
    %v8295 = vunpack.c.l.b16 %v7203
    %v8296 = vunpack.c.h.b16 %v7203
    %v8297 = vunpack.c.l.b16 %v7204
    %v8298 = vunpack.c.h.b16 %v7204
    %v8299 = vunpack.c.l.b16 %v7205
    %v8300 = vunpack.c.h.b16 %v7205
    %v8301 = vunpack.c.l.b16 %v7206
    %v8302 = vunpack.c.h.b16 %v7206
    %v8303 = vunpack.c.l.b16 %v7207
    %v8304 = vunpack.c.h.b16 %v7207
    %v8305 = vunpack.c.l.b16 %v7208
    %v8306 = vunpack.c.h.b16 %v7208
    %v8307 = vunpack.c.l.b16 %v7209
    %v8308 = vunpack.c.h.b16 %v7209
    %v8309 = vunpack.c.l.b16 %v7210
    %v8310 = vunpack.c.h.b16 %v7210
    %v8311 = vunpack.c.l.b16 %v7211
    %v8312 = vunpack.c.h.b16 %v7211
    %v8313 = vunpack.c.l.b16 %v7212
    %v8314 = vunpack.c.h.b16 %v7212
    %v8315 = vunpack.c.l.b16 %v7213
    %v8316 = vunpack.c.h.b16 %v7213
    %v8317 = vunpack.c.l.b16 %v7214
    %v8318 = vunpack.c.h.b16 %v7214
    %v8319 = vunpack.c.l.b16 %v7215
    %v8320 = vunpack.c.h.b16 %v7215
    %v8321 = vunpack.c.l.b16 %v7216
    %v8322 = vunpack.c.h.b16 %v7216
    %v8323 = vunpack.c.l.b16 %v7217
    %v8324 = vunpack.c.h.b16 %v7217
    %v8325 = vunpack.c.l.b16 %v7218
    %v8326 = vunpack.c.h.b16 %v7218
    %v8327 = vunpack.c.l.b16 %v7219
    %v8328 = vunpack.c.h.b16 %v7219
    %v8329 = vunpack.c.l.b16 %v7220
    %v8330 = vunpack.c.h.b16 %v7220
    %v8331 = vunpack.c.l.b16 %v7221
    %v8332 = vunpack.c.h.b16 %v7221
    %v8333 = vunpack.c.l.b16 %v7222
    %v8334 = vunpack.c.h.b16 %v7222
    %v8335 = vunpack.c.l.b16 %v7223
    %v8336 = vunpack.c.h.b16 %v7223
    %v8337 = vunpack.c.l.b16 %v7224
    %v8338 = vunpack.c.h.b16 %v7224
    %v8339 = vunpack.c.l.b16 %v7225
    %v8340 = vunpack.c.h.b16 %v7225
    %v8341 = vunpack.c.l.b16 %v7226
    %v8342 = vunpack.c.h.b16 %v7226
    %v8343 = vunpack.c.l.b16 %v7227
    %v8344 = vunpack.c.h.b16 %v7227
    %v8345 = vunpack.c.l.b16 %v7228
    %v8346 = vunpack.c.h.b16 %v7228
    %v8347 = vunpack.c.l.b16 %v7229
    %v8348 = vunpack.c.h.b16 %v7229
    %v8349 = vunpack.c.l.b16 %v7230
    %v8350 = vunpack.c.h.b16 %v7230
    %v8351 = vunpack.c.l.b16 %v7231
    %v8352 = vunpack.c.h.b16 %v7231
    %v8353 = vunpack.c.l.b16 %v7232
    %v8354 = vunpack.c.h.b16 %v7232
    %v8355 = vunpack.c.l.b16 %v7233
    %v8356 = vunpack.c.h.b16 %v7233
    %v8357 = vunpack.c.l.b16 %v7234
    %v8358 = vunpack.c.h.b16 %v7234
    %v8359 = vunpack.c.l.b16 %v7235
    %v8360 = vunpack.c.h.b16 %v7235
    %v8361 = vunpack.c.l.b16 %v7236
    %v8362 = vunpack.c.h.b16 %v7236
    %v8363 = vunpack.c.l.b16 %v7237
    %v8364 = vunpack.c.h.b16 %v7237
    %v8365 = vunpack.c.l.b16 %v7238
    %v8366 = vunpack.c.h.b16 %v7238
    %v8367 = vunpack.c.l.b16 %v7239
    %v8368 = vunpack.c.h.b16 %v7239
    %v8369 = vunpack.c.l.b16 %v7240
    %v8370 = vunpack.c.h.b16 %v7240
    %v8371 = vunpack.c.l.b16 %v7241
    %v8372 = vunpack.c.h.b16 %v7241
    %v8373 = vunpack.c.l.b16 %v7242
    %v8374 = vunpack.c.h.b16 %v7242
    %v8375 = vunpack.c.l.b16 %v7243
    %v8376 = vunpack.c.h.b16 %v7243
    %v8377 = vunpack.c.l.b16 %v7244
    %v8378 = vunpack.c.h.b16 %v7244
    %v8379 = vunpack.c.l.b16 %v7245
    %v8380 = vunpack.c.h.b16 %v7245
    %v8381 = vunpack.c.l.b16 %v7246
    %v8382 = vunpack.c.h.b16 %v7246
    %v8383 = vunpack.c.l.b16 %v7247
    %v8384 = vunpack.c.h.b16 %v7247
    %v8385 = vunpack.c.l.b16 %v7248
    %v8386 = vunpack.c.h.b16 %v7248
    %v8387 = vunpack.c.l.b16 %v7249
    %v8388 = vunpack.c.h.b16 %v7249
    %v8389 = vunpack.c.l.b16 %v7250
    %v8390 = vunpack.c.h.b16 %v7250
    %v8391 = vunpack.c.l.b16 %v7251
    %v8392 = vunpack.c.h.b16 %v7251
    %v8393 = vunpack.c.l.b16 %v7252
    %v8394 = vunpack.c.h.b16 %v7252
    %v8395 = vunpack.c.l.b16 %v7253
    %v8396 = vunpack.c.h.b16 %v7253
    %v8397 = vunpack.c.l.b16 %v7254
    %v8398 = vunpack.c.h.b16 %v7254
    %v8399 = vunpack.c.l.b16 %v7255
    %v8400 = vunpack.c.h.b16 %v7255
    %v8401 = vunpack.c.l.b16 %v7256
    %v8402 = vunpack.c.h.b16 %v7256
    %v8403 = vunpack.c.l.b16 %v7257
    %v8404 = vunpack.c.h.b16 %v7257
    %v8405 = vunpack.c.l.b16 %v7258
    %v8406 = vunpack.c.h.b16 %v7258
    %v8407 = vunpack.c.l.b16 %v7259
    %v8408 = vunpack.c.h.b16 %v7259
    %v8409 = vunpack.c.l.b16 %v7260
    %v8410 = vunpack.c.h.b16 %v7260
    %v8411 = vunpack.c.l.b16 %v7261
    %v8412 = vunpack.c.h.b16 %v7261
    %v8413 = vunpack.c.l.b16 %v7262
    %v8414 = vunpack.c.h.b16 %v7262
    %v8415 = vunpack.c.l.b16 %v7263
    %v8416 = vunpack.c.h.b16 %v7263
    %v8417 = vunpack.c.l.b16 %v7264
    %v8418 = vunpack.c.h.b16 %v7264
    %v8419 = vunpack.c.l.b16 %v7265
    %v8420 = vunpack.c.h.b16 %v7265
    %v8421 = vunpack.c.l.b16 %v7266
    %v8422 = vunpack.c.h.b16 %v7266
    %v8423 = vunpack.c.l.b16 %v7267
    %v8424 = vunpack.c.h.b16 %v7267
    %v8425 = vunpack.c.l.b16 %v7268
    %v8426 = vunpack.c.h.b16 %v7268
    %v8427 = vunpack.c.l.b16 %v7269
    %v8428 = vunpack.c.h.b16 %v7269
    %v8429 = vunpack.c.l.b16 %v7270
    %v8430 = vunpack.c.h.b16 %v7270
    %v8431 = vunpack.c.l.b16 %v7271
    %v8432 = vunpack.c.h.b16 %v7271
    %v8433 = vunpack.c.l.b16 %v7272
    %v8434 = vunpack.c.h.b16 %v7272
    %v8435 = vunpack.c.l.b16 %v7273
    %v8436 = vunpack.c.h.b16 %v7273
    %v8437 = vunpack.c.l.b16 %v7274
    %v8438 = vunpack.c.h.b16 %v7274
    %v8439 = vunpack.c.l.b16 %v7275
    %v8440 = vunpack.c.h.b16 %v7275
    %v8441 = vunpack.c.l.b16 %v7276
    %v8442 = vunpack.c.h.b16 %v7276
    %v8443 = vunpack.c.l.b16 %v7277
    %v8444 = vunpack.c.h.b16 %v7277
    %v8445 = vunpack.c.l.b16 %v7278
    %v8446 = vunpack.c.h.b16 %v7278
    %v8447 = vunpack.c.l.b16 %v7279
    %v8448 = vunpack.c.h.b16 %v7279
    %v8449 = vunpack.c.l.b16 %v7280
    %v8450 = vunpack.c.h.b16 %v7280
    %v8451 = vunpack.c.l.b16 %v7281
    %v8452 = vunpack.c.h.b16 %v7281
    %v8453 = vunpack.c.l.b16 %v7282
    %v8454 = vunpack.c.h.b16 %v7282
    %v8455 = vunpack.c.l.b16 %v7283
    %v8456 = vunpack.c.h.b16 %v7283
    %v8457 = vunpack.c.l.b16 %v7284
    %v8458 = vunpack.c.h.b16 %v7284
    %v8459 = vunpack.c.l.b16 %v7285
    %v8460 = vunpack.c.h.b16 %v7285
    %v8461 = vunpack.c.l.b16 %v7286
    %v8462 = vunpack.c.h.b16 %v7286
    %v8463 = vunpack.c.l.b16 %v7287
    %v8464 = vunpack.c.h.b16 %v7287
    %v8465 = vunpack.c.l.b16 %v7288
    %v8466 = vunpack.c.h.b16 %v7288
    %v8467 = vunpack.c.l.b16 %v7289
    %v8468 = vunpack.c.h.b16 %v7289
    %v8469 = vunpack.c.l.b16 %v7290
    %v8470 = vunpack.c.h.b16 %v7290
    %v8471 = vunpack.c.l.b16 %v7291
    %v8472 = vunpack.c.h.b16 %v7291
    %v8473 = vunpack.c.l.b16 %v7292
    %v8474 = vunpack.c.h.b16 %v7292
    %v8475 = vunpack.c.l.b16 %v7293
    %v8476 = vunpack.c.h.b16 %v7293
    %v8477 = vunpack.c.l.b16 %v7294
    %v8478 = vunpack.c.h.b16 %v7294
    %v8479 = vunpack.c.l.b16 %v7295
    %v8480 = vunpack.c.h.b16 %v7295
    %v8481 = vunpack.c.l.b16 %v7296
    %v8482 = vunpack.c.h.b16 %v7296
    %v8483 = vunpack.c.l.b16 %v7297
    %v8484 = vunpack.c.h.b16 %v7297
    %v8485 = vunpack.c.l.b16 %v7298
    %v8486 = vunpack.c.h.b16 %v7298
    %v8487 = vunpack.c.l.b16 %v7299
    %v8488 = vunpack.c.h.b16 %v7299
    %v8489 = vunpack.c.l.b16 %v7300
    %v8490 = vunpack.c.h.b16 %v7300
    %v8491 = vunpack.c.l.b16 %v7301
    %v8492 = vunpack.c.h.b16 %v7301
    %v8493 = vunpack.c.l.b16 %v7302
    %v8494 = vunpack.c.h.b16 %v7302
    %v8495 = vunpack.c.l.b16 %v7303
    %v8496 = vunpack.c.h.b16 %v7303
    %v8497 = vunpack.c.l.b16 %v7304
    %v8498 = vunpack.c.h.b16 %v7304
    %v8499 = vunpack.c.l.b16 %v7305
    %v8500 = vunpack.c.h.b16 %v7305
    %v8501 = vunpack.c.l.b16 %v7306
    %v8502 = vunpack.c.h.b16 %v7306
    %v8503 = vunpack.c.l.b16 %v7307
    %v8504 = vunpack.c.h.b16 %v7307
    %v8505 = vunpack.c.l.b16 %v7308
    %v8506 = vunpack.c.h.b16 %v7308
    %v8507 = vunpack.c.l.b16 %v7309
    %v8508 = vunpack.c.h.b16 %v7309
    %v8509 = vunpack.c.l.b16 %v7310
    %v8510 = vunpack.c.h.b16 %v7310
    %v8511 = vunpack.c.l.b16 %v7311
    %v8512 = vunpack.c.h.b16 %v7311
    %v8513 = vunpack.c.l.b16 %v7312
    %v8514 = vunpack.c.h.b16 %v7312
    %v8515 = vunpack.c.l.b16 %v7313
    %v8516 = vunpack.c.h.b16 %v7313
    %v8517 = vunpack.c.l.b16 %v7314
    %v8518 = vunpack.c.h.b16 %v7314
    %v8519 = vunpack.c.l.b16 %v7315
    %v8520 = vunpack.c.h.b16 %v7315
    %v8521 = vunpack.c.l.b16 %v7316
    %v8522 = vunpack.c.h.b16 %v7316
    %v8523 = vunpack.c.l.b16 %v7317
    %v8524 = vunpack.c.h.b16 %v7317
    %v8525 = vunpack.c.l.b16 %v7318
    %v8526 = vunpack.c.h.b16 %v7318
    %v8527 = vunpack.c.l.b16 %v7319
    %v8528 = vunpack.c.h.b16 %v7319
    %v8529 = vunpack.c.l.b16 %v7320
    %v8530 = vunpack.c.h.b16 %v7320
    %v8531 = vunpack.c.l.b16 %v7321
    %v8532 = vunpack.c.h.b16 %v7321
    %v8533 = vunpack.c.l.b16 %v7322
    %v8534 = vunpack.c.h.b16 %v7322
    %v8535 = vunpack.c.l.b16 %v7323
    %v8536 = vunpack.c.h.b16 %v7323
    %v8537 = vunpack.c.l.b16 %v7324
    %v8538 = vunpack.c.h.b16 %v7324
    %v8539 = vunpack.c.l.b16 %v7325
    %v8540 = vunpack.c.h.b16 %v7325
    %v8541 = vunpack.c.l.b16 %v7326
    %v8542 = vunpack.c.h.b16 %v7326
    %v8543 = vunpack.c.l.b16 %v7327
    %v8544 = vunpack.c.h.b16 %v7327
    %v8545 = vunpack.c.l.b16 %v7328
    %v8546 = vunpack.c.h.b16 %v7328
    %v8547 = vunpack.c.l.b16 %v7329
    %v8548 = vunpack.c.h.b16 %v7329
    %v8549 = vunpack.c.l.b16 %v7330
    %v8550 = vunpack.c.h.b16 %v7330
    %v8551 = vunpack.c.l.b16 %v7331
    %v8552 = vunpack.c.h.b16 %v7331
    %v8553 = vunpack.c.l.b16 %v7332
    %v8554 = vunpack.c.h.b16 %v7332
    %v8555 = vunpack.c.l.b16 %v7333
    %v8556 = vunpack.c.h.b16 %v7333
    %v8557 = vunpack.c.l.b16 %v7334
    %v8558 = vunpack.c.h.b16 %v7334
    %v8559 = vunpack.c.l.b16 %v7335
    %v8560 = vunpack.c.h.b16 %v7335
    %v8561 = vunpack.c.l.b16 %v7336
    %v8562 = vunpack.c.h.b16 %v7336
    %v8563 = vunpack.c.l.b16 %v7337
    %v8564 = vunpack.c.h.b16 %v7337
    %v8565 = vunpack.c.l.b16 %v7338
    %v8566 = vunpack.c.h.b16 %v7338
    %v8567 = vunpack.c.l.b16 %v7339
    %v8568 = vunpack.c.h.b16 %v7339
    %v8569 = vunpack.c.l.b16 %v7340
    %v8570 = vunpack.c.h.b16 %v7340
    %v8571 = vunpack.c.l.b16 %v7341
    %v8572 = vunpack.c.h.b16 %v7341
    %v8573 = vunpack.c.l.b16 %v7342
    %v8574 = vunpack.c.h.b16 %v7342
    %v8575 = vunpack.c.l.b16 %v7343
    %v8576 = vunpack.c.h.b16 %v7343
    %v8577 = vunpack.c.l.b16 %v7344
    %v8578 = vunpack.c.h.b16 %v7344
    %v8579 = vunpack.c.l.b16 %v7345
    %v8580 = vunpack.c.h.b16 %v7345
    %v8581 = vunpack.c.l.b16 %v7346
    %v8582 = vunpack.c.h.b16 %v7346
    %v8583 = vunpack.c.l.b16 %v7347
    %v8584 = vunpack.c.h.b16 %v7347
    %v8585 = vunpack.c.l.b16 %v7348
    %v8586 = vunpack.c.h.b16 %v7348
    %v8587 = vunpack.c.l.b16 %v7349
    %v8588 = vunpack.c.h.b16 %v7349
    %v8589 = vunpack.c.l.b16 %v7350
    %v8590 = vunpack.c.h.b16 %v7350
    %v8591 = vunpack.c.l.b16 %v7351
    %v8592 = vunpack.c.h.b16 %v7351
    %v8593 = vunpack.c.l.b16 %v7352
    %v8594 = vunpack.c.h.b16 %v7352
    %v8595 = vunpack.c.l.b16 %v7353
    %v8596 = vunpack.c.h.b16 %v7353
    %v8597 = vunpack.c.l.b16 %v7354
    %v8598 = vunpack.c.h.b16 %v7354
    %v8599 = vunpack.c.l.b16 %v7355
    %v8600 = vunpack.c.h.b16 %v7355
    %v8601 = vunpack.c.l.b16 %v7356
    %v8602 = vunpack.c.h.b16 %v7356
    %v8603 = vunpack.c.l.b16 %v7357
    %v8604 = vunpack.c.h.b16 %v7357
    %v8605 = vunpack.c.l.b16 %v7358
    %v8606 = vunpack.c.h.b16 %v7358
    %v8607 = vunpack.c.l.b16 %v7359
    %v8608 = vunpack.c.h.b16 %v7359
    %v8609 = vunpack.c.l.b16 %v7360
    %v8610 = vunpack.c.h.b16 %v7360
    %v8611 = vunpack.c.l.b16 %v7361
    %v8612 = vunpack.c.h.b16 %v7361
    %v8613 = vunpack.c.l.b16 %v7362
    %v8614 = vunpack.c.h.b16 %v7362
    %v8615 = vunpack.c.l.b16 %v7363
    %v8616 = vunpack.c.h.b16 %v7363
    %v8617 = vunpack.c.l.b16 %v7364
    %v8618 = vunpack.c.h.b16 %v7364
    %v8619 = vunpack.c.l.b16 %v7365
    %v8620 = vunpack.c.h.b16 %v7365
    %v8621 = vunpack.c.l.b16 %v7366
    %v8622 = vunpack.c.h.b16 %v7366
    %v8623 = vunpack.c.l.b16 %v7367
    %v8624 = vunpack.c.h.b16 %v7367
    %v8625 = vunpack.c.l.b16 %v7368
    %v8626 = vunpack.c.h.b16 %v7368
    %v8627 = vunpack.c.l.b16 %v7369
    %v8628 = vunpack.c.h.b16 %v7369
    %v8629 = vunpack.c.l.b16 %v7370
    %v8630 = vunpack.c.h.b16 %v7370
    %v8631 = vunpack.c.l.b16 %v7371
    %v8632 = vunpack.c.h.b16 %v7371
    %v8633 = vunpack.c.l.b16 %v7372
    %v8634 = vunpack.c.h.b16 %v7372
    %v8635 = vunpack.c.l.b16 %v7373
    %v8636 = vunpack.c.h.b16 %v7373
    %v8637 = vunpack.c.l.b16 %v7374
    %v8638 = vunpack.c.h.b16 %v7374
    %v8639 = vunpack.c.l.b16 %v7375
    %v8640 = vunpack.c.h.b16 %v7375
    %v8641 = vunpack.c.l.b16 %v7376
    %v8642 = vunpack.c.h.b16 %v7376
    %v8643 = vunpack.c.l.b16 %v7377
    %v8644 = vunpack.c.h.b16 %v7377
    %v8645 = vunpack.c.l.b16 %v7378
    %v8646 = vunpack.c.h.b16 %v7378
    %v8647 = vunpack.c.l.b16 %v7379
    %v8648 = vunpack.c.h.b16 %v7379
    %v8649 = vunpack.c.l.b16 %v7380
    %v8650 = vunpack.c.h.b16 %v7380
    %v8651 = vunpack.c.l.b16 %v7381
    %v8652 = vunpack.c.h.b16 %v7381
    %v8653 = vunpack.c.l.b16 %v7382
    %v8654 = vunpack.c.h.b16 %v7382
    %v8655 = vunpack.c.l.b16 %v7383
    %v8656 = vunpack.c.h.b16 %v7383
    %v8657 = vunpack.c.l.b16 %v7384
    %v8658 = vunpack.c.h.b16 %v7384
    %v8659 = vunpack.c.l.b16 %v7385
    %v8660 = vunpack.c.h.b16 %v7385
    %v8661 = vunpack.c.l.b16 %v7386
    %v8662 = vunpack.c.h.b16 %v7386
    %v8663 = vunpack.c.l.b16 %v7387
    %v8664 = vunpack.c.h.b16 %v7387
    %v8665 = vunpack.c.l.b16 %v7388
    %v8666 = vunpack.c.h.b16 %v7388
    %v8667 = vunpack.c.l.b16 %v7389
    %v8668 = vunpack.c.h.b16 %v7389
    %v8669 = vunpack.c.l.b16 %v7390
    %v8670 = vunpack.c.h.b16 %v7390
    %v8671 = vunpack.c.l.b16 %v7391
    %v8672 = vunpack.c.h.b16 %v7391
    %v8673 = vunpack.c.l.b16 %v7392
    %v8674 = vunpack.c.h.b16 %v7392
    %v8675 = vunpack.c.l.b16 %v7393
    %v8676 = vunpack.c.h.b16 %v7393
    %v8677 = vunpack.c.l.b16 %v7394
    %v8678 = vunpack.c.h.b16 %v7394
    %v8679 = vunpack.c.l.b16 %v7395
    %v8680 = vunpack.c.h.b16 %v7395
    %v8681 = vunpack.c.l.b16 %v7396
    %v8682 = vunpack.c.h.b16 %v7396
    %v8683 = vunpack.c.l.b16 %v7397
    %v8684 = vunpack.c.h.b16 %v7397
    %v8685 = vunpack.c.l.b16 %v7398
    %v8686 = vunpack.c.h.b16 %v7398
    %v8687 = vunpack.c.l.b16 %v7399
    %v8688 = vunpack.c.h.b16 %v7399
    %v8689 = vunpack.c.l.b16 %v7400
    %v8690 = vunpack.c.h.b16 %v7400
    %v8691 = vunpack.c.l.b16 %v7401
    %v8692 = vunpack.c.h.b16 %v7401
    %v8693 = vunpack.c.l.b16 %v7402
    %v8694 = vunpack.c.h.b16 %v7402
    %v8695 = vunpack.c.l.b16 %v7403
    %v8696 = vunpack.c.h.b16 %v7403
    %v8697 = vunpack.c.l.b16 %v7404
    %v8698 = vunpack.c.h.b16 %v7404
    %v8699 = vunpack.c.l.b16 %v7405
    %v8700 = vunpack.c.h.b16 %v7405
    %v8701 = vunpack.c.l.b16 %v7406
    %v8702 = vunpack.c.h.b16 %v7406
    %v8703 = vunpack.c.l.b16 %v7407
    %v8704 = vunpack.c.h.b16 %v7407
    %v8705 = vunpack.c.l.b16 %v7408
    %v8706 = vunpack.c.h.b16 %v7408
    %v8707 = vunpack.c.l.b16 %v7409
    %v8708 = vunpack.c.h.b16 %v7409
    %v8709 = vunpack.c.l.b16 %v7410
    %v8710 = vunpack.c.h.b16 %v7410
    %v8711 = vunpack.c.l.b16 %v7411
    %v8712 = vunpack.c.h.b16 %v7411
    %v8713 = vunpack.c.l.b16 %v7412
    %v8714 = vunpack.c.h.b16 %v7412
    %v8715 = vunpack.c.l.b16 %v7413
    %v8716 = vunpack.c.h.b16 %v7413
    %v8717 = vunpack.c.l.b16 %v7414
    %v8718 = vunpack.c.h.b16 %v7414
    %v8719 = vunpack.c.l.b16 %v7415
    %v8720 = vunpack.c.h.b16 %v7415
    %v8721 = vunpack.c.l.b16 %v7416
    %v8722 = vunpack.c.h.b16 %v7416
    %v8723 = vunpack.c.l.b16 %v7417
    %v8724 = vunpack.c.h.b16 %v7417
    %v8725 = vunpack.c.l.b16 %v7418
    %v8726 = vunpack.c.h.b16 %v7418
    %v8727 = vunpack.c.l.b16 %v7419
    %v8728 = vunpack.c.h.b16 %v7419
    %v8729 = vunpack.c.l.b16 %v7420
    %v8730 = vunpack.c.h.b16 %v7420
    %v8731 = vunpack.c.l.b16 %v7421
    %v8732 = vunpack.c.h.b16 %v7421
    %v8733 = vunpack.c.l.b16 %v7422
    %v8734 = vunpack.c.h.b16 %v7422
    %v8735 = vunpack.c.l.b16 %v7423
    %v8736 = vunpack.c.h.b16 %v7423
    %v8737 = vunpack.c.l.b16 %v7424
    %v8738 = vunpack.c.h.b16 %v7424
    %v8739 = vunpack.c.l.b16 %v7425
    %v8740 = vunpack.c.h.b16 %v7425
    %v8741 = vunpack.c.l.b16 %v7426
    %v8742 = vunpack.c.h.b16 %v7426
    %v8743 = vunpack.c.l.b16 %v7427
    %v8744 = vunpack.c.h.b16 %v7427
    %v8745 = vunpack.c.l.b16 %v7428
    %v8746 = vunpack.c.h.b16 %v7428
    %v8747 = vunpack.c.l.b16 %v7429
    %v8748 = vunpack.c.h.b16 %v7429
    %v8749 = vunpack.c.l.b16 %v7430
    %v8750 = vunpack.c.h.b16 %v7430
    %v8751 = vunpack.c.l.b16 %v7431
    %v8752 = vunpack.c.h.b16 %v7431
    %v8753 = vunpack.c.l.b16 %v7432
    %v8754 = vunpack.c.h.b16 %v7432
    %v8755 = vunpack.c.l.b16 %v7433
    %v8756 = vunpack.c.h.b16 %v7433
    %v8757 = vunpack.c.l.b16 %v7434
    %v8758 = vunpack.c.h.b16 %v7434
    %v8759 = vunpack.c.l.b16 %v7435
    %v8760 = vunpack.c.h.b16 %v7435
    %v8761 = vunpack.c.l.b16 %v7436
    %v8762 = vunpack.c.h.b16 %v7436
    %v8763 = vunpack.c.l.b16 %v7437
    %v8764 = vunpack.c.h.b16 %v7437
    %v8765 = vunpack.c.l.b16 %v7438
    %v8766 = vunpack.c.h.b16 %v7438
    %v8767 = vunpack.c.l.b16 %v7439
    %v8768 = vunpack.c.h.b16 %v7439
    %v8769 = vunpack.c.l.b16 %v7440
    %v8770 = vunpack.c.h.b16 %v7440
    %v8771 = vunpack.c.l.b16 %v7441
    %v8772 = vunpack.c.h.b16 %v7441
    %v8773 = vunpack.c.l.b16 %v7442
    %v8774 = vunpack.c.h.b16 %v7442
    %v8775 = vunpack.c.l.b16 %v7443
    %v8776 = vunpack.c.h.b16 %v7443
    %v8777 = vunpack.c.l.b16 %v7444
    %v8778 = vunpack.c.h.b16 %v7444
    %v8779 = vunpack.c.l.b16 %v7445
    %v8780 = vunpack.c.h.b16 %v7445
    %v8781 = vunpack.c.l.b16 %v7446
    %v8782 = vunpack.c.h.b16 %v7446
    %v8783 = vunpack.c.l.b16 %v7447
    %v8784 = vunpack.c.h.b16 %v7447
    %v8785 = vunpack.c.l.b16 %v7448
    %v8786 = vunpack.c.h.b16 %v7448
    %v8787 = vunpack.c.l.b16 %v7449
    %v8788 = vunpack.c.h.b16 %v7449
    %v8789 = vunpack.c.l.b16 %v7450
    %v8790 = vunpack.c.h.b16 %v7450
    %v8791 = vunpack.c.l.b16 %v7451
    %v8792 = vunpack.c.h.b16 %v7451
    %v8793 = vunpack.c.l.b16 %v7452
    %v8794 = vunpack.c.h.b16 %v7452
    %v8795 = vunpack.c.l.b16 %v7453
    %v8796 = vunpack.c.h.b16 %v7453
    %v8797 = vunpack.c.l.b16 %v7454
    %v8798 = vunpack.c.h.b16 %v7454
    %v8799 = vunpack.c.l.b16 %v7455
    %v8800 = vunpack.c.h.b16 %v7455
    %v8801 = vunpack.c.l.b16 %v7456
    %v8802 = vunpack.c.h.b16 %v7456
    %v8803 = vunpack.c.l.b16 %v7457
    %v8804 = vunpack.c.h.b16 %v7457
    %v8805 = vunpack.c.l.b16 %v7458
    %v8806 = vunpack.c.h.b16 %v7458
    %v8807 = vunpack.c.l.b16 %v7459
    %v8808 = vunpack.c.h.b16 %v7459
    %v8809 = vunpack.c.l.b16 %v7460
    %v8810 = vunpack.c.h.b16 %v7460
    %v8811 = vunpack.c.l.b16 %v7461
    %v8812 = vunpack.c.h.b16 %v7461
    %v8813 = vunpack.c.l.b16 %v7462
    %v8814 = vunpack.c.h.b16 %v7462
    %v8815 = vunpack.c.l.b16 %v7463
    %v8816 = vunpack.c.h.b16 %v7463
    %v8817 = vunpack.c.l.b16 %v7464
    %v8818 = vunpack.c.h.b16 %v7464
    %v8819 = vunpack.c.l.b16 %v7465
    %v8820 = vunpack.c.h.b16 %v7465
    %v8821 = vunpack.c.l.b16 %v7466
    %v8822 = vunpack.c.h.b16 %v7466
    %v8823 = vunpack.c.l.b16 %v7467
    %v8824 = vunpack.c.h.b16 %v7467
    %v8825 = vunpack.c.l.b16 %v7468
    %v8826 = vunpack.c.h.b16 %v7468
    %v8827 = vunpack.c.l.b16 %v7469
    %v8828 = vunpack.c.h.b16 %v7469
    %v8829 = vunpack.c.l.b16 %v7470
    %v8830 = vunpack.c.h.b16 %v7470
    %v8831 = vunpack.c.l.b16 %v7471
    %v8832 = vunpack.c.h.b16 %v7471
    %v8833 = vunpack.c.l.b16 %v7472
    %v8834 = vunpack.c.h.b16 %v7472
    %v8835 = vunpack.c.l.b16 %v7473
    %v8836 = vunpack.c.h.b16 %v7473
    %v8837 = vunpack.c.l.b16 %v7474
    %v8838 = vunpack.c.h.b16 %v7474
    %v8839 = vunpack.c.l.b16 %v7475
    %v8840 = vunpack.c.h.b16 %v7475
    %v8841 = vunpack.c.l.b16 %v7476
    %v8842 = vunpack.c.h.b16 %v7476
    %v8843 = vunpack.c.l.b16 %v7477
    %v8844 = vunpack.c.h.b16 %v7477
    %v8845 = vunpack.c.l.b16 %v7478
    %v8846 = vunpack.c.h.b16 %v7478
    %v8847 = vunpack.c.l.b16 %v7479
    %v8848 = vunpack.c.h.b16 %v7479
    %v8849 = vunpack.c.l.b16 %v7480
    %v8850 = vunpack.c.h.b16 %v7480
    %v8851 = vunpack.c.l.b16 %v7481
    %v8852 = vunpack.c.h.b16 %v7481
    %v8853 = vunpack.c.l.b16 %v7482
    %v8854 = vunpack.c.h.b16 %v7482
    %v8855 = vunpack.c.l.b16 %v7483
    %v8856 = vunpack.c.h.b16 %v7483
    %v8857 = vunpack.c.l.b16 %v7484
    %v8858 = vunpack.c.h.b16 %v7484
    %v8859 = vunpack.c.l.b16 %v7485
    %v8860 = vunpack.c.h.b16 %v7485
    %v8861 = vunpack.c.l.b16 %v7486
    %v8862 = vunpack.c.h.b16 %v7486
    %v8863 = vunpack.c.l.b16 %v7487
    %v8864 = vunpack.c.h.b16 %v7487
    %v8865 = vunpack.c.l.b16 %v7488
    %v8866 = vunpack.c.h.b16 %v7488
    %v8867 = vunpack.c.l.b16 %v7489
    %v8868 = vunpack.c.h.b16 %v7489
    %v8869 = vunpack.c.l.b16 %v7490
    %v8870 = vunpack.c.h.b16 %v7490
    %v8871 = vunpack.c.l.b16 %v7491
    %v8872 = vunpack.c.h.b16 %v7491
    %v8873 = vunpack.c.l.b16 %v7492
    %v8874 = vunpack.c.h.b16 %v7492
    %v8875 = vunpack.c.l.b16 %v7493
    %v8876 = vunpack.c.h.b16 %v7493
    %v8877 = vunpack.c.l.b16 %v7494
    %v8878 = vunpack.c.h.b16 %v7494
    %v8879 = vunpack.c.l.b16 %v7495
    %v8880 = vunpack.c.h.b16 %v7495
    %v8881 = vunpack.c.l.b16 %v7496
    %v8882 = vunpack.c.h.b16 %v7496
    %v8883 = vunpack.c.l.b16 %v7497
    %v8884 = vunpack.c.h.b16 %v7497
    %v8885 = vunpack.c.l.b16 %v7498
    %v8886 = vunpack.c.h.b16 %v7498
    %v8887 = vunpack.c.l.b16 %v7499
    %v8888 = vunpack.c.h.b16 %v7499
    %v8889 = vunpack.c.l.b16 %v7500
    %v8890 = vunpack.c.h.b16 %v7500
    %v8891 = vunpack.c.l.b16 %v7501
    %v8892 = vunpack.c.h.b16 %v7501
    %v8893 = vunpack.c.l.b16 %v7502
    %v8894 = vunpack.c.h.b16 %v7502
    %v8895 = vunpack.c.l.b16 %v7503
    %v8896 = vunpack.c.h.b16 %v7503
    %v8897 = vunpack.c.l.b16 %v7504
    %v8898 = vunpack.c.h.b16 %v7504
    %v8899 = vunpack.c.l.b16 %v7505
    %v8900 = vunpack.c.h.b16 %v7505
    %v8901 = vunpack.c.l.b16 %v7506
    %v8902 = vunpack.c.h.b16 %v7506
    %v8903 = vunpack.c.l.b16 %v7507
    %v8904 = vunpack.c.h.b16 %v7507
    %v8905 = vunpack.c.l.b16 %v7508
    %v8906 = vunpack.c.h.b16 %v7508
    %v8907 = vunpack.c.l.b16 %v7509
    %v8908 = vunpack.c.h.b16 %v7509
    %v8909 = vunpack.c.l.b16 %v7510
    %v8910 = vunpack.c.h.b16 %v7510
    %v8911 = vunpack.c.l.b16 %v7511
    %v8912 = vunpack.c.h.b16 %v7511
    %v8913 = vunpack.c.l.b16 %v7512
    %v8914 = vunpack.c.h.b16 %v7512
    %v8915 = vunpack.c.l.b16 %v7513
    %v8916 = vunpack.c.h.b16 %v7513
    %v8917 = vunpack.c.l.b16 %v7514
    %v8918 = vunpack.c.h.b16 %v7514
    %v8919 = vunpack.c.l.b16 %v7515
    %v8920 = vunpack.c.h.b16 %v7515
    %v8921 = vunpack.c.l.b16 %v7516
    %v8922 = vunpack.c.h.b16 %v7516
    %v8923 = vunpack.c.l.b16 %v7517
    %v8924 = vunpack.c.h.b16 %v7517
    %v8925 = vunpack.c.l.b16 %v7518
    %v8926 = vunpack.c.h.b16 %v7518
    %v8927 = vunpack.c.l.b16 %v7519
    %v8928 = vunpack.c.h.b16 %v7519
    %v8929 = vunpack.c.l.b16 %v7520
    %v8930 = vunpack.c.h.b16 %v7520
    %v8931 = vunpack.c.l.b16 %v7521
    %v8932 = vunpack.c.h.b16 %v7521
    %v8933 = vunpack.c.l.b16 %v7522
    %v8934 = vunpack.c.h.b16 %v7522
    %v8935 = vunpack.c.l.b16 %v7523
    %v8936 = vunpack.c.h.b16 %v7523
    %v8937 = vunpack.c.l.b16 %v7524
    %v8938 = vunpack.c.h.b16 %v7524
    %v8939 = vunpack.c.l.b16 %v7525
    %v8940 = vunpack.c.h.b16 %v7525
    %v8941 = vunpack.c.l.b16 %v7526
    %v8942 = vunpack.c.h.b16 %v7526
    %v8943 = vunpack.c.l.b16 %v7527
    %v8944 = vunpack.c.h.b16 %v7527
    %v8945 = vunpack.c.l.b16 %v7528
    %v8946 = vunpack.c.h.b16 %v7528
    %v8947 = vunpack.c.l.b16 %v7529
    %v8948 = vunpack.c.h.b16 %v7529
    %v8949 = vunpack.c.l.b16 %v7530
    %v8950 = vunpack.c.h.b16 %v7530
    %v8951 = vunpack.c.l.b16 %v7531
    %v8952 = vunpack.c.h.b16 %v7531
    %v8953 = vunpack.c.l.b16 %v7532
    %v8954 = vunpack.c.h.b16 %v7532
    %v8955 = vunpack.c.l.b16 %v7533
    %v8956 = vunpack.c.h.b16 %v7533
    %v8957 = vunpack.c.l.b16 %v7534
    %v8958 = vunpack.c.h.b16 %v7534
    %v8959 = vunpack.c.l.b16 %v7535
    %v8960 = vunpack.c.h.b16 %v7535
    %v8961 = vunpack.c.l.b16 %v7536
    %v8962 = vunpack.c.h.b16 %v7536
    %v8963 = vunpack.c.l.b16 %v7537
    %v8964 = vunpack.c.h.b16 %v7537
    %v8965 = vunpack.c.l.b16 %v7538
    %v8966 = vunpack.c.h.b16 %v7538
    %v8967 = vunpack.c.l.b16 %v7539
    %v8968 = vunpack.c.h.b16 %v7539
    %v8969 = vunpack.c.l.b16 %v7540
    %v8970 = vunpack.c.h.b16 %v7540
    %v8971 = vunpack.c.l.b16 %v7541
    %v8972 = vunpack.c.h.b16 %v7541
    %v8973 = vunpack.c.l.b16 %v7542
    %v8974 = vunpack.c.h.b16 %v7542
    %v8975 = vunpack.c.l.b16 %v7543
    %v8976 = vunpack.c.h.b16 %v7543
    %v8977 = vunpack.c.l.b16 %v7544
    %v8978 = vunpack.c.h.b16 %v7544
    %v8979 = vunpack.c.l.b16 %v7545
    %v8980 = vunpack.c.h.b16 %v7545
    %v8981 = vunpack.c.l.b16 %v7546
    %v8982 = vunpack.c.h.b16 %v7546
    %v8983 = vunpack.c.l.b16 %v7547
    %v8984 = vunpack.c.h.b16 %v7547
    %v8985 = vunpack.c.l.b16 %v7548
    %v8986 = vunpack.c.h.b16 %v7548
    %v8987 = vunpack.c.l.b16 %v7549
    %v8988 = vunpack.c.h.b16 %v7549
    %v8989 = vunpack.c.l.b16 %v7550
    %v8990 = vunpack.c.h.b16 %v7550
    %v8991 = vunpack.c.l.b16 %v7551
    %v8992 = vunpack.c.h.b16 %v7551
    %v8993 = vunpack.c.l.b16 %v7552
    %v8994 = vunpack.c.h.b16 %v7552
    %v8995 = vunpack.c.l.b16 %v7553
    %v8996 = vunpack.c.h.b16 %v7553
    %v8997 = vunpack.c.l.b16 %v7554
    %v8998 = vunpack.c.h.b16 %v7554
    %v8999 = vunpack.c.l.b16 %v7555
    %v9000 = vunpack.c.h.b16 %v7555
    %v9001 = vunpack.c.l.b16 %v7556
    %v9002 = vunpack.c.h.b16 %v7556
    %v9003 = vunpack.c.l.b16 %v7557
    %v9004 = vunpack.c.h.b16 %v7557
    %v9005 = vunpack.c.l.b16 %v7558
    %v9006 = vunpack.c.h.b16 %v7558
    %v9007 = vunpack.c.l.b16 %v7559
    %v9008 = vunpack.c.h.b16 %v7559
    %v9009 = vunpack.c.l.b16 %v7560
    %v9010 = vunpack.c.h.b16 %v7560
    %v9011 = vunpack.c.l.b16 %v7561
    %v9012 = vunpack.c.h.b16 %v7561
    %v9013 = vunpack.c.l.b16 %v7562
    %v9014 = vunpack.c.h.b16 %v7562
    %v9015 = vunpack.c.l.b16 %v7563
    %v9016 = vunpack.c.h.b16 %v7563
    %v9017 = vunpack.c.l.b16 %v7564
    %v9018 = vunpack.c.h.b16 %v7564
    %v9019 = vunpack.c.l.b16 %v7565
    %v9020 = vunpack.c.h.b16 %v7565
    %v9021 = vunpack.c.l.b16 %v7566
    %v9022 = vunpack.c.h.b16 %v7566
    %v9023 = vunpack.c.l.b16 %v7567
    %v9024 = vunpack.c.h.b16 %v7567
    %v9025 = vunpack.c.l.b16 %v7568
    %v9026 = vunpack.c.h.b16 %v7568
    %v9027 = vunpack.c.l.b16 %v7569
    %v9028 = vunpack.c.h.b16 %v7569
    %v9029 = vunpack.c.l.b16 %v7570
    %v9030 = vunpack.c.h.b16 %v7570
    %v9031 = vunpack.c.l.b16 %v7571
    %v9032 = vunpack.c.h.b16 %v7571
    %v9033 = vunpack.c.l.b16 %v7572
    %v9034 = vunpack.c.h.b16 %v7572
    %v9035 = vunpack.c.l.b16 %v7573
    %v9036 = vunpack.c.h.b16 %v7573
    %v9037 = vunpack.c.l.b16 %v7574
    %v9038 = vunpack.c.h.b16 %v7574
    %v9039 = vunpack.c.l.b16 %v7575
    %v9040 = vunpack.c.h.b16 %v7575
    %v9041 = vunpack.c.l.b16 %v7576
    %v9042 = vunpack.c.h.b16 %v7576
    %v9043 = vunpack.c.l.b16 %v7577
    %v9044 = vunpack.c.h.b16 %v7577
    %v9045 = vunpack.c.l.b16 %v7578
    %v9046 = vunpack.c.h.b16 %v7578
    %v9047 = vunpack.c.l.b16 %v7579
    %v9048 = vunpack.c.h.b16 %v7579
    %v9049 = vunpack.c.l.b16 %v7580
    %v9050 = vunpack.c.h.b16 %v7580
    %v9051 = vunpack.c.l.b16 %v7581
    %v9052 = vunpack.c.h.b16 %v7581
    %v9053 = vunpack.c.l.b16 %v7582
    %v9054 = vunpack.c.h.b16 %v7582
    %v9055 = vunpack.c.l.b16 %v7583
    %v9056 = vunpack.c.h.b16 %v7583
    %v9057 = vunpack.c.l.b16 %v7584
    %v9058 = vunpack.c.h.b16 %v7584
    %v9059 = vunpack.c.l.b16 %v7585
    %v9060 = vunpack.c.h.b16 %v7585
    %v9061 = vunpack.c.l.b16 %v7586
    %v9062 = vunpack.c.h.b16 %v7586
    %v9063 = vunpack.c.l.b16 %v7587
    %v9064 = vunpack.c.h.b16 %v7587
    %v9065 = vunpack.c.l.b16 %v7588
    %v9066 = vunpack.c.h.b16 %v7588
    %v9067 = vunpack.c.l.b16 %v7589
    %v9068 = vunpack.c.h.b16 %v7589
    %v9069 = vunpack.c.l.b16 %v7590
    %v9070 = vunpack.c.h.b16 %v7590
    %v9071 = vunpack.c.l.b16 %v7591
    %v9072 = vunpack.c.h.b16 %v7591
    %v9073 = vunpack.c.l.b16 %v7592
    %v9074 = vunpack.c.h.b16 %v7592
    %v9075 = vunpack.c.l.b16 %v7593
    %v9076 = vunpack.c.h.b16 %v7593
    %v9077 = vunpack.c.l.b16 %v7594
    %v9078 = vunpack.c.h.b16 %v7594
    %v9079 = vunpack.c.l.b16 %v7595
    %v9080 = vunpack.c.h.b16 %v7595
    %v9081 = vunpack.c.l.b16 %v7596
    %v9082 = vunpack.c.h.b16 %v7596
    %v9083 = vunpack.c.l.b16 %v7597
    %v9084 = vunpack.c.h.b16 %v7597
    %v9085 = vunpack.c.l.b16 %v7598
    %v9086 = vunpack.c.h.b16 %v7598
    %v9087 = vunpack.c.l.b16 %v7599
    %v9088 = vunpack.c.h.b16 %v7599
    %v9089 = vunpack.c.l.b16 %v7600
    %v9090 = vunpack.c.h.b16 %v7600
    %v9091 = vunpack.c.l.b16 %v7601
    %v9092 = vunpack.c.h.b16 %v7601
    %v9093 = vunpack.c.l.b16 %v7602
    %v9094 = vunpack.c.h.b16 %v7602
    %v9095 = vunpack.c.l.b16 %v7603
    %v9096 = vunpack.c.h.b16 %v7603
    %v9097 = vunpack.c.l.b16 %v7604
    %v9098 = vunpack.c.h.b16 %v7604
    %v9099 = vunpack.c.l.b16 %v7605
    %v9100 = vunpack.c.h.b16 %v7605
    %v9101 = vunpack.c.l.b16 %v7606
    %v9102 = vunpack.c.h.b16 %v7606
    %v9103 = vunpack.c.l.b16 %v7607
    %v9104 = vunpack.c.h.b16 %v7607
    %v9105 = vunpack.c.l.b16 %v7608
    %v9106 = vunpack.c.h.b16 %v7608
    %v9107 = vunpack.c.l.b16 %v7609
    %v9108 = vunpack.c.h.b16 %v7609
    %v9109 = vunpack.c.l.b16 %v7610
    %v9110 = vunpack.c.h.b16 %v7610
    %v9111 = vunpack.c.l.b16 %v7611
    %v9112 = vunpack.c.h.b16 %v7611
    %v9113 = vunpack.c.l.b16 %v7612
    %v9114 = vunpack.c.h.b16 %v7612
    %v9115 = vunpack.c.l.b16 %v7613
    %v9116 = vunpack.c.h.b16 %v7613
    %v9117 = vunpack.c.l.b16 %v7614
    %v9118 = vunpack.c.h.b16 %v7614
    %v9119 = vunpack.c.l.b16 %v7615
    %v9120 = vunpack.c.h.b16 %v7615
    %v9121 = vunpack.c.l.b16 %v7616
    %v9122 = vunpack.c.h.b16 %v7616
    %v9123 = vunpack.c.l.b16 %v7617
    %v9124 = vunpack.c.h.b16 %v7617
    %v9125 = vunpack.c.l.b16 %v7618
    %v9126 = vunpack.c.h.b16 %v7618
    %v9127 = vunpack.c.l.b16 %v7619
    %v9128 = vunpack.c.h.b16 %v7619
    %v9129 = vunpack.c.l.b16 %v7620
    %v9130 = vunpack.c.h.b16 %v7620
    %v9131 = vunpack.c.l.b16 %v7621
    %v9132 = vunpack.c.h.b16 %v7621
    %v9133 = vunpack.c.l.b16 %v7622
    %v9134 = vunpack.c.h.b16 %v7622
    %v9135 = vunpack.c.l.b16 %v7623
    %v9136 = vunpack.c.h.b16 %v7623
    %v9137 = vunpack.c.l.b16 %v7624
    %v9138 = vunpack.c.h.b16 %v7624
    %v9139 = vunpack.c.l.b16 %v7625
    %v9140 = vunpack.c.h.b16 %v7625
    %v9141 = vunpack.c.l.b16 %v7626
    %v9142 = vunpack.c.h.b16 %v7626
    %v9143 = vunpack.c.l.b16 %v7627
    %v9144 = vunpack.c.h.b16 %v7627
    %v9145 = vunpack.c.l.b16 %v7628
    %v9146 = vunpack.c.h.b16 %v7628
    %v9147 = vunpack.c.l.b16 %v7629
    %v9148 = vunpack.c.h.b16 %v7629
    %v9149 = vunpack.c.l.b16 %v7630
    %v9150 = vunpack.c.h.b16 %v7630
    %v9151 = vunpack.c.l.b16 %v7631
    %v9152 = vunpack.c.h.b16 %v7631
    %v9153 = vunpack.c.l.b16 %v7632
    %v9154 = vunpack.c.h.b16 %v7632
    %v9155 = vunpack.c.l.b16 %v7633
    %v9156 = vunpack.c.h.b16 %v7633
    %v9157 = vunpack.c.l.b16 %v7634
    %v9158 = vunpack.c.h.b16 %v7634
    %v9159 = vunpack.c.l.b16 %v7635
    %v9160 = vunpack.c.h.b16 %v7635
    %v9161 = vunpack.c.l.b16 %v7636
    %v9162 = vunpack.c.h.b16 %v7636
    %v9163 = vunpack.c.l.b16 %v7637
    %v9164 = vunpack.c.h.b16 %v7637
    %v9165 = vunpack.c.l.b16 %v7638
    %v9166 = vunpack.c.h.b16 %v7638
    %v9167 = vunpack.c.l.b16 %v7639
    %v9168 = vunpack.c.h.b16 %v7639
    %v9169 = vunpack.c.l.b16 %v7640
    %v9170 = vunpack.c.h.b16 %v7640
    %v9171 = vunpack.c.l.b16 %v7641
    %v9172 = vunpack.c.h.b16 %v7641
    %v9173 = vunpack.c.l.b16 %v7642
    %v9174 = vunpack.c.h.b16 %v7642
    %v9175 = vunpack.c.l.b16 %v7643
    %v9176 = vunpack.c.h.b16 %v7643
    %v9177 = vunpack.c.l.b16 %v7644
    %v9178 = vunpack.c.h.b16 %v7644
    %v9179 = vunpack.c.l.b16 %v7645
    %v9180 = vunpack.c.h.b16 %v7645
    %v9181 = vunpack.c.l.b16 %v7646
    %v9182 = vunpack.c.h.b16 %v7646
    %v9183 = vpack.c.b16 %v8163, %v8159
    %v9184 = vpack.c.b16 %v8164, %v8160
    %v9185 = vpack.c.b16 %v8165, %v8161
    %v9186 = vpack.c.b16 %v8166, %v8162
    %v9187 = vpack.c.b16 %v8171, %v8167
    %v9188 = vpack.c.b16 %v8172, %v8168
    %v9189 = vpack.c.b16 %v8173, %v8169
    %v9190 = vpack.c.b16 %v8174, %v8170
    %v9191 = vpack.c.b16 %v8179, %v8175
    %v9192 = vpack.c.b16 %v8180, %v8176
    %v9193 = vpack.c.b16 %v8181, %v8177
    %v9194 = vpack.c.b16 %v8182, %v8178
    %v9195 = vpack.c.b16 %v8187, %v8183
    %v9196 = vpack.c.b16 %v8188, %v8184
    %v9197 = vpack.c.b16 %v8189, %v8185
    %v9198 = vpack.c.b16 %v8190, %v8186
    %v9199 = vpack.c.b16 %v8195, %v8191
    %v9200 = vpack.c.b16 %v8196, %v8192
    %v9201 = vpack.c.b16 %v8197, %v8193
    %v9202 = vpack.c.b16 %v8198, %v8194
    %v9203 = vpack.c.b16 %v8203, %v8199
    %v9204 = vpack.c.b16 %v8204, %v8200
    %v9205 = vpack.c.b16 %v8205, %v8201
    %v9206 = vpack.c.b16 %v8206, %v8202
    %v9207 = vpack.c.b16 %v8211, %v8207
    %v9208 = vpack.c.b16 %v8212, %v8208
    %v9209 = vpack.c.b16 %v8213, %v8209
    %v9210 = vpack.c.b16 %v8214, %v8210
    %v9211 = vpack.c.b16 %v8219, %v8215
    %v9212 = vpack.c.b16 %v8220, %v8216
    %v9213 = vpack.c.b16 %v8221, %v8217
    %v9214 = vpack.c.b16 %v8222, %v8218
    %v9215 = vpack.c.b16 %v8227, %v8223
    %v9216 = vpack.c.b16 %v8228, %v8224
    %v9217 = vpack.c.b16 %v8229, %v8225
    %v9218 = vpack.c.b16 %v8230, %v8226
    %v9219 = vpack.c.b16 %v8235, %v8231
    %v9220 = vpack.c.b16 %v8236, %v8232
    %v9221 = vpack.c.b16 %v8237, %v8233
    %v9222 = vpack.c.b16 %v8238, %v8234
    %v9223 = vpack.c.b16 %v8243, %v8239
    %v9224 = vpack.c.b16 %v8244, %v8240
    %v9225 = vpack.c.b16 %v8245, %v8241
    %v9226 = vpack.c.b16 %v8246, %v8242
    %v9227 = vpack.c.b16 %v8251, %v8247
    %v9228 = vpack.c.b16 %v8252, %v8248
    %v9229 = vpack.c.b16 %v8253, %v8249
    %v9230 = vpack.c.b16 %v8254, %v8250
    %v9231 = vpack.c.b16 %v8259, %v8255
    %v9232 = vpack.c.b16 %v8260, %v8256
    %v9233 = vpack.c.b16 %v8261, %v8257
    %v9234 = vpack.c.b16 %v8262, %v8258
    %v9235 = vpack.c.b16 %v8267, %v8263
    %v9236 = vpack.c.b16 %v8268, %v8264
    %v9237 = vpack.c.b16 %v8269, %v8265
    %v9238 = vpack.c.b16 %v8270, %v8266
    %v9239 = vpack.c.b16 %v8275, %v8271
    %v9240 = vpack.c.b16 %v8276, %v8272
    %v9241 = vpack.c.b16 %v8277, %v8273
    %v9242 = vpack.c.b16 %v8278, %v8274
    %v9243 = vpack.c.b16 %v8283, %v8279
    %v9244 = vpack.c.b16 %v8284, %v8280
    %v9245 = vpack.c.b16 %v8285, %v8281
    %v9246 = vpack.c.b16 %v8286, %v8282
    %v9247 = vpack.c.b16 %v8291, %v8287
    %v9248 = vpack.c.b16 %v8292, %v8288
    %v9249 = vpack.c.b16 %v8293, %v8289
    %v9250 = vpack.c.b16 %v8294, %v8290
    %v9251 = vpack.c.b16 %v8299, %v8295
    %v9252 = vpack.c.b16 %v8300, %v8296
    %v9253 = vpack.c.b16 %v8301, %v8297
    %v9254 = vpack.c.b16 %v8302, %v8298
    %v9255 = vpack.c.b16 %v8307, %v8303
    %v9256 = vpack.c.b16 %v8308, %v8304
    %v9257 = vpack.c.b16 %v8309, %v8305
    %v9258 = vpack.c.b16 %v8310, %v8306
    %v9259 = vpack.c.b16 %v8315, %v8311
    %v9260 = vpack.c.b16 %v8316, %v8312
    %v9261 = vpack.c.b16 %v8317, %v8313
    %v9262 = vpack.c.b16 %v8318, %v8314
    %v9263 = vpack.c.b16 %v8323, %v8319
    %v9264 = vpack.c.b16 %v8324, %v8320
    %v9265 = vpack.c.b16 %v8325, %v8321
    %v9266 = vpack.c.b16 %v8326, %v8322
    %v9267 = vpack.c.b16 %v8331, %v8327
    %v9268 = vpack.c.b16 %v8332, %v8328
    %v9269 = vpack.c.b16 %v8333, %v8329
    %v9270 = vpack.c.b16 %v8334, %v8330
    %v9271 = vpack.c.b16 %v8339, %v8335
    %v9272 = vpack.c.b16 %v8340, %v8336
    %v9273 = vpack.c.b16 %v8341, %v8337
    %v9274 = vpack.c.b16 %v8342, %v8338
    %v9275 = vpack.c.b16 %v8347, %v8343
    %v9276 = vpack.c.b16 %v8348, %v8344
    %v9277 = vpack.c.b16 %v8349, %v8345
    %v9278 = vpack.c.b16 %v8350, %v8346
    %v9279 = vpack.c.b16 %v8355, %v8351
    %v9280 = vpack.c.b16 %v8356, %v8352
    %v9281 = vpack.c.b16 %v8357, %v8353
    %v9282 = vpack.c.b16 %v8358, %v8354
    %v9283 = vpack.c.b16 %v8363, %v8359
    %v9284 = vpack.c.b16 %v8364, %v8360
    %v9285 = vpack.c.b16 %v8365, %v8361
    %v9286 = vpack.c.b16 %v8366, %v8362
    %v9287 = vpack.c.b16 %v8371, %v8367
    %v9288 = vpack.c.b16 %v8372, %v8368
    %v9289 = vpack.c.b16 %v8373, %v8369
    %v9290 = vpack.c.b16 %v8374, %v8370
    %v9291 = vpack.c.b16 %v8379, %v8375
    %v9292 = vpack.c.b16 %v8380, %v8376
    %v9293 = vpack.c.b16 %v8381, %v8377
    %v9294 = vpack.c.b16 %v8382, %v8378
    %v9295 = vpack.c.b16 %v8387, %v8383
    %v9296 = vpack.c.b16 %v8388, %v8384
    %v9297 = vpack.c.b16 %v8389, %v8385
    %v9298 = vpack.c.b16 %v8390, %v8386
    %v9299 = vpack.c.b16 %v8395, %v8391
    %v9300 = vpack.c.b16 %v8396, %v8392
    %v9301 = vpack.c.b16 %v8397, %v8393
    %v9302 = vpack.c.b16 %v8398, %v8394
    %v9303 = vpack.c.b16 %v8403, %v8399
    %v9304 = vpack.c.b16 %v8404, %v8400
    %v9305 = vpack.c.b16 %v8405, %v8401
    %v9306 = vpack.c.b16 %v8406, %v8402
    %v9307 = vpack.c.b16 %v8411, %v8407
    %v9308 = vpack.c.b16 %v8412, %v8408
    %v9309 = vpack.c.b16 %v8413, %v8409
    %v9310 = vpack.c.b16 %v8414, %v8410
    %v9311 = vpack.c.b16 %v8419, %v8415
    %v9312 = vpack.c.b16 %v8420, %v8416
    %v9313 = vpack.c.b16 %v8421, %v8417
    %v9314 = vpack.c.b16 %v8422, %v8418
    %v9315 = vpack.c.b16 %v8427, %v8423
    %v9316 = vpack.c.b16 %v8428, %v8424
    %v9317 = vpack.c.b16 %v8429, %v8425
    %v9318 = vpack.c.b16 %v8430, %v8426
    %v9319 = vpack.c.b16 %v8435, %v8431
    %v9320 = vpack.c.b16 %v8436, %v8432
    %v9321 = vpack.c.b16 %v8437, %v8433
    %v9322 = vpack.c.b16 %v8438, %v8434
    %v9323 = vpack.c.b16 %v8443, %v8439
    %v9324 = vpack.c.b16 %v8444, %v8440
    %v9325 = vpack.c.b16 %v8445, %v8441
    %v9326 = vpack.c.b16 %v8446, %v8442
    %v9327 = vpack.c.b16 %v8451, %v8447
    %v9328 = vpack.c.b16 %v8452, %v8448
    %v9329 = vpack.c.b16 %v8453, %v8449
    %v9330 = vpack.c.b16 %v8454, %v8450
    %v9331 = vpack.c.b16 %v8459, %v8455
    %v9332 = vpack.c.b16 %v8460, %v8456
    %v9333 = vpack.c.b16 %v8461, %v8457
    %v9334 = vpack.c.b16 %v8462, %v8458
    %v9335 = vpack.c.b16 %v8467, %v8463
    %v9336 = vpack.c.b16 %v8468, %v8464
    %v9337 = vpack.c.b16 %v8469, %v8465
    %v9338 = vpack.c.b16 %v8470, %v8466
    %v9339 = vpack.c.b16 %v8475, %v8471
    %v9340 = vpack.c.b16 %v8476, %v8472
    %v9341 = vpack.c.b16 %v8477, %v8473
    %v9342 = vpack.c.b16 %v8478, %v8474
    %v9343 = vpack.c.b16 %v8483, %v8479
    %v9344 = vpack.c.b16 %v8484, %v8480
    %v9345 = vpack.c.b16 %v8485, %v8481
    %v9346 = vpack.c.b16 %v8486, %v8482
    %v9347 = vpack.c.b16 %v8491, %v8487
    %v9348 = vpack.c.b16 %v8492, %v8488
    %v9349 = vpack.c.b16 %v8493, %v8489
    %v9350 = vpack.c.b16 %v8494, %v8490
    %v9351 = vpack.c.b16 %v8499, %v8495
    %v9352 = vpack.c.b16 %v8500, %v8496
    %v9353 = vpack.c.b16 %v8501, %v8497
    %v9354 = vpack.c.b16 %v8502, %v8498
    %v9355 = vpack.c.b16 %v8507, %v8503
    %v9356 = vpack.c.b16 %v8508, %v8504
    %v9357 = vpack.c.b16 %v8509, %v8505
    %v9358 = vpack.c.b16 %v8510, %v8506
    %v9359 = vpack.c.b16 %v8515, %v8511
    %v9360 = vpack.c.b16 %v8516, %v8512
    %v9361 = vpack.c.b16 %v8517, %v8513
    %v9362 = vpack.c.b16 %v8518, %v8514
    %v9363 = vpack.c.b16 %v8523, %v8519
    %v9364 = vpack.c.b16 %v8524, %v8520
    %v9365 = vpack.c.b16 %v8525, %v8521
    %v9366 = vpack.c.b16 %v8526, %v8522
    %v9367 = vpack.c.b16 %v8531, %v8527
    %v9368 = vpack.c.b16 %v8532, %v8528
    %v9369 = vpack.c.b16 %v8533, %v8529
    %v9370 = vpack.c.b16 %v8534, %v8530
    %v9371 = vpack.c.b16 %v8539, %v8535
    %v9372 = vpack.c.b16 %v8540, %v8536
    %v9373 = vpack.c.b16 %v8541, %v8537
    %v9374 = vpack.c.b16 %v8542, %v8538
    %v9375 = vpack.c.b16 %v8547, %v8543
    %v9376 = vpack.c.b16 %v8548, %v8544
    %v9377 = vpack.c.b16 %v8549, %v8545
    %v9378 = vpack.c.b16 %v8550, %v8546
    %v9379 = vpack.c.b16 %v8555, %v8551
    %v9380 = vpack.c.b16 %v8556, %v8552
    %v9381 = vpack.c.b16 %v8557, %v8553
    %v9382 = vpack.c.b16 %v8558, %v8554
    %v9383 = vpack.c.b16 %v8563, %v8559
    %v9384 = vpack.c.b16 %v8564, %v8560
    %v9385 = vpack.c.b16 %v8565, %v8561
    %v9386 = vpack.c.b16 %v8566, %v8562
    %v9387 = vpack.c.b16 %v8571, %v8567
    %v9388 = vpack.c.b16 %v8572, %v8568
    %v9389 = vpack.c.b16 %v8573, %v8569
    %v9390 = vpack.c.b16 %v8574, %v8570
    %v9391 = vpack.c.b16 %v8579, %v8575
    %v9392 = vpack.c.b16 %v8580, %v8576
    %v9393 = vpack.c.b16 %v8581, %v8577
    %v9394 = vpack.c.b16 %v8582, %v8578
    %v9395 = vpack.c.b16 %v8587, %v8583
    %v9396 = vpack.c.b16 %v8588, %v8584
    %v9397 = vpack.c.b16 %v8589, %v8585
    %v9398 = vpack.c.b16 %v8590, %v8586
    %v9399 = vpack.c.b16 %v8595, %v8591
    %v9400 = vpack.c.b16 %v8596, %v8592
    %v9401 = vpack.c.b16 %v8597, %v8593
    %v9402 = vpack.c.b16 %v8598, %v8594
    %v9403 = vpack.c.b16 %v8603, %v8599
    %v9404 = vpack.c.b16 %v8604, %v8600
    %v9405 = vpack.c.b16 %v8605, %v8601
    %v9406 = vpack.c.b16 %v8606, %v8602
    %v9407 = vpack.c.b16 %v8611, %v8607
    %v9408 = vpack.c.b16 %v8612, %v8608
    %v9409 = vpack.c.b16 %v8613, %v8609
    %v9410 = vpack.c.b16 %v8614, %v8610
    %v9411 = vpack.c.b16 %v8619, %v8615
    %v9412 = vpack.c.b16 %v8620, %v8616
    %v9413 = vpack.c.b16 %v8621, %v8617
    %v9414 = vpack.c.b16 %v8622, %v8618
    %v9415 = vpack.c.b16 %v8627, %v8623
    %v9416 = vpack.c.b16 %v8628, %v8624
    %v9417 = vpack.c.b16 %v8629, %v8625
    %v9418 = vpack.c.b16 %v8630, %v8626
    %v9419 = vpack.c.b16 %v8635, %v8631
    %v9420 = vpack.c.b16 %v8636, %v8632
    %v9421 = vpack.c.b16 %v8637, %v8633
    %v9422 = vpack.c.b16 %v8638, %v8634
    %v9423 = vpack.c.b16 %v8643, %v8639
    %v9424 = vpack.c.b16 %v8644, %v8640
    %v9425 = vpack.c.b16 %v8645, %v8641
    %v9426 = vpack.c.b16 %v8646, %v8642
    %v9427 = vpack.c.b16 %v8651, %v8647
    %v9428 = vpack.c.b16 %v8652, %v8648
    %v9429 = vpack.c.b16 %v8653, %v8649
    %v9430 = vpack.c.b16 %v8654, %v8650
    %v9431 = vpack.c.b16 %v8659, %v8655
    %v9432 = vpack.c.b16 %v8660, %v8656
    %v9433 = vpack.c.b16 %v8661, %v8657
    %v9434 = vpack.c.b16 %v8662, %v8658
    %v9435 = vpack.c.b16 %v8667, %v8663
    %v9436 = vpack.c.b16 %v8668, %v8664
    %v9437 = vpack.c.b16 %v8669, %v8665
    %v9438 = vpack.c.b16 %v8670, %v8666
    %v9439 = vpack.c.b16 %v8675, %v8671
    %v9440 = vpack.c.b16 %v8676, %v8672
    %v9441 = vpack.c.b16 %v8677, %v8673
    %v9442 = vpack.c.b16 %v8678, %v8674
    %v9443 = vpack.c.b16 %v8683, %v8679
    %v9444 = vpack.c.b16 %v8684, %v8680
    %v9445 = vpack.c.b16 %v8685, %v8681
    %v9446 = vpack.c.b16 %v8686, %v8682
    %v9447 = vpack.c.b16 %v8691, %v8687
    %v9448 = vpack.c.b16 %v8692, %v8688
    %v9449 = vpack.c.b16 %v8693, %v8689
    %v9450 = vpack.c.b16 %v8694, %v8690
    %v9451 = vpack.c.b16 %v8699, %v8695
    %v9452 = vpack.c.b16 %v8700, %v8696
    %v9453 = vpack.c.b16 %v8701, %v8697
    %v9454 = vpack.c.b16 %v8702, %v8698
    %v9455 = vpack.c.b16 %v8707, %v8703
    %v9456 = vpack.c.b16 %v8708, %v8704
    %v9457 = vpack.c.b16 %v8709, %v8705
    %v9458 = vpack.c.b16 %v8710, %v8706
    %v9459 = vpack.c.b16 %v8715, %v8711
    %v9460 = vpack.c.b16 %v8716, %v8712
    %v9461 = vpack.c.b16 %v8717, %v8713
    %v9462 = vpack.c.b16 %v8718, %v8714
    %v9463 = vpack.c.b16 %v8723, %v8719
    %v9464 = vpack.c.b16 %v8724, %v8720
    %v9465 = vpack.c.b16 %v8725, %v8721
    %v9466 = vpack.c.b16 %v8726, %v8722
    %v9467 = vpack.c.b16 %v8731, %v8727
    %v9468 = vpack.c.b16 %v8732, %v8728
    %v9469 = vpack.c.b16 %v8733, %v8729
    %v9470 = vpack.c.b16 %v8734, %v8730
    %v9471 = vpack.c.b16 %v8739, %v8735
    %v9472 = vpack.c.b16 %v8740, %v8736
    %v9473 = vpack.c.b16 %v8741, %v8737
    %v9474 = vpack.c.b16 %v8742, %v8738
    %v9475 = vpack.c.b16 %v8747, %v8743
    %v9476 = vpack.c.b16 %v8748, %v8744
    %v9477 = vpack.c.b16 %v8749, %v8745
    %v9478 = vpack.c.b16 %v8750, %v8746
    %v9479 = vpack.c.b16 %v8755, %v8751
    %v9480 = vpack.c.b16 %v8756, %v8752
    %v9481 = vpack.c.b16 %v8757, %v8753
    %v9482 = vpack.c.b16 %v8758, %v8754
    %v9483 = vpack.c.b16 %v8763, %v8759
    %v9484 = vpack.c.b16 %v8764, %v8760
    %v9485 = vpack.c.b16 %v8765, %v8761
    %v9486 = vpack.c.b16 %v8766, %v8762
    %v9487 = vpack.c.b16 %v8771, %v8767
    %v9488 = vpack.c.b16 %v8772, %v8768
    %v9489 = vpack.c.b16 %v8773, %v8769
    %v9490 = vpack.c.b16 %v8774, %v8770
    %v9491 = vpack.c.b16 %v8779, %v8775
    %v9492 = vpack.c.b16 %v8780, %v8776
    %v9493 = vpack.c.b16 %v8781, %v8777
    %v9494 = vpack.c.b16 %v8782, %v8778
    %v9495 = vpack.c.b16 %v8787, %v8783
    %v9496 = vpack.c.b16 %v8788, %v8784
    %v9497 = vpack.c.b16 %v8789, %v8785
    %v9498 = vpack.c.b16 %v8790, %v8786
    %v9499 = vpack.c.b16 %v8795, %v8791
    %v9500 = vpack.c.b16 %v8796, %v8792
    %v9501 = vpack.c.b16 %v8797, %v8793
    %v9502 = vpack.c.b16 %v8798, %v8794
    %v9503 = vpack.c.b16 %v8803, %v8799
    %v9504 = vpack.c.b16 %v8804, %v8800
    %v9505 = vpack.c.b16 %v8805, %v8801
    %v9506 = vpack.c.b16 %v8806, %v8802
    %v9507 = vpack.c.b16 %v8811, %v8807
    %v9508 = vpack.c.b16 %v8812, %v8808
    %v9509 = vpack.c.b16 %v8813, %v8809
    %v9510 = vpack.c.b16 %v8814, %v8810
    %v9511 = vpack.c.b16 %v8819, %v8815
    %v9512 = vpack.c.b16 %v8820, %v8816
    %v9513 = vpack.c.b16 %v8821, %v8817
    %v9514 = vpack.c.b16 %v8822, %v8818
    %v9515 = vpack.c.b16 %v8827, %v8823
    %v9516 = vpack.c.b16 %v8828, %v8824
    %v9517 = vpack.c.b16 %v8829, %v8825
    %v9518 = vpack.c.b16 %v8830, %v8826
    %v9519 = vpack.c.b16 %v8835, %v8831
    %v9520 = vpack.c.b16 %v8836, %v8832
    %v9521 = vpack.c.b16 %v8837, %v8833
    %v9522 = vpack.c.b16 %v8838, %v8834
    %v9523 = vpack.c.b16 %v8843, %v8839
    %v9524 = vpack.c.b16 %v8844, %v8840
    %v9525 = vpack.c.b16 %v8845, %v8841
    %v9526 = vpack.c.b16 %v8846, %v8842
    %v9527 = vpack.c.b16 %v8851, %v8847
    %v9528 = vpack.c.b16 %v8852, %v8848
    %v9529 = vpack.c.b16 %v8853, %v8849
    %v9530 = vpack.c.b16 %v8854, %v8850
    %v9531 = vpack.c.b16 %v8859, %v8855
    %v9532 = vpack.c.b16 %v8860, %v8856
    %v9533 = vpack.c.b16 %v8861, %v8857
    %v9534 = vpack.c.b16 %v8862, %v8858
    %v9535 = vpack.c.b16 %v8867, %v8863
    %v9536 = vpack.c.b16 %v8868, %v8864
    %v9537 = vpack.c.b16 %v8869, %v8865
    %v9538 = vpack.c.b16 %v8870, %v8866
    %v9539 = vpack.c.b16 %v8875, %v8871
    %v9540 = vpack.c.b16 %v8876, %v8872
    %v9541 = vpack.c.b16 %v8877, %v8873
    %v9542 = vpack.c.b16 %v8878, %v8874
    %v9543 = vpack.c.b16 %v8883, %v8879
    %v9544 = vpack.c.b16 %v8884, %v8880
    %v9545 = vpack.c.b16 %v8885, %v8881
    %v9546 = vpack.c.b16 %v8886, %v8882
    %v9547 = vpack.c.b16 %v8891, %v8887
    %v9548 = vpack.c.b16 %v8892, %v8888
    %v9549 = vpack.c.b16 %v8893, %v8889
    %v9550 = vpack.c.b16 %v8894, %v8890
    %v9551 = vpack.c.b16 %v8899, %v8895
    %v9552 = vpack.c.b16 %v8900, %v8896
    %v9553 = vpack.c.b16 %v8901, %v8897
    %v9554 = vpack.c.b16 %v8902, %v8898
    %v9555 = vpack.c.b16 %v8907, %v8903
    %v9556 = vpack.c.b16 %v8908, %v8904
    %v9557 = vpack.c.b16 %v8909, %v8905
    %v9558 = vpack.c.b16 %v8910, %v8906
    %v9559 = vpack.c.b16 %v8915, %v8911
    %v9560 = vpack.c.b16 %v8916, %v8912
    %v9561 = vpack.c.b16 %v8917, %v8913
    %v9562 = vpack.c.b16 %v8918, %v8914
    %v9563 = vpack.c.b16 %v8923, %v8919
    %v9564 = vpack.c.b16 %v8924, %v8920
    %v9565 = vpack.c.b16 %v8925, %v8921
    %v9566 = vpack.c.b16 %v8926, %v8922
    %v9567 = vpack.c.b16 %v8931, %v8927
    %v9568 = vpack.c.b16 %v8932, %v8928
    %v9569 = vpack.c.b16 %v8933, %v8929
    %v9570 = vpack.c.b16 %v8934, %v8930
    %v9571 = vpack.c.b16 %v8939, %v8935
    %v9572 = vpack.c.b16 %v8940, %v8936
    %v9573 = vpack.c.b16 %v8941, %v8937
    %v9574 = vpack.c.b16 %v8942, %v8938
    %v9575 = vpack.c.b16 %v8947, %v8943
    %v9576 = vpack.c.b16 %v8948, %v8944
    %v9577 = vpack.c.b16 %v8949, %v8945
    %v9578 = vpack.c.b16 %v8950, %v8946
    %v9579 = vpack.c.b16 %v8955, %v8951
    %v9580 = vpack.c.b16 %v8956, %v8952
    %v9581 = vpack.c.b16 %v8957, %v8953
    %v9582 = vpack.c.b16 %v8958, %v8954
    %v9583 = vpack.c.b16 %v8963, %v8959
    %v9584 = vpack.c.b16 %v8964, %v8960
    %v9585 = vpack.c.b16 %v8965, %v8961
    %v9586 = vpack.c.b16 %v8966, %v8962
    %v9587 = vpack.c.b16 %v8971, %v8967
    %v9588 = vpack.c.b16 %v8972, %v8968
    %v9589 = vpack.c.b16 %v8973, %v8969
    %v9590 = vpack.c.b16 %v8974, %v8970
    %v9591 = vpack.c.b16 %v8979, %v8975
    %v9592 = vpack.c.b16 %v8980, %v8976
    %v9593 = vpack.c.b16 %v8981, %v8977
    %v9594 = vpack.c.b16 %v8982, %v8978
    %v9595 = vpack.c.b16 %v8987, %v8983
    %v9596 = vpack.c.b16 %v8988, %v8984
    %v9597 = vpack.c.b16 %v8989, %v8985
    %v9598 = vpack.c.b16 %v8990, %v8986
    %v9599 = vpack.c.b16 %v8995, %v8991
    %v9600 = vpack.c.b16 %v8996, %v8992
    %v9601 = vpack.c.b16 %v8997, %v8993
    %v9602 = vpack.c.b16 %v8998, %v8994
    %v9603 = vpack.c.b16 %v9003, %v8999
    %v9604 = vpack.c.b16 %v9004, %v9000
    %v9605 = vpack.c.b16 %v9005, %v9001
    %v9606 = vpack.c.b16 %v9006, %v9002
    %v9607 = vpack.c.b16 %v9011, %v9007
    %v9608 = vpack.c.b16 %v9012, %v9008
    %v9609 = vpack.c.b16 %v9013, %v9009
    %v9610 = vpack.c.b16 %v9014, %v9010
    %v9611 = vpack.c.b16 %v9019, %v9015
    %v9612 = vpack.c.b16 %v9020, %v9016
    %v9613 = vpack.c.b16 %v9021, %v9017
    %v9614 = vpack.c.b16 %v9022, %v9018
    %v9615 = vpack.c.b16 %v9027, %v9023
    %v9616 = vpack.c.b16 %v9028, %v9024
    %v9617 = vpack.c.b16 %v9029, %v9025
    %v9618 = vpack.c.b16 %v9030, %v9026
    %v9619 = vpack.c.b16 %v9035, %v9031
    %v9620 = vpack.c.b16 %v9036, %v9032
    %v9621 = vpack.c.b16 %v9037, %v9033
    %v9622 = vpack.c.b16 %v9038, %v9034
    %v9623 = vpack.c.b16 %v9043, %v9039
    %v9624 = vpack.c.b16 %v9044, %v9040
    %v9625 = vpack.c.b16 %v9045, %v9041
    %v9626 = vpack.c.b16 %v9046, %v9042
    %v9627 = vpack.c.b16 %v9051, %v9047
    %v9628 = vpack.c.b16 %v9052, %v9048
    %v9629 = vpack.c.b16 %v9053, %v9049
    %v9630 = vpack.c.b16 %v9054, %v9050
    %v9631 = vpack.c.b16 %v9059, %v9055
    %v9632 = vpack.c.b16 %v9060, %v9056
    %v9633 = vpack.c.b16 %v9061, %v9057
    %v9634 = vpack.c.b16 %v9062, %v9058
    %v9635 = vpack.c.b16 %v9067, %v9063
    %v9636 = vpack.c.b16 %v9068, %v9064
    %v9637 = vpack.c.b16 %v9069, %v9065
    %v9638 = vpack.c.b16 %v9070, %v9066
    %v9639 = vpack.c.b16 %v9075, %v9071
    %v9640 = vpack.c.b16 %v9076, %v9072
    %v9641 = vpack.c.b16 %v9077, %v9073
    %v9642 = vpack.c.b16 %v9078, %v9074
    %v9643 = vpack.c.b16 %v9083, %v9079
    %v9644 = vpack.c.b16 %v9084, %v9080
    %v9645 = vpack.c.b16 %v9085, %v9081
    %v9646 = vpack.c.b16 %v9086, %v9082
    %v9647 = vpack.c.b16 %v9091, %v9087
    %v9648 = vpack.c.b16 %v9092, %v9088
    %v9649 = vpack.c.b16 %v9093, %v9089
    %v9650 = vpack.c.b16 %v9094, %v9090
    %v9651 = vpack.c.b16 %v9099, %v9095
    %v9652 = vpack.c.b16 %v9100, %v9096
    %v9653 = vpack.c.b16 %v9101, %v9097
    %v9654 = vpack.c.b16 %v9102, %v9098
    %v9655 = vpack.c.b16 %v9107, %v9103
    %v9656 = vpack.c.b16 %v9108, %v9104
    %v9657 = vpack.c.b16 %v9109, %v9105
    %v9658 = vpack.c.b16 %v9110, %v9106
    %v9659 = vpack.c.b16 %v9115, %v9111
    %v9660 = vpack.c.b16 %v9116, %v9112
    %v9661 = vpack.c.b16 %v9117, %v9113
    %v9662 = vpack.c.b16 %v9118, %v9114
    %v9663 = vpack.c.b16 %v9123, %v9119
    %v9664 = vpack.c.b16 %v9124, %v9120
    %v9665 = vpack.c.b16 %v9125, %v9121
    %v9666 = vpack.c.b16 %v9126, %v9122
    %v9667 = vpack.c.b16 %v9131, %v9127
    %v9668 = vpack.c.b16 %v9132, %v9128
    %v9669 = vpack.c.b16 %v9133, %v9129
    %v9670 = vpack.c.b16 %v9134, %v9130
    %v9671 = vpack.c.b16 %v9139, %v9135
    %v9672 = vpack.c.b16 %v9140, %v9136
    %v9673 = vpack.c.b16 %v9141, %v9137
    %v9674 = vpack.c.b16 %v9142, %v9138
    %v9675 = vpack.c.b16 %v9147, %v9143
    %v9676 = vpack.c.b16 %v9148, %v9144
    %v9677 = vpack.c.b16 %v9149, %v9145
    %v9678 = vpack.c.b16 %v9150, %v9146
    %v9679 = vpack.c.b16 %v9155, %v9151
    %v9680 = vpack.c.b16 %v9156, %v9152
    %v9681 = vpack.c.b16 %v9157, %v9153
    %v9682 = vpack.c.b16 %v9158, %v9154
    %v9683 = vpack.c.b16 %v9163, %v9159
    %v9684 = vpack.c.b16 %v9164, %v9160
    %v9685 = vpack.c.b16 %v9165, %v9161
    %v9686 = vpack.c.b16 %v9166, %v9162
    %v9687 = vpack.c.b16 %v9171, %v9167
    %v9688 = vpack.c.b16 %v9172, %v9168
    %v9689 = vpack.c.b16 %v9173, %v9169
    %v9690 = vpack.c.b16 %v9174, %v9170
    %v9691 = vpack.c.b16 %v9179, %v9175
    %v9692 = vpack.c.b16 %v9180, %v9176
    %v9693 = vpack.c.b16 %v9181, %v9177
    %v9694 = vpack.c.b16 %v9182, %v9178
    %10207 = vmatprep.subr.bf16.mxu0 %v9184
    %10208 = vmatpush1.bf16.msra.mxu0 %v9183
    %10209 = vmatprep.subr.bf16.mxu0 %v9188
    %10210 = vmatpush1.bf16.msra.mxu0 %v9187
    %10211 = vmatprep.subr.bf16.mxu0 %v9192
    %10212 = vmatpush1.bf16.msra.mxu0 %v9191
    %10213 = vmatprep.subr.bf16.mxu0 %v9196
    %10214 = vmatpush1.bf16.msra.mxu0 %v9195
    %10215 = vmatprep.subr.bf16.mxu0 %v9200
    %10216 = vmatpush1.bf16.msra.mxu0 %v9199
    %10217 = vmatprep.subr.bf16.mxu0 %v9204
    %10218 = vmatpush1.bf16.msra.mxu0 %v9203
    %10219 = vmatprep.subr.bf16.mxu0 %v9208
    %10220 = vmatpush1.bf16.msra.mxu0 %v9207
    %10221 = vmatprep.subr.bf16.mxu0 %v9212
    %10222 = vmatpush1.bf16.msra.mxu0 %v9211
    %10223 = vmatprep.subr.bf16.mxu0 %v9216
    %10224 = vmatpush1.bf16.msra.mxu0 %v9215
    %10225 = vmatprep.subr.bf16.mxu0 %v9220
    %10226 = vmatpush1.bf16.msra.mxu0 %v9219
    %10227 = vmatprep.subr.bf16.mxu0 %v9224
    %10228 = vmatpush1.bf16.msra.mxu0 %v9223
    %10229 = vmatprep.subr.bf16.mxu0 %v9228
    %10230 = vmatpush1.bf16.msra.mxu0 %v9227
    %10231 = vmatprep.subr.bf16.mxu0 %v9232
    %10232 = vmatpush1.bf16.msra.mxu0 %v9231
    %10233 = vmatprep.subr.bf16.mxu0 %v9236
    %10234 = vmatpush1.bf16.msra.mxu0 %v9235
    %10235 = vmatprep.subr.bf16.mxu0 %v9240
    %10236 = vmatpush1.bf16.msra.mxu0 %v9239
    %10237 = vmatprep.subr.bf16.mxu0 %v9244
    %10238 = vmatpush1.bf16.msra.mxu0 %v9243
    %10239 = vmatprep.mubr.bf16.mxu0 %v6880
    %10240 = vmatmul.mubr.bf16.gmra.mrb[0].mxu0 %v6879
    %v10241 = vpop.f32.mrb[0].mxu0
    %v10242 = vadd.f32 %v15, %v10241
    %v10243 = vpop.f32.mrb[0].mxu0
    %v10244 = vadd.f32 %v16, %v10243
    %v10245 = vpop.f32.mrb[0].mxu0
    %v10246 = vadd.f32 %v19, %v10245
    %v10247 = vpop.f32.mrb[0].mxu0
    %v10248 = vadd.f32 %v20, %v10247
    %10249 = vmatprep.mubr.bf16.mxu0 %v6896
    %10250 = vmatmul.mubr.bf16.gmra.mrb[0].mxu0 %v6895
    %v10251 = vpop.f32.mrb[0].mxu0
    %v10252 = vadd.f32 %v23, %v10251
    %v10253 = vpop.f32.mrb[0].mxu0
    %v10254 = vadd.f32 %v24, %v10253
    %v10255 = vpop.f32.mrb[0].mxu0
    %v10256 = vadd.f32 %v27, %v10255
    %v10257 = vpop.f32.mrb[0].mxu0
    %v10258 = vadd.f32 %v28, %v10257
    %10259 = vmatprep.mubr.bf16.mxu0 %v6912
    %10260 = vmatmul.mubr.bf16.gmra.mrb[0].mxu0 %v6911
    %v10261 = vpop.f32.mrb[0].mxu0
    %v10262 = vadd.f32 %v31, %v10261
    %v10263 = vpop.f32.mrb[0].mxu0
    %v10264 = vadd.f32 %v32, %v10263
    %v10265 = vpop.f32.mrb[0].mxu0
    %v10266 = vadd.f32 %v35, %v10265
    %v10267 = vpop.f32.mrb[0].mxu0
    %v10268 = vadd.f32 %v36, %v10267
    %10269 = vmatprep.mubr.bf16.mxu0 %v6928
    %10270 = vmatmul.mubr.bf16.gmra.mrb[0].mxu0 %v6927
    %v10271 = vpop.f32.mrb[0].mxu0
    %v10272 = vadd.f32 %v39, %v10271
    %v10273 = vpop.f32.mrb[0].mxu0
    %v10274 = vadd.f32 %v40, %v10273
    %v10275 = vpop.f32.mrb[0].mxu0
    %v10276 = vadd.f32 %v43, %v10275
    %v10277 = vpop.f32.mrb[0].mxu0
    %v10278 = vadd.f32 %v44, %v10277
    %10279 = vmatprep.mubr.bf16.mxu0 %v6944
    %10280 = vmatmul.mubr.bf16.gmra.mrb[0].mxu0 %v6943
    %v10281 = vpop.f32.mrb[0].mxu0
    %v10282 = vadd.f32 %v47, %v10281
    %v10283 = vpop.f32.mrb[0].mxu0
    %v10284 = vadd.f32 %v48, %v10283
    %v10285 = vpop.f32.mrb[0].mxu0
    %v10286 = vadd.f32 %v51, %v10285
    %v10287 = vpop.f32.mrb[0].mxu0
    %v10288 = vadd.f32 %v52, %v10287
    %10289 = vmatprep.mubr.bf16.mxu0 %v6960
    %10290 = vmatmul.mubr.bf16.gmra.mrb[0].mxu0 %v6959
    %v10291 = vpop.f32.mrb[0].mxu0
    %v10292 = vadd.f32 %v55, %v10291
    %v10293 = vpop.f32.mrb[0].mxu0
    %v10294 = vadd.f32 %v56, %v10293
    %v10295 = vpop.f32.mrb[0].mxu0
    %v10296 = vadd.f32 %v59, %v10295
    %v10297 = vpop.f32.mrb[0].mxu0
    %v10298 = vadd.f32 %v60, %v10297
    %10299 = vmatprep.mubr.bf16.mxu0 %v6976
    %10300 = vmatmul.mubr.bf16.gmra.mrb[0].mxu0 %v6975
    %v10301 = vpop.f32.mrb[0].mxu0
    %v10302 = vadd.f32 %v63, %v10301
    %v10303 = vpop.f32.mrb[0].mxu0
    %v10304 = vadd.f32 %v64, %v10303
    %v10305 = vpop.f32.mrb[0].mxu0
    %v10306 = vadd.f32 %v67, %v10305
    %v10307 = vpop.f32.mrb[0].mxu0
    %v10308 = vadd.f32 %v68, %v10307
    %10309 = vmatprep.mubr.bf16.mxu0 %v6992
    %10310 = vmatmul.mubr.bf16.gmra.mrb[0].mxu0 %v6991
    %v10311 = vpop.f32.mrb[0].mxu0
    %v10312 = vadd.f32 %v71, %v10311
    %v10313 = vpop.f32.mrb[0].mxu0
    %v10314 = vadd.f32 %v72, %v10313
    %v10315 = vpop.f32.mrb[0].mxu0
    %v10316 = vadd.f32 %v75, %v10315
    %v10317 = vpop.f32.mrb[0].mxu0
    %v10318 = vadd.f32 %v76, %v10317
    %10319 = vmatprep.mubr.bf16.mxu0 %v7008
    %10320 = vmatmul.mubr.bf16.gmra.mrb[0].mxu0 %v7007
    %v10321 = vpop.f32.mrb[0].mxu0
    %v10322 = vadd.f32 %v79, %v10321
    %v10323 = vpop.f32.mrb[0].mxu0
    %v10324 = vadd.f32 %v80, %v10323
    %v10325 = vpop.f32.mrb[0].mxu0
    %v10326 = vadd.f32 %v83, %v10325
    %v10327 = vpop.f32.mrb[0].mxu0
    %v10328 = vadd.f32 %v84, %v10327
    %10329 = vmatprep.mubr.bf16.mxu0 %v7024
    %10330 = vmatmul.mubr.bf16.gmra.mrb[0].mxu0 %v7023
    %v10331 = vpop.f32.mrb[0].mxu0
    %v10332 = vadd.f32 %v87, %v10331
    %v10333 = vpop.f32.mrb[0].mxu0
    %v10334 = vadd.f32 %v88, %v10333
    %v10335 = vpop.f32.mrb[0].mxu0
    %v10336 = vadd.f32 %v91, %v10335
    %v10337 = vpop.f32.mrb[0].mxu0
    %v10338 = vadd.f32 %v92, %v10337
    %10339 = vmatprep.mubr.bf16.mxu0 %v7040
    %10340 = vmatmul.mubr.bf16.gmra.mrb[0].mxu0 %v7039
    %v10341 = vpop.f32.mrb[0].mxu0
    %v10342 = vadd.f32 %v95, %v10341
    %v10343 = vpop.f32.mrb[0].mxu0
    %v10344 = vadd.f32 %v96, %v10343
    %v10345 = vpop.f32.mrb[0].mxu0
    %v10346 = vadd.f32 %v99, %v10345
    %v10347 = vpop.f32.mrb[0].mxu0
    %v10348 = vadd.f32 %v100, %v10347
    %10349 = vmatprep.mubr.bf16.mxu0 %v7056
    %10350 = vmatmul.mubr.bf16.gmra.mrb[0].mxu0 %v7055
    %v10351 = vpop.f32.mrb[0].mxu0
    %v10352 = vadd.f32 %v103, %v10351
    %v10353 = vpop.f32.mrb[0].mxu0
    %v10354 = vadd.f32 %v104, %v10353
    %v10355 = vpop.f32.mrb[0].mxu0
    %v10356 = vadd.f32 %v107, %v10355
    %v10357 = vpop.f32.mrb[0].mxu0
    %v10358 = vadd.f32 %v108, %v10357
    %10359 = vmatprep.mubr.bf16.mxu0 %v7072
    %10360 = vmatmul.mubr.bf16.gmra.mrb[0].mxu0 %v7071
    %v10361 = vpop.f32.mrb[0].mxu0
    %v10362 = vadd.f32 %v111, %v10361
    %v10363 = vpop.f32.mrb[0].mxu0
    %v10364 = vadd.f32 %v112, %v10363
    %v10365 = vpop.f32.mrb[0].mxu0
    %v10366 = vadd.f32 %v115, %v10365
    %v10367 = vpop.f32.mrb[0].mxu0
    %v10368 = vadd.f32 %v116, %v10367
    %10369 = vmatprep.mubr.bf16.mxu0 %v7088
    %10370 = vmatmul.mubr.bf16.gmra.mrb[0].mxu0 %v7087
    %v10371 = vpop.f32.mrb[0].mxu0
    %v10372 = vadd.f32 %v119, %v10371
    %v10373 = vpop.f32.mrb[0].mxu0
    %v10374 = vadd.f32 %v120, %v10373
    %v10375 = vpop.f32.mrb[0].mxu0
    %v10376 = vadd.f32 %v123, %v10375
    %v10377 = vpop.f32.mrb[0].mxu0
    %v10378 = vadd.f32 %v124, %v10377
    %10379 = vmatprep.mubr.bf16.mxu0 %v7104
    %10380 = vmatmul.mubr.bf16.gmra.mrb[0].mxu0 %v7103
    %v10381 = vpop.f32.mrb[0].mxu0
    %v10382 = vadd.f32 %v127, %v10381
    %v10383 = vpop.f32.mrb[0].mxu0
    %v10384 = vadd.f32 %v128, %v10383
    %v10385 = vpop.f32.mrb[0].mxu0
    %v10386 = vadd.f32 %v131, %v10385
    %v10387 = vpop.f32.mrb[0].mxu0
    %v10388 = vadd.f32 %v132, %v10387
    %10389 = vmatprep.mubr.bf16.mxu0 %v7120
    %10390 = vmatmul.mubr.bf16.gmra.mrb[0].mxu0 %v7119
    %v10391 = vpop.f32.mrb[0].mxu0
    %v10392 = vadd.f32 %v135, %v10391
    %v10393 = vpop.f32.mrb[0].mxu0
    %v10394 = vadd.f32 %v136, %v10393
    %v10395 = vpop.f32.mrb[0].mxu0
    %v10396 = vadd.f32 %v139, %v10395
    %v10397 = vpop.f32.mrb[0].mxu0
    %v10398 = vadd.f32 %v140, %v10397
    %10399 = vdwg.mxu0
    %10400 = vmatprep.subr.bf16.mxu0 %v9248
    %10401 = vmatpush1.bf16.msra.mxu0 %v9247
    %10402 = vmatprep.subr.bf16.mxu0 %v9252
    %10403 = vmatpush1.bf16.msra.mxu0 %v9251
    %10404 = vmatprep.subr.bf16.mxu0 %v9256
    %10405 = vmatpush1.bf16.msra.mxu0 %v9255
    %10406 = vmatprep.subr.bf16.mxu0 %v9260
    %10407 = vmatpush1.bf16.msra.mxu0 %v9259
    %10408 = vmatprep.subr.bf16.mxu0 %v9264
    %10409 = vmatpush1.bf16.msra.mxu0 %v9263
    %10410 = vmatprep.subr.bf16.mxu0 %v9268
    %10411 = vmatpush1.bf16.msra.mxu0 %v9267
    %10412 = vmatprep.subr.bf16.mxu0 %v9272
    %10413 = vmatpush1.bf16.msra.mxu0 %v9271
    %10414 = vmatprep.subr.bf16.mxu0 %v9276
    %10415 = vmatpush1.bf16.msra.mxu0 %v9275
    %10416 = vmatprep.subr.bf16.mxu0 %v9280
    %10417 = vmatpush1.bf16.msra.mxu0 %v9279
    %10418 = vmatprep.subr.bf16.mxu0 %v9284
    %10419 = vmatpush1.bf16.msra.mxu0 %v9283
    %10420 = vmatprep.subr.bf16.mxu0 %v9288
    %10421 = vmatpush1.bf16.msra.mxu0 %v9287
    %10422 = vmatprep.subr.bf16.mxu0 %v9292
    %10423 = vmatpush1.bf16.msra.mxu0 %v9291
    %10424 = vmatprep.subr.bf16.mxu0 %v9296
    %10425 = vmatpush1.bf16.msra.mxu0 %v9295
    %10426 = vmatprep.subr.bf16.mxu0 %v9300
    %10427 = vmatpush1.bf16.msra.mxu0 %v9299
    %10428 = vmatprep.subr.bf16.mxu0 %v9304
    %10429 = vmatpush1.bf16.msra.mxu0 %v9303
    %10430 = vmatprep.subr.bf16.mxu0 %v9308
    %10431 = vmatpush1.bf16.msra.mxu0 %v9307
    %10432 = vmatprep.mubr.bf16.mxu0 %v6882
    %10433 = vmatmul.mubr.bf16.gmra.mrb[0].mxu0 %v6881
    %v10434 = vpop.f32.mrb[0].mxu0
    %v10435 = vadd.f32 %v10242, %v10434
    %v10436 = vpop.f32.mrb[0].mxu0
    %v10437 = vadd.f32 %v10244, %v10436
    %v10438 = vpop.f32.mrb[0].mxu0
    %v10439 = vadd.f32 %v10246, %v10438
    %v10440 = vpop.f32.mrb[0].mxu0
    %v10441 = vadd.f32 %v10248, %v10440
    %10442 = vmatprep.mubr.bf16.mxu0 %v6898
    %10443 = vmatmul.mubr.bf16.gmra.mrb[0].mxu0 %v6897
    %v10444 = vpop.f32.mrb[0].mxu0
    %v10445 = vadd.f32 %v10252, %v10444
    %v10446 = vpop.f32.mrb[0].mxu0
    %v10447 = vadd.f32 %v10254, %v10446
    %v10448 = vpop.f32.mrb[0].mxu0
    %v10449 = vadd.f32 %v10256, %v10448
    %v10450 = vpop.f32.mrb[0].mxu0
    %v10451 = vadd.f32 %v10258, %v10450
    %10452 = vmatprep.mubr.bf16.mxu0 %v6914
    %10453 = vmatmul.mubr.bf16.gmra.mrb[0].mxu0 %v6913
    %v10454 = vpop.f32.mrb[0].mxu0
    %v10455 = vadd.f32 %v10262, %v10454
    %v10456 = vpop.f32.mrb[0].mxu0
    %v10457 = vadd.f32 %v10264, %v10456
    %v10458 = vpop.f32.mrb[0].mxu0
    %v10459 = vadd.f32 %v10266, %v10458
    %v10460 = vpop.f32.mrb[0].mxu0
    %v10461 = vadd.f32 %v10268, %v10460
    %10462 = vmatprep.mubr.bf16.mxu0 %v6930
    %10463 = vmatmul.mubr.bf16.gmra.mrb[0].mxu0 %v6929
    %v10464 = vpop.f32.mrb[0].mxu0
    %v10465 = vadd.f32 %v10272, %v10464
    %v10466 = vpop.f32.mrb[0].mxu0
    %v10467 = vadd.f32 %v10274, %v10466
    %v10468 = vpop.f32.mrb[0].mxu0
    %v10469 = vadd.f32 %v10276, %v10468
    %v10470 = vpop.f32.mrb[0].mxu0
    %v10471 = vadd.f32 %v10278, %v10470
    %10472 = vmatprep.mubr.bf16.mxu0 %v6946
    %10473 = vmatmul.mubr.bf16.gmra.mrb[0].mxu0 %v6945
    %v10474 = vpop.f32.mrb[0].mxu0
    %v10475 = vadd.f32 %v10282, %v10474
    %v10476 = vpop.f32.mrb[0].mxu0
    %v10477 = vadd.f32 %v10284, %v10476
    %v10478 = vpop.f32.mrb[0].mxu0
    %v10479 = vadd.f32 %v10286, %v10478
    %v10480 = vpop.f32.mrb[0].mxu0
    %v10481 = vadd.f32 %v10288, %v10480
    %10482 = vmatprep.mubr.bf16.mxu0 %v6962
    %10483 = vmatmul.mubr.bf16.gmra.mrb[0].mxu0 %v6961
    %v10484 = vpop.f32.mrb[0].mxu0
    %v10485 = vadd.f32 %v10292, %v10484
    %v10486 = vpop.f32.mrb[0].mxu0
    %v10487 = vadd.f32 %v10294, %v10486
    %v10488 = vpop.f32.mrb[0].mxu0
    %v10489 = vadd.f32 %v10296, %v10488
    %v10490 = vpop.f32.mrb[0].mxu0
    %v10491 = vadd.f32 %v10298, %v10490
    %10492 = vmatprep.mubr.bf16.mxu0 %v6978
    %10493 = vmatmul.mubr.bf16.gmra.mrb[0].mxu0 %v6977
    %v10494 = vpop.f32.mrb[0].mxu0
    %v10495 = vadd.f32 %v10302, %v10494
    %v10496 = vpop.f32.mrb[0].mxu0
    %v10497 = vadd.f32 %v10304, %v10496
    %v10498 = vpop.f32.mrb[0].mxu0
    %v10499 = vadd.f32 %v10306, %v10498
    %v10500 = vpop.f32.mrb[0].mxu0
    %v10501 = vadd.f32 %v10308, %v10500
    %10502 = vmatprep.mubr.bf16.mxu0 %v6994
    %10503 = vmatmul.mubr.bf16.gmra.mrb[0].mxu0 %v6993
    %v10504 = vpop.f32.mrb[0].mxu0
    %v10505 = vadd.f32 %v10312, %v10504
    %v10506 = vpop.f32.mrb[0].mxu0
    %v10507 = vadd.f32 %v10314, %v10506
    %v10508 = vpop.f32.mrb[0].mxu0
    %v10509 = vadd.f32 %v10316, %v10508
    %v10510 = vpop.f32.mrb[0].mxu0
    %v10511 = vadd.f32 %v10318, %v10510
    %10512 = vmatprep.mubr.bf16.mxu0 %v7010
    %10513 = vmatmul.mubr.bf16.gmra.mrb[0].mxu0 %v7009
    %v10514 = vpop.f32.mrb[0].mxu0
    %v10515 = vadd.f32 %v10322, %v10514
    %v10516 = vpop.f32.mrb[0].mxu0
    %v10517 = vadd.f32 %v10324, %v10516
    %v10518 = vpop.f32.mrb[0].mxu0
    %v10519 = vadd.f32 %v10326, %v10518
    %v10520 = vpop.f32.mrb[0].mxu0
    %v10521 = vadd.f32 %v10328, %v10520
    %10522 = vmatprep.mubr.bf16.mxu0 %v7026
    %10523 = vmatmul.mubr.bf16.gmra.mrb[0].mxu0 %v7025
    %v10524 = vpop.f32.mrb[0].mxu0
    %v10525 = vadd.f32 %v10332, %v10524
    %v10526 = vpop.f32.mrb[0].mxu0
    %v10527 = vadd.f32 %v10334, %v10526
    %v10528 = vpop.f32.mrb[0].mxu0
    %v10529 = vadd.f32 %v10336, %v10528
    %v10530 = vpop.f32.mrb[0].mxu0
    %v10531 = vadd.f32 %v10338, %v10530
    %10532 = vmatprep.mubr.bf16.mxu0 %v7042
    %10533 = vmatmul.mubr.bf16.gmra.mrb[0].mxu0 %v7041
    %v10534 = vpop.f32.mrb[0].mxu0
    %v10535 = vadd.f32 %v10342, %v10534
    %v10536 = vpop.f32.mrb[0].mxu0
    %v10537 = vadd.f32 %v10344, %v10536
    %v10538 = vpop.f32.mrb[0].mxu0
    %v10539 = vadd.f32 %v10346, %v10538
    %v10540 = vpop.f32.mrb[0].mxu0
    %v10541 = vadd.f32 %v10348, %v10540
    %10542 = vmatprep.mubr.bf16.mxu0 %v7058
    %10543 = vmatmul.mubr.bf16.gmra.mrb[0].mxu0 %v7057
    %v10544 = vpop.f32.mrb[0].mxu0
    %v10545 = vadd.f32 %v10352, %v10544
    %v10546 = vpop.f32.mrb[0].mxu0
    %v10547 = vadd.f32 %v10354, %v10546
    %v10548 = vpop.f32.mrb[0].mxu0
    %v10549 = vadd.f32 %v10356, %v10548
    %v10550 = vpop.f32.mrb[0].mxu0
    %v10551 = vadd.f32 %v10358, %v10550
    %10552 = vmatprep.mubr.bf16.mxu0 %v7074
    %10553 = vmatmul.mubr.bf16.gmra.mrb[0].mxu0 %v7073
    %v10554 = vpop.f32.mrb[0].mxu0
    %v10555 = vadd.f32 %v10362, %v10554
    %v10556 = vpop.f32.mrb[0].mxu0
    %v10557 = vadd.f32 %v10364, %v10556
    %v10558 = vpop.f32.mrb[0].mxu0
    %v10559 = vadd.f32 %v10366, %v10558
    %v10560 = vpop.f32.mrb[0].mxu0
    %v10561 = vadd.f32 %v10368, %v10560
    %10562 = vmatprep.mubr.bf16.mxu0 %v7090
    %10563 = vmatmul.mubr.bf16.gmra.mrb[0].mxu0 %v7089
    %v10564 = vpop.f32.mrb[0].mxu0
    %v10565 = vadd.f32 %v10372, %v10564
    %v10566 = vpop.f32.mrb[0].mxu0
    %v10567 = vadd.f32 %v10374, %v10566
    %v10568 = vpop.f32.mrb[0].mxu0
    %v10569 = vadd.f32 %v10376, %v10568
    %v10570 = vpop.f32.mrb[0].mxu0
    %v10571 = vadd.f32 %v10378, %v10570
    %10572 = vmatprep.mubr.bf16.mxu0 %v7106
    %10573 = vmatmul.mubr.bf16.gmra.mrb[0].mxu0 %v7105
    %v10574 = vpop.f32.mrb[0].mxu0
    %v10575 = vadd.f32 %v10382, %v10574
    %v10576 = vpop.f32.mrb[0].mxu0
    %v10577 = vadd.f32 %v10384, %v10576
    %v10578 = vpop.f32.mrb[0].mxu0
    %v10579 = vadd.f32 %v10386, %v10578
    %v10580 = vpop.f32.mrb[0].mxu0
    %v10581 = vadd.f32 %v10388, %v10580
    %10582 = vmatprep.mubr.bf16.mxu0 %v7122
    %10583 = vmatmul.mubr.bf16.gmra.mrb[0].mxu0 %v7121
    %v10584 = vpop.f32.mrb[0].mxu0
    %v10585 = vadd.f32 %v10392, %v10584
    %v10586 = vpop.f32.mrb[0].mxu0
    %v10587 = vadd.f32 %v10394, %v10586
    %v10588 = vpop.f32.mrb[0].mxu0
    %v10589 = vadd.f32 %v10396, %v10588
    %v10590 = vpop.f32.mrb[0].mxu0
    %v10591 = vadd.f32 %v10398, %v10590
    %10592 = vdwg.mxu0
    %10593 = vmatprep.subr.bf16.mxu0 %v9312
    %10594 = vmatpush1.bf16.msra.mxu0 %v9311
    %10595 = vmatprep.subr.bf16.mxu0 %v9316
    %10596 = vmatpush1.bf16.msra.mxu0 %v9315
    %10597 = vmatprep.subr.bf16.mxu0 %v9320
    %10598 = vmatpush1.bf16.msra.mxu0 %v9319
    %10599 = vmatprep.subr.bf16.mxu0 %v9324
    %10600 = vmatpush1.bf16.msra.mxu0 %v9323
    %10601 = vmatprep.subr.bf16.mxu0 %v9328
    %10602 = vmatpush1.bf16.msra.mxu0 %v9327
    %10603 = vmatprep.subr.bf16.mxu0 %v9332
    %10604 = vmatpush1.bf16.msra.mxu0 %v9331
    %10605 = vmatprep.subr.bf16.mxu0 %v9336
    %10606 = vmatpush1.bf16.msra.mxu0 %v9335
    %10607 = vmatprep.subr.bf16.mxu0 %v9340
    %10608 = vmatpush1.bf16.msra.mxu0 %v9339
    %10609 = vmatprep.subr.bf16.mxu0 %v9344
    %10610 = vmatpush1.bf16.msra.mxu0 %v9343
    %10611 = vmatprep.subr.bf16.mxu0 %v9348
    %10612 = vmatpush1.bf16.msra.mxu0 %v9347
    %10613 = vmatprep.subr.bf16.mxu0 %v9352
    %10614 = vmatpush1.bf16.msra.mxu0 %v9351
    %10615 = vmatprep.subr.bf16.mxu0 %v9356
    %10616 = vmatpush1.bf16.msra.mxu0 %v9355
    %10617 = vmatprep.subr.bf16.mxu0 %v9360
    %10618 = vmatpush1.bf16.msra.mxu0 %v9359
    %10619 = vmatprep.subr.bf16.mxu0 %v9364
    %10620 = vmatpush1.bf16.msra.mxu0 %v9363
    %10621 = vmatprep.subr.bf16.mxu0 %v9368
    %10622 = vmatpush1.bf16.msra.mxu0 %v9367
    %10623 = vmatprep.subr.bf16.mxu0 %v9372
    %10624 = vmatpush1.bf16.msra.mxu0 %v9371
    %10625 = vmatprep.mubr.bf16.mxu0 %v6884
    %10626 = vmatmul.mubr.bf16.gmra.mrb[0].mxu0 %v6883
    %v10627 = vpop.f32.mrb[0].mxu0
    %v10628 = vadd.f32 %v10435, %v10627
    %v10629 = vpop.f32.mrb[0].mxu0
    %v10630 = vadd.f32 %v10437, %v10629
    %v10631 = vpop.f32.mrb[0].mxu0
    %v10632 = vadd.f32 %v10439, %v10631
    %v10633 = vpop.f32.mrb[0].mxu0
    %v10634 = vadd.f32 %v10441, %v10633
    %10635 = vmatprep.mubr.bf16.mxu0 %v6900
    %10636 = vmatmul.mubr.bf16.gmra.mrb[0].mxu0 %v6899
    %v10637 = vpop.f32.mrb[0].mxu0
    %v10638 = vadd.f32 %v10445, %v10637
    %v10639 = vpop.f32.mrb[0].mxu0
    %v10640 = vadd.f32 %v10447, %v10639
    %v10641 = vpop.f32.mrb[0].mxu0
    %v10642 = vadd.f32 %v10449, %v10641
    %v10643 = vpop.f32.mrb[0].mxu0
    %v10644 = vadd.f32 %v10451, %v10643
    %10645 = vmatprep.mubr.bf16.mxu0 %v6916
    %10646 = vmatmul.mubr.bf16.gmra.mrb[0].mxu0 %v6915
    %v10647 = vpop.f32.mrb[0].mxu0
    %v10648 = vadd.f32 %v10455, %v10647
    %v10649 = vpop.f32.mrb[0].mxu0
    %v10650 = vadd.f32 %v10457, %v10649
    %v10651 = vpop.f32.mrb[0].mxu0
    %v10652 = vadd.f32 %v10459, %v10651
    %v10653 = vpop.f32.mrb[0].mxu0
    %v10654 = vadd.f32 %v10461, %v10653
    %10655 = vmatprep.mubr.bf16.mxu0 %v6932
    %10656 = vmatmul.mubr.bf16.gmra.mrb[0].mxu0 %v6931
    %v10657 = vpop.f32.mrb[0].mxu0
    %v10658 = vadd.f32 %v10465, %v10657
    %v10659 = vpop.f32.mrb[0].mxu0
    %v10660 = vadd.f32 %v10467, %v10659
    %v10661 = vpop.f32.mrb[0].mxu0
    %v10662 = vadd.f32 %v10469, %v10661
    %v10663 = vpop.f32.mrb[0].mxu0
    %v10664 = vadd.f32 %v10471, %v10663
    %10665 = vmatprep.mubr.bf16.mxu0 %v6948
    %10666 = vmatmul.mubr.bf16.gmra.mrb[0].mxu0 %v6947
    %v10667 = vpop.f32.mrb[0].mxu0
    %v10668 = vadd.f32 %v10475, %v10667
    %v10669 = vpop.f32.mrb[0].mxu0
    %v10670 = vadd.f32 %v10477, %v10669
    %v10671 = vpop.f32.mrb[0].mxu0
    %v10672 = vadd.f32 %v10479, %v10671
    %v10673 = vpop.f32.mrb[0].mxu0
    %v10674 = vadd.f32 %v10481, %v10673
    %10675 = vmatprep.mubr.bf16.mxu0 %v6964
    %10676 = vmatmul.mubr.bf16.gmra.mrb[0].mxu0 %v6963
    %v10677 = vpop.f32.mrb[0].mxu0
    %v10678 = vadd.f32 %v10485, %v10677
    %v10679 = vpop.f32.mrb[0].mxu0
    %v10680 = vadd.f32 %v10487, %v10679
    %v10681 = vpop.f32.mrb[0].mxu0
    %v10682 = vadd.f32 %v10489, %v10681
    %v10683 = vpop.f32.mrb[0].mxu0
    %v10684 = vadd.f32 %v10491, %v10683
    %10685 = vmatprep.mubr.bf16.mxu0 %v6980
    %10686 = vmatmul.mubr.bf16.gmra.mrb[0].mxu0 %v6979
    %v10687 = vpop.f32.mrb[0].mxu0
    %v10688 = vadd.f32 %v10495, %v10687
    %v10689 = vpop.f32.mrb[0].mxu0
    %v10690 = vadd.f32 %v10497, %v10689
    %v10691 = vpop.f32.mrb[0].mxu0
    %v10692 = vadd.f32 %v10499, %v10691
    %v10693 = vpop.f32.mrb[0].mxu0
    %v10694 = vadd.f32 %v10501, %v10693
    %10695 = vmatprep.mubr.bf16.mxu0 %v6996
    %10696 = vmatmul.mubr.bf16.gmra.mrb[0].mxu0 %v6995
    %v10697 = vpop.f32.mrb[0].mxu0
    %v10698 = vadd.f32 %v10505, %v10697
    %v10699 = vpop.f32.mrb[0].mxu0
    %v10700 = vadd.f32 %v10507, %v10699
    %v10701 = vpop.f32.mrb[0].mxu0
    %v10702 = vadd.f32 %v10509, %v10701
    %v10703 = vpop.f32.mrb[0].mxu0
    %v10704 = vadd.f32 %v10511, %v10703
    %10705 = vmatprep.mubr.bf16.mxu0 %v7012
    %10706 = vmatmul.mubr.bf16.gmra.mrb[0].mxu0 %v7011
    %v10707 = vpop.f32.mrb[0].mxu0
    %v10708 = vadd.f32 %v10515, %v10707
    %v10709 = vpop.f32.mrb[0].mxu0
    %v10710 = vadd.f32 %v10517, %v10709
    %v10711 = vpop.f32.mrb[0].mxu0
    %v10712 = vadd.f32 %v10519, %v10711
    %v10713 = vpop.f32.mrb[0].mxu0
    %v10714 = vadd.f32 %v10521, %v10713
    %10715 = vmatprep.mubr.bf16.mxu0 %v7028
    %10716 = vmatmul.mubr.bf16.gmra.mrb[0].mxu0 %v7027
    %v10717 = vpop.f32.mrb[0].mxu0
    %v10718 = vadd.f32 %v10525, %v10717
    %v10719 = vpop.f32.mrb[0].mxu0
    %v10720 = vadd.f32 %v10527, %v10719
    %v10721 = vpop.f32.mrb[0].mxu0
    %v10722 = vadd.f32 %v10529, %v10721
    %v10723 = vpop.f32.mrb[0].mxu0
    %v10724 = vadd.f32 %v10531, %v10723
    %10725 = vmatprep.mubr.bf16.mxu0 %v7044
    %10726 = vmatmul.mubr.bf16.gmra.mrb[0].mxu0 %v7043
    %v10727 = vpop.f32.mrb[0].mxu0
    %v10728 = vadd.f32 %v10535, %v10727
    %v10729 = vpop.f32.mrb[0].mxu0
    %v10730 = vadd.f32 %v10537, %v10729
    %v10731 = vpop.f32.mrb[0].mxu0
    %v10732 = vadd.f32 %v10539, %v10731
    %v10733 = vpop.f32.mrb[0].mxu0
    %v10734 = vadd.f32 %v10541, %v10733
    %10735 = vmatprep.mubr.bf16.mxu0 %v7060
    %10736 = vmatmul.mubr.bf16.gmra.mrb[0].mxu0 %v7059
    %v10737 = vpop.f32.mrb[0].mxu0
    %v10738 = vadd.f32 %v10545, %v10737
    %v10739 = vpop.f32.mrb[0].mxu0
    %v10740 = vadd.f32 %v10547, %v10739
    %v10741 = vpop.f32.mrb[0].mxu0
    %v10742 = vadd.f32 %v10549, %v10741
    %v10743 = vpop.f32.mrb[0].mxu0
    %v10744 = vadd.f32 %v10551, %v10743
    %10745 = vmatprep.mubr.bf16.mxu0 %v7076
    %10746 = vmatmul.mubr.bf16.gmra.mrb[0].mxu0 %v7075
    %v10747 = vpop.f32.mrb[0].mxu0
    %v10748 = vadd.f32 %v10555, %v10747
    %v10749 = vpop.f32.mrb[0].mxu0
    %v10750 = vadd.f32 %v10557, %v10749
    %v10751 = vpop.f32.mrb[0].mxu0
    %v10752 = vadd.f32 %v10559, %v10751
    %v10753 = vpop.f32.mrb[0].mxu0
    %v10754 = vadd.f32 %v10561, %v10753
    %10755 = vmatprep.mubr.bf16.mxu0 %v7092
    %10756 = vmatmul.mubr.bf16.gmra.mrb[0].mxu0 %v7091
    %v10757 = vpop.f32.mrb[0].mxu0
    %v10758 = vadd.f32 %v10565, %v10757
    %v10759 = vpop.f32.mrb[0].mxu0
    %v10760 = vadd.f32 %v10567, %v10759
    %v10761 = vpop.f32.mrb[0].mxu0
    %v10762 = vadd.f32 %v10569, %v10761
    %v10763 = vpop.f32.mrb[0].mxu0
    %v10764 = vadd.f32 %v10571, %v10763
    %10765 = vmatprep.mubr.bf16.mxu0 %v7108
    %10766 = vmatmul.mubr.bf16.gmra.mrb[0].mxu0 %v7107
    %v10767 = vpop.f32.mrb[0].mxu0
    %v10768 = vadd.f32 %v10575, %v10767
    %v10769 = vpop.f32.mrb[0].mxu0
    %v10770 = vadd.f32 %v10577, %v10769
    %v10771 = vpop.f32.mrb[0].mxu0
    %v10772 = vadd.f32 %v10579, %v10771
    %v10773 = vpop.f32.mrb[0].mxu0
    %v10774 = vadd.f32 %v10581, %v10773
    %10775 = vmatprep.mubr.bf16.mxu0 %v7124
    %10776 = vmatmul.mubr.bf16.gmra.mrb[0].mxu0 %v7123
    %v10777 = vpop.f32.mrb[0].mxu0
    %v10778 = vadd.f32 %v10585, %v10777
    %v10779 = vpop.f32.mrb[0].mxu0
    %v10780 = vadd.f32 %v10587, %v10779
    %v10781 = vpop.f32.mrb[0].mxu0
    %v10782 = vadd.f32 %v10589, %v10781
    %v10783 = vpop.f32.mrb[0].mxu0
    %v10784 = vadd.f32 %v10591, %v10783
    %10785 = vdwg.mxu0
    %10786 = vmatprep.subr.bf16.mxu0 %v9376
    %10787 = vmatpush1.bf16.msra.mxu0 %v9375
    %10788 = vmatprep.subr.bf16.mxu0 %v9380
    %10789 = vmatpush1.bf16.msra.mxu0 %v9379
    %10790 = vmatprep.subr.bf16.mxu0 %v9384
    %10791 = vmatpush1.bf16.msra.mxu0 %v9383
    %10792 = vmatprep.subr.bf16.mxu0 %v9388
    %10793 = vmatpush1.bf16.msra.mxu0 %v9387
    %10794 = vmatprep.subr.bf16.mxu0 %v9392
    %10795 = vmatpush1.bf16.msra.mxu0 %v9391
    %10796 = vmatprep.subr.bf16.mxu0 %v9396
    %10797 = vmatpush1.bf16.msra.mxu0 %v9395
    %10798 = vmatprep.subr.bf16.mxu0 %v9400
    %10799 = vmatpush1.bf16.msra.mxu0 %v9399
    %10800 = vmatprep.subr.bf16.mxu0 %v9404
    %10801 = vmatpush1.bf16.msra.mxu0 %v9403
    %10802 = vmatprep.subr.bf16.mxu0 %v9408
    %10803 = vmatpush1.bf16.msra.mxu0 %v9407
    %10804 = vmatprep.subr.bf16.mxu0 %v9412
    %10805 = vmatpush1.bf16.msra.mxu0 %v9411
    %10806 = vmatprep.subr.bf16.mxu0 %v9416
    %10807 = vmatpush1.bf16.msra.mxu0 %v9415
    %10808 = vmatprep.subr.bf16.mxu0 %v9420
    %10809 = vmatpush1.bf16.msra.mxu0 %v9419
    %10810 = vmatprep.subr.bf16.mxu0 %v9424
    %10811 = vmatpush1.bf16.msra.mxu0 %v9423
    %10812 = vmatprep.subr.bf16.mxu0 %v9428
    %10813 = vmatpush1.bf16.msra.mxu0 %v9427
    %10814 = vmatprep.subr.bf16.mxu0 %v9432
    %10815 = vmatpush1.bf16.msra.mxu0 %v9431
    %10816 = vmatprep.subr.bf16.mxu0 %v9436
    %10817 = vmatpush1.bf16.msra.mxu0 %v9435
    %10818 = vmatprep.mubr.bf16.mxu0 %v6886
    %10819 = vmatmul.mubr.bf16.gmra.mrb[0].mxu0 %v6885
    %v10820 = vpop.f32.mrb[0].mxu0
    %v10821 = vadd.f32 %v10628, %v10820
    %v10822 = vpop.f32.mrb[0].mxu0
    %v10823 = vadd.f32 %v10630, %v10822
    %v10824 = vpop.f32.mrb[0].mxu0
    %v10825 = vadd.f32 %v10632, %v10824
    %v10826 = vpop.f32.mrb[0].mxu0
    %v10827 = vadd.f32 %v10634, %v10826
    %10828 = vmatprep.mubr.bf16.mxu0 %v6902
    %10829 = vmatmul.mubr.bf16.gmra.mrb[0].mxu0 %v6901
    %v10830 = vpop.f32.mrb[0].mxu0
    %v10831 = vadd.f32 %v10638, %v10830
    %v10832 = vpop.f32.mrb[0].mxu0
    %v10833 = vadd.f32 %v10640, %v10832
    %v10834 = vpop.f32.mrb[0].mxu0
    %v10835 = vadd.f32 %v10642, %v10834
    %v10836 = vpop.f32.mrb[0].mxu0
    %v10837 = vadd.f32 %v10644, %v10836
    %10838 = vmatprep.mubr.bf16.mxu0 %v6918
    %10839 = vmatmul.mubr.bf16.gmra.mrb[0].mxu0 %v6917
    %v10840 = vpop.f32.mrb[0].mxu0
    %v10841 = vadd.f32 %v10648, %v10840
    %v10842 = vpop.f32.mrb[0].mxu0
    %v10843 = vadd.f32 %v10650, %v10842
    %v10844 = vpop.f32.mrb[0].mxu0
    %v10845 = vadd.f32 %v10652, %v10844
    %v10846 = vpop.f32.mrb[0].mxu0
    %v10847 = vadd.f32 %v10654, %v10846
    %10848 = vmatprep.mubr.bf16.mxu0 %v6934
    %10849 = vmatmul.mubr.bf16.gmra.mrb[0].mxu0 %v6933
    %v10850 = vpop.f32.mrb[0].mxu0
    %v10851 = vadd.f32 %v10658, %v10850
    %v10852 = vpop.f32.mrb[0].mxu0
    %v10853 = vadd.f32 %v10660, %v10852
    %v10854 = vpop.f32.mrb[0].mxu0
    %v10855 = vadd.f32 %v10662, %v10854
    %v10856 = vpop.f32.mrb[0].mxu0
    %v10857 = vadd.f32 %v10664, %v10856
    %10858 = vmatprep.mubr.bf16.mxu0 %v6950
    %10859 = vmatmul.mubr.bf16.gmra.mrb[0].mxu0 %v6949
    %v10860 = vpop.f32.mrb[0].mxu0
    %v10861 = vadd.f32 %v10668, %v10860
    %v10862 = vpop.f32.mrb[0].mxu0
    %v10863 = vadd.f32 %v10670, %v10862
    %v10864 = vpop.f32.mrb[0].mxu0
    %v10865 = vadd.f32 %v10672, %v10864
    %v10866 = vpop.f32.mrb[0].mxu0
    %v10867 = vadd.f32 %v10674, %v10866
    %10868 = vmatprep.mubr.bf16.mxu0 %v6966
    %10869 = vmatmul.mubr.bf16.gmra.mrb[0].mxu0 %v6965
    %v10870 = vpop.f32.mrb[0].mxu0
    %v10871 = vadd.f32 %v10678, %v10870
    %v10872 = vpop.f32.mrb[0].mxu0
    %v10873 = vadd.f32 %v10680, %v10872
    %v10874 = vpop.f32.mrb[0].mxu0
    %v10875 = vadd.f32 %v10682, %v10874
    %v10876 = vpop.f32.mrb[0].mxu0
    %v10877 = vadd.f32 %v10684, %v10876
    %10878 = vmatprep.mubr.bf16.mxu0 %v6982
    %10879 = vmatmul.mubr.bf16.gmra.mrb[0].mxu0 %v6981
    %v10880 = vpop.f32.mrb[0].mxu0
    %v10881 = vadd.f32 %v10688, %v10880
    %v10882 = vpop.f32.mrb[0].mxu0
    %v10883 = vadd.f32 %v10690, %v10882
    %v10884 = vpop.f32.mrb[0].mxu0
    %v10885 = vadd.f32 %v10692, %v10884
    %v10886 = vpop.f32.mrb[0].mxu0
    %v10887 = vadd.f32 %v10694, %v10886
    %10888 = vmatprep.mubr.bf16.mxu0 %v6998
    %10889 = vmatmul.mubr.bf16.gmra.mrb[0].mxu0 %v6997
    %v10890 = vpop.f32.mrb[0].mxu0
    %v10891 = vadd.f32 %v10698, %v10890
    %v10892 = vpop.f32.mrb[0].mxu0
    %v10893 = vadd.f32 %v10700, %v10892
    %v10894 = vpop.f32.mrb[0].mxu0
    %v10895 = vadd.f32 %v10702, %v10894
    %v10896 = vpop.f32.mrb[0].mxu0
    %v10897 = vadd.f32 %v10704, %v10896
    %10898 = vmatprep.mubr.bf16.mxu0 %v7014
    %10899 = vmatmul.mubr.bf16.gmra.mrb[0].mxu0 %v7013
    %v10900 = vpop.f32.mrb[0].mxu0
    %v10901 = vadd.f32 %v10708, %v10900
    %v10902 = vpop.f32.mrb[0].mxu0
    %v10903 = vadd.f32 %v10710, %v10902
    %v10904 = vpop.f32.mrb[0].mxu0
    %v10905 = vadd.f32 %v10712, %v10904
    %v10906 = vpop.f32.mrb[0].mxu0
    %v10907 = vadd.f32 %v10714, %v10906
    %10908 = vmatprep.mubr.bf16.mxu0 %v7030
    %10909 = vmatmul.mubr.bf16.gmra.mrb[0].mxu0 %v7029
    %v10910 = vpop.f32.mrb[0].mxu0
    %v10911 = vadd.f32 %v10718, %v10910
    %v10912 = vpop.f32.mrb[0].mxu0
    %v10913 = vadd.f32 %v10720, %v10912
    %v10914 = vpop.f32.mrb[0].mxu0
    %v10915 = vadd.f32 %v10722, %v10914
    %v10916 = vpop.f32.mrb[0].mxu0
    %v10917 = vadd.f32 %v10724, %v10916
    %10918 = vmatprep.mubr.bf16.mxu0 %v7046
    %10919 = vmatmul.mubr.bf16.gmra.mrb[0].mxu0 %v7045
    %v10920 = vpop.f32.mrb[0].mxu0
    %v10921 = vadd.f32 %v10728, %v10920
    %v10922 = vpop.f32.mrb[0].mxu0
    %v10923 = vadd.f32 %v10730, %v10922
    %v10924 = vpop.f32.mrb[0].mxu0
    %v10925 = vadd.f32 %v10732, %v10924
    %v10926 = vpop.f32.mrb[0].mxu0
    %v10927 = vadd.f32 %v10734, %v10926
    %10928 = vmatprep.mubr.bf16.mxu0 %v7062
    %10929 = vmatmul.mubr.bf16.gmra.mrb[0].mxu0 %v7061
    %v10930 = vpop.f32.mrb[0].mxu0
    %v10931 = vadd.f32 %v10738, %v10930
    %v10932 = vpop.f32.mrb[0].mxu0
    %v10933 = vadd.f32 %v10740, %v10932
    %v10934 = vpop.f32.mrb[0].mxu0
    %v10935 = vadd.f32 %v10742, %v10934
    %v10936 = vpop.f32.mrb[0].mxu0
    %v10937 = vadd.f32 %v10744, %v10936
    %10938 = vmatprep.mubr.bf16.mxu0 %v7078
    %10939 = vmatmul.mubr.bf16.gmra.mrb[0].mxu0 %v7077
    %v10940 = vpop.f32.mrb[0].mxu0
    %v10941 = vadd.f32 %v10748, %v10940
    %v10942 = vpop.f32.mrb[0].mxu0
    %v10943 = vadd.f32 %v10750, %v10942
    %v10944 = vpop.f32.mrb[0].mxu0
    %v10945 = vadd.f32 %v10752, %v10944
    %v10946 = vpop.f32.mrb[0].mxu0
    %v10947 = vadd.f32 %v10754, %v10946
    %10948 = vmatprep.mubr.bf16.mxu0 %v7094
    %10949 = vmatmul.mubr.bf16.gmra.mrb[0].mxu0 %v7093
    %v10950 = vpop.f32.mrb[0].mxu0
    %v10951 = vadd.f32 %v10758, %v10950
    %v10952 = vpop.f32.mrb[0].mxu0
    %v10953 = vadd.f32 %v10760, %v10952
    %v10954 = vpop.f32.mrb[0].mxu0
    %v10955 = vadd.f32 %v10762, %v10954
    %v10956 = vpop.f32.mrb[0].mxu0
    %v10957 = vadd.f32 %v10764, %v10956
    %10958 = vmatprep.mubr.bf16.mxu0 %v7110
    %10959 = vmatmul.mubr.bf16.gmra.mrb[0].mxu0 %v7109
    %v10960 = vpop.f32.mrb[0].mxu0
    %v10961 = vadd.f32 %v10768, %v10960
    %v10962 = vpop.f32.mrb[0].mxu0
    %v10963 = vadd.f32 %v10770, %v10962
    %v10964 = vpop.f32.mrb[0].mxu0
    %v10965 = vadd.f32 %v10772, %v10964
    %v10966 = vpop.f32.mrb[0].mxu0
    %v10967 = vadd.f32 %v10774, %v10966
    %10968 = vmatprep.mubr.bf16.mxu0 %v7126
    %10969 = vmatmul.mubr.bf16.gmra.mrb[0].mxu0 %v7125
    %v10970 = vpop.f32.mrb[0].mxu0
    %v10971 = vadd.f32 %v10778, %v10970
    %v10972 = vpop.f32.mrb[0].mxu0
    %v10973 = vadd.f32 %v10780, %v10972
    %v10974 = vpop.f32.mrb[0].mxu0
    %v10975 = vadd.f32 %v10782, %v10974
    %v10976 = vpop.f32.mrb[0].mxu0
    %v10977 = vadd.f32 %v10784, %v10976
    %10978 = vdwg.mxu0
    %10979 = vmatprep.subr.bf16.mxu0 %v9440
    %10980 = vmatpush1.bf16.msra.mxu0 %v9439
    %10981 = vmatprep.subr.bf16.mxu0 %v9444
    %10982 = vmatpush1.bf16.msra.mxu0 %v9443
    %10983 = vmatprep.subr.bf16.mxu0 %v9448
    %10984 = vmatpush1.bf16.msra.mxu0 %v9447
    %10985 = vmatprep.subr.bf16.mxu0 %v9452
    %10986 = vmatpush1.bf16.msra.mxu0 %v9451
    %10987 = vmatprep.subr.bf16.mxu0 %v9456
    %10988 = vmatpush1.bf16.msra.mxu0 %v9455
    %10989 = vmatprep.subr.bf16.mxu0 %v9460
    %10990 = vmatpush1.bf16.msra.mxu0 %v9459
    %10991 = vmatprep.subr.bf16.mxu0 %v9464
    %10992 = vmatpush1.bf16.msra.mxu0 %v9463
    %10993 = vmatprep.subr.bf16.mxu0 %v9468
    %10994 = vmatpush1.bf16.msra.mxu0 %v9467
    %10995 = vmatprep.subr.bf16.mxu0 %v9472
    %10996 = vmatpush1.bf16.msra.mxu0 %v9471
    %10997 = vmatprep.subr.bf16.mxu0 %v9476
    %10998 = vmatpush1.bf16.msra.mxu0 %v9475
    %10999 = vmatprep.subr.bf16.mxu0 %v9480
    %11000 = vmatpush1.bf16.msra.mxu0 %v9479
    %11001 = vmatprep.subr.bf16.mxu0 %v9484
    %11002 = vmatpush1.bf16.msra.mxu0 %v9483
    %11003 = vmatprep.subr.bf16.mxu0 %v9488
    %11004 = vmatpush1.bf16.msra.mxu0 %v9487
    %11005 = vmatprep.subr.bf16.mxu0 %v9492
    %11006 = vmatpush1.bf16.msra.mxu0 %v9491
    %11007 = vmatprep.subr.bf16.mxu0 %v9496
    %11008 = vmatpush1.bf16.msra.mxu0 %v9495
    %11009 = vmatprep.subr.bf16.mxu0 %v9500
    %11010 = vmatpush1.bf16.msra.mxu0 %v9499
    %11011 = vmatprep.mubr.bf16.mxu0 %v6888
    %11012 = vmatmul.mubr.bf16.gmra.mrb[0].mxu0 %v6887
    %v11013 = vpop.f32.mrb[0].mxu0
    %v11014 = vadd.f32 %v10821, %v11013
    %v11015 = vpop.f32.mrb[0].mxu0
    %v11016 = vadd.f32 %v10823, %v11015
    %v11017 = vpop.f32.mrb[0].mxu0
    %v11018 = vadd.f32 %v10825, %v11017
    %v11019 = vpop.f32.mrb[0].mxu0
    %v11020 = vadd.f32 %v10827, %v11019
    %11021 = vmatprep.mubr.bf16.mxu0 %v6904
    %11022 = vmatmul.mubr.bf16.gmra.mrb[0].mxu0 %v6903
    %v11023 = vpop.f32.mrb[0].mxu0
    %v11024 = vadd.f32 %v10831, %v11023
    %v11025 = vpop.f32.mrb[0].mxu0
    %v11026 = vadd.f32 %v10833, %v11025
    %v11027 = vpop.f32.mrb[0].mxu0
    %v11028 = vadd.f32 %v10835, %v11027
    %v11029 = vpop.f32.mrb[0].mxu0
    %v11030 = vadd.f32 %v10837, %v11029
    %11031 = vmatprep.mubr.bf16.mxu0 %v6920
    %11032 = vmatmul.mubr.bf16.gmra.mrb[0].mxu0 %v6919
    %v11033 = vpop.f32.mrb[0].mxu0
    %v11034 = vadd.f32 %v10841, %v11033
    %v11035 = vpop.f32.mrb[0].mxu0
    %v11036 = vadd.f32 %v10843, %v11035
    %v11037 = vpop.f32.mrb[0].mxu0
    %v11038 = vadd.f32 %v10845, %v11037
    %v11039 = vpop.f32.mrb[0].mxu0
    %v11040 = vadd.f32 %v10847, %v11039
    %11041 = vmatprep.mubr.bf16.mxu0 %v6936
    %11042 = vmatmul.mubr.bf16.gmra.mrb[0].mxu0 %v6935
    %v11043 = vpop.f32.mrb[0].mxu0
    %v11044 = vadd.f32 %v10851, %v11043
    %v11045 = vpop.f32.mrb[0].mxu0
    %v11046 = vadd.f32 %v10853, %v11045
    %v11047 = vpop.f32.mrb[0].mxu0
    %v11048 = vadd.f32 %v10855, %v11047
    %v11049 = vpop.f32.mrb[0].mxu0
    %v11050 = vadd.f32 %v10857, %v11049
    %11051 = vmatprep.mubr.bf16.mxu0 %v6952
    %11052 = vmatmul.mubr.bf16.gmra.mrb[0].mxu0 %v6951
    %v11053 = vpop.f32.mrb[0].mxu0
    %v11054 = vadd.f32 %v10861, %v11053
    %v11055 = vpop.f32.mrb[0].mxu0
    %v11056 = vadd.f32 %v10863, %v11055
    %v11057 = vpop.f32.mrb[0].mxu0
    %v11058 = vadd.f32 %v10865, %v11057
    %v11059 = vpop.f32.mrb[0].mxu0
    %v11060 = vadd.f32 %v10867, %v11059
    %11061 = vmatprep.mubr.bf16.mxu0 %v6968
    %11062 = vmatmul.mubr.bf16.gmra.mrb[0].mxu0 %v6967
    %v11063 = vpop.f32.mrb[0].mxu0
    %v11064 = vadd.f32 %v10871, %v11063
    %v11065 = vpop.f32.mrb[0].mxu0
    %v11066 = vadd.f32 %v10873, %v11065
    %v11067 = vpop.f32.mrb[0].mxu0
    %v11068 = vadd.f32 %v10875, %v11067
    %v11069 = vpop.f32.mrb[0].mxu0
    %v11070 = vadd.f32 %v10877, %v11069
    %11071 = vmatprep.mubr.bf16.mxu0 %v6984
    %11072 = vmatmul.mubr.bf16.gmra.mrb[0].mxu0 %v6983
    %v11073 = vpop.f32.mrb[0].mxu0
    %v11074 = vadd.f32 %v10881, %v11073
    %v11075 = vpop.f32.mrb[0].mxu0
    %v11076 = vadd.f32 %v10883, %v11075
    %v11077 = vpop.f32.mrb[0].mxu0
    %v11078 = vadd.f32 %v10885, %v11077
    %v11079 = vpop.f32.mrb[0].mxu0
    %v11080 = vadd.f32 %v10887, %v11079
    %11081 = vmatprep.mubr.bf16.mxu0 %v7000
    %11082 = vmatmul.mubr.bf16.gmra.mrb[0].mxu0 %v6999
    %v11083 = vpop.f32.mrb[0].mxu0
    %v11084 = vadd.f32 %v10891, %v11083
    %v11085 = vpop.f32.mrb[0].mxu0
    %v11086 = vadd.f32 %v10893, %v11085
    %v11087 = vpop.f32.mrb[0].mxu0
    %v11088 = vadd.f32 %v10895, %v11087
    %v11089 = vpop.f32.mrb[0].mxu0
    %v11090 = vadd.f32 %v10897, %v11089
    %11091 = vmatprep.mubr.bf16.mxu0 %v7016
    %11092 = vmatmul.mubr.bf16.gmra.mrb[0].mxu0 %v7015
    %v11093 = vpop.f32.mrb[0].mxu0
    %v11094 = vadd.f32 %v10901, %v11093
    %v11095 = vpop.f32.mrb[0].mxu0
    %v11096 = vadd.f32 %v10903, %v11095
    %v11097 = vpop.f32.mrb[0].mxu0
    %v11098 = vadd.f32 %v10905, %v11097
    %v11099 = vpop.f32.mrb[0].mxu0
    %v11100 = vadd.f32 %v10907, %v11099
    %11101 = vmatprep.mubr.bf16.mxu0 %v7032
    %11102 = vmatmul.mubr.bf16.gmra.mrb[0].mxu0 %v7031
    %v11103 = vpop.f32.mrb[0].mxu0
    %v11104 = vadd.f32 %v10911, %v11103
    %v11105 = vpop.f32.mrb[0].mxu0
    %v11106 = vadd.f32 %v10913, %v11105
    %v11107 = vpop.f32.mrb[0].mxu0
    %v11108 = vadd.f32 %v10915, %v11107
    %v11109 = vpop.f32.mrb[0].mxu0
    %v11110 = vadd.f32 %v10917, %v11109
    %11111 = vmatprep.mubr.bf16.mxu0 %v7048
    %11112 = vmatmul.mubr.bf16.gmra.mrb[0].mxu0 %v7047
    %v11113 = vpop.f32.mrb[0].mxu0
    %v11114 = vadd.f32 %v10921, %v11113
    %v11115 = vpop.f32.mrb[0].mxu0
    %v11116 = vadd.f32 %v10923, %v11115
    %v11117 = vpop.f32.mrb[0].mxu0
    %v11118 = vadd.f32 %v10925, %v11117
    %v11119 = vpop.f32.mrb[0].mxu0
    %v11120 = vadd.f32 %v10927, %v11119
    %11121 = vmatprep.mubr.bf16.mxu0 %v7064
    %11122 = vmatmul.mubr.bf16.gmra.mrb[0].mxu0 %v7063
    %v11123 = vpop.f32.mrb[0].mxu0
    %v11124 = vadd.f32 %v10931, %v11123
    %v11125 = vpop.f32.mrb[0].mxu0
    %v11126 = vadd.f32 %v10933, %v11125
    %v11127 = vpop.f32.mrb[0].mxu0
    %v11128 = vadd.f32 %v10935, %v11127
    %v11129 = vpop.f32.mrb[0].mxu0
    %v11130 = vadd.f32 %v10937, %v11129
    %11131 = vmatprep.mubr.bf16.mxu0 %v7080
    %11132 = vmatmul.mubr.bf16.gmra.mrb[0].mxu0 %v7079
    %v11133 = vpop.f32.mrb[0].mxu0
    %v11134 = vadd.f32 %v10941, %v11133
    %v11135 = vpop.f32.mrb[0].mxu0
    %v11136 = vadd.f32 %v10943, %v11135
    %v11137 = vpop.f32.mrb[0].mxu0
    %v11138 = vadd.f32 %v10945, %v11137
    %v11139 = vpop.f32.mrb[0].mxu0
    %v11140 = vadd.f32 %v10947, %v11139
    %11141 = vmatprep.mubr.bf16.mxu0 %v7096
    %11142 = vmatmul.mubr.bf16.gmra.mrb[0].mxu0 %v7095
    %v11143 = vpop.f32.mrb[0].mxu0
    %v11144 = vadd.f32 %v10951, %v11143
    %v11145 = vpop.f32.mrb[0].mxu0
    %v11146 = vadd.f32 %v10953, %v11145
    %v11147 = vpop.f32.mrb[0].mxu0
    %v11148 = vadd.f32 %v10955, %v11147
    %v11149 = vpop.f32.mrb[0].mxu0
    %v11150 = vadd.f32 %v10957, %v11149
    %11151 = vmatprep.mubr.bf16.mxu0 %v7112
    %11152 = vmatmul.mubr.bf16.gmra.mrb[0].mxu0 %v7111
    %v11153 = vpop.f32.mrb[0].mxu0
    %v11154 = vadd.f32 %v10961, %v11153
    %v11155 = vpop.f32.mrb[0].mxu0
    %v11156 = vadd.f32 %v10963, %v11155
    %v11157 = vpop.f32.mrb[0].mxu0
    %v11158 = vadd.f32 %v10965, %v11157
    %v11159 = vpop.f32.mrb[0].mxu0
    %v11160 = vadd.f32 %v10967, %v11159
    %11161 = vmatprep.mubr.bf16.mxu0 %v7128
    %11162 = vmatmul.mubr.bf16.gmra.mrb[0].mxu0 %v7127
    %v11163 = vpop.f32.mrb[0].mxu0
    %v11164 = vadd.f32 %v10971, %v11163
    %v11165 = vpop.f32.mrb[0].mxu0
    %v11166 = vadd.f32 %v10973, %v11165
    %v11167 = vpop.f32.mrb[0].mxu0
    %v11168 = vadd.f32 %v10975, %v11167
    %v11169 = vpop.f32.mrb[0].mxu0
    %v11170 = vadd.f32 %v10977, %v11169
    %11171 = vdwg.mxu0
    %11172 = vmatprep.subr.bf16.mxu0 %v9504
    %11173 = vmatpush1.bf16.msra.mxu0 %v9503
    %11174 = vmatprep.subr.bf16.mxu0 %v9508
    %11175 = vmatpush1.bf16.msra.mxu0 %v9507
    %11176 = vmatprep.subr.bf16.mxu0 %v9512
    %11177 = vmatpush1.bf16.msra.mxu0 %v9511
    %11178 = vmatprep.subr.bf16.mxu0 %v9516
    %11179 = vmatpush1.bf16.msra.mxu0 %v9515
    %11180 = vmatprep.subr.bf16.mxu0 %v9520
    %11181 = vmatpush1.bf16.msra.mxu0 %v9519
    %11182 = vmatprep.subr.bf16.mxu0 %v9524
    %11183 = vmatpush1.bf16.msra.mxu0 %v9523
    %11184 = vmatprep.subr.bf16.mxu0 %v9528
    %11185 = vmatpush1.bf16.msra.mxu0 %v9527
    %11186 = vmatprep.subr.bf16.mxu0 %v9532
    %11187 = vmatpush1.bf16.msra.mxu0 %v9531
    %11188 = vmatprep.subr.bf16.mxu0 %v9536
    %11189 = vmatpush1.bf16.msra.mxu0 %v9535
    %11190 = vmatprep.subr.bf16.mxu0 %v9540
    %11191 = vmatpush1.bf16.msra.mxu0 %v9539
    %11192 = vmatprep.subr.bf16.mxu0 %v9544
    %11193 = vmatpush1.bf16.msra.mxu0 %v9543
    %11194 = vmatprep.subr.bf16.mxu0 %v9548
    %11195 = vmatpush1.bf16.msra.mxu0 %v9547
    %11196 = vmatprep.subr.bf16.mxu0 %v9552
    %11197 = vmatpush1.bf16.msra.mxu0 %v9551
    %11198 = vmatprep.subr.bf16.mxu0 %v9556
    %11199 = vmatpush1.bf16.msra.mxu0 %v9555
    %11200 = vmatprep.subr.bf16.mxu0 %v9560
    %11201 = vmatpush1.bf16.msra.mxu0 %v9559
    %11202 = vmatprep.subr.bf16.mxu0 %v9564
    %11203 = vmatpush1.bf16.msra.mxu0 %v9563
    %11204 = vmatprep.mubr.bf16.mxu0 %v6890
    %11205 = vmatmul.mubr.bf16.gmra.mrb[0].mxu0 %v6889
    %v11206 = vpop.f32.mrb[0].mxu0
    %v11207 = vadd.f32 %v11014, %v11206
    %v11208 = vpop.f32.mrb[0].mxu0
    %v11209 = vadd.f32 %v11016, %v11208
    %v11210 = vpop.f32.mrb[0].mxu0
    %v11211 = vadd.f32 %v11018, %v11210
    %v11212 = vpop.f32.mrb[0].mxu0
    %v11213 = vadd.f32 %v11020, %v11212
    %11214 = vmatprep.mubr.bf16.mxu0 %v6906
    %11215 = vmatmul.mubr.bf16.gmra.mrb[0].mxu0 %v6905
    %v11216 = vpop.f32.mrb[0].mxu0
    %v11217 = vadd.f32 %v11024, %v11216
    %v11218 = vpop.f32.mrb[0].mxu0
    %v11219 = vadd.f32 %v11026, %v11218
    %v11220 = vpop.f32.mrb[0].mxu0
    %v11221 = vadd.f32 %v11028, %v11220
    %v11222 = vpop.f32.mrb[0].mxu0
    %v11223 = vadd.f32 %v11030, %v11222
    %11224 = vmatprep.mubr.bf16.mxu0 %v6922
    %11225 = vmatmul.mubr.bf16.gmra.mrb[0].mxu0 %v6921
    %v11226 = vpop.f32.mrb[0].mxu0
    %v11227 = vadd.f32 %v11034, %v11226
    %v11228 = vpop.f32.mrb[0].mxu0
    %v11229 = vadd.f32 %v11036, %v11228
    %v11230 = vpop.f32.mrb[0].mxu0
    %v11231 = vadd.f32 %v11038, %v11230
    %v11232 = vpop.f32.mrb[0].mxu0
    %v11233 = vadd.f32 %v11040, %v11232
    %11234 = vmatprep.mubr.bf16.mxu0 %v6938
    %11235 = vmatmul.mubr.bf16.gmra.mrb[0].mxu0 %v6937
    %v11236 = vpop.f32.mrb[0].mxu0
    %v11237 = vadd.f32 %v11044, %v11236
    %v11238 = vpop.f32.mrb[0].mxu0
    %v11239 = vadd.f32 %v11046, %v11238
    %v11240 = vpop.f32.mrb[0].mxu0
    %v11241 = vadd.f32 %v11048, %v11240
    %v11242 = vpop.f32.mrb[0].mxu0
    %v11243 = vadd.f32 %v11050, %v11242
    %11244 = vmatprep.mubr.bf16.mxu0 %v6954
    %11245 = vmatmul.mubr.bf16.gmra.mrb[0].mxu0 %v6953
    %v11246 = vpop.f32.mrb[0].mxu0
    %v11247 = vadd.f32 %v11054, %v11246
    %v11248 = vpop.f32.mrb[0].mxu0
    %v11249 = vadd.f32 %v11056, %v11248
    %v11250 = vpop.f32.mrb[0].mxu0
    %v11251 = vadd.f32 %v11058, %v11250
    %v11252 = vpop.f32.mrb[0].mxu0
    %v11253 = vadd.f32 %v11060, %v11252
    %11254 = vmatprep.mubr.bf16.mxu0 %v6970
    %11255 = vmatmul.mubr.bf16.gmra.mrb[0].mxu0 %v6969
    %v11256 = vpop.f32.mrb[0].mxu0
    %v11257 = vadd.f32 %v11064, %v11256
    %v11258 = vpop.f32.mrb[0].mxu0
    %v11259 = vadd.f32 %v11066, %v11258
    %v11260 = vpop.f32.mrb[0].mxu0
    %v11261 = vadd.f32 %v11068, %v11260
    %v11262 = vpop.f32.mrb[0].mxu0
    %v11263 = vadd.f32 %v11070, %v11262
    %11264 = vmatprep.mubr.bf16.mxu0 %v6986
    %11265 = vmatmul.mubr.bf16.gmra.mrb[0].mxu0 %v6985
    %v11266 = vpop.f32.mrb[0].mxu0
    %v11267 = vadd.f32 %v11074, %v11266
    %v11268 = vpop.f32.mrb[0].mxu0
    %v11269 = vadd.f32 %v11076, %v11268
    %v11270 = vpop.f32.mrb[0].mxu0
    %v11271 = vadd.f32 %v11078, %v11270
    %v11272 = vpop.f32.mrb[0].mxu0
    %v11273 = vadd.f32 %v11080, %v11272
    %11274 = vmatprep.mubr.bf16.mxu0 %v7002
    %11275 = vmatmul.mubr.bf16.gmra.mrb[0].mxu0 %v7001
    %v11276 = vpop.f32.mrb[0].mxu0
    %v11277 = vadd.f32 %v11084, %v11276
    %v11278 = vpop.f32.mrb[0].mxu0
    %v11279 = vadd.f32 %v11086, %v11278
    %v11280 = vpop.f32.mrb[0].mxu0
    %v11281 = vadd.f32 %v11088, %v11280
    %v11282 = vpop.f32.mrb[0].mxu0
    %v11283 = vadd.f32 %v11090, %v11282
    %11284 = vmatprep.mubr.bf16.mxu0 %v7018
    %11285 = vmatmul.mubr.bf16.gmra.mrb[0].mxu0 %v7017
    %v11286 = vpop.f32.mrb[0].mxu0
    %v11287 = vadd.f32 %v11094, %v11286
    %v11288 = vpop.f32.mrb[0].mxu0
    %v11289 = vadd.f32 %v11096, %v11288
    %v11290 = vpop.f32.mrb[0].mxu0
    %v11291 = vadd.f32 %v11098, %v11290
    %v11292 = vpop.f32.mrb[0].mxu0
    %v11293 = vadd.f32 %v11100, %v11292
    %11294 = vmatprep.mubr.bf16.mxu0 %v7034
    %11295 = vmatmul.mubr.bf16.gmra.mrb[0].mxu0 %v7033
    %v11296 = vpop.f32.mrb[0].mxu0
    %v11297 = vadd.f32 %v11104, %v11296
    %v11298 = vpop.f32.mrb[0].mxu0
    %v11299 = vadd.f32 %v11106, %v11298
    %v11300 = vpop.f32.mrb[0].mxu0
    %v11301 = vadd.f32 %v11108, %v11300
    %v11302 = vpop.f32.mrb[0].mxu0
    %v11303 = vadd.f32 %v11110, %v11302
    %11304 = vmatprep.mubr.bf16.mxu0 %v7050
    %11305 = vmatmul.mubr.bf16.gmra.mrb[0].mxu0 %v7049
    %v11306 = vpop.f32.mrb[0].mxu0
    %v11307 = vadd.f32 %v11114, %v11306
    %v11308 = vpop.f32.mrb[0].mxu0
    %v11309 = vadd.f32 %v11116, %v11308
    %v11310 = vpop.f32.mrb[0].mxu0
    %v11311 = vadd.f32 %v11118, %v11310
    %v11312 = vpop.f32.mrb[0].mxu0
    %v11313 = vadd.f32 %v11120, %v11312
    %11314 = vmatprep.mubr.bf16.mxu0 %v7066
    %11315 = vmatmul.mubr.bf16.gmra.mrb[0].mxu0 %v7065
    %v11316 = vpop.f32.mrb[0].mxu0
    %v11317 = vadd.f32 %v11124, %v11316
    %v11318 = vpop.f32.mrb[0].mxu0
    %v11319 = vadd.f32 %v11126, %v11318
    %v11320 = vpop.f32.mrb[0].mxu0
    %v11321 = vadd.f32 %v11128, %v11320
    %v11322 = vpop.f32.mrb[0].mxu0
    %v11323 = vadd.f32 %v11130, %v11322
    %11324 = vmatprep.mubr.bf16.mxu0 %v7082
    %11325 = vmatmul.mubr.bf16.gmra.mrb[0].mxu0 %v7081
    %v11326 = vpop.f32.mrb[0].mxu0
    %v11327 = vadd.f32 %v11134, %v11326
    %v11328 = vpop.f32.mrb[0].mxu0
    %v11329 = vadd.f32 %v11136, %v11328
    %v11330 = vpop.f32.mrb[0].mxu0
    %v11331 = vadd.f32 %v11138, %v11330
    %v11332 = vpop.f32.mrb[0].mxu0
    %v11333 = vadd.f32 %v11140, %v11332
    %11334 = vmatprep.mubr.bf16.mxu0 %v7098
    %11335 = vmatmul.mubr.bf16.gmra.mrb[0].mxu0 %v7097
    %v11336 = vpop.f32.mrb[0].mxu0
    %v11337 = vadd.f32 %v11144, %v11336
    %v11338 = vpop.f32.mrb[0].mxu0
    %v11339 = vadd.f32 %v11146, %v11338
    %v11340 = vpop.f32.mrb[0].mxu0
    %v11341 = vadd.f32 %v11148, %v11340
    %v11342 = vpop.f32.mrb[0].mxu0
    %v11343 = vadd.f32 %v11150, %v11342
    %11344 = vmatprep.mubr.bf16.mxu0 %v7114
    %11345 = vmatmul.mubr.bf16.gmra.mrb[0].mxu0 %v7113
    %v11346 = vpop.f32.mrb[0].mxu0
    %v11347 = vadd.f32 %v11154, %v11346
    %v11348 = vpop.f32.mrb[0].mxu0
    %v11349 = vadd.f32 %v11156, %v11348
    %v11350 = vpop.f32.mrb[0].mxu0
    %v11351 = vadd.f32 %v11158, %v11350
    %v11352 = vpop.f32.mrb[0].mxu0
    %v11353 = vadd.f32 %v11160, %v11352
    %11354 = vmatprep.mubr.bf16.mxu0 %v7130
    %11355 = vmatmul.mubr.bf16.gmra.mrb[0].mxu0 %v7129
    %v11356 = vpop.f32.mrb[0].mxu0
    %v11357 = vadd.f32 %v11164, %v11356
    %v11358 = vpop.f32.mrb[0].mxu0
    %v11359 = vadd.f32 %v11166, %v11358
    %v11360 = vpop.f32.mrb[0].mxu0
    %v11361 = vadd.f32 %v11168, %v11360
    %v11362 = vpop.f32.mrb[0].mxu0
    %v11363 = vadd.f32 %v11170, %v11362
    %11364 = vdwg.mxu0
    %11365 = vmatprep.subr.bf16.mxu0 %v9568
    %11366 = vmatpush1.bf16.msra.mxu0 %v9567
    %11367 = vmatprep.subr.bf16.mxu0 %v9572
    %11368 = vmatpush1.bf16.msra.mxu0 %v9571
    %11369 = vmatprep.subr.bf16.mxu0 %v9576
    %11370 = vmatpush1.bf16.msra.mxu0 %v9575
    %11371 = vmatprep.subr.bf16.mxu0 %v9580
    %11372 = vmatpush1.bf16.msra.mxu0 %v9579
    %11373 = vmatprep.subr.bf16.mxu0 %v9584
    %11374 = vmatpush1.bf16.msra.mxu0 %v9583
    %11375 = vmatprep.subr.bf16.mxu0 %v9588
    %11376 = vmatpush1.bf16.msra.mxu0 %v9587
    %11377 = vmatprep.subr.bf16.mxu0 %v9592
    %11378 = vmatpush1.bf16.msra.mxu0 %v9591
    %11379 = vmatprep.subr.bf16.mxu0 %v9596
    %11380 = vmatpush1.bf16.msra.mxu0 %v9595
    %11381 = vmatprep.subr.bf16.mxu0 %v9600
    %11382 = vmatpush1.bf16.msra.mxu0 %v9599
    %11383 = vmatprep.subr.bf16.mxu0 %v9604
    %11384 = vmatpush1.bf16.msra.mxu0 %v9603
    %11385 = vmatprep.subr.bf16.mxu0 %v9608
    %11386 = vmatpush1.bf16.msra.mxu0 %v9607
    %11387 = vmatprep.subr.bf16.mxu0 %v9612
    %11388 = vmatpush1.bf16.msra.mxu0 %v9611
    %11389 = vmatprep.subr.bf16.mxu0 %v9616
    %11390 = vmatpush1.bf16.msra.mxu0 %v9615
    %11391 = vmatprep.subr.bf16.mxu0 %v9620
    %11392 = vmatpush1.bf16.msra.mxu0 %v9619
    %11393 = vmatprep.subr.bf16.mxu0 %v9624
    %11394 = vmatpush1.bf16.msra.mxu0 %v9623
    %11395 = vmatprep.subr.bf16.mxu0 %v9628
    %11396 = vmatpush1.bf16.msra.mxu0 %v9627
    %11397 = vmatprep.mubr.bf16.mxu0 %v6892
    %11398 = vmatmul.mubr.bf16.gmra.mrb[0].mxu0 %v6891
    %v11399 = vpop.f32.mrb[0].mxu0
    %v11400 = vadd.f32 %v11207, %v11399
    %v11401 = vpop.f32.mrb[0].mxu0
    %v11402 = vadd.f32 %v11209, %v11401
    %v11403 = vpop.f32.mrb[0].mxu0
    %v11404 = vadd.f32 %v11211, %v11403
    %v11405 = vpop.f32.mrb[0].mxu0
    %v11406 = vadd.f32 %v11213, %v11405
    %11407 = vmatprep.mubr.bf16.mxu0 %v6908
    %11408 = vmatmul.mubr.bf16.gmra.mrb[0].mxu0 %v6907
    %v11409 = vpop.f32.mrb[0].mxu0
    %v11410 = vadd.f32 %v11217, %v11409
    %v11411 = vpop.f32.mrb[0].mxu0
    %v11412 = vadd.f32 %v11219, %v11411
    %v11413 = vpop.f32.mrb[0].mxu0
    %v11414 = vadd.f32 %v11221, %v11413
    %v11415 = vpop.f32.mrb[0].mxu0
    %v11416 = vadd.f32 %v11223, %v11415
    %11417 = vmatprep.mubr.bf16.mxu0 %v6924
    %11418 = vmatmul.mubr.bf16.gmra.mrb[0].mxu0 %v6923
    %v11419 = vpop.f32.mrb[0].mxu0
    %v11420 = vadd.f32 %v11227, %v11419
    %v11421 = vpop.f32.mrb[0].mxu0
    %v11422 = vadd.f32 %v11229, %v11421
    %v11423 = vpop.f32.mrb[0].mxu0
    %v11424 = vadd.f32 %v11231, %v11423
    %v11425 = vpop.f32.mrb[0].mxu0
    %v11426 = vadd.f32 %v11233, %v11425
    %11427 = vmatprep.mubr.bf16.mxu0 %v6940
    %11428 = vmatmul.mubr.bf16.gmra.mrb[0].mxu0 %v6939
    %v11429 = vpop.f32.mrb[0].mxu0
    %v11430 = vadd.f32 %v11237, %v11429
    %v11431 = vpop.f32.mrb[0].mxu0
    %v11432 = vadd.f32 %v11239, %v11431
    %v11433 = vpop.f32.mrb[0].mxu0
    %v11434 = vadd.f32 %v11241, %v11433
    %v11435 = vpop.f32.mrb[0].mxu0
    %v11436 = vadd.f32 %v11243, %v11435
    %11437 = vmatprep.mubr.bf16.mxu0 %v6956
    %11438 = vmatmul.mubr.bf16.gmra.mrb[0].mxu0 %v6955
    %v11439 = vpop.f32.mrb[0].mxu0
    %v11440 = vadd.f32 %v11247, %v11439
    %v11441 = vpop.f32.mrb[0].mxu0
    %v11442 = vadd.f32 %v11249, %v11441
    %v11443 = vpop.f32.mrb[0].mxu0
    %v11444 = vadd.f32 %v11251, %v11443
    %v11445 = vpop.f32.mrb[0].mxu0
    %v11446 = vadd.f32 %v11253, %v11445
    %11447 = vmatprep.mubr.bf16.mxu0 %v6972
    %11448 = vmatmul.mubr.bf16.gmra.mrb[0].mxu0 %v6971
    %v11449 = vpop.f32.mrb[0].mxu0
    %v11450 = vadd.f32 %v11257, %v11449
    %v11451 = vpop.f32.mrb[0].mxu0
    %v11452 = vadd.f32 %v11259, %v11451
    %v11453 = vpop.f32.mrb[0].mxu0
    %v11454 = vadd.f32 %v11261, %v11453
    %v11455 = vpop.f32.mrb[0].mxu0
    %v11456 = vadd.f32 %v11263, %v11455
    %11457 = vmatprep.mubr.bf16.mxu0 %v6988
    %11458 = vmatmul.mubr.bf16.gmra.mrb[0].mxu0 %v6987
    %v11459 = vpop.f32.mrb[0].mxu0
    %v11460 = vadd.f32 %v11267, %v11459
    %v11461 = vpop.f32.mrb[0].mxu0
    %v11462 = vadd.f32 %v11269, %v11461
    %v11463 = vpop.f32.mrb[0].mxu0
    %v11464 = vadd.f32 %v11271, %v11463
    %v11465 = vpop.f32.mrb[0].mxu0
    %v11466 = vadd.f32 %v11273, %v11465
    %11467 = vmatprep.mubr.bf16.mxu0 %v7004
    %11468 = vmatmul.mubr.bf16.gmra.mrb[0].mxu0 %v7003
    %v11469 = vpop.f32.mrb[0].mxu0
    %v11470 = vadd.f32 %v11277, %v11469
    %v11471 = vpop.f32.mrb[0].mxu0
    %v11472 = vadd.f32 %v11279, %v11471
    %v11473 = vpop.f32.mrb[0].mxu0
    %v11474 = vadd.f32 %v11281, %v11473
    %v11475 = vpop.f32.mrb[0].mxu0
    %v11476 = vadd.f32 %v11283, %v11475
    %11477 = vmatprep.mubr.bf16.mxu0 %v7020
    %11478 = vmatmul.mubr.bf16.gmra.mrb[0].mxu0 %v7019
    %v11479 = vpop.f32.mrb[0].mxu0
    %v11480 = vadd.f32 %v11287, %v11479
    %v11481 = vpop.f32.mrb[0].mxu0
    %v11482 = vadd.f32 %v11289, %v11481
    %v11483 = vpop.f32.mrb[0].mxu0
    %v11484 = vadd.f32 %v11291, %v11483
    %v11485 = vpop.f32.mrb[0].mxu0
    %v11486 = vadd.f32 %v11293, %v11485
    %11487 = vmatprep.mubr.bf16.mxu0 %v7036
    %11488 = vmatmul.mubr.bf16.gmra.mrb[0].mxu0 %v7035
    %v11489 = vpop.f32.mrb[0].mxu0
    %v11490 = vadd.f32 %v11297, %v11489
    %v11491 = vpop.f32.mrb[0].mxu0
    %v11492 = vadd.f32 %v11299, %v11491
    %v11493 = vpop.f32.mrb[0].mxu0
    %v11494 = vadd.f32 %v11301, %v11493
    %v11495 = vpop.f32.mrb[0].mxu0
    %v11496 = vadd.f32 %v11303, %v11495
    %11497 = vmatprep.mubr.bf16.mxu0 %v7052
    %11498 = vmatmul.mubr.bf16.gmra.mrb[0].mxu0 %v7051
    %v11499 = vpop.f32.mrb[0].mxu0
    %v11500 = vadd.f32 %v11307, %v11499
    %v11501 = vpop.f32.mrb[0].mxu0
    %v11502 = vadd.f32 %v11309, %v11501
    %v11503 = vpop.f32.mrb[0].mxu0
    %v11504 = vadd.f32 %v11311, %v11503
    %v11505 = vpop.f32.mrb[0].mxu0
    %v11506 = vadd.f32 %v11313, %v11505
    %11507 = vmatprep.mubr.bf16.mxu0 %v7068
    %11508 = vmatmul.mubr.bf16.gmra.mrb[0].mxu0 %v7067
    %v11509 = vpop.f32.mrb[0].mxu0
    %v11510 = vadd.f32 %v11317, %v11509
    %v11511 = vpop.f32.mrb[0].mxu0
    %v11512 = vadd.f32 %v11319, %v11511
    %v11513 = vpop.f32.mrb[0].mxu0
    %v11514 = vadd.f32 %v11321, %v11513
    %v11515 = vpop.f32.mrb[0].mxu0
    %v11516 = vadd.f32 %v11323, %v11515
    %11517 = vmatprep.mubr.bf16.mxu0 %v7084
    %11518 = vmatmul.mubr.bf16.gmra.mrb[0].mxu0 %v7083
    %v11519 = vpop.f32.mrb[0].mxu0
    %v11520 = vadd.f32 %v11327, %v11519
    %v11521 = vpop.f32.mrb[0].mxu0
    %v11522 = vadd.f32 %v11329, %v11521
    %v11523 = vpop.f32.mrb[0].mxu0
    %v11524 = vadd.f32 %v11331, %v11523
    %v11525 = vpop.f32.mrb[0].mxu0
    %v11526 = vadd.f32 %v11333, %v11525
    %11527 = vmatprep.mubr.bf16.mxu0 %v7100
    %11528 = vmatmul.mubr.bf16.gmra.mrb[0].mxu0 %v7099
    %v11529 = vpop.f32.mrb[0].mxu0
    %v11530 = vadd.f32 %v11337, %v11529
    %v11531 = vpop.f32.mrb[0].mxu0
    %v11532 = vadd.f32 %v11339, %v11531
    %v11533 = vpop.f32.mrb[0].mxu0
    %v11534 = vadd.f32 %v11341, %v11533
    %v11535 = vpop.f32.mrb[0].mxu0
    %v11536 = vadd.f32 %v11343, %v11535
    %11537 = vmatprep.mubr.bf16.mxu0 %v7116
    %11538 = vmatmul.mubr.bf16.gmra.mrb[0].mxu0 %v7115
    %v11539 = vpop.f32.mrb[0].mxu0
    %v11540 = vadd.f32 %v11347, %v11539
    %v11541 = vpop.f32.mrb[0].mxu0
    %v11542 = vadd.f32 %v11349, %v11541
    %v11543 = vpop.f32.mrb[0].mxu0
    %v11544 = vadd.f32 %v11351, %v11543
    %v11545 = vpop.f32.mrb[0].mxu0
    %v11546 = vadd.f32 %v11353, %v11545
    %11547 = vmatprep.mubr.bf16.mxu0 %v7132
    %11548 = vmatmul.mubr.bf16.gmra.mrb[0].mxu0 %v7131
    %v11549 = vpop.f32.mrb[0].mxu0
    %v11550 = vadd.f32 %v11357, %v11549
    %v11551 = vpop.f32.mrb[0].mxu0
    %v11552 = vadd.f32 %v11359, %v11551
    %v11553 = vpop.f32.mrb[0].mxu0
    %v11554 = vadd.f32 %v11361, %v11553
    %v11555 = vpop.f32.mrb[0].mxu0
    %v11556 = vadd.f32 %v11363, %v11555
    %11557 = vdwg.mxu0
    %11558 = vmatprep.subr.bf16.mxu0 %v9632
    %11559 = vmatpush1.bf16.msra.mxu0 %v9631
    %11560 = vmatprep.subr.bf16.mxu0 %v9636
    %11561 = vmatpush1.bf16.msra.mxu0 %v9635
    %11562 = vmatprep.subr.bf16.mxu0 %v9640
    %11563 = vmatpush1.bf16.msra.mxu0 %v9639
    %11564 = vmatprep.subr.bf16.mxu0 %v9644
    %11565 = vmatpush1.bf16.msra.mxu0 %v9643
    %11566 = vmatprep.subr.bf16.mxu0 %v9648
    %11567 = vmatpush1.bf16.msra.mxu0 %v9647
    %11568 = vmatprep.subr.bf16.mxu0 %v9652
    %11569 = vmatpush1.bf16.msra.mxu0 %v9651
    %11570 = vmatprep.subr.bf16.mxu0 %v9656
    %11571 = vmatpush1.bf16.msra.mxu0 %v9655
    %11572 = vmatprep.subr.bf16.mxu0 %v9660
    %11573 = vmatpush1.bf16.msra.mxu0 %v9659
    %11574 = vmatprep.subr.bf16.mxu0 %v9664
    %11575 = vmatpush1.bf16.msra.mxu0 %v9663
    %11576 = vmatprep.subr.bf16.mxu0 %v9668
    %11577 = vmatpush1.bf16.msra.mxu0 %v9667
    %11578 = vmatprep.subr.bf16.mxu0 %v9672
    %11579 = vmatpush1.bf16.msra.mxu0 %v9671
    %11580 = vmatprep.subr.bf16.mxu0 %v9676
    %11581 = vmatpush1.bf16.msra.mxu0 %v9675
    %11582 = vmatprep.subr.bf16.mxu0 %v9680
    %11583 = vmatpush1.bf16.msra.mxu0 %v9679
    %11584 = vmatprep.subr.bf16.mxu0 %v9684
    %11585 = vmatpush1.bf16.msra.mxu0 %v9683
    %11586 = vmatprep.subr.bf16.mxu0 %v9688
    %11587 = vmatpush1.bf16.msra.mxu0 %v9687
    %11588 = vmatprep.subr.bf16.mxu0 %v9692
    %11589 = vmatpush1.bf16.msra.mxu0 %v9691
    %11590 = vmatprep.mubr.bf16.mxu0 %v6894
    %11591 = vmatmul.mubr.bf16.gmra.mrb[0].mxu0 %v6893
    %v11592 = vpop.f32.mrb[0].mxu0
    %v11593 = vadd.f32 %v11400, %v11592
    %v11594 = vpop.f32.mrb[0].mxu0
    %v11595 = vadd.f32 %v11402, %v11594
    %v11596 = vpop.f32.mrb[0].mxu0
    %v11597 = vadd.f32 %v11404, %v11596
    %v11598 = vpop.f32.mrb[0].mxu0
    %v11599 = vadd.f32 %v11406, %v11598
    %11600 = vmatprep.mubr.bf16.mxu0 %v6910
    %11601 = vmatmul.mubr.bf16.gmra.mrb[0].mxu0 %v6909
    %v11602 = vpop.f32.mrb[0].mxu0
    %v11603 = vadd.f32 %v11410, %v11602
    %v11604 = vpop.f32.mrb[0].mxu0
    %v11605 = vadd.f32 %v11412, %v11604
    %v11606 = vpop.f32.mrb[0].mxu0
    %v11607 = vadd.f32 %v11414, %v11606
    %v11608 = vpop.f32.mrb[0].mxu0
    %v11609 = vadd.f32 %v11416, %v11608
    %11610 = vmatprep.mubr.bf16.mxu0 %v6926
    %11611 = vmatmul.mubr.bf16.gmra.mrb[0].mxu0 %v6925
    %v11612 = vpop.f32.mrb[0].mxu0
    %v11613 = vadd.f32 %v11420, %v11612
    %v11614 = vpop.f32.mrb[0].mxu0
    %v11615 = vadd.f32 %v11422, %v11614
    %v11616 = vpop.f32.mrb[0].mxu0
    %v11617 = vadd.f32 %v11424, %v11616
    %v11618 = vpop.f32.mrb[0].mxu0
    %v11619 = vadd.f32 %v11426, %v11618
    %11620 = vmatprep.mubr.bf16.mxu0 %v6942
    %11621 = vmatmul.mubr.bf16.gmra.mrb[0].mxu0 %v6941
    %v11622 = vpop.f32.mrb[0].mxu0
    %v11623 = vadd.f32 %v11430, %v11622
    %v11624 = vpop.f32.mrb[0].mxu0
    %v11625 = vadd.f32 %v11432, %v11624
    %v11626 = vpop.f32.mrb[0].mxu0
    %v11627 = vadd.f32 %v11434, %v11626
    %v11628 = vpop.f32.mrb[0].mxu0
    %v11629 = vadd.f32 %v11436, %v11628
    %11630 = vmatprep.mubr.bf16.mxu0 %v6958
    %11631 = vmatmul.mubr.bf16.gmra.mrb[0].mxu0 %v6957
    %v11632 = vpop.f32.mrb[0].mxu0
    %v11633 = vadd.f32 %v11440, %v11632
    %v11634 = vpop.f32.mrb[0].mxu0
    %v11635 = vadd.f32 %v11442, %v11634
    %v11636 = vpop.f32.mrb[0].mxu0
    %v11637 = vadd.f32 %v11444, %v11636
    %v11638 = vpop.f32.mrb[0].mxu0
    %v11639 = vadd.f32 %v11446, %v11638
    %11640 = vmatprep.mubr.bf16.mxu0 %v6974
    %11641 = vmatmul.mubr.bf16.gmra.mrb[0].mxu0 %v6973
    %v11642 = vpop.f32.mrb[0].mxu0
    %v11643 = vadd.f32 %v11450, %v11642
    %v11644 = vpop.f32.mrb[0].mxu0
    %v11645 = vadd.f32 %v11452, %v11644
    %v11646 = vpop.f32.mrb[0].mxu0
    %v11647 = vadd.f32 %v11454, %v11646
    %v11648 = vpop.f32.mrb[0].mxu0
    %v11649 = vadd.f32 %v11456, %v11648
    %11650 = vmatprep.mubr.bf16.mxu0 %v6990
    %11651 = vmatmul.mubr.bf16.gmra.mrb[0].mxu0 %v6989
    %v11652 = vpop.f32.mrb[0].mxu0
    %v11653 = vadd.f32 %v11460, %v11652
    %v11654 = vpop.f32.mrb[0].mxu0
    %v11655 = vadd.f32 %v11462, %v11654
    %v11656 = vpop.f32.mrb[0].mxu0
    %v11657 = vadd.f32 %v11464, %v11656
    %v11658 = vpop.f32.mrb[0].mxu0
    %v11659 = vadd.f32 %v11466, %v11658
    %11660 = vmatprep.mubr.bf16.mxu0 %v7006
    %11661 = vmatmul.mubr.bf16.gmra.mrb[0].mxu0 %v7005
    %v11662 = vpop.f32.mrb[0].mxu0
    %v11663 = vadd.f32 %v11470, %v11662
    %v11664 = vpop.f32.mrb[0].mxu0
    %v11665 = vadd.f32 %v11472, %v11664
    %v11666 = vpop.f32.mrb[0].mxu0
    %v11667 = vadd.f32 %v11474, %v11666
    %v11668 = vpop.f32.mrb[0].mxu0
    %v11669 = vadd.f32 %v11476, %v11668
    %11670 = vmatprep.mubr.bf16.mxu0 %v7022
    %11671 = vmatmul.mubr.bf16.gmra.mrb[0].mxu0 %v7021
    %v11672 = vpop.f32.mrb[0].mxu0
    %v11673 = vadd.f32 %v11480, %v11672
    %v11674 = vpop.f32.mrb[0].mxu0
    %v11675 = vadd.f32 %v11482, %v11674
    %v11676 = vpop.f32.mrb[0].mxu0
    %v11677 = vadd.f32 %v11484, %v11676
    %v11678 = vpop.f32.mrb[0].mxu0
    %v11679 = vadd.f32 %v11486, %v11678
    %11680 = vmatprep.mubr.bf16.mxu0 %v7038
    %11681 = vmatmul.mubr.bf16.gmra.mrb[0].mxu0 %v7037
    %v11682 = vpop.f32.mrb[0].mxu0
    %v11683 = vadd.f32 %v11490, %v11682
    %v11684 = vpop.f32.mrb[0].mxu0
    %v11685 = vadd.f32 %v11492, %v11684
    %v11686 = vpop.f32.mrb[0].mxu0
    %v11687 = vadd.f32 %v11494, %v11686
    %v11688 = vpop.f32.mrb[0].mxu0
    %v11689 = vadd.f32 %v11496, %v11688
    %11690 = vmatprep.mubr.bf16.mxu0 %v7054
    %11691 = vmatmul.mubr.bf16.gmra.mrb[0].mxu0 %v7053
    %v11692 = vpop.f32.mrb[0].mxu0
    %v11693 = vadd.f32 %v11500, %v11692
    %v11694 = vpop.f32.mrb[0].mxu0
    %v11695 = vadd.f32 %v11502, %v11694
    %v11696 = vpop.f32.mrb[0].mxu0
    %v11697 = vadd.f32 %v11504, %v11696
    %v11698 = vpop.f32.mrb[0].mxu0
    %v11699 = vadd.f32 %v11506, %v11698
    %11700 = vmatprep.mubr.bf16.mxu0 %v7070
    %11701 = vmatmul.mubr.bf16.gmra.mrb[0].mxu0 %v7069
    %v11702 = vpop.f32.mrb[0].mxu0
    %v11703 = vadd.f32 %v11510, %v11702
    %v11704 = vpop.f32.mrb[0].mxu0
    %v11705 = vadd.f32 %v11512, %v11704
    %v11706 = vpop.f32.mrb[0].mxu0
    %v11707 = vadd.f32 %v11514, %v11706
    %v11708 = vpop.f32.mrb[0].mxu0
    %v11709 = vadd.f32 %v11516, %v11708
    %11710 = vmatprep.mubr.bf16.mxu0 %v7086
    %11711 = vmatmul.mubr.bf16.gmra.mrb[0].mxu0 %v7085
    %v11712 = vpop.f32.mrb[0].mxu0
    %v11713 = vadd.f32 %v11520, %v11712
    %v11714 = vpop.f32.mrb[0].mxu0
    %v11715 = vadd.f32 %v11522, %v11714
    %v11716 = vpop.f32.mrb[0].mxu0
    %v11717 = vadd.f32 %v11524, %v11716
    %v11718 = vpop.f32.mrb[0].mxu0
    %v11719 = vadd.f32 %v11526, %v11718
    %11720 = vmatprep.mubr.bf16.mxu0 %v7102
    %11721 = vmatmul.mubr.bf16.gmra.mrb[0].mxu0 %v7101
    %v11722 = vpop.f32.mrb[0].mxu0
    %v11723 = vadd.f32 %v11530, %v11722
    %v11724 = vpop.f32.mrb[0].mxu0
    %v11725 = vadd.f32 %v11532, %v11724
    %v11726 = vpop.f32.mrb[0].mxu0
    %v11727 = vadd.f32 %v11534, %v11726
    %v11728 = vpop.f32.mrb[0].mxu0
    %v11729 = vadd.f32 %v11536, %v11728
    %11730 = vmatprep.mubr.bf16.mxu0 %v7118
    %11731 = vmatmul.mubr.bf16.gmra.mrb[0].mxu0 %v7117
    %v11732 = vpop.f32.mrb[0].mxu0
    %v11733 = vadd.f32 %v11540, %v11732
    %v11734 = vpop.f32.mrb[0].mxu0
    %v11735 = vadd.f32 %v11542, %v11734
    %v11736 = vpop.f32.mrb[0].mxu0
    %v11737 = vadd.f32 %v11544, %v11736
    %v11738 = vpop.f32.mrb[0].mxu0
    %v11739 = vadd.f32 %v11546, %v11738
    %11740 = vmatprep.mubr.bf16.mxu0 %v7134
    %11741 = vmatmul.mubr.bf16.gmra.mrb[0].mxu0 %v7133
    %v11742 = vpop.f32.mrb[0].mxu0
    %v11743 = vadd.f32 %v11550, %v11742
    %v11744 = vpop.f32.mrb[0].mxu0
    %v11745 = vadd.f32 %v11552, %v11744
    %v11746 = vpop.f32.mrb[0].mxu0
    %v11747 = vadd.f32 %v11554, %v11746
    %v11748 = vpop.f32.mrb[0].mxu0
    %v11749 = vadd.f32 %v11556, %v11748
    %11750 = vdwg.mxu0
    %11751 = vmatprep.subr.bf16.mxu0 %v9186
    %11752 = vmatpush1.bf16.msra.mxu0 %v9185
    %11753 = vmatprep.subr.bf16.mxu0 %v9190
    %11754 = vmatpush1.bf16.msra.mxu0 %v9189
    %11755 = vmatprep.subr.bf16.mxu0 %v9194
    %11756 = vmatpush1.bf16.msra.mxu0 %v9193
    %11757 = vmatprep.subr.bf16.mxu0 %v9198
    %11758 = vmatpush1.bf16.msra.mxu0 %v9197
    %11759 = vmatprep.subr.bf16.mxu0 %v9202
    %11760 = vmatpush1.bf16.msra.mxu0 %v9201
    %11761 = vmatprep.subr.bf16.mxu0 %v9206
    %11762 = vmatpush1.bf16.msra.mxu0 %v9205
    %11763 = vmatprep.subr.bf16.mxu0 %v9210
    %11764 = vmatpush1.bf16.msra.mxu0 %v9209
    %11765 = vmatprep.subr.bf16.mxu0 %v9214
    %11766 = vmatpush1.bf16.msra.mxu0 %v9213
    %11767 = vmatprep.subr.bf16.mxu0 %v9218
    %11768 = vmatpush1.bf16.msra.mxu0 %v9217
    %11769 = vmatprep.subr.bf16.mxu0 %v9222
    %11770 = vmatpush1.bf16.msra.mxu0 %v9221
    %11771 = vmatprep.subr.bf16.mxu0 %v9226
    %11772 = vmatpush1.bf16.msra.mxu0 %v9225
    %11773 = vmatprep.subr.bf16.mxu0 %v9230
    %11774 = vmatpush1.bf16.msra.mxu0 %v9229
    %11775 = vmatprep.subr.bf16.mxu0 %v9234
    %11776 = vmatpush1.bf16.msra.mxu0 %v9233
    %11777 = vmatprep.subr.bf16.mxu0 %v9238
    %11778 = vmatpush1.bf16.msra.mxu0 %v9237
    %11779 = vmatprep.subr.bf16.mxu0 %v9242
    %11780 = vmatpush1.bf16.msra.mxu0 %v9241
    %11781 = vmatprep.subr.bf16.mxu0 %v9246
    %11782 = vmatpush1.bf16.msra.mxu0 %v9245
    %11783 = vmatprep.mubr.bf16.mxu0 %v6880
    %11784 = vmatmul.mubr.bf16.gmra.mrb[0].mxu0 %v6879
    %v11785 = vpop.f32.mrb[0].mxu0
    %v11786 = vadd.f32 %v17, %v11785
    %v11787 = vpop.f32.mrb[0].mxu0
    %v11788 = vadd.f32 %v18, %v11787
    %v11789 = vpop.f32.mrb[0].mxu0
    %v11790 = vadd.f32 %v21, %v11789
    %v11791 = vpop.f32.mrb[0].mxu0
    %v11792 = vadd.f32 %v22, %v11791
    %11793 = vmatprep.mubr.bf16.mxu0 %v6896
    %11794 = vmatmul.mubr.bf16.gmra.mrb[0].mxu0 %v6895
    %v11795 = vpop.f32.mrb[0].mxu0
    %v11796 = vadd.f32 %v25, %v11795
    %v11797 = vpop.f32.mrb[0].mxu0
    %v11798 = vadd.f32 %v26, %v11797
    %v11799 = vpop.f32.mrb[0].mxu0
    %v11800 = vadd.f32 %v29, %v11799
    %v11801 = vpop.f32.mrb[0].mxu0
    %v11802 = vadd.f32 %v30, %v11801
    %11803 = vmatprep.mubr.bf16.mxu0 %v6912
    %11804 = vmatmul.mubr.bf16.gmra.mrb[0].mxu0 %v6911
    %v11805 = vpop.f32.mrb[0].mxu0
    %v11806 = vadd.f32 %v33, %v11805
    %v11807 = vpop.f32.mrb[0].mxu0
    %v11808 = vadd.f32 %v34, %v11807
    %v11809 = vpop.f32.mrb[0].mxu0
    %v11810 = vadd.f32 %v37, %v11809
    %v11811 = vpop.f32.mrb[0].mxu0
    %v11812 = vadd.f32 %v38, %v11811
    %11813 = vmatprep.mubr.bf16.mxu0 %v6928
    %11814 = vmatmul.mubr.bf16.gmra.mrb[0].mxu0 %v6927
    %v11815 = vpop.f32.mrb[0].mxu0
    %v11816 = vadd.f32 %v41, %v11815
    %v11817 = vpop.f32.mrb[0].mxu0
    %v11818 = vadd.f32 %v42, %v11817
    %v11819 = vpop.f32.mrb[0].mxu0
    %v11820 = vadd.f32 %v45, %v11819
    %v11821 = vpop.f32.mrb[0].mxu0
    %v11822 = vadd.f32 %v46, %v11821
    %11823 = vmatprep.mubr.bf16.mxu0 %v6944
    %11824 = vmatmul.mubr.bf16.gmra.mrb[0].mxu0 %v6943
    %v11825 = vpop.f32.mrb[0].mxu0
    %v11826 = vadd.f32 %v49, %v11825
    %v11827 = vpop.f32.mrb[0].mxu0
    %v11828 = vadd.f32 %v50, %v11827
    %v11829 = vpop.f32.mrb[0].mxu0
    %v11830 = vadd.f32 %v53, %v11829
    %v11831 = vpop.f32.mrb[0].mxu0
    %v11832 = vadd.f32 %v54, %v11831
    %11833 = vmatprep.mubr.bf16.mxu0 %v6960
    %11834 = vmatmul.mubr.bf16.gmra.mrb[0].mxu0 %v6959
    %v11835 = vpop.f32.mrb[0].mxu0
    %v11836 = vadd.f32 %v57, %v11835
    %v11837 = vpop.f32.mrb[0].mxu0
    %v11838 = vadd.f32 %v58, %v11837
    %v11839 = vpop.f32.mrb[0].mxu0
    %v11840 = vadd.f32 %v61, %v11839
    %v11841 = vpop.f32.mrb[0].mxu0
    %v11842 = vadd.f32 %v62, %v11841
    %11843 = vmatprep.mubr.bf16.mxu0 %v6976
    %11844 = vmatmul.mubr.bf16.gmra.mrb[0].mxu0 %v6975
    %v11845 = vpop.f32.mrb[0].mxu0
    %v11846 = vadd.f32 %v65, %v11845
    %v11847 = vpop.f32.mrb[0].mxu0
    %v11848 = vadd.f32 %v66, %v11847
    %v11849 = vpop.f32.mrb[0].mxu0
    %v11850 = vadd.f32 %v69, %v11849
    %v11851 = vpop.f32.mrb[0].mxu0
    %v11852 = vadd.f32 %v70, %v11851
    %11853 = vmatprep.mubr.bf16.mxu0 %v6992
    %11854 = vmatmul.mubr.bf16.gmra.mrb[0].mxu0 %v6991
    %v11855 = vpop.f32.mrb[0].mxu0
    %v11856 = vadd.f32 %v73, %v11855
    %v11857 = vpop.f32.mrb[0].mxu0
    %v11858 = vadd.f32 %v74, %v11857
    %v11859 = vpop.f32.mrb[0].mxu0
    %v11860 = vadd.f32 %v77, %v11859
    %v11861 = vpop.f32.mrb[0].mxu0
    %v11862 = vadd.f32 %v78, %v11861
    %11863 = vmatprep.mubr.bf16.mxu0 %v7008
    %11864 = vmatmul.mubr.bf16.gmra.mrb[0].mxu0 %v7007
    %v11865 = vpop.f32.mrb[0].mxu0
    %v11866 = vadd.f32 %v81, %v11865
    %v11867 = vpop.f32.mrb[0].mxu0
    %v11868 = vadd.f32 %v82, %v11867
    %v11869 = vpop.f32.mrb[0].mxu0
    %v11870 = vadd.f32 %v85, %v11869
    %v11871 = vpop.f32.mrb[0].mxu0
    %v11872 = vadd.f32 %v86, %v11871
    %11873 = vmatprep.mubr.bf16.mxu0 %v7024
    %11874 = vmatmul.mubr.bf16.gmra.mrb[0].mxu0 %v7023
    %v11875 = vpop.f32.mrb[0].mxu0
    %v11876 = vadd.f32 %v89, %v11875
    %v11877 = vpop.f32.mrb[0].mxu0
    %v11878 = vadd.f32 %v90, %v11877
    %v11879 = vpop.f32.mrb[0].mxu0
    %v11880 = vadd.f32 %v93, %v11879
    %v11881 = vpop.f32.mrb[0].mxu0
    %v11882 = vadd.f32 %v94, %v11881
    %11883 = vmatprep.mubr.bf16.mxu0 %v7040
    %11884 = vmatmul.mubr.bf16.gmra.mrb[0].mxu0 %v7039
    %v11885 = vpop.f32.mrb[0].mxu0
    %v11886 = vadd.f32 %v97, %v11885
    %v11887 = vpop.f32.mrb[0].mxu0
    %v11888 = vadd.f32 %v98, %v11887
    %v11889 = vpop.f32.mrb[0].mxu0
    %v11890 = vadd.f32 %v101, %v11889
    %v11891 = vpop.f32.mrb[0].mxu0
    %v11892 = vadd.f32 %v102, %v11891
    %11893 = vmatprep.mubr.bf16.mxu0 %v7056
    %11894 = vmatmul.mubr.bf16.gmra.mrb[0].mxu0 %v7055
    %v11895 = vpop.f32.mrb[0].mxu0
    %v11896 = vadd.f32 %v105, %v11895
    %v11897 = vpop.f32.mrb[0].mxu0
    %v11898 = vadd.f32 %v106, %v11897
    %v11899 = vpop.f32.mrb[0].mxu0
    %v11900 = vadd.f32 %v109, %v11899
    %v11901 = vpop.f32.mrb[0].mxu0
    %v11902 = vadd.f32 %v110, %v11901
    %11903 = vmatprep.mubr.bf16.mxu0 %v7072
    %11904 = vmatmul.mubr.bf16.gmra.mrb[0].mxu0 %v7071
    %v11905 = vpop.f32.mrb[0].mxu0
    %v11906 = vadd.f32 %v113, %v11905
    %v11907 = vpop.f32.mrb[0].mxu0
    %v11908 = vadd.f32 %v114, %v11907
    %v11909 = vpop.f32.mrb[0].mxu0
    %v11910 = vadd.f32 %v117, %v11909
    %v11911 = vpop.f32.mrb[0].mxu0
    %v11912 = vadd.f32 %v118, %v11911
    %11913 = vmatprep.mubr.bf16.mxu0 %v7088
    %11914 = vmatmul.mubr.bf16.gmra.mrb[0].mxu0 %v7087
    %v11915 = vpop.f32.mrb[0].mxu0
    %v11916 = vadd.f32 %v121, %v11915
    %v11917 = vpop.f32.mrb[0].mxu0
    %v11918 = vadd.f32 %v122, %v11917
    %v11919 = vpop.f32.mrb[0].mxu0
    %v11920 = vadd.f32 %v125, %v11919
    %v11921 = vpop.f32.mrb[0].mxu0
    %v11922 = vadd.f32 %v126, %v11921
    %11923 = vmatprep.mubr.bf16.mxu0 %v7104
    %11924 = vmatmul.mubr.bf16.gmra.mrb[0].mxu0 %v7103
    %v11925 = vpop.f32.mrb[0].mxu0
    %v11926 = vadd.f32 %v129, %v11925
    %v11927 = vpop.f32.mrb[0].mxu0
    %v11928 = vadd.f32 %v130, %v11927
    %v11929 = vpop.f32.mrb[0].mxu0
    %v11930 = vadd.f32 %v133, %v11929
    %v11931 = vpop.f32.mrb[0].mxu0
    %v11932 = vadd.f32 %v134, %v11931
    %11933 = vmatprep.mubr.bf16.mxu0 %v7120
    %11934 = vmatmul.mubr.bf16.gmra.mrb[0].mxu0 %v7119
    %v11935 = vpop.f32.mrb[0].mxu0
    %v11936 = vadd.f32 %v137, %v11935
    %v11937 = vpop.f32.mrb[0].mxu0
    %v11938 = vadd.f32 %v138, %v11937
    %v11939 = vpop.f32.mrb[0].mxu0
    %v11940 = vadd.f32 %v141, %v11939
    %v11941 = vpop.f32.mrb[0].mxu0
    %v11942 = vadd.f32 %v142, %v11941
    %11943 = vdwg.mxu0
    %11944 = vmatprep.subr.bf16.mxu0 %v9250
    %11945 = vmatpush1.bf16.msra.mxu0 %v9249
    %11946 = vmatprep.subr.bf16.mxu0 %v9254
    %11947 = vmatpush1.bf16.msra.mxu0 %v9253
    %11948 = vmatprep.subr.bf16.mxu0 %v9258
    %11949 = vmatpush1.bf16.msra.mxu0 %v9257
    %11950 = vmatprep.subr.bf16.mxu0 %v9262
    %11951 = vmatpush1.bf16.msra.mxu0 %v9261
    %11952 = vmatprep.subr.bf16.mxu0 %v9266
    %11953 = vmatpush1.bf16.msra.mxu0 %v9265
    %11954 = vmatprep.subr.bf16.mxu0 %v9270
    %11955 = vmatpush1.bf16.msra.mxu0 %v9269
    %11956 = vmatprep.subr.bf16.mxu0 %v9274
    %11957 = vmatpush1.bf16.msra.mxu0 %v9273
    %11958 = vmatprep.subr.bf16.mxu0 %v9278
    %11959 = vmatpush1.bf16.msra.mxu0 %v9277
    %11960 = vmatprep.subr.bf16.mxu0 %v9282
    %11961 = vmatpush1.bf16.msra.mxu0 %v9281
    %11962 = vmatprep.subr.bf16.mxu0 %v9286
    %11963 = vmatpush1.bf16.msra.mxu0 %v9285
    %11964 = vmatprep.subr.bf16.mxu0 %v9290
    %11965 = vmatpush1.bf16.msra.mxu0 %v9289
    %11966 = vmatprep.subr.bf16.mxu0 %v9294
    %11967 = vmatpush1.bf16.msra.mxu0 %v9293
    %11968 = vmatprep.subr.bf16.mxu0 %v9298
    %11969 = vmatpush1.bf16.msra.mxu0 %v9297
    %11970 = vmatprep.subr.bf16.mxu0 %v9302
    %11971 = vmatpush1.bf16.msra.mxu0 %v9301
    %11972 = vmatprep.subr.bf16.mxu0 %v9306
    %11973 = vmatpush1.bf16.msra.mxu0 %v9305
    %11974 = vmatprep.subr.bf16.mxu0 %v9310
    %11975 = vmatpush1.bf16.msra.mxu0 %v9309
    %11976 = vmatprep.mubr.bf16.mxu0 %v6882
    %11977 = vmatmul.mubr.bf16.gmra.mrb[0].mxu0 %v6881
    %v11978 = vpop.f32.mrb[0].mxu0
    %v11979 = vadd.f32 %v11786, %v11978
    %v11980 = vpop.f32.mrb[0].mxu0
    %v11981 = vadd.f32 %v11788, %v11980
    %v11982 = vpop.f32.mrb[0].mxu0
    %v11983 = vadd.f32 %v11790, %v11982
    %v11984 = vpop.f32.mrb[0].mxu0
    %v11985 = vadd.f32 %v11792, %v11984
    %11986 = vmatprep.mubr.bf16.mxu0 %v6898
    %11987 = vmatmul.mubr.bf16.gmra.mrb[0].mxu0 %v6897
    %v11988 = vpop.f32.mrb[0].mxu0
    %v11989 = vadd.f32 %v11796, %v11988
    %v11990 = vpop.f32.mrb[0].mxu0
    %v11991 = vadd.f32 %v11798, %v11990
    %v11992 = vpop.f32.mrb[0].mxu0
    %v11993 = vadd.f32 %v11800, %v11992
    %v11994 = vpop.f32.mrb[0].mxu0
    %v11995 = vadd.f32 %v11802, %v11994
    %11996 = vmatprep.mubr.bf16.mxu0 %v6914
    %11997 = vmatmul.mubr.bf16.gmra.mrb[0].mxu0 %v6913
    %v11998 = vpop.f32.mrb[0].mxu0
    %v11999 = vadd.f32 %v11806, %v11998
    %v12000 = vpop.f32.mrb[0].mxu0
    %v12001 = vadd.f32 %v11808, %v12000
    %v12002 = vpop.f32.mrb[0].mxu0
    %v12003 = vadd.f32 %v11810, %v12002
    %v12004 = vpop.f32.mrb[0].mxu0
    %v12005 = vadd.f32 %v11812, %v12004
    %12006 = vmatprep.mubr.bf16.mxu0 %v6930
    %12007 = vmatmul.mubr.bf16.gmra.mrb[0].mxu0 %v6929
    %v12008 = vpop.f32.mrb[0].mxu0
    %v12009 = vadd.f32 %v11816, %v12008
    %v12010 = vpop.f32.mrb[0].mxu0
    %v12011 = vadd.f32 %v11818, %v12010
    %v12012 = vpop.f32.mrb[0].mxu0
    %v12013 = vadd.f32 %v11820, %v12012
    %v12014 = vpop.f32.mrb[0].mxu0
    %v12015 = vadd.f32 %v11822, %v12014
    %12016 = vmatprep.mubr.bf16.mxu0 %v6946
    %12017 = vmatmul.mubr.bf16.gmra.mrb[0].mxu0 %v6945
    %v12018 = vpop.f32.mrb[0].mxu0
    %v12019 = vadd.f32 %v11826, %v12018
    %v12020 = vpop.f32.mrb[0].mxu0
    %v12021 = vadd.f32 %v11828, %v12020
    %v12022 = vpop.f32.mrb[0].mxu0
    %v12023 = vadd.f32 %v11830, %v12022
    %v12024 = vpop.f32.mrb[0].mxu0
    %v12025 = vadd.f32 %v11832, %v12024
    %12026 = vmatprep.mubr.bf16.mxu0 %v6962
    %12027 = vmatmul.mubr.bf16.gmra.mrb[0].mxu0 %v6961
    %v12028 = vpop.f32.mrb[0].mxu0
    %v12029 = vadd.f32 %v11836, %v12028
    %v12030 = vpop.f32.mrb[0].mxu0
    %v12031 = vadd.f32 %v11838, %v12030
    %v12032 = vpop.f32.mrb[0].mxu0
    %v12033 = vadd.f32 %v11840, %v12032
    %v12034 = vpop.f32.mrb[0].mxu0
    %v12035 = vadd.f32 %v11842, %v12034
    %12036 = vmatprep.mubr.bf16.mxu0 %v6978
    %12037 = vmatmul.mubr.bf16.gmra.mrb[0].mxu0 %v6977
    %v12038 = vpop.f32.mrb[0].mxu0
    %v12039 = vadd.f32 %v11846, %v12038
    %v12040 = vpop.f32.mrb[0].mxu0
    %v12041 = vadd.f32 %v11848, %v12040
    %v12042 = vpop.f32.mrb[0].mxu0
    %v12043 = vadd.f32 %v11850, %v12042
    %v12044 = vpop.f32.mrb[0].mxu0
    %v12045 = vadd.f32 %v11852, %v12044
    %12046 = vmatprep.mubr.bf16.mxu0 %v6994
    %12047 = vmatmul.mubr.bf16.gmra.mrb[0].mxu0 %v6993
    %v12048 = vpop.f32.mrb[0].mxu0
    %v12049 = vadd.f32 %v11856, %v12048
    %v12050 = vpop.f32.mrb[0].mxu0
    %v12051 = vadd.f32 %v11858, %v12050
    %v12052 = vpop.f32.mrb[0].mxu0
    %v12053 = vadd.f32 %v11860, %v12052
    %v12054 = vpop.f32.mrb[0].mxu0
    %v12055 = vadd.f32 %v11862, %v12054
    %12056 = vmatprep.mubr.bf16.mxu0 %v7010
    %12057 = vmatmul.mubr.bf16.gmra.mrb[0].mxu0 %v7009
    %v12058 = vpop.f32.mrb[0].mxu0
    %v12059 = vadd.f32 %v11866, %v12058
    %v12060 = vpop.f32.mrb[0].mxu0
    %v12061 = vadd.f32 %v11868, %v12060
    %v12062 = vpop.f32.mrb[0].mxu0
    %v12063 = vadd.f32 %v11870, %v12062
    %v12064 = vpop.f32.mrb[0].mxu0
    %v12065 = vadd.f32 %v11872, %v12064
    %12066 = vmatprep.mubr.bf16.mxu0 %v7026
    %12067 = vmatmul.mubr.bf16.gmra.mrb[0].mxu0 %v7025
    %v12068 = vpop.f32.mrb[0].mxu0
    %v12069 = vadd.f32 %v11876, %v12068
    %v12070 = vpop.f32.mrb[0].mxu0
    %v12071 = vadd.f32 %v11878, %v12070
    %v12072 = vpop.f32.mrb[0].mxu0
    %v12073 = vadd.f32 %v11880, %v12072
    %v12074 = vpop.f32.mrb[0].mxu0
    %v12075 = vadd.f32 %v11882, %v12074
    %12076 = vmatprep.mubr.bf16.mxu0 %v7042
    %12077 = vmatmul.mubr.bf16.gmra.mrb[0].mxu0 %v7041
    %v12078 = vpop.f32.mrb[0].mxu0
    %v12079 = vadd.f32 %v11886, %v12078
    %v12080 = vpop.f32.mrb[0].mxu0
    %v12081 = vadd.f32 %v11888, %v12080
    %v12082 = vpop.f32.mrb[0].mxu0
    %v12083 = vadd.f32 %v11890, %v12082
    %v12084 = vpop.f32.mrb[0].mxu0
    %v12085 = vadd.f32 %v11892, %v12084
    %12086 = vmatprep.mubr.bf16.mxu0 %v7058
    %12087 = vmatmul.mubr.bf16.gmra.mrb[0].mxu0 %v7057
    %v12088 = vpop.f32.mrb[0].mxu0
    %v12089 = vadd.f32 %v11896, %v12088
    %v12090 = vpop.f32.mrb[0].mxu0
    %v12091 = vadd.f32 %v11898, %v12090
    %v12092 = vpop.f32.mrb[0].mxu0
    %v12093 = vadd.f32 %v11900, %v12092
    %v12094 = vpop.f32.mrb[0].mxu0
    %v12095 = vadd.f32 %v11902, %v12094
    %12096 = vmatprep.mubr.bf16.mxu0 %v7074
    %12097 = vmatmul.mubr.bf16.gmra.mrb[0].mxu0 %v7073
    %v12098 = vpop.f32.mrb[0].mxu0
    %v12099 = vadd.f32 %v11906, %v12098
    %v12100 = vpop.f32.mrb[0].mxu0
    %v12101 = vadd.f32 %v11908, %v12100
    %v12102 = vpop.f32.mrb[0].mxu0
    %v12103 = vadd.f32 %v11910, %v12102
    %v12104 = vpop.f32.mrb[0].mxu0
    %v12105 = vadd.f32 %v11912, %v12104
    %12106 = vmatprep.mubr.bf16.mxu0 %v7090
    %12107 = vmatmul.mubr.bf16.gmra.mrb[0].mxu0 %v7089
    %v12108 = vpop.f32.mrb[0].mxu0
    %v12109 = vadd.f32 %v11916, %v12108
    %v12110 = vpop.f32.mrb[0].mxu0
    %v12111 = vadd.f32 %v11918, %v12110
    %v12112 = vpop.f32.mrb[0].mxu0
    %v12113 = vadd.f32 %v11920, %v12112
    %v12114 = vpop.f32.mrb[0].mxu0
    %v12115 = vadd.f32 %v11922, %v12114
    %12116 = vmatprep.mubr.bf16.mxu0 %v7106
    %12117 = vmatmul.mubr.bf16.gmra.mrb[0].mxu0 %v7105
    %v12118 = vpop.f32.mrb[0].mxu0
    %v12119 = vadd.f32 %v11926, %v12118
    %v12120 = vpop.f32.mrb[0].mxu0
    %v12121 = vadd.f32 %v11928, %v12120
    %v12122 = vpop.f32.mrb[0].mxu0
    %v12123 = vadd.f32 %v11930, %v12122
    %v12124 = vpop.f32.mrb[0].mxu0
    %v12125 = vadd.f32 %v11932, %v12124
    %12126 = vmatprep.mubr.bf16.mxu0 %v7122
    %12127 = vmatmul.mubr.bf16.gmra.mrb[0].mxu0 %v7121
    %v12128 = vpop.f32.mrb[0].mxu0
    %v12129 = vadd.f32 %v11936, %v12128
    %v12130 = vpop.f32.mrb[0].mxu0
    %v12131 = vadd.f32 %v11938, %v12130
    %v12132 = vpop.f32.mrb[0].mxu0
    %v12133 = vadd.f32 %v11940, %v12132
    %v12134 = vpop.f32.mrb[0].mxu0
    %v12135 = vadd.f32 %v11942, %v12134
    %12136 = vdwg.mxu0
    %12137 = vmatprep.subr.bf16.mxu0 %v9314
    %12138 = vmatpush1.bf16.msra.mxu0 %v9313
    %12139 = vmatprep.subr.bf16.mxu0 %v9318
    %12140 = vmatpush1.bf16.msra.mxu0 %v9317
    %12141 = vmatprep.subr.bf16.mxu0 %v9322
    %12142 = vmatpush1.bf16.msra.mxu0 %v9321
    %12143 = vmatprep.subr.bf16.mxu0 %v9326
    %12144 = vmatpush1.bf16.msra.mxu0 %v9325
    %12145 = vmatprep.subr.bf16.mxu0 %v9330
    %12146 = vmatpush1.bf16.msra.mxu0 %v9329
    %12147 = vmatprep.subr.bf16.mxu0 %v9334
    %12148 = vmatpush1.bf16.msra.mxu0 %v9333
    %12149 = vmatprep.subr.bf16.mxu0 %v9338
    %12150 = vmatpush1.bf16.msra.mxu0 %v9337
    %12151 = vmatprep.subr.bf16.mxu0 %v9342
    %12152 = vmatpush1.bf16.msra.mxu0 %v9341
    %12153 = vmatprep.subr.bf16.mxu0 %v9346
    %12154 = vmatpush1.bf16.msra.mxu0 %v9345
    %12155 = vmatprep.subr.bf16.mxu0 %v9350
    %12156 = vmatpush1.bf16.msra.mxu0 %v9349
    %12157 = vmatprep.subr.bf16.mxu0 %v9354
    %12158 = vmatpush1.bf16.msra.mxu0 %v9353
    %12159 = vmatprep.subr.bf16.mxu0 %v9358
    %12160 = vmatpush1.bf16.msra.mxu0 %v9357
    %12161 = vmatprep.subr.bf16.mxu0 %v9362
    %12162 = vmatpush1.bf16.msra.mxu0 %v9361
    %12163 = vmatprep.subr.bf16.mxu0 %v9366
    %12164 = vmatpush1.bf16.msra.mxu0 %v9365
    %12165 = vmatprep.subr.bf16.mxu0 %v9370
    %12166 = vmatpush1.bf16.msra.mxu0 %v9369
    %12167 = vmatprep.subr.bf16.mxu0 %v9374
    %12168 = vmatpush1.bf16.msra.mxu0 %v9373
    %12169 = vmatprep.mubr.bf16.mxu0 %v6884
    %12170 = vmatmul.mubr.bf16.gmra.mrb[0].mxu0 %v6883
    %v12171 = vpop.f32.mrb[0].mxu0
    %v12172 = vadd.f32 %v11979, %v12171
    %v12173 = vpop.f32.mrb[0].mxu0
    %v12174 = vadd.f32 %v11981, %v12173
    %v12175 = vpop.f32.mrb[0].mxu0
    %v12176 = vadd.f32 %v11983, %v12175
    %v12177 = vpop.f32.mrb[0].mxu0
    %v12178 = vadd.f32 %v11985, %v12177
    %12179 = vmatprep.mubr.bf16.mxu0 %v6900
    %12180 = vmatmul.mubr.bf16.gmra.mrb[0].mxu0 %v6899
    %v12181 = vpop.f32.mrb[0].mxu0
    %v12182 = vadd.f32 %v11989, %v12181
    %v12183 = vpop.f32.mrb[0].mxu0
    %v12184 = vadd.f32 %v11991, %v12183
    %v12185 = vpop.f32.mrb[0].mxu0
    %v12186 = vadd.f32 %v11993, %v12185
    %v12187 = vpop.f32.mrb[0].mxu0
    %v12188 = vadd.f32 %v11995, %v12187
    %12189 = vmatprep.mubr.bf16.mxu0 %v6916
    %12190 = vmatmul.mubr.bf16.gmra.mrb[0].mxu0 %v6915
    %v12191 = vpop.f32.mrb[0].mxu0
    %v12192 = vadd.f32 %v11999, %v12191
    %v12193 = vpop.f32.mrb[0].mxu0
    %v12194 = vadd.f32 %v12001, %v12193
    %v12195 = vpop.f32.mrb[0].mxu0
    %v12196 = vadd.f32 %v12003, %v12195
    %v12197 = vpop.f32.mrb[0].mxu0
    %v12198 = vadd.f32 %v12005, %v12197
    %12199 = vmatprep.mubr.bf16.mxu0 %v6932
    %12200 = vmatmul.mubr.bf16.gmra.mrb[0].mxu0 %v6931
    %v12201 = vpop.f32.mrb[0].mxu0
    %v12202 = vadd.f32 %v12009, %v12201
    %v12203 = vpop.f32.mrb[0].mxu0
    %v12204 = vadd.f32 %v12011, %v12203
    %v12205 = vpop.f32.mrb[0].mxu0
    %v12206 = vadd.f32 %v12013, %v12205
    %v12207 = vpop.f32.mrb[0].mxu0
    %v12208 = vadd.f32 %v12015, %v12207
    %12209 = vmatprep.mubr.bf16.mxu0 %v6948
    %12210 = vmatmul.mubr.bf16.gmra.mrb[0].mxu0 %v6947
    %v12211 = vpop.f32.mrb[0].mxu0
    %v12212 = vadd.f32 %v12019, %v12211
    %v12213 = vpop.f32.mrb[0].mxu0
    %v12214 = vadd.f32 %v12021, %v12213
    %v12215 = vpop.f32.mrb[0].mxu0
    %v12216 = vadd.f32 %v12023, %v12215
    %v12217 = vpop.f32.mrb[0].mxu0
    %v12218 = vadd.f32 %v12025, %v12217
    %12219 = vmatprep.mubr.bf16.mxu0 %v6964
    %12220 = vmatmul.mubr.bf16.gmra.mrb[0].mxu0 %v6963
    %v12221 = vpop.f32.mrb[0].mxu0
    %v12222 = vadd.f32 %v12029, %v12221
    %v12223 = vpop.f32.mrb[0].mxu0
    %v12224 = vadd.f32 %v12031, %v12223
    %v12225 = vpop.f32.mrb[0].mxu0
    %v12226 = vadd.f32 %v12033, %v12225
    %v12227 = vpop.f32.mrb[0].mxu0
    %v12228 = vadd.f32 %v12035, %v12227
    %12229 = vmatprep.mubr.bf16.mxu0 %v6980
    %12230 = vmatmul.mubr.bf16.gmra.mrb[0].mxu0 %v6979
    %v12231 = vpop.f32.mrb[0].mxu0
    %v12232 = vadd.f32 %v12039, %v12231
    %v12233 = vpop.f32.mrb[0].mxu0
    %v12234 = vadd.f32 %v12041, %v12233
    %v12235 = vpop.f32.mrb[0].mxu0
    %v12236 = vadd.f32 %v12043, %v12235
    %v12237 = vpop.f32.mrb[0].mxu0
    %v12238 = vadd.f32 %v12045, %v12237
    %12239 = vmatprep.mubr.bf16.mxu0 %v6996
    %12240 = vmatmul.mubr.bf16.gmra.mrb[0].mxu0 %v6995
    %v12241 = vpop.f32.mrb[0].mxu0
    %v12242 = vadd.f32 %v12049, %v12241
    %v12243 = vpop.f32.mrb[0].mxu0
    %v12244 = vadd.f32 %v12051, %v12243
    %v12245 = vpop.f32.mrb[0].mxu0
    %v12246 = vadd.f32 %v12053, %v12245
    %v12247 = vpop.f32.mrb[0].mxu0
    %v12248 = vadd.f32 %v12055, %v12247
    %12249 = vmatprep.mubr.bf16.mxu0 %v7012
    %12250 = vmatmul.mubr.bf16.gmra.mrb[0].mxu0 %v7011
    %v12251 = vpop.f32.mrb[0].mxu0
    %v12252 = vadd.f32 %v12059, %v12251
    %v12253 = vpop.f32.mrb[0].mxu0
    %v12254 = vadd.f32 %v12061, %v12253
    %v12255 = vpop.f32.mrb[0].mxu0
    %v12256 = vadd.f32 %v12063, %v12255
    %v12257 = vpop.f32.mrb[0].mxu0
    %v12258 = vadd.f32 %v12065, %v12257
    %12259 = vmatprep.mubr.bf16.mxu0 %v7028
    %12260 = vmatmul.mubr.bf16.gmra.mrb[0].mxu0 %v7027
    %v12261 = vpop.f32.mrb[0].mxu0
    %v12262 = vadd.f32 %v12069, %v12261
    %v12263 = vpop.f32.mrb[0].mxu0
    %v12264 = vadd.f32 %v12071, %v12263
    %v12265 = vpop.f32.mrb[0].mxu0
    %v12266 = vadd.f32 %v12073, %v12265
    %v12267 = vpop.f32.mrb[0].mxu0
    %v12268 = vadd.f32 %v12075, %v12267
    %12269 = vmatprep.mubr.bf16.mxu0 %v7044
    %12270 = vmatmul.mubr.bf16.gmra.mrb[0].mxu0 %v7043
    %v12271 = vpop.f32.mrb[0].mxu0
    %v12272 = vadd.f32 %v12079, %v12271
    %v12273 = vpop.f32.mrb[0].mxu0
    %v12274 = vadd.f32 %v12081, %v12273
    %v12275 = vpop.f32.mrb[0].mxu0
    %v12276 = vadd.f32 %v12083, %v12275
    %v12277 = vpop.f32.mrb[0].mxu0
    %v12278 = vadd.f32 %v12085, %v12277
    %12279 = vmatprep.mubr.bf16.mxu0 %v7060
    %12280 = vmatmul.mubr.bf16.gmra.mrb[0].mxu0 %v7059
    %v12281 = vpop.f32.mrb[0].mxu0
    %v12282 = vadd.f32 %v12089, %v12281
    %v12283 = vpop.f32.mrb[0].mxu0
    %v12284 = vadd.f32 %v12091, %v12283
    %v12285 = vpop.f32.mrb[0].mxu0
    %v12286 = vadd.f32 %v12093, %v12285
    %v12287 = vpop.f32.mrb[0].mxu0
    %v12288 = vadd.f32 %v12095, %v12287
    %12289 = vmatprep.mubr.bf16.mxu0 %v7076
    %12290 = vmatmul.mubr.bf16.gmra.mrb[0].mxu0 %v7075
    %v12291 = vpop.f32.mrb[0].mxu0
    %v12292 = vadd.f32 %v12099, %v12291
    %v12293 = vpop.f32.mrb[0].mxu0
    %v12294 = vadd.f32 %v12101, %v12293
    %v12295 = vpop.f32.mrb[0].mxu0
    %v12296 = vadd.f32 %v12103, %v12295
    %v12297 = vpop.f32.mrb[0].mxu0
    %v12298 = vadd.f32 %v12105, %v12297
    %12299 = vmatprep.mubr.bf16.mxu0 %v7092
    %12300 = vmatmul.mubr.bf16.gmra.mrb[0].mxu0 %v7091
    %v12301 = vpop.f32.mrb[0].mxu0
    %v12302 = vadd.f32 %v12109, %v12301
    %v12303 = vpop.f32.mrb[0].mxu0
    %v12304 = vadd.f32 %v12111, %v12303
    %v12305 = vpop.f32.mrb[0].mxu0
    %v12306 = vadd.f32 %v12113, %v12305
    %v12307 = vpop.f32.mrb[0].mxu0
    %v12308 = vadd.f32 %v12115, %v12307
    %12309 = vmatprep.mubr.bf16.mxu0 %v7108
    %12310 = vmatmul.mubr.bf16.gmra.mrb[0].mxu0 %v7107
    %v12311 = vpop.f32.mrb[0].mxu0
    %v12312 = vadd.f32 %v12119, %v12311
    %v12313 = vpop.f32.mrb[0].mxu0
    %v12314 = vadd.f32 %v12121, %v12313
    %v12315 = vpop.f32.mrb[0].mxu0
    %v12316 = vadd.f32 %v12123, %v12315
    %v12317 = vpop.f32.mrb[0].mxu0
    %v12318 = vadd.f32 %v12125, %v12317
    %12319 = vmatprep.mubr.bf16.mxu0 %v7124
    %12320 = vmatmul.mubr.bf16.gmra.mrb[0].mxu0 %v7123
    %v12321 = vpop.f32.mrb[0].mxu0
    %v12322 = vadd.f32 %v12129, %v12321
    %v12323 = vpop.f32.mrb[0].mxu0
    %v12324 = vadd.f32 %v12131, %v12323
    %v12325 = vpop.f32.mrb[0].mxu0
    %v12326 = vadd.f32 %v12133, %v12325
    %v12327 = vpop.f32.mrb[0].mxu0
    %v12328 = vadd.f32 %v12135, %v12327
    %12329 = vdwg.mxu0
    %12330 = vmatprep.subr.bf16.mxu0 %v9378
    %12331 = vmatpush1.bf16.msra.mxu0 %v9377
    %12332 = vmatprep.subr.bf16.mxu0 %v9382
    %12333 = vmatpush1.bf16.msra.mxu0 %v9381
    %12334 = vmatprep.subr.bf16.mxu0 %v9386
    %12335 = vmatpush1.bf16.msra.mxu0 %v9385
    %12336 = vmatprep.subr.bf16.mxu0 %v9390
    %12337 = vmatpush1.bf16.msra.mxu0 %v9389
    %12338 = vmatprep.subr.bf16.mxu0 %v9394
    %12339 = vmatpush1.bf16.msra.mxu0 %v9393
    %12340 = vmatprep.subr.bf16.mxu0 %v9398
    %12341 = vmatpush1.bf16.msra.mxu0 %v9397
    %12342 = vmatprep.subr.bf16.mxu0 %v9402
    %12343 = vmatpush1.bf16.msra.mxu0 %v9401
    %12344 = vmatprep.subr.bf16.mxu0 %v9406
    %12345 = vmatpush1.bf16.msra.mxu0 %v9405
    %12346 = vmatprep.subr.bf16.mxu0 %v9410
    %12347 = vmatpush1.bf16.msra.mxu0 %v9409
    %12348 = vmatprep.subr.bf16.mxu0 %v9414
    %12349 = vmatpush1.bf16.msra.mxu0 %v9413
    %12350 = vmatprep.subr.bf16.mxu0 %v9418
    %12351 = vmatpush1.bf16.msra.mxu0 %v9417
    %12352 = vmatprep.subr.bf16.mxu0 %v9422
    %12353 = vmatpush1.bf16.msra.mxu0 %v9421
    %12354 = vmatprep.subr.bf16.mxu0 %v9426
    %12355 = vmatpush1.bf16.msra.mxu0 %v9425
    %12356 = vmatprep.subr.bf16.mxu0 %v9430
    %12357 = vmatpush1.bf16.msra.mxu0 %v9429
    %12358 = vmatprep.subr.bf16.mxu0 %v9434
    %12359 = vmatpush1.bf16.msra.mxu0 %v9433
    %12360 = vmatprep.subr.bf16.mxu0 %v9438
    %12361 = vmatpush1.bf16.msra.mxu0 %v9437
    %12362 = vmatprep.mubr.bf16.mxu0 %v6886
    %12363 = vmatmul.mubr.bf16.gmra.mrb[0].mxu0 %v6885
    %v12364 = vpop.f32.mrb[0].mxu0
    %v12365 = vadd.f32 %v12172, %v12364
    %v12366 = vpop.f32.mrb[0].mxu0
    %v12367 = vadd.f32 %v12174, %v12366
    %v12368 = vpop.f32.mrb[0].mxu0
    %v12369 = vadd.f32 %v12176, %v12368
    %v12370 = vpop.f32.mrb[0].mxu0
    %v12371 = vadd.f32 %v12178, %v12370
    %12372 = vmatprep.mubr.bf16.mxu0 %v6902
    %12373 = vmatmul.mubr.bf16.gmra.mrb[0].mxu0 %v6901
    %v12374 = vpop.f32.mrb[0].mxu0
    %v12375 = vadd.f32 %v12182, %v12374
    %v12376 = vpop.f32.mrb[0].mxu0
    %v12377 = vadd.f32 %v12184, %v12376
    %v12378 = vpop.f32.mrb[0].mxu0
    %v12379 = vadd.f32 %v12186, %v12378
    %v12380 = vpop.f32.mrb[0].mxu0
    %v12381 = vadd.f32 %v12188, %v12380
    %12382 = vmatprep.mubr.bf16.mxu0 %v6918
    %12383 = vmatmul.mubr.bf16.gmra.mrb[0].mxu0 %v6917
    %v12384 = vpop.f32.mrb[0].mxu0
    %v12385 = vadd.f32 %v12192, %v12384
    %v12386 = vpop.f32.mrb[0].mxu0
    %v12387 = vadd.f32 %v12194, %v12386
    %v12388 = vpop.f32.mrb[0].mxu0
    %v12389 = vadd.f32 %v12196, %v12388
    %v12390 = vpop.f32.mrb[0].mxu0
    %v12391 = vadd.f32 %v12198, %v12390
    %12392 = vmatprep.mubr.bf16.mxu0 %v6934
    %12393 = vmatmul.mubr.bf16.gmra.mrb[0].mxu0 %v6933
    %v12394 = vpop.f32.mrb[0].mxu0
    %v12395 = vadd.f32 %v12202, %v12394
    %v12396 = vpop.f32.mrb[0].mxu0
    %v12397 = vadd.f32 %v12204, %v12396
    %v12398 = vpop.f32.mrb[0].mxu0
    %v12399 = vadd.f32 %v12206, %v12398
    %v12400 = vpop.f32.mrb[0].mxu0
    %v12401 = vadd.f32 %v12208, %v12400
    %12402 = vmatprep.mubr.bf16.mxu0 %v6950
    %12403 = vmatmul.mubr.bf16.gmra.mrb[0].mxu0 %v6949
    %v12404 = vpop.f32.mrb[0].mxu0
    %v12405 = vadd.f32 %v12212, %v12404
    %v12406 = vpop.f32.mrb[0].mxu0
    %v12407 = vadd.f32 %v12214, %v12406
    %v12408 = vpop.f32.mrb[0].mxu0
    %v12409 = vadd.f32 %v12216, %v12408
    %v12410 = vpop.f32.mrb[0].mxu0
    %v12411 = vadd.f32 %v12218, %v12410
    %12412 = vmatprep.mubr.bf16.mxu0 %v6966
    %12413 = vmatmul.mubr.bf16.gmra.mrb[0].mxu0 %v6965
    %v12414 = vpop.f32.mrb[0].mxu0
    %v12415 = vadd.f32 %v12222, %v12414
    %v12416 = vpop.f32.mrb[0].mxu0
    %v12417 = vadd.f32 %v12224, %v12416
    %v12418 = vpop.f32.mrb[0].mxu0
    %v12419 = vadd.f32 %v12226, %v12418
    %v12420 = vpop.f32.mrb[0].mxu0
    %v12421 = vadd.f32 %v12228, %v12420
    %12422 = vmatprep.mubr.bf16.mxu0 %v6982
    %12423 = vmatmul.mubr.bf16.gmra.mrb[0].mxu0 %v6981
    %v12424 = vpop.f32.mrb[0].mxu0
    %v12425 = vadd.f32 %v12232, %v12424
    %v12426 = vpop.f32.mrb[0].mxu0
    %v12427 = vadd.f32 %v12234, %v12426
    %v12428 = vpop.f32.mrb[0].mxu0
    %v12429 = vadd.f32 %v12236, %v12428
    %v12430 = vpop.f32.mrb[0].mxu0
    %v12431 = vadd.f32 %v12238, %v12430
    %12432 = vmatprep.mubr.bf16.mxu0 %v6998
    %12433 = vmatmul.mubr.bf16.gmra.mrb[0].mxu0 %v6997
    %v12434 = vpop.f32.mrb[0].mxu0
    %v12435 = vadd.f32 %v12242, %v12434
    %v12436 = vpop.f32.mrb[0].mxu0
    %v12437 = vadd.f32 %v12244, %v12436
    %v12438 = vpop.f32.mrb[0].mxu0
    %v12439 = vadd.f32 %v12246, %v12438
    %v12440 = vpop.f32.mrb[0].mxu0
    %v12441 = vadd.f32 %v12248, %v12440
    %12442 = vmatprep.mubr.bf16.mxu0 %v7014
    %12443 = vmatmul.mubr.bf16.gmra.mrb[0].mxu0 %v7013
    %v12444 = vpop.f32.mrb[0].mxu0
    %v12445 = vadd.f32 %v12252, %v12444
    %v12446 = vpop.f32.mrb[0].mxu0
    %v12447 = vadd.f32 %v12254, %v12446
    %v12448 = vpop.f32.mrb[0].mxu0
    %v12449 = vadd.f32 %v12256, %v12448
    %v12450 = vpop.f32.mrb[0].mxu0
    %v12451 = vadd.f32 %v12258, %v12450
    %12452 = vmatprep.mubr.bf16.mxu0 %v7030
    %12453 = vmatmul.mubr.bf16.gmra.mrb[0].mxu0 %v7029
    %v12454 = vpop.f32.mrb[0].mxu0
    %v12455 = vadd.f32 %v12262, %v12454
    %v12456 = vpop.f32.mrb[0].mxu0
    %v12457 = vadd.f32 %v12264, %v12456
    %v12458 = vpop.f32.mrb[0].mxu0
    %v12459 = vadd.f32 %v12266, %v12458
    %v12460 = vpop.f32.mrb[0].mxu0
    %v12461 = vadd.f32 %v12268, %v12460
    %12462 = vmatprep.mubr.bf16.mxu0 %v7046
    %12463 = vmatmul.mubr.bf16.gmra.mrb[0].mxu0 %v7045
    %v12464 = vpop.f32.mrb[0].mxu0
    %v12465 = vadd.f32 %v12272, %v12464
    %v12466 = vpop.f32.mrb[0].mxu0
    %v12467 = vadd.f32 %v12274, %v12466
    %v12468 = vpop.f32.mrb[0].mxu0
    %v12469 = vadd.f32 %v12276, %v12468
    %v12470 = vpop.f32.mrb[0].mxu0
    %v12471 = vadd.f32 %v12278, %v12470
    %12472 = vmatprep.mubr.bf16.mxu0 %v7062
    %12473 = vmatmul.mubr.bf16.gmra.mrb[0].mxu0 %v7061
    %v12474 = vpop.f32.mrb[0].mxu0
    %v12475 = vadd.f32 %v12282, %v12474
    %v12476 = vpop.f32.mrb[0].mxu0
    %v12477 = vadd.f32 %v12284, %v12476
    %v12478 = vpop.f32.mrb[0].mxu0
    %v12479 = vadd.f32 %v12286, %v12478
    %v12480 = vpop.f32.mrb[0].mxu0
    %v12481 = vadd.f32 %v12288, %v12480
    %12482 = vmatprep.mubr.bf16.mxu0 %v7078
    %12483 = vmatmul.mubr.bf16.gmra.mrb[0].mxu0 %v7077
    %v12484 = vpop.f32.mrb[0].mxu0
    %v12485 = vadd.f32 %v12292, %v12484
    %v12486 = vpop.f32.mrb[0].mxu0
    %v12487 = vadd.f32 %v12294, %v12486
    %v12488 = vpop.f32.mrb[0].mxu0
    %v12489 = vadd.f32 %v12296, %v12488
    %v12490 = vpop.f32.mrb[0].mxu0
    %v12491 = vadd.f32 %v12298, %v12490
    %12492 = vmatprep.mubr.bf16.mxu0 %v7094
    %12493 = vmatmul.mubr.bf16.gmra.mrb[0].mxu0 %v7093
    %v12494 = vpop.f32.mrb[0].mxu0
    %v12495 = vadd.f32 %v12302, %v12494
    %v12496 = vpop.f32.mrb[0].mxu0
    %v12497 = vadd.f32 %v12304, %v12496
    %v12498 = vpop.f32.mrb[0].mxu0
    %v12499 = vadd.f32 %v12306, %v12498
    %v12500 = vpop.f32.mrb[0].mxu0
    %v12501 = vadd.f32 %v12308, %v12500
    %12502 = vmatprep.mubr.bf16.mxu0 %v7110
    %12503 = vmatmul.mubr.bf16.gmra.mrb[0].mxu0 %v7109
    %v12504 = vpop.f32.mrb[0].mxu0
    %v12505 = vadd.f32 %v12312, %v12504
    %v12506 = vpop.f32.mrb[0].mxu0
    %v12507 = vadd.f32 %v12314, %v12506
    %v12508 = vpop.f32.mrb[0].mxu0
    %v12509 = vadd.f32 %v12316, %v12508
    %v12510 = vpop.f32.mrb[0].mxu0
    %v12511 = vadd.f32 %v12318, %v12510
    %12512 = vmatprep.mubr.bf16.mxu0 %v7126
    %12513 = vmatmul.mubr.bf16.gmra.mrb[0].mxu0 %v7125
    %v12514 = vpop.f32.mrb[0].mxu0
    %v12515 = vadd.f32 %v12322, %v12514
    %v12516 = vpop.f32.mrb[0].mxu0
    %v12517 = vadd.f32 %v12324, %v12516
    %v12518 = vpop.f32.mrb[0].mxu0
    %v12519 = vadd.f32 %v12326, %v12518
    %v12520 = vpop.f32.mrb[0].mxu0
    %v12521 = vadd.f32 %v12328, %v12520
    %12522 = vdwg.mxu0
    %12523 = vmatprep.subr.bf16.mxu0 %v9442
    %12524 = vmatpush1.bf16.msra.mxu0 %v9441
    %12525 = vmatprep.subr.bf16.mxu0 %v9446
    %12526 = vmatpush1.bf16.msra.mxu0 %v9445
    %12527 = vmatprep.subr.bf16.mxu0 %v9450
    %12528 = vmatpush1.bf16.msra.mxu0 %v9449
    %12529 = vmatprep.subr.bf16.mxu0 %v9454
    %12530 = vmatpush1.bf16.msra.mxu0 %v9453
    %12531 = vmatprep.subr.bf16.mxu0 %v9458
    %12532 = vmatpush1.bf16.msra.mxu0 %v9457
    %12533 = vmatprep.subr.bf16.mxu0 %v9462
    %12534 = vmatpush1.bf16.msra.mxu0 %v9461
    %12535 = vmatprep.subr.bf16.mxu0 %v9466
    %12536 = vmatpush1.bf16.msra.mxu0 %v9465
    %12537 = vmatprep.subr.bf16.mxu0 %v9470
    %12538 = vmatpush1.bf16.msra.mxu0 %v9469
    %12539 = vmatprep.subr.bf16.mxu0 %v9474
    %12540 = vmatpush1.bf16.msra.mxu0 %v9473
    %12541 = vmatprep.subr.bf16.mxu0 %v9478
    %12542 = vmatpush1.bf16.msra.mxu0 %v9477
    %12543 = vmatprep.subr.bf16.mxu0 %v9482
    %12544 = vmatpush1.bf16.msra.mxu0 %v9481
    %12545 = vmatprep.subr.bf16.mxu0 %v9486
    %12546 = vmatpush1.bf16.msra.mxu0 %v9485
    %12547 = vmatprep.subr.bf16.mxu0 %v9490
    %12548 = vmatpush1.bf16.msra.mxu0 %v9489
    %12549 = vmatprep.subr.bf16.mxu0 %v9494
    %12550 = vmatpush1.bf16.msra.mxu0 %v9493
    %12551 = vmatprep.subr.bf16.mxu0 %v9498
    %12552 = vmatpush1.bf16.msra.mxu0 %v9497
    %12553 = vmatprep.subr.bf16.mxu0 %v9502
    %12554 = vmatpush1.bf16.msra.mxu0 %v9501
    %12555 = vmatprep.mubr.bf16.mxu0 %v6888
    %12556 = vmatmul.mubr.bf16.gmra.mrb[0].mxu0 %v6887
    %v12557 = vpop.f32.mrb[0].mxu0
    %v12558 = vadd.f32 %v12365, %v12557
    %v12559 = vpop.f32.mrb[0].mxu0
    %v12560 = vadd.f32 %v12367, %v12559
    %v12561 = vpop.f32.mrb[0].mxu0
    %v12562 = vadd.f32 %v12369, %v12561
    %v12563 = vpop.f32.mrb[0].mxu0
    %v12564 = vadd.f32 %v12371, %v12563
    %12565 = vmatprep.mubr.bf16.mxu0 %v6904
    %12566 = vmatmul.mubr.bf16.gmra.mrb[0].mxu0 %v6903
    %v12567 = vpop.f32.mrb[0].mxu0
    %v12568 = vadd.f32 %v12375, %v12567
    %v12569 = vpop.f32.mrb[0].mxu0
    %v12570 = vadd.f32 %v12377, %v12569
    %v12571 = vpop.f32.mrb[0].mxu0
    %v12572 = vadd.f32 %v12379, %v12571
    %v12573 = vpop.f32.mrb[0].mxu0
    %v12574 = vadd.f32 %v12381, %v12573
    %12575 = vmatprep.mubr.bf16.mxu0 %v6920
    %12576 = vmatmul.mubr.bf16.gmra.mrb[0].mxu0 %v6919
    %v12577 = vpop.f32.mrb[0].mxu0
    %v12578 = vadd.f32 %v12385, %v12577
    %v12579 = vpop.f32.mrb[0].mxu0
    %v12580 = vadd.f32 %v12387, %v12579
    %v12581 = vpop.f32.mrb[0].mxu0
    %v12582 = vadd.f32 %v12389, %v12581
    %v12583 = vpop.f32.mrb[0].mxu0
    %v12584 = vadd.f32 %v12391, %v12583
    %12585 = vmatprep.mubr.bf16.mxu0 %v6936
    %12586 = vmatmul.mubr.bf16.gmra.mrb[0].mxu0 %v6935
    %v12587 = vpop.f32.mrb[0].mxu0
    %v12588 = vadd.f32 %v12395, %v12587
    %v12589 = vpop.f32.mrb[0].mxu0
    %v12590 = vadd.f32 %v12397, %v12589
    %v12591 = vpop.f32.mrb[0].mxu0
    %v12592 = vadd.f32 %v12399, %v12591
    %v12593 = vpop.f32.mrb[0].mxu0
    %v12594 = vadd.f32 %v12401, %v12593
    %12595 = vmatprep.mubr.bf16.mxu0 %v6952
    %12596 = vmatmul.mubr.bf16.gmra.mrb[0].mxu0 %v6951
    %v12597 = vpop.f32.mrb[0].mxu0
    %v12598 = vadd.f32 %v12405, %v12597
    %v12599 = vpop.f32.mrb[0].mxu0
    %v12600 = vadd.f32 %v12407, %v12599
    %v12601 = vpop.f32.mrb[0].mxu0
    %v12602 = vadd.f32 %v12409, %v12601
    %v12603 = vpop.f32.mrb[0].mxu0
    %v12604 = vadd.f32 %v12411, %v12603
    %12605 = vmatprep.mubr.bf16.mxu0 %v6968
    %12606 = vmatmul.mubr.bf16.gmra.mrb[0].mxu0 %v6967
    %v12607 = vpop.f32.mrb[0].mxu0
    %v12608 = vadd.f32 %v12415, %v12607
    %v12609 = vpop.f32.mrb[0].mxu0
    %v12610 = vadd.f32 %v12417, %v12609
    %v12611 = vpop.f32.mrb[0].mxu0
    %v12612 = vadd.f32 %v12419, %v12611
    %v12613 = vpop.f32.mrb[0].mxu0
    %v12614 = vadd.f32 %v12421, %v12613
    %12615 = vmatprep.mubr.bf16.mxu0 %v6984
    %12616 = vmatmul.mubr.bf16.gmra.mrb[0].mxu0 %v6983
    %v12617 = vpop.f32.mrb[0].mxu0
    %v12618 = vadd.f32 %v12425, %v12617
    %v12619 = vpop.f32.mrb[0].mxu0
    %v12620 = vadd.f32 %v12427, %v12619
    %v12621 = vpop.f32.mrb[0].mxu0
    %v12622 = vadd.f32 %v12429, %v12621
    %v12623 = vpop.f32.mrb[0].mxu0
    %v12624 = vadd.f32 %v12431, %v12623
    %12625 = vmatprep.mubr.bf16.mxu0 %v7000
    %12626 = vmatmul.mubr.bf16.gmra.mrb[0].mxu0 %v6999
    %v12627 = vpop.f32.mrb[0].mxu0
    %v12628 = vadd.f32 %v12435, %v12627
    %v12629 = vpop.f32.mrb[0].mxu0
    %v12630 = vadd.f32 %v12437, %v12629
    %v12631 = vpop.f32.mrb[0].mxu0
    %v12632 = vadd.f32 %v12439, %v12631
    %v12633 = vpop.f32.mrb[0].mxu0
    %v12634 = vadd.f32 %v12441, %v12633
    %12635 = vmatprep.mubr.bf16.mxu0 %v7016
    %12636 = vmatmul.mubr.bf16.gmra.mrb[0].mxu0 %v7015
    %v12637 = vpop.f32.mrb[0].mxu0
    %v12638 = vadd.f32 %v12445, %v12637
    %v12639 = vpop.f32.mrb[0].mxu0
    %v12640 = vadd.f32 %v12447, %v12639
    %v12641 = vpop.f32.mrb[0].mxu0
    %v12642 = vadd.f32 %v12449, %v12641
    %v12643 = vpop.f32.mrb[0].mxu0
    %v12644 = vadd.f32 %v12451, %v12643
    %12645 = vmatprep.mubr.bf16.mxu0 %v7032
    %12646 = vmatmul.mubr.bf16.gmra.mrb[0].mxu0 %v7031
    %v12647 = vpop.f32.mrb[0].mxu0
    %v12648 = vadd.f32 %v12455, %v12647
    %v12649 = vpop.f32.mrb[0].mxu0
    %v12650 = vadd.f32 %v12457, %v12649
    %v12651 = vpop.f32.mrb[0].mxu0
    %v12652 = vadd.f32 %v12459, %v12651
    %v12653 = vpop.f32.mrb[0].mxu0
    %v12654 = vadd.f32 %v12461, %v12653
    %12655 = vmatprep.mubr.bf16.mxu0 %v7048
    %12656 = vmatmul.mubr.bf16.gmra.mrb[0].mxu0 %v7047
    %v12657 = vpop.f32.mrb[0].mxu0
    %v12658 = vadd.f32 %v12465, %v12657
    %v12659 = vpop.f32.mrb[0].mxu0
    %v12660 = vadd.f32 %v12467, %v12659
    %v12661 = vpop.f32.mrb[0].mxu0
    %v12662 = vadd.f32 %v12469, %v12661
    %v12663 = vpop.f32.mrb[0].mxu0
    %v12664 = vadd.f32 %v12471, %v12663
    %12665 = vmatprep.mubr.bf16.mxu0 %v7064
    %12666 = vmatmul.mubr.bf16.gmra.mrb[0].mxu0 %v7063
    %v12667 = vpop.f32.mrb[0].mxu0
    %v12668 = vadd.f32 %v12475, %v12667
    %v12669 = vpop.f32.mrb[0].mxu0
    %v12670 = vadd.f32 %v12477, %v12669
    %v12671 = vpop.f32.mrb[0].mxu0
    %v12672 = vadd.f32 %v12479, %v12671
    %v12673 = vpop.f32.mrb[0].mxu0
    %v12674 = vadd.f32 %v12481, %v12673
    %12675 = vmatprep.mubr.bf16.mxu0 %v7080
    %12676 = vmatmul.mubr.bf16.gmra.mrb[0].mxu0 %v7079
    %v12677 = vpop.f32.mrb[0].mxu0
    %v12678 = vadd.f32 %v12485, %v12677
    %v12679 = vpop.f32.mrb[0].mxu0
    %v12680 = vadd.f32 %v12487, %v12679
    %v12681 = vpop.f32.mrb[0].mxu0
    %v12682 = vadd.f32 %v12489, %v12681
    %v12683 = vpop.f32.mrb[0].mxu0
    %v12684 = vadd.f32 %v12491, %v12683
    %12685 = vmatprep.mubr.bf16.mxu0 %v7096
    %12686 = vmatmul.mubr.bf16.gmra.mrb[0].mxu0 %v7095
    %v12687 = vpop.f32.mrb[0].mxu0
    %v12688 = vadd.f32 %v12495, %v12687
    %v12689 = vpop.f32.mrb[0].mxu0
    %v12690 = vadd.f32 %v12497, %v12689
    %v12691 = vpop.f32.mrb[0].mxu0
    %v12692 = vadd.f32 %v12499, %v12691
    %v12693 = vpop.f32.mrb[0].mxu0
    %v12694 = vadd.f32 %v12501, %v12693
    %12695 = vmatprep.mubr.bf16.mxu0 %v7112
    %12696 = vmatmul.mubr.bf16.gmra.mrb[0].mxu0 %v7111
    %v12697 = vpop.f32.mrb[0].mxu0
    %v12698 = vadd.f32 %v12505, %v12697
    %v12699 = vpop.f32.mrb[0].mxu0
    %v12700 = vadd.f32 %v12507, %v12699
    %v12701 = vpop.f32.mrb[0].mxu0
    %v12702 = vadd.f32 %v12509, %v12701
    %v12703 = vpop.f32.mrb[0].mxu0
    %v12704 = vadd.f32 %v12511, %v12703
    %12705 = vmatprep.mubr.bf16.mxu0 %v7128
    %12706 = vmatmul.mubr.bf16.gmra.mrb[0].mxu0 %v7127
    %v12707 = vpop.f32.mrb[0].mxu0
    %v12708 = vadd.f32 %v12515, %v12707
    %v12709 = vpop.f32.mrb[0].mxu0
    %v12710 = vadd.f32 %v12517, %v12709
    %v12711 = vpop.f32.mrb[0].mxu0
    %v12712 = vadd.f32 %v12519, %v12711
    %v12713 = vpop.f32.mrb[0].mxu0
    %v12714 = vadd.f32 %v12521, %v12713
    %12715 = vdwg.mxu0
    %12716 = vmatprep.subr.bf16.mxu0 %v9506
    %12717 = vmatpush1.bf16.msra.mxu0 %v9505
    %12718 = vmatprep.subr.bf16.mxu0 %v9510
    %12719 = vmatpush1.bf16.msra.mxu0 %v9509
    %12720 = vmatprep.subr.bf16.mxu0 %v9514
    %12721 = vmatpush1.bf16.msra.mxu0 %v9513
    %12722 = vmatprep.subr.bf16.mxu0 %v9518
    %12723 = vmatpush1.bf16.msra.mxu0 %v9517
    %12724 = vmatprep.subr.bf16.mxu0 %v9522
    %12725 = vmatpush1.bf16.msra.mxu0 %v9521
    %12726 = vmatprep.subr.bf16.mxu0 %v9526
    %12727 = vmatpush1.bf16.msra.mxu0 %v9525
    %12728 = vmatprep.subr.bf16.mxu0 %v9530
    %12729 = vmatpush1.bf16.msra.mxu0 %v9529
    %12730 = vmatprep.subr.bf16.mxu0 %v9534
    %12731 = vmatpush1.bf16.msra.mxu0 %v9533
    %12732 = vmatprep.subr.bf16.mxu0 %v9538
    %12733 = vmatpush1.bf16.msra.mxu0 %v9537
    %12734 = vmatprep.subr.bf16.mxu0 %v9542
    %12735 = vmatpush1.bf16.msra.mxu0 %v9541
    %12736 = vmatprep.subr.bf16.mxu0 %v9546
    %12737 = vmatpush1.bf16.msra.mxu0 %v9545
    %12738 = vmatprep.subr.bf16.mxu0 %v9550
    %12739 = vmatpush1.bf16.msra.mxu0 %v9549
    %12740 = vmatprep.subr.bf16.mxu0 %v9554
    %12741 = vmatpush1.bf16.msra.mxu0 %v9553
    %12742 = vmatprep.subr.bf16.mxu0 %v9558
    %12743 = vmatpush1.bf16.msra.mxu0 %v9557
    %12744 = vmatprep.subr.bf16.mxu0 %v9562
    %12745 = vmatpush1.bf16.msra.mxu0 %v9561
    %12746 = vmatprep.subr.bf16.mxu0 %v9566
    %12747 = vmatpush1.bf16.msra.mxu0 %v9565
    %12748 = vmatprep.mubr.bf16.mxu0 %v6890
    %12749 = vmatmul.mubr.bf16.gmra.mrb[0].mxu0 %v6889
    %v12750 = vpop.f32.mrb[0].mxu0
    %v12751 = vadd.f32 %v12558, %v12750
    %v12752 = vpop.f32.mrb[0].mxu0
    %v12753 = vadd.f32 %v12560, %v12752
    %v12754 = vpop.f32.mrb[0].mxu0
    %v12755 = vadd.f32 %v12562, %v12754
    %v12756 = vpop.f32.mrb[0].mxu0
    %v12757 = vadd.f32 %v12564, %v12756
    %12758 = vmatprep.mubr.bf16.mxu0 %v6906
    %12759 = vmatmul.mubr.bf16.gmra.mrb[0].mxu0 %v6905
    %v12760 = vpop.f32.mrb[0].mxu0
    %v12761 = vadd.f32 %v12568, %v12760
    %v12762 = vpop.f32.mrb[0].mxu0
    %v12763 = vadd.f32 %v12570, %v12762
    %v12764 = vpop.f32.mrb[0].mxu0
    %v12765 = vadd.f32 %v12572, %v12764
    %v12766 = vpop.f32.mrb[0].mxu0
    %v12767 = vadd.f32 %v12574, %v12766
    %12768 = vmatprep.mubr.bf16.mxu0 %v6922
    %12769 = vmatmul.mubr.bf16.gmra.mrb[0].mxu0 %v6921
    %v12770 = vpop.f32.mrb[0].mxu0
    %v12771 = vadd.f32 %v12578, %v12770
    %v12772 = vpop.f32.mrb[0].mxu0
    %v12773 = vadd.f32 %v12580, %v12772
    %v12774 = vpop.f32.mrb[0].mxu0
    %v12775 = vadd.f32 %v12582, %v12774
    %v12776 = vpop.f32.mrb[0].mxu0
    %v12777 = vadd.f32 %v12584, %v12776
    %12778 = vmatprep.mubr.bf16.mxu0 %v6938
    %12779 = vmatmul.mubr.bf16.gmra.mrb[0].mxu0 %v6937
    %v12780 = vpop.f32.mrb[0].mxu0
    %v12781 = vadd.f32 %v12588, %v12780
    %v12782 = vpop.f32.mrb[0].mxu0
    %v12783 = vadd.f32 %v12590, %v12782
    %v12784 = vpop.f32.mrb[0].mxu0
    %v12785 = vadd.f32 %v12592, %v12784
    %v12786 = vpop.f32.mrb[0].mxu0
    %v12787 = vadd.f32 %v12594, %v12786
    %12788 = vmatprep.mubr.bf16.mxu0 %v6954
    %12789 = vmatmul.mubr.bf16.gmra.mrb[0].mxu0 %v6953
    %v12790 = vpop.f32.mrb[0].mxu0
    %v12791 = vadd.f32 %v12598, %v12790
    %v12792 = vpop.f32.mrb[0].mxu0
    %v12793 = vadd.f32 %v12600, %v12792
    %v12794 = vpop.f32.mrb[0].mxu0
    %v12795 = vadd.f32 %v12602, %v12794
    %v12796 = vpop.f32.mrb[0].mxu0
    %v12797 = vadd.f32 %v12604, %v12796
    %12798 = vmatprep.mubr.bf16.mxu0 %v6970
    %12799 = vmatmul.mubr.bf16.gmra.mrb[0].mxu0 %v6969
    %v12800 = vpop.f32.mrb[0].mxu0
    %v12801 = vadd.f32 %v12608, %v12800
    %v12802 = vpop.f32.mrb[0].mxu0
    %v12803 = vadd.f32 %v12610, %v12802
    %v12804 = vpop.f32.mrb[0].mxu0
    %v12805 = vadd.f32 %v12612, %v12804
    %v12806 = vpop.f32.mrb[0].mxu0
    %v12807 = vadd.f32 %v12614, %v12806
    %12808 = vmatprep.mubr.bf16.mxu0 %v6986
    %12809 = vmatmul.mubr.bf16.gmra.mrb[0].mxu0 %v6985
    %v12810 = vpop.f32.mrb[0].mxu0
    %v12811 = vadd.f32 %v12618, %v12810
    %v12812 = vpop.f32.mrb[0].mxu0
    %v12813 = vadd.f32 %v12620, %v12812
    %v12814 = vpop.f32.mrb[0].mxu0
    %v12815 = vadd.f32 %v12622, %v12814
    %v12816 = vpop.f32.mrb[0].mxu0
    %v12817 = vadd.f32 %v12624, %v12816
    %12818 = vmatprep.mubr.bf16.mxu0 %v7002
    %12819 = vmatmul.mubr.bf16.gmra.mrb[0].mxu0 %v7001
    %v12820 = vpop.f32.mrb[0].mxu0
    %v12821 = vadd.f32 %v12628, %v12820
    %v12822 = vpop.f32.mrb[0].mxu0
    %v12823 = vadd.f32 %v12630, %v12822
    %v12824 = vpop.f32.mrb[0].mxu0
    %v12825 = vadd.f32 %v12632, %v12824
    %v12826 = vpop.f32.mrb[0].mxu0
    %v12827 = vadd.f32 %v12634, %v12826
    %12828 = vmatprep.mubr.bf16.mxu0 %v7018
    %12829 = vmatmul.mubr.bf16.gmra.mrb[0].mxu0 %v7017
    %v12830 = vpop.f32.mrb[0].mxu0
    %v12831 = vadd.f32 %v12638, %v12830
    %v12832 = vpop.f32.mrb[0].mxu0
    %v12833 = vadd.f32 %v12640, %v12832
    %v12834 = vpop.f32.mrb[0].mxu0
    %v12835 = vadd.f32 %v12642, %v12834
    %v12836 = vpop.f32.mrb[0].mxu0
    %v12837 = vadd.f32 %v12644, %v12836
    %12838 = vmatprep.mubr.bf16.mxu0 %v7034
    %12839 = vmatmul.mubr.bf16.gmra.mrb[0].mxu0 %v7033
    %v12840 = vpop.f32.mrb[0].mxu0
    %v12841 = vadd.f32 %v12648, %v12840
    %v12842 = vpop.f32.mrb[0].mxu0
    %v12843 = vadd.f32 %v12650, %v12842
    %v12844 = vpop.f32.mrb[0].mxu0
    %v12845 = vadd.f32 %v12652, %v12844
    %v12846 = vpop.f32.mrb[0].mxu0
    %v12847 = vadd.f32 %v12654, %v12846
    %12848 = vmatprep.mubr.bf16.mxu0 %v7050
    %12849 = vmatmul.mubr.bf16.gmra.mrb[0].mxu0 %v7049
    %v12850 = vpop.f32.mrb[0].mxu0
    %v12851 = vadd.f32 %v12658, %v12850
    %v12852 = vpop.f32.mrb[0].mxu0
    %v12853 = vadd.f32 %v12660, %v12852
    %v12854 = vpop.f32.mrb[0].mxu0
    %v12855 = vadd.f32 %v12662, %v12854
    %v12856 = vpop.f32.mrb[0].mxu0
    %v12857 = vadd.f32 %v12664, %v12856
    %12858 = vmatprep.mubr.bf16.mxu0 %v7066
    %12859 = vmatmul.mubr.bf16.gmra.mrb[0].mxu0 %v7065
    %v12860 = vpop.f32.mrb[0].mxu0
    %v12861 = vadd.f32 %v12668, %v12860
    %v12862 = vpop.f32.mrb[0].mxu0
    %v12863 = vadd.f32 %v12670, %v12862
    %v12864 = vpop.f32.mrb[0].mxu0
    %v12865 = vadd.f32 %v12672, %v12864
    %v12866 = vpop.f32.mrb[0].mxu0
    %v12867 = vadd.f32 %v12674, %v12866
    %12868 = vmatprep.mubr.bf16.mxu0 %v7082
    %12869 = vmatmul.mubr.bf16.gmra.mrb[0].mxu0 %v7081
    %v12870 = vpop.f32.mrb[0].mxu0
    %v12871 = vadd.f32 %v12678, %v12870
    %v12872 = vpop.f32.mrb[0].mxu0
    %v12873 = vadd.f32 %v12680, %v12872
    %v12874 = vpop.f32.mrb[0].mxu0
    %v12875 = vadd.f32 %v12682, %v12874
    %v12876 = vpop.f32.mrb[0].mxu0
    %v12877 = vadd.f32 %v12684, %v12876
    %12878 = vmatprep.mubr.bf16.mxu0 %v7098
    %12879 = vmatmul.mubr.bf16.gmra.mrb[0].mxu0 %v7097
    %v12880 = vpop.f32.mrb[0].mxu0
    %v12881 = vadd.f32 %v12688, %v12880
    %v12882 = vpop.f32.mrb[0].mxu0
    %v12883 = vadd.f32 %v12690, %v12882
    %v12884 = vpop.f32.mrb[0].mxu0
    %v12885 = vadd.f32 %v12692, %v12884
    %v12886 = vpop.f32.mrb[0].mxu0
    %v12887 = vadd.f32 %v12694, %v12886
    %12888 = vmatprep.mubr.bf16.mxu0 %v7114
    %12889 = vmatmul.mubr.bf16.gmra.mrb[0].mxu0 %v7113
    %v12890 = vpop.f32.mrb[0].mxu0
    %v12891 = vadd.f32 %v12698, %v12890
    %v12892 = vpop.f32.mrb[0].mxu0
    %v12893 = vadd.f32 %v12700, %v12892
    %v12894 = vpop.f32.mrb[0].mxu0
    %v12895 = vadd.f32 %v12702, %v12894
    %v12896 = vpop.f32.mrb[0].mxu0
    %v12897 = vadd.f32 %v12704, %v12896
    %12898 = vmatprep.mubr.bf16.mxu0 %v7130
    %12899 = vmatmul.mubr.bf16.gmra.mrb[0].mxu0 %v7129
    %v12900 = vpop.f32.mrb[0].mxu0
    %v12901 = vadd.f32 %v12708, %v12900
    %v12902 = vpop.f32.mrb[0].mxu0
    %v12903 = vadd.f32 %v12710, %v12902
    %v12904 = vpop.f32.mrb[0].mxu0
    %v12905 = vadd.f32 %v12712, %v12904
    %v12906 = vpop.f32.mrb[0].mxu0
    %v12907 = vadd.f32 %v12714, %v12906
    %12908 = vdwg.mxu0
    %12909 = vmatprep.subr.bf16.mxu0 %v9570
    %12910 = vmatpush1.bf16.msra.mxu0 %v9569
    %12911 = vmatprep.subr.bf16.mxu0 %v9574
    %12912 = vmatpush1.bf16.msra.mxu0 %v9573
    %12913 = vmatprep.subr.bf16.mxu0 %v9578
    %12914 = vmatpush1.bf16.msra.mxu0 %v9577
    %12915 = vmatprep.subr.bf16.mxu0 %v9582
    %12916 = vmatpush1.bf16.msra.mxu0 %v9581
    %12917 = vmatprep.subr.bf16.mxu0 %v9586
    %12918 = vmatpush1.bf16.msra.mxu0 %v9585
    %12919 = vmatprep.subr.bf16.mxu0 %v9590
    %12920 = vmatpush1.bf16.msra.mxu0 %v9589
    %12921 = vmatprep.subr.bf16.mxu0 %v9594
    %12922 = vmatpush1.bf16.msra.mxu0 %v9593
    %12923 = vmatprep.subr.bf16.mxu0 %v9598
    %12924 = vmatpush1.bf16.msra.mxu0 %v9597
    %12925 = vmatprep.subr.bf16.mxu0 %v9602
    %12926 = vmatpush1.bf16.msra.mxu0 %v9601
    %12927 = vmatprep.subr.bf16.mxu0 %v9606
    %12928 = vmatpush1.bf16.msra.mxu0 %v9605
    %12929 = vmatprep.subr.bf16.mxu0 %v9610
    %12930 = vmatpush1.bf16.msra.mxu0 %v9609
    %12931 = vmatprep.subr.bf16.mxu0 %v9614
    %12932 = vmatpush1.bf16.msra.mxu0 %v9613
    %12933 = vmatprep.subr.bf16.mxu0 %v9618
    %12934 = vmatpush1.bf16.msra.mxu0 %v9617
    %12935 = vmatprep.subr.bf16.mxu0 %v9622
    %12936 = vmatpush1.bf16.msra.mxu0 %v9621
    %12937 = vmatprep.subr.bf16.mxu0 %v9626
    %12938 = vmatpush1.bf16.msra.mxu0 %v9625
    %12939 = vmatprep.subr.bf16.mxu0 %v9630
    %12940 = vmatpush1.bf16.msra.mxu0 %v9629
    %12941 = vmatprep.mubr.bf16.mxu0 %v6892
    %12942 = vmatmul.mubr.bf16.gmra.mrb[0].mxu0 %v6891
    %v12943 = vpop.f32.mrb[0].mxu0
    %v12944 = vadd.f32 %v12751, %v12943
    %v12945 = vpop.f32.mrb[0].mxu0
    %v12946 = vadd.f32 %v12753, %v12945
    %v12947 = vpop.f32.mrb[0].mxu0
    %v12948 = vadd.f32 %v12755, %v12947
    %v12949 = vpop.f32.mrb[0].mxu0
    %v12950 = vadd.f32 %v12757, %v12949
    %12951 = vmatprep.mubr.bf16.mxu0 %v6908
    %12952 = vmatmul.mubr.bf16.gmra.mrb[0].mxu0 %v6907
    %v12953 = vpop.f32.mrb[0].mxu0
    %v12954 = vadd.f32 %v12761, %v12953
    %v12955 = vpop.f32.mrb[0].mxu0
    %v12956 = vadd.f32 %v12763, %v12955
    %v12957 = vpop.f32.mrb[0].mxu0
    %v12958 = vadd.f32 %v12765, %v12957
    %v12959 = vpop.f32.mrb[0].mxu0
    %v12960 = vadd.f32 %v12767, %v12959
    %12961 = vmatprep.mubr.bf16.mxu0 %v6924
    %12962 = vmatmul.mubr.bf16.gmra.mrb[0].mxu0 %v6923
    %v12963 = vpop.f32.mrb[0].mxu0
    %v12964 = vadd.f32 %v12771, %v12963
    %v12965 = vpop.f32.mrb[0].mxu0
    %v12966 = vadd.f32 %v12773, %v12965
    %v12967 = vpop.f32.mrb[0].mxu0
    %v12968 = vadd.f32 %v12775, %v12967
    %v12969 = vpop.f32.mrb[0].mxu0
    %v12970 = vadd.f32 %v12777, %v12969
    %12971 = vmatprep.mubr.bf16.mxu0 %v6940
    %12972 = vmatmul.mubr.bf16.gmra.mrb[0].mxu0 %v6939
    %v12973 = vpop.f32.mrb[0].mxu0
    %v12974 = vadd.f32 %v12781, %v12973
    %v12975 = vpop.f32.mrb[0].mxu0
    %v12976 = vadd.f32 %v12783, %v12975
    %v12977 = vpop.f32.mrb[0].mxu0
    %v12978 = vadd.f32 %v12785, %v12977
    %v12979 = vpop.f32.mrb[0].mxu0
    %v12980 = vadd.f32 %v12787, %v12979
    %12981 = vmatprep.mubr.bf16.mxu0 %v6956
    %12982 = vmatmul.mubr.bf16.gmra.mrb[0].mxu0 %v6955
    %v12983 = vpop.f32.mrb[0].mxu0
    %v12984 = vadd.f32 %v12791, %v12983
    %v12985 = vpop.f32.mrb[0].mxu0
    %v12986 = vadd.f32 %v12793, %v12985
    %v12987 = vpop.f32.mrb[0].mxu0
    %v12988 = vadd.f32 %v12795, %v12987
    %v12989 = vpop.f32.mrb[0].mxu0
    %v12990 = vadd.f32 %v12797, %v12989
    %12991 = vmatprep.mubr.bf16.mxu0 %v6972
    %12992 = vmatmul.mubr.bf16.gmra.mrb[0].mxu0 %v6971
    %v12993 = vpop.f32.mrb[0].mxu0
    %v12994 = vadd.f32 %v12801, %v12993
    %v12995 = vpop.f32.mrb[0].mxu0
    %v12996 = vadd.f32 %v12803, %v12995
    %v12997 = vpop.f32.mrb[0].mxu0
    %v12998 = vadd.f32 %v12805, %v12997
    %v12999 = vpop.f32.mrb[0].mxu0
    %v13000 = vadd.f32 %v12807, %v12999
    %13001 = vmatprep.mubr.bf16.mxu0 %v6988
    %13002 = vmatmul.mubr.bf16.gmra.mrb[0].mxu0 %v6987
    %v13003 = vpop.f32.mrb[0].mxu0
    %v13004 = vadd.f32 %v12811, %v13003
    %v13005 = vpop.f32.mrb[0].mxu0
    %v13006 = vadd.f32 %v12813, %v13005
    %v13007 = vpop.f32.mrb[0].mxu0
    %v13008 = vadd.f32 %v12815, %v13007
    %v13009 = vpop.f32.mrb[0].mxu0
    %v13010 = vadd.f32 %v12817, %v13009
    %13011 = vmatprep.mubr.bf16.mxu0 %v7004
    %13012 = vmatmul.mubr.bf16.gmra.mrb[0].mxu0 %v7003
    %v13013 = vpop.f32.mrb[0].mxu0
    %v13014 = vadd.f32 %v12821, %v13013
    %v13015 = vpop.f32.mrb[0].mxu0
    %v13016 = vadd.f32 %v12823, %v13015
    %v13017 = vpop.f32.mrb[0].mxu0
    %v13018 = vadd.f32 %v12825, %v13017
    %v13019 = vpop.f32.mrb[0].mxu0
    %v13020 = vadd.f32 %v12827, %v13019
    %13021 = vmatprep.mubr.bf16.mxu0 %v7020
    %13022 = vmatmul.mubr.bf16.gmra.mrb[0].mxu0 %v7019
    %v13023 = vpop.f32.mrb[0].mxu0
    %v13024 = vadd.f32 %v12831, %v13023
    %v13025 = vpop.f32.mrb[0].mxu0
    %v13026 = vadd.f32 %v12833, %v13025
    %v13027 = vpop.f32.mrb[0].mxu0
    %v13028 = vadd.f32 %v12835, %v13027
    %v13029 = vpop.f32.mrb[0].mxu0
    %v13030 = vadd.f32 %v12837, %v13029
    %13031 = vmatprep.mubr.bf16.mxu0 %v7036
    %13032 = vmatmul.mubr.bf16.gmra.mrb[0].mxu0 %v7035
    %v13033 = vpop.f32.mrb[0].mxu0
    %v13034 = vadd.f32 %v12841, %v13033
    %v13035 = vpop.f32.mrb[0].mxu0
    %v13036 = vadd.f32 %v12843, %v13035
    %v13037 = vpop.f32.mrb[0].mxu0
    %v13038 = vadd.f32 %v12845, %v13037
    %v13039 = vpop.f32.mrb[0].mxu0
    %v13040 = vadd.f32 %v12847, %v13039
    %13041 = vmatprep.mubr.bf16.mxu0 %v7052
    %13042 = vmatmul.mubr.bf16.gmra.mrb[0].mxu0 %v7051
    %v13043 = vpop.f32.mrb[0].mxu0
    %v13044 = vadd.f32 %v12851, %v13043
    %v13045 = vpop.f32.mrb[0].mxu0
    %v13046 = vadd.f32 %v12853, %v13045
    %v13047 = vpop.f32.mrb[0].mxu0
    %v13048 = vadd.f32 %v12855, %v13047
    %v13049 = vpop.f32.mrb[0].mxu0
    %v13050 = vadd.f32 %v12857, %v13049
    %13051 = vmatprep.mubr.bf16.mxu0 %v7068
    %13052 = vmatmul.mubr.bf16.gmra.mrb[0].mxu0 %v7067
    %v13053 = vpop.f32.mrb[0].mxu0
    %v13054 = vadd.f32 %v12861, %v13053
    %v13055 = vpop.f32.mrb[0].mxu0
    %v13056 = vadd.f32 %v12863, %v13055
    %v13057 = vpop.f32.mrb[0].mxu0
    %v13058 = vadd.f32 %v12865, %v13057
    %v13059 = vpop.f32.mrb[0].mxu0
    %v13060 = vadd.f32 %v12867, %v13059
    %13061 = vmatprep.mubr.bf16.mxu0 %v7084
    %13062 = vmatmul.mubr.bf16.gmra.mrb[0].mxu0 %v7083
    %v13063 = vpop.f32.mrb[0].mxu0
    %v13064 = vadd.f32 %v12871, %v13063
    %v13065 = vpop.f32.mrb[0].mxu0
    %v13066 = vadd.f32 %v12873, %v13065
    %v13067 = vpop.f32.mrb[0].mxu0
    %v13068 = vadd.f32 %v12875, %v13067
    %v13069 = vpop.f32.mrb[0].mxu0
    %v13070 = vadd.f32 %v12877, %v13069
    %13071 = vmatprep.mubr.bf16.mxu0 %v7100
    %13072 = vmatmul.mubr.bf16.gmra.mrb[0].mxu0 %v7099
    %v13073 = vpop.f32.mrb[0].mxu0
    %v13074 = vadd.f32 %v12881, %v13073
    %v13075 = vpop.f32.mrb[0].mxu0
    %v13076 = vadd.f32 %v12883, %v13075
    %v13077 = vpop.f32.mrb[0].mxu0
    %v13078 = vadd.f32 %v12885, %v13077
    %v13079 = vpop.f32.mrb[0].mxu0
    %v13080 = vadd.f32 %v12887, %v13079
    %13081 = vmatprep.mubr.bf16.mxu0 %v7116
    %13082 = vmatmul.mubr.bf16.gmra.mrb[0].mxu0 %v7115
    %v13083 = vpop.f32.mrb[0].mxu0
    %v13084 = vadd.f32 %v12891, %v13083
    %v13085 = vpop.f32.mrb[0].mxu0
    %v13086 = vadd.f32 %v12893, %v13085
    %v13087 = vpop.f32.mrb[0].mxu0
    %v13088 = vadd.f32 %v12895, %v13087
    %v13089 = vpop.f32.mrb[0].mxu0
    %v13090 = vadd.f32 %v12897, %v13089
    %13091 = vmatprep.mubr.bf16.mxu0 %v7132
    %13092 = vmatmul.mubr.bf16.gmra.mrb[0].mxu0 %v7131
    %v13093 = vpop.f32.mrb[0].mxu0
    %v13094 = vadd.f32 %v12901, %v13093
    %v13095 = vpop.f32.mrb[0].mxu0
    %v13096 = vadd.f32 %v12903, %v13095
    %v13097 = vpop.f32.mrb[0].mxu0
    %v13098 = vadd.f32 %v12905, %v13097
    %v13099 = vpop.f32.mrb[0].mxu0
    %v13100 = vadd.f32 %v12907, %v13099
    %13101 = vdwg.mxu0
    %13102 = vmatprep.subr.bf16.mxu0 %v9634
    %13103 = vmatpush1.bf16.msra.mxu0 %v9633
    %13104 = vmatprep.subr.bf16.mxu0 %v9638
    %13105 = vmatpush1.bf16.msra.mxu0 %v9637
    %13106 = vmatprep.subr.bf16.mxu0 %v9642
    %13107 = vmatpush1.bf16.msra.mxu0 %v9641
    %13108 = vmatprep.subr.bf16.mxu0 %v9646
    %13109 = vmatpush1.bf16.msra.mxu0 %v9645
    %13110 = vmatprep.subr.bf16.mxu0 %v9650
    %13111 = vmatpush1.bf16.msra.mxu0 %v9649
    %13112 = vmatprep.subr.bf16.mxu0 %v9654
    %13113 = vmatpush1.bf16.msra.mxu0 %v9653
    %13114 = vmatprep.subr.bf16.mxu0 %v9658
    %13115 = vmatpush1.bf16.msra.mxu0 %v9657
    %13116 = vmatprep.subr.bf16.mxu0 %v9662
    %13117 = vmatpush1.bf16.msra.mxu0 %v9661
    %13118 = vmatprep.subr.bf16.mxu0 %v9666
    %13119 = vmatpush1.bf16.msra.mxu0 %v9665
    %13120 = vmatprep.subr.bf16.mxu0 %v9670
    %13121 = vmatpush1.bf16.msra.mxu0 %v9669
    %13122 = vmatprep.subr.bf16.mxu0 %v9674
    %13123 = vmatpush1.bf16.msra.mxu0 %v9673
    %13124 = vmatprep.subr.bf16.mxu0 %v9678
    %13125 = vmatpush1.bf16.msra.mxu0 %v9677
    %13126 = vmatprep.subr.bf16.mxu0 %v9682
    %13127 = vmatpush1.bf16.msra.mxu0 %v9681
    %13128 = vmatprep.subr.bf16.mxu0 %v9686
    %13129 = vmatpush1.bf16.msra.mxu0 %v9685
    %13130 = vmatprep.subr.bf16.mxu0 %v9690
    %13131 = vmatpush1.bf16.msra.mxu0 %v9689
    %13132 = vmatprep.subr.bf16.mxu0 %v9694
    %13133 = vmatpush1.bf16.msra.mxu0 %v9693
    %13134 = vmatprep.mubr.bf16.mxu0 %v6894
    %13135 = vmatmul.mubr.bf16.gmra.mrb[0].mxu0 %v6893
    %v13136 = vpop.f32.mrb[0].mxu0
    %v13137 = vadd.f32 %v12944, %v13136
    %v13138 = vpop.f32.mrb[0].mxu0
    %v13139 = vadd.f32 %v12946, %v13138
    %v13140 = vpop.f32.mrb[0].mxu0
    %v13141 = vadd.f32 %v12948, %v13140
    %v13142 = vpop.f32.mrb[0].mxu0
    %v13143 = vadd.f32 %v12950, %v13142
    %13144 = vmatprep.mubr.bf16.mxu0 %v6910
    %13145 = vmatmul.mubr.bf16.gmra.mrb[0].mxu0 %v6909
    %v13146 = vpop.f32.mrb[0].mxu0
    %v13147 = vadd.f32 %v12954, %v13146
    %v13148 = vpop.f32.mrb[0].mxu0
    %v13149 = vadd.f32 %v12956, %v13148
    %v13150 = vpop.f32.mrb[0].mxu0
    %v13151 = vadd.f32 %v12958, %v13150
    %v13152 = vpop.f32.mrb[0].mxu0
    %v13153 = vadd.f32 %v12960, %v13152
    %13154 = vmatprep.mubr.bf16.mxu0 %v6926
    %13155 = vmatmul.mubr.bf16.gmra.mrb[0].mxu0 %v6925
    %v13156 = vpop.f32.mrb[0].mxu0
    %v13157 = vadd.f32 %v12964, %v13156
    %v13158 = vpop.f32.mrb[0].mxu0
    %v13159 = vadd.f32 %v12966, %v13158
    %v13160 = vpop.f32.mrb[0].mxu0
    %v13161 = vadd.f32 %v12968, %v13160
    %v13162 = vpop.f32.mrb[0].mxu0
    %v13163 = vadd.f32 %v12970, %v13162
    %13164 = vmatprep.mubr.bf16.mxu0 %v6942
    %13165 = vmatmul.mubr.bf16.gmra.mrb[0].mxu0 %v6941
    %v13166 = vpop.f32.mrb[0].mxu0
    %v13167 = vadd.f32 %v12974, %v13166
    %v13168 = vpop.f32.mrb[0].mxu0
    %v13169 = vadd.f32 %v12976, %v13168
    %v13170 = vpop.f32.mrb[0].mxu0
    %v13171 = vadd.f32 %v12978, %v13170
    %v13172 = vpop.f32.mrb[0].mxu0
    %v13173 = vadd.f32 %v12980, %v13172
    %13174 = vmatprep.mubr.bf16.mxu0 %v6958
    %13175 = vmatmul.mubr.bf16.gmra.mrb[0].mxu0 %v6957
    %v13176 = vpop.f32.mrb[0].mxu0
    %v13177 = vadd.f32 %v12984, %v13176
    %v13178 = vpop.f32.mrb[0].mxu0
    %v13179 = vadd.f32 %v12986, %v13178
    %v13180 = vpop.f32.mrb[0].mxu0
    %v13181 = vadd.f32 %v12988, %v13180
    %v13182 = vpop.f32.mrb[0].mxu0
    %v13183 = vadd.f32 %v12990, %v13182
    %13184 = vmatprep.mubr.bf16.mxu0 %v6974
    %13185 = vmatmul.mubr.bf16.gmra.mrb[0].mxu0 %v6973
    %v13186 = vpop.f32.mrb[0].mxu0
    %v13187 = vadd.f32 %v12994, %v13186
    %v13188 = vpop.f32.mrb[0].mxu0
    %v13189 = vadd.f32 %v12996, %v13188
    %v13190 = vpop.f32.mrb[0].mxu0
    %v13191 = vadd.f32 %v12998, %v13190
    %v13192 = vpop.f32.mrb[0].mxu0
    %v13193 = vadd.f32 %v13000, %v13192
    %13194 = vmatprep.mubr.bf16.mxu0 %v6990
    %13195 = vmatmul.mubr.bf16.gmra.mrb[0].mxu0 %v6989
    %v13196 = vpop.f32.mrb[0].mxu0
    %v13197 = vadd.f32 %v13004, %v13196
    %v13198 = vpop.f32.mrb[0].mxu0
    %v13199 = vadd.f32 %v13006, %v13198
    %v13200 = vpop.f32.mrb[0].mxu0
    %v13201 = vadd.f32 %v13008, %v13200
    %v13202 = vpop.f32.mrb[0].mxu0
    %v13203 = vadd.f32 %v13010, %v13202
    %13204 = vmatprep.mubr.bf16.mxu0 %v7006
    %13205 = vmatmul.mubr.bf16.gmra.mrb[0].mxu0 %v7005
    %v13206 = vpop.f32.mrb[0].mxu0
    %v13207 = vadd.f32 %v13014, %v13206
    %v13208 = vpop.f32.mrb[0].mxu0
    %v13209 = vadd.f32 %v13016, %v13208
    %v13210 = vpop.f32.mrb[0].mxu0
    %v13211 = vadd.f32 %v13018, %v13210
    %v13212 = vpop.f32.mrb[0].mxu0
    %v13213 = vadd.f32 %v13020, %v13212
    %13214 = vmatprep.mubr.bf16.mxu0 %v7022
    %13215 = vmatmul.mubr.bf16.gmra.mrb[0].mxu0 %v7021
    %v13216 = vpop.f32.mrb[0].mxu0
    %v13217 = vadd.f32 %v13024, %v13216
    %v13218 = vpop.f32.mrb[0].mxu0
    %v13219 = vadd.f32 %v13026, %v13218
    %v13220 = vpop.f32.mrb[0].mxu0
    %v13221 = vadd.f32 %v13028, %v13220
    %v13222 = vpop.f32.mrb[0].mxu0
    %v13223 = vadd.f32 %v13030, %v13222
    %13224 = vmatprep.mubr.bf16.mxu0 %v7038
    %13225 = vmatmul.mubr.bf16.gmra.mrb[0].mxu0 %v7037
    %v13226 = vpop.f32.mrb[0].mxu0
    %v13227 = vadd.f32 %v13034, %v13226
    %v13228 = vpop.f32.mrb[0].mxu0
    %v13229 = vadd.f32 %v13036, %v13228
    %v13230 = vpop.f32.mrb[0].mxu0
    %v13231 = vadd.f32 %v13038, %v13230
    %v13232 = vpop.f32.mrb[0].mxu0
    %v13233 = vadd.f32 %v13040, %v13232
    %13234 = vmatprep.mubr.bf16.mxu0 %v7054
    %13235 = vmatmul.mubr.bf16.gmra.mrb[0].mxu0 %v7053
    %v13236 = vpop.f32.mrb[0].mxu0
    %v13237 = vadd.f32 %v13044, %v13236
    %v13238 = vpop.f32.mrb[0].mxu0
    %v13239 = vadd.f32 %v13046, %v13238
    %v13240 = vpop.f32.mrb[0].mxu0
    %v13241 = vadd.f32 %v13048, %v13240
    %v13242 = vpop.f32.mrb[0].mxu0
    %v13243 = vadd.f32 %v13050, %v13242
    %13244 = vmatprep.mubr.bf16.mxu0 %v7070
    %13245 = vmatmul.mubr.bf16.gmra.mrb[0].mxu0 %v7069
    %v13246 = vpop.f32.mrb[0].mxu0
    %v13247 = vadd.f32 %v13054, %v13246
    %v13248 = vpop.f32.mrb[0].mxu0
    %v13249 = vadd.f32 %v13056, %v13248
    %v13250 = vpop.f32.mrb[0].mxu0
    %v13251 = vadd.f32 %v13058, %v13250
    %v13252 = vpop.f32.mrb[0].mxu0
    %v13253 = vadd.f32 %v13060, %v13252
    %13254 = vmatprep.mubr.bf16.mxu0 %v7086
    %13255 = vmatmul.mubr.bf16.gmra.mrb[0].mxu0 %v7085
    %v13256 = vpop.f32.mrb[0].mxu0
    %v13257 = vadd.f32 %v13064, %v13256
    %v13258 = vpop.f32.mrb[0].mxu0
    %v13259 = vadd.f32 %v13066, %v13258
    %v13260 = vpop.f32.mrb[0].mxu0
    %v13261 = vadd.f32 %v13068, %v13260
    %v13262 = vpop.f32.mrb[0].mxu0
    %v13263 = vadd.f32 %v13070, %v13262
    %13264 = vmatprep.mubr.bf16.mxu0 %v7102
    %13265 = vmatmul.mubr.bf16.gmra.mrb[0].mxu0 %v7101
    %v13266 = vpop.f32.mrb[0].mxu0
    %v13267 = vadd.f32 %v13074, %v13266
    %v13268 = vpop.f32.mrb[0].mxu0
    %v13269 = vadd.f32 %v13076, %v13268
    %v13270 = vpop.f32.mrb[0].mxu0
    %v13271 = vadd.f32 %v13078, %v13270
    %v13272 = vpop.f32.mrb[0].mxu0
    %v13273 = vadd.f32 %v13080, %v13272
    %13274 = vmatprep.mubr.bf16.mxu0 %v7118
    %13275 = vmatmul.mubr.bf16.gmra.mrb[0].mxu0 %v7117
    %v13276 = vpop.f32.mrb[0].mxu0
    %v13277 = vadd.f32 %v13084, %v13276
    %v13278 = vpop.f32.mrb[0].mxu0
    %v13279 = vadd.f32 %v13086, %v13278
    %v13280 = vpop.f32.mrb[0].mxu0
    %v13281 = vadd.f32 %v13088, %v13280
    %v13282 = vpop.f32.mrb[0].mxu0
    %v13283 = vadd.f32 %v13090, %v13282
    %13284 = vmatprep.mubr.bf16.mxu0 %v7134
    %13285 = vmatmul.mubr.bf16.gmra.mrb[0].mxu0 %v7133
    %v13286 = vpop.f32.mrb[0].mxu0
    %v13287 = vadd.f32 %v13094, %v13286
    %v13288 = vpop.f32.mrb[0].mxu0
    %v13289 = vadd.f32 %v13096, %v13288
    %v13290 = vpop.f32.mrb[0].mxu0
    %v13291 = vadd.f32 %v13098, %v13290
    %v13292 = vpop.f32.mrb[0].mxu0
    %v13293 = vadd.f32 %v13100, %v13292
    %13294 = vdwg.mxu0
    %v13295 = vadd.f32 %v11593, %v11595
    %v13296 = vadd.f32 %v13295, %v13137
    %v13297 = vadd.f32 %v13296, %v13139
    %13298 = vadd.xlane.f32.xlu0 %v13297
    %v13299 = vpop.xlane.xlu0 %13298
    %v13300 = vadd.f32 %v11597, %v11599
    %v13301 = vadd.f32 %v13300, %v13141
    %v13302 = vadd.f32 %v13301, %v13143
    %13303 = vadd.xlane.f32.xlu0 %v13302
    %v13304 = vpop.xlane.xlu0 %13303
    %v13305 = vadd.f32 %v11603, %v11605
    %v13306 = vadd.f32 %v13305, %v13147
    %v13307 = vadd.f32 %v13306, %v13149
    %13308 = vadd.xlane.f32.xlu0 %v13307
    %v13309 = vpop.xlane.xlu0 %13308
    %v13310 = vadd.f32 %v11607, %v11609
    %v13311 = vadd.f32 %v13310, %v13151
    %v13312 = vadd.f32 %v13311, %v13153
    %13313 = vadd.xlane.f32.xlu0 %v13312
    %v13314 = vpop.xlane.xlu0 %13313
    %v13315 = vadd.f32 %v11613, %v11615
    %v13316 = vadd.f32 %v13315, %v13157
    %v13317 = vadd.f32 %v13316, %v13159
    %13318 = vadd.xlane.f32.xlu0 %v13317
    %v13319 = vpop.xlane.xlu0 %13318
    %v13320 = vadd.f32 %v11617, %v11619
    %v13321 = vadd.f32 %v13320, %v13161
    %v13322 = vadd.f32 %v13321, %v13163
    %13323 = vadd.xlane.f32.xlu0 %v13322
    %v13324 = vpop.xlane.xlu0 %13323
    %v13325 = vadd.f32 %v11623, %v11625
    %v13326 = vadd.f32 %v13325, %v13167
    %v13327 = vadd.f32 %v13326, %v13169
    %13328 = vadd.xlane.f32.xlu0 %v13327
    %v13329 = vpop.xlane.xlu0 %13328
    %v13330 = vadd.f32 %v11627, %v11629
    %v13331 = vadd.f32 %v13330, %v13171
    %v13332 = vadd.f32 %v13331, %v13173
    %13333 = vadd.xlane.f32.xlu0 %v13332
    %v13334 = vpop.xlane.xlu0 %13333
    %v13335 = vadd.f32 %v11633, %v11635
    %v13336 = vadd.f32 %v13335, %v13177
    %v13337 = vadd.f32 %v13336, %v13179
    %13338 = vadd.xlane.f32.xlu0 %v13337
    %v13339 = vpop.xlane.xlu0 %13338
    %v13340 = vadd.f32 %v11637, %v11639
    %v13341 = vadd.f32 %v13340, %v13181
    %v13342 = vadd.f32 %v13341, %v13183
    %13343 = vadd.xlane.f32.xlu0 %v13342
    %v13344 = vpop.xlane.xlu0 %13343
    %v13345 = vadd.f32 %v11643, %v11645
    %v13346 = vadd.f32 %v13345, %v13187
    %v13347 = vadd.f32 %v13346, %v13189
    %13348 = vadd.xlane.f32.xlu0 %v13347
    %v13349 = vpop.xlane.xlu0 %13348
    %v13350 = vadd.f32 %v11647, %v11649
    %v13351 = vadd.f32 %v13350, %v13191
    %v13352 = vadd.f32 %v13351, %v13193
    %13353 = vadd.xlane.f32.xlu0 %v13352
    %v13354 = vpop.xlane.xlu0 %13353
    %v13355 = vadd.f32 %v11653, %v11655
    %v13356 = vadd.f32 %v13355, %v13197
    %v13357 = vadd.f32 %v13356, %v13199
    %13358 = vadd.xlane.f32.xlu0 %v13357
    %v13359 = vpop.xlane.xlu0 %13358
    %v13360 = vadd.f32 %v11657, %v11659
    %v13361 = vadd.f32 %v13360, %v13201
    %v13362 = vadd.f32 %v13361, %v13203
    %13363 = vadd.xlane.f32.xlu0 %v13362
    %v13364 = vpop.xlane.xlu0 %13363
    %v13365 = vadd.f32 %v11663, %v11665
    %v13366 = vadd.f32 %v13365, %v13207
    %v13367 = vadd.f32 %v13366, %v13209
    %13368 = vadd.xlane.f32.xlu0 %v13367
    %v13369 = vpop.xlane.xlu0 %13368
    %v13370 = vadd.f32 %v11667, %v11669
    %v13371 = vadd.f32 %v13370, %v13211
    %v13372 = vadd.f32 %v13371, %v13213
    %13373 = vadd.xlane.f32.xlu0 %v13372
    %v13374 = vpop.xlane.xlu0 %13373
    %v13375 = vadd.f32 %v11673, %v11675
    %v13376 = vadd.f32 %v13375, %v13217
    %v13377 = vadd.f32 %v13376, %v13219
    %13378 = vadd.xlane.f32.xlu0 %v13377
    %v13379 = vpop.xlane.xlu0 %13378
    %v13380 = vadd.f32 %v11677, %v11679
    %v13381 = vadd.f32 %v13380, %v13221
    %v13382 = vadd.f32 %v13381, %v13223
    %13383 = vadd.xlane.f32.xlu0 %v13382
    %v13384 = vpop.xlane.xlu0 %13383
    %v13385 = vadd.f32 %v11683, %v11685
    %v13386 = vadd.f32 %v13385, %v13227
    %v13387 = vadd.f32 %v13386, %v13229
    %13388 = vadd.xlane.f32.xlu0 %v13387
    %v13389 = vpop.xlane.xlu0 %13388
    %v13390 = vadd.f32 %v11687, %v11689
    %v13391 = vadd.f32 %v13390, %v13231
    %v13392 = vadd.f32 %v13391, %v13233
    %13393 = vadd.xlane.f32.xlu0 %v13392
    %v13394 = vpop.xlane.xlu0 %13393
    %v13395 = vadd.f32 %v11693, %v11695
    %v13396 = vadd.f32 %v13395, %v13237
    %v13397 = vadd.f32 %v13396, %v13239
    %13398 = vadd.xlane.f32.xlu0 %v13397
    %v13399 = vpop.xlane.xlu0 %13398
    %v13400 = vadd.f32 %v11697, %v11699
    %v13401 = vadd.f32 %v13400, %v13241
    %v13402 = vadd.f32 %v13401, %v13243
    %13403 = vadd.xlane.f32.xlu0 %v13402
    %v13404 = vpop.xlane.xlu0 %13403
    %v13405 = vadd.f32 %v11703, %v11705
    %v13406 = vadd.f32 %v13405, %v13247
    %v13407 = vadd.f32 %v13406, %v13249
    %13408 = vadd.xlane.f32.xlu0 %v13407
    %v13409 = vpop.xlane.xlu0 %13408
    %v13410 = vadd.f32 %v11707, %v11709
    %v13411 = vadd.f32 %v13410, %v13251
    %v13412 = vadd.f32 %v13411, %v13253
    %13413 = vadd.xlane.f32.xlu0 %v13412
    %v13414 = vpop.xlane.xlu0 %13413
    %v13415 = vadd.f32 %v11713, %v11715
    %v13416 = vadd.f32 %v13415, %v13257
    %v13417 = vadd.f32 %v13416, %v13259
    %13418 = vadd.xlane.f32.xlu0 %v13417
    %v13419 = vpop.xlane.xlu0 %13418
    %v13420 = vadd.f32 %v11717, %v11719
    %v13421 = vadd.f32 %v13420, %v13261
    %v13422 = vadd.f32 %v13421, %v13263
    %13423 = vadd.xlane.f32.xlu0 %v13422
    %v13424 = vpop.xlane.xlu0 %13423
    %v13425 = vadd.f32 %v11723, %v11725
    %v13426 = vadd.f32 %v13425, %v13267
    %v13427 = vadd.f32 %v13426, %v13269
    %13428 = vadd.xlane.f32.xlu0 %v13427
    %v13429 = vpop.xlane.xlu0 %13428
    %v13430 = vadd.f32 %v11727, %v11729
    %v13431 = vadd.f32 %v13430, %v13271
    %v13432 = vadd.f32 %v13431, %v13273
    %13433 = vadd.xlane.f32.xlu0 %v13432
    %v13434 = vpop.xlane.xlu0 %13433
    %v13435 = vadd.f32 %v11733, %v11735
    %v13436 = vadd.f32 %v13435, %v13277
    %v13437 = vadd.f32 %v13436, %v13279
    %13438 = vadd.xlane.f32.xlu0 %v13437
    %v13439 = vpop.xlane.xlu0 %13438
    %v13440 = vadd.f32 %v11737, %v11739
    %v13441 = vadd.f32 %v13440, %v13281
    %v13442 = vadd.f32 %v13441, %v13283
    %13443 = vadd.xlane.f32.xlu0 %v13442
    %v13444 = vpop.xlane.xlu0 %13443
    %v13445 = vadd.f32 %v11743, %v11745
    %v13446 = vadd.f32 %v13445, %v13287
    %v13447 = vadd.f32 %v13446, %v13289
    %13448 = vadd.xlane.f32.xlu0 %v13447
    %v13449 = vpop.xlane.xlu0 %13448
    %v13450 = vadd.f32 %v11747, %v11749
    %v13451 = vadd.f32 %v13450, %v13291
    %v13452 = vadd.f32 %v13451, %v13293
    %13453 = vadd.xlane.f32.xlu0 %v13452
    %v13454 = vpop.xlane.xlu0 %13453
    %v13455 = vrcp.pop 512.0
    %v13456 = vmul.f32 %v13299, %v13455
    %v13457 = vmul.f32 %v13304, %v13455
    %v13458 = vmul.f32 %v13309, %v13455
    %v13459 = vmul.f32 %v13314, %v13455
    %v13460 = vmul.f32 %v13319, %v13455
    %v13461 = vmul.f32 %v13324, %v13455
    %v13462 = vmul.f32 %v13329, %v13455
    %v13463 = vmul.f32 %v13334, %v13455
    %v13464 = vmul.f32 %v13339, %v13455
    %v13465 = vmul.f32 %v13344, %v13455
    %v13466 = vmul.f32 %v13349, %v13455
    %v13467 = vmul.f32 %v13354, %v13455
    %v13468 = vmul.f32 %v13359, %v13455
    %v13469 = vmul.f32 %v13364, %v13455
    %v13470 = vmul.f32 %v13369, %v13455
    %v13471 = vmul.f32 %v13374, %v13455
    %v13472 = vmul.f32 %v13379, %v13455
    %v13473 = vmul.f32 %v13384, %v13455
    %v13474 = vmul.f32 %v13389, %v13455
    %v13475 = vmul.f32 %v13394, %v13455
    %v13476 = vmul.f32 %v13399, %v13455
    %v13477 = vmul.f32 %v13404, %v13455
    %v13478 = vmul.f32 %v13409, %v13455
    %v13479 = vmul.f32 %v13414, %v13455
    %v13480 = vmul.f32 %v13419, %v13455
    %v13481 = vmul.f32 %v13424, %v13455
    %v13482 = vmul.f32 %v13429, %v13455
    %v13483 = vmul.f32 %v13434, %v13455
    %v13484 = vmul.f32 %v13439, %v13455
    %v13485 = vmul.f32 %v13444, %v13455
    %v13486 = vmul.f32 %v13449, %v13455
    %v13487 = vmul.f32 %v13454, %v13455
    %v13488 = vsub.f32 %v11593, %v13456
    %v13489 = vsub.f32 %v11595, %v13456
    %v13490 = vsub.f32 %v13137, %v13456
    %v13491 = vsub.f32 %v13139, %v13456
    %v13492 = vsub.f32 %v11597, %v13457
    %v13493 = vsub.f32 %v11599, %v13457
    %v13494 = vsub.f32 %v13141, %v13457
    %v13495 = vsub.f32 %v13143, %v13457
    %v13496 = vsub.f32 %v11603, %v13458
    %v13497 = vsub.f32 %v11605, %v13458
    %v13498 = vsub.f32 %v13147, %v13458
    %v13499 = vsub.f32 %v13149, %v13458
    %v13500 = vsub.f32 %v11607, %v13459
    %v13501 = vsub.f32 %v11609, %v13459
    %v13502 = vsub.f32 %v13151, %v13459
    %v13503 = vsub.f32 %v13153, %v13459
    %v13504 = vsub.f32 %v11613, %v13460
    %v13505 = vsub.f32 %v11615, %v13460
    %v13506 = vsub.f32 %v13157, %v13460
    %v13507 = vsub.f32 %v13159, %v13460
    %v13508 = vsub.f32 %v11617, %v13461
    %v13509 = vsub.f32 %v11619, %v13461
    %v13510 = vsub.f32 %v13161, %v13461
    %v13511 = vsub.f32 %v13163, %v13461
    %v13512 = vsub.f32 %v11623, %v13462
    %v13513 = vsub.f32 %v11625, %v13462
    %v13514 = vsub.f32 %v13167, %v13462
    %v13515 = vsub.f32 %v13169, %v13462
    %v13516 = vsub.f32 %v11627, %v13463
    %v13517 = vsub.f32 %v11629, %v13463
    %v13518 = vsub.f32 %v13171, %v13463
    %v13519 = vsub.f32 %v13173, %v13463
    %v13520 = vsub.f32 %v11633, %v13464
    %v13521 = vsub.f32 %v11635, %v13464
    %v13522 = vsub.f32 %v13177, %v13464
    %v13523 = vsub.f32 %v13179, %v13464
    %v13524 = vsub.f32 %v11637, %v13465
    %v13525 = vsub.f32 %v11639, %v13465
    %v13526 = vsub.f32 %v13181, %v13465
    %v13527 = vsub.f32 %v13183, %v13465
    %v13528 = vsub.f32 %v11643, %v13466
    %v13529 = vsub.f32 %v11645, %v13466
    %v13530 = vsub.f32 %v13187, %v13466
    %v13531 = vsub.f32 %v13189, %v13466
    %v13532 = vsub.f32 %v11647, %v13467
    %v13533 = vsub.f32 %v11649, %v13467
    %v13534 = vsub.f32 %v13191, %v13467
    %v13535 = vsub.f32 %v13193, %v13467
    %v13536 = vsub.f32 %v11653, %v13468
    %v13537 = vsub.f32 %v11655, %v13468
    %v13538 = vsub.f32 %v13197, %v13468
    %v13539 = vsub.f32 %v13199, %v13468
    %v13540 = vsub.f32 %v11657, %v13469
    %v13541 = vsub.f32 %v11659, %v13469
    %v13542 = vsub.f32 %v13201, %v13469
    %v13543 = vsub.f32 %v13203, %v13469
    %v13544 = vsub.f32 %v11663, %v13470
    %v13545 = vsub.f32 %v11665, %v13470
    %v13546 = vsub.f32 %v13207, %v13470
    %v13547 = vsub.f32 %v13209, %v13470
    %v13548 = vsub.f32 %v11667, %v13471
    %v13549 = vsub.f32 %v11669, %v13471
    %v13550 = vsub.f32 %v13211, %v13471
    %v13551 = vsub.f32 %v13213, %v13471
    %v13552 = vsub.f32 %v11673, %v13472
    %v13553 = vsub.f32 %v11675, %v13472
    %v13554 = vsub.f32 %v13217, %v13472
    %v13555 = vsub.f32 %v13219, %v13472
    %v13556 = vsub.f32 %v11677, %v13473
    %v13557 = vsub.f32 %v11679, %v13473
    %v13558 = vsub.f32 %v13221, %v13473
    %v13559 = vsub.f32 %v13223, %v13473
    %v13560 = vsub.f32 %v11683, %v13474
    %v13561 = vsub.f32 %v11685, %v13474
    %v13562 = vsub.f32 %v13227, %v13474
    %v13563 = vsub.f32 %v13229, %v13474
    %v13564 = vsub.f32 %v11687, %v13475
    %v13565 = vsub.f32 %v11689, %v13475
    %v13566 = vsub.f32 %v13231, %v13475
    %v13567 = vsub.f32 %v13233, %v13475
    %v13568 = vsub.f32 %v11693, %v13476
    %v13569 = vsub.f32 %v11695, %v13476
    %v13570 = vsub.f32 %v13237, %v13476
    %v13571 = vsub.f32 %v13239, %v13476
    %v13572 = vsub.f32 %v11697, %v13477
    %v13573 = vsub.f32 %v11699, %v13477
    %v13574 = vsub.f32 %v13241, %v13477
    %v13575 = vsub.f32 %v13243, %v13477
    %v13576 = vsub.f32 %v11703, %v13478
    %v13577 = vsub.f32 %v11705, %v13478
    %v13578 = vsub.f32 %v13247, %v13478
    %v13579 = vsub.f32 %v13249, %v13478
    %v13580 = vsub.f32 %v11707, %v13479
    %v13581 = vsub.f32 %v11709, %v13479
    %v13582 = vsub.f32 %v13251, %v13479
    %v13583 = vsub.f32 %v13253, %v13479
    %v13584 = vsub.f32 %v11713, %v13480
    %v13585 = vsub.f32 %v11715, %v13480
    %v13586 = vsub.f32 %v13257, %v13480
    %v13587 = vsub.f32 %v13259, %v13480
    %v13588 = vsub.f32 %v11717, %v13481
    %v13589 = vsub.f32 %v11719, %v13481
    %v13590 = vsub.f32 %v13261, %v13481
    %v13591 = vsub.f32 %v13263, %v13481
    %v13592 = vsub.f32 %v11723, %v13482
    %v13593 = vsub.f32 %v11725, %v13482
    %v13594 = vsub.f32 %v13267, %v13482
    %v13595 = vsub.f32 %v13269, %v13482
    %v13596 = vsub.f32 %v11727, %v13483
    %v13597 = vsub.f32 %v11729, %v13483
    %v13598 = vsub.f32 %v13271, %v13483
    %v13599 = vsub.f32 %v13273, %v13483
    %v13600 = vsub.f32 %v11733, %v13484
    %v13601 = vsub.f32 %v11735, %v13484
    %v13602 = vsub.f32 %v13277, %v13484
    %v13603 = vsub.f32 %v13279, %v13484
    %v13604 = vsub.f32 %v11737, %v13485
    %v13605 = vsub.f32 %v11739, %v13485
    %v13606 = vsub.f32 %v13281, %v13485
    %v13607 = vsub.f32 %v13283, %v13485
    %v13608 = vsub.f32 %v11743, %v13486
    %v13609 = vsub.f32 %v11745, %v13486
    %v13610 = vsub.f32 %v13287, %v13486
    %v13611 = vsub.f32 %v13289, %v13486
    %v13612 = vsub.f32 %v11747, %v13487
    %v13613 = vsub.f32 %v11749, %v13487
    %v13614 = vsub.f32 %v13291, %v13487
    %v13615 = vsub.f32 %v13293, %v13487
    %v13616 = vmul.f32 %v13488, %v13488
    %v13617 = vmul.f32 %v13489, %v13489
    %v13618 = vmul.f32 %v13490, %v13490
    %v13619 = vmul.f32 %v13491, %v13491
    %v13620 = vmul.f32 %v13492, %v13492
    %v13621 = vmul.f32 %v13493, %v13493
    %v13622 = vmul.f32 %v13494, %v13494
    %v13623 = vmul.f32 %v13495, %v13495
    %v13624 = vmul.f32 %v13496, %v13496
    %v13625 = vmul.f32 %v13497, %v13497
    %v13626 = vmul.f32 %v13498, %v13498
    %v13627 = vmul.f32 %v13499, %v13499
    %v13628 = vmul.f32 %v13500, %v13500
    %v13629 = vmul.f32 %v13501, %v13501
    %v13630 = vmul.f32 %v13502, %v13502
    %v13631 = vmul.f32 %v13503, %v13503
    %v13632 = vmul.f32 %v13504, %v13504
    %v13633 = vmul.f32 %v13505, %v13505
    %v13634 = vmul.f32 %v13506, %v13506
    %v13635 = vmul.f32 %v13507, %v13507
    %v13636 = vmul.f32 %v13508, %v13508
    %v13637 = vmul.f32 %v13509, %v13509
    %v13638 = vmul.f32 %v13510, %v13510
    %v13639 = vmul.f32 %v13511, %v13511
    %v13640 = vmul.f32 %v13512, %v13512
    %v13641 = vmul.f32 %v13513, %v13513
    %v13642 = vmul.f32 %v13514, %v13514
    %v13643 = vmul.f32 %v13515, %v13515
    %v13644 = vmul.f32 %v13516, %v13516
    %v13645 = vmul.f32 %v13517, %v13517
    %v13646 = vmul.f32 %v13518, %v13518
    %v13647 = vmul.f32 %v13519, %v13519
    %v13648 = vmul.f32 %v13520, %v13520
    %v13649 = vmul.f32 %v13521, %v13521
    %v13650 = vmul.f32 %v13522, %v13522
    %v13651 = vmul.f32 %v13523, %v13523
    %v13652 = vmul.f32 %v13524, %v13524
    %v13653 = vmul.f32 %v13525, %v13525
    %v13654 = vmul.f32 %v13526, %v13526
    %v13655 = vmul.f32 %v13527, %v13527
    %v13656 = vmul.f32 %v13528, %v13528
    %v13657 = vmul.f32 %v13529, %v13529
    %v13658 = vmul.f32 %v13530, %v13530
    %v13659 = vmul.f32 %v13531, %v13531
    %v13660 = vmul.f32 %v13532, %v13532
    %v13661 = vmul.f32 %v13533, %v13533
    %v13662 = vmul.f32 %v13534, %v13534
    %v13663 = vmul.f32 %v13535, %v13535
    %v13664 = vmul.f32 %v13536, %v13536
    %v13665 = vmul.f32 %v13537, %v13537
    %v13666 = vmul.f32 %v13538, %v13538
    %v13667 = vmul.f32 %v13539, %v13539
    %v13668 = vmul.f32 %v13540, %v13540
    %v13669 = vmul.f32 %v13541, %v13541
    %v13670 = vmul.f32 %v13542, %v13542
    %v13671 = vmul.f32 %v13543, %v13543
    %v13672 = vmul.f32 %v13544, %v13544
    %v13673 = vmul.f32 %v13545, %v13545
    %v13674 = vmul.f32 %v13546, %v13546
    %v13675 = vmul.f32 %v13547, %v13547
    %v13676 = vmul.f32 %v13548, %v13548
    %v13677 = vmul.f32 %v13549, %v13549
    %v13678 = vmul.f32 %v13550, %v13550
    %v13679 = vmul.f32 %v13551, %v13551
    %v13680 = vmul.f32 %v13552, %v13552
    %v13681 = vmul.f32 %v13553, %v13553
    %v13682 = vmul.f32 %v13554, %v13554
    %v13683 = vmul.f32 %v13555, %v13555
    %v13684 = vmul.f32 %v13556, %v13556
    %v13685 = vmul.f32 %v13557, %v13557
    %v13686 = vmul.f32 %v13558, %v13558
    %v13687 = vmul.f32 %v13559, %v13559
    %v13688 = vmul.f32 %v13560, %v13560
    %v13689 = vmul.f32 %v13561, %v13561
    %v13690 = vmul.f32 %v13562, %v13562
    %v13691 = vmul.f32 %v13563, %v13563
    %v13692 = vmul.f32 %v13564, %v13564
    %v13693 = vmul.f32 %v13565, %v13565
    %v13694 = vmul.f32 %v13566, %v13566
    %v13695 = vmul.f32 %v13567, %v13567
    %v13696 = vmul.f32 %v13568, %v13568
    %v13697 = vmul.f32 %v13569, %v13569
    %v13698 = vmul.f32 %v13570, %v13570
    %v13699 = vmul.f32 %v13571, %v13571
    %v13700 = vmul.f32 %v13572, %v13572
    %v13701 = vmul.f32 %v13573, %v13573
    %v13702 = vmul.f32 %v13574, %v13574
    %v13703 = vmul.f32 %v13575, %v13575
    %v13704 = vmul.f32 %v13576, %v13576
    %v13705 = vmul.f32 %v13577, %v13577
    %v13706 = vmul.f32 %v13578, %v13578
    %v13707 = vmul.f32 %v13579, %v13579
    %v13708 = vmul.f32 %v13580, %v13580
    %v13709 = vmul.f32 %v13581, %v13581
    %v13710 = vmul.f32 %v13582, %v13582
    %v13711 = vmul.f32 %v13583, %v13583
    %v13712 = vmul.f32 %v13584, %v13584
    %v13713 = vmul.f32 %v13585, %v13585
    %v13714 = vmul.f32 %v13586, %v13586
    %v13715 = vmul.f32 %v13587, %v13587
    %v13716 = vmul.f32 %v13588, %v13588
    %v13717 = vmul.f32 %v13589, %v13589
    %v13718 = vmul.f32 %v13590, %v13590
    %v13719 = vmul.f32 %v13591, %v13591
    %v13720 = vmul.f32 %v13592, %v13592
    %v13721 = vmul.f32 %v13593, %v13593
    %v13722 = vmul.f32 %v13594, %v13594
    %v13723 = vmul.f32 %v13595, %v13595
    %v13724 = vmul.f32 %v13596, %v13596
    %v13725 = vmul.f32 %v13597, %v13597
    %v13726 = vmul.f32 %v13598, %v13598
    %v13727 = vmul.f32 %v13599, %v13599
    %v13728 = vmul.f32 %v13600, %v13600
    %v13729 = vmul.f32 %v13601, %v13601
    %v13730 = vmul.f32 %v13602, %v13602
    %v13731 = vmul.f32 %v13603, %v13603
    %v13732 = vmul.f32 %v13604, %v13604
    %v13733 = vmul.f32 %v13605, %v13605
    %v13734 = vmul.f32 %v13606, %v13606
    %v13735 = vmul.f32 %v13607, %v13607
    %v13736 = vmul.f32 %v13608, %v13608
    %v13737 = vmul.f32 %v13609, %v13609
    %v13738 = vmul.f32 %v13610, %v13610
    %v13739 = vmul.f32 %v13611, %v13611
    %v13740 = vmul.f32 %v13612, %v13612
    %v13741 = vmul.f32 %v13613, %v13613
    %v13742 = vmul.f32 %v13614, %v13614
    %v13743 = vmul.f32 %v13615, %v13615
    %v13744 = vadd.f32 %v13616, %v13617
    %v13745 = vadd.f32 %v13744, %v13618
    %v13746 = vadd.f32 %v13745, %v13619
    %13747 = vadd.xlane.f32.xlu0 %v13746
    %v13748 = vpop.xlane.xlu0 %13747
    %v13749 = vadd.f32 %v13620, %v13621
    %v13750 = vadd.f32 %v13749, %v13622
    %v13751 = vadd.f32 %v13750, %v13623
    %13752 = vadd.xlane.f32.xlu0 %v13751
    %v13753 = vpop.xlane.xlu0 %13752
    %v13754 = vadd.f32 %v13624, %v13625
    %v13755 = vadd.f32 %v13754, %v13626
    %v13756 = vadd.f32 %v13755, %v13627
    %13757 = vadd.xlane.f32.xlu0 %v13756
    %v13758 = vpop.xlane.xlu0 %13757
    %v13759 = vadd.f32 %v13628, %v13629
    %v13760 = vadd.f32 %v13759, %v13630
    %v13761 = vadd.f32 %v13760, %v13631
    %13762 = vadd.xlane.f32.xlu0 %v13761
    %v13763 = vpop.xlane.xlu0 %13762
    %v13764 = vadd.f32 %v13632, %v13633
    %v13765 = vadd.f32 %v13764, %v13634
    %v13766 = vadd.f32 %v13765, %v13635
    %13767 = vadd.xlane.f32.xlu0 %v13766
    %v13768 = vpop.xlane.xlu0 %13767
    %v13769 = vadd.f32 %v13636, %v13637
    %v13770 = vadd.f32 %v13769, %v13638
    %v13771 = vadd.f32 %v13770, %v13639
    %13772 = vadd.xlane.f32.xlu0 %v13771
    %v13773 = vpop.xlane.xlu0 %13772
    %v13774 = vadd.f32 %v13640, %v13641
    %v13775 = vadd.f32 %v13774, %v13642
    %v13776 = vadd.f32 %v13775, %v13643
    %13777 = vadd.xlane.f32.xlu0 %v13776
    %v13778 = vpop.xlane.xlu0 %13777
    %v13779 = vadd.f32 %v13644, %v13645
    %v13780 = vadd.f32 %v13779, %v13646
    %v13781 = vadd.f32 %v13780, %v13647
    %13782 = vadd.xlane.f32.xlu0 %v13781
    %v13783 = vpop.xlane.xlu0 %13782
    %v13784 = vadd.f32 %v13648, %v13649
    %v13785 = vadd.f32 %v13784, %v13650
    %v13786 = vadd.f32 %v13785, %v13651
    %13787 = vadd.xlane.f32.xlu0 %v13786
    %v13788 = vpop.xlane.xlu0 %13787
    %v13789 = vadd.f32 %v13652, %v13653
    %v13790 = vadd.f32 %v13789, %v13654
    %v13791 = vadd.f32 %v13790, %v13655
    %13792 = vadd.xlane.f32.xlu0 %v13791
    %v13793 = vpop.xlane.xlu0 %13792
    %v13794 = vadd.f32 %v13656, %v13657
    %v13795 = vadd.f32 %v13794, %v13658
    %v13796 = vadd.f32 %v13795, %v13659
    %13797 = vadd.xlane.f32.xlu0 %v13796
    %v13798 = vpop.xlane.xlu0 %13797
    %v13799 = vadd.f32 %v13660, %v13661
    %v13800 = vadd.f32 %v13799, %v13662
    %v13801 = vadd.f32 %v13800, %v13663
    %13802 = vadd.xlane.f32.xlu0 %v13801
    %v13803 = vpop.xlane.xlu0 %13802
    %v13804 = vadd.f32 %v13664, %v13665
    %v13805 = vadd.f32 %v13804, %v13666
    %v13806 = vadd.f32 %v13805, %v13667
    %13807 = vadd.xlane.f32.xlu0 %v13806
    %v13808 = vpop.xlane.xlu0 %13807
    %v13809 = vadd.f32 %v13668, %v13669
    %v13810 = vadd.f32 %v13809, %v13670
    %v13811 = vadd.f32 %v13810, %v13671
    %13812 = vadd.xlane.f32.xlu0 %v13811
    %v13813 = vpop.xlane.xlu0 %13812
    %v13814 = vadd.f32 %v13672, %v13673
    %v13815 = vadd.f32 %v13814, %v13674
    %v13816 = vadd.f32 %v13815, %v13675
    %13817 = vadd.xlane.f32.xlu0 %v13816
    %v13818 = vpop.xlane.xlu0 %13817
    %v13819 = vadd.f32 %v13676, %v13677
    %v13820 = vadd.f32 %v13819, %v13678
    %v13821 = vadd.f32 %v13820, %v13679
    %13822 = vadd.xlane.f32.xlu0 %v13821
    %v13823 = vpop.xlane.xlu0 %13822
    %v13824 = vadd.f32 %v13680, %v13681
    %v13825 = vadd.f32 %v13824, %v13682
    %v13826 = vadd.f32 %v13825, %v13683
    %13827 = vadd.xlane.f32.xlu0 %v13826
    %v13828 = vpop.xlane.xlu0 %13827
    %v13829 = vadd.f32 %v13684, %v13685
    %v13830 = vadd.f32 %v13829, %v13686
    %v13831 = vadd.f32 %v13830, %v13687
    %13832 = vadd.xlane.f32.xlu0 %v13831
    %v13833 = vpop.xlane.xlu0 %13832
    %v13834 = vadd.f32 %v13688, %v13689
    %v13835 = vadd.f32 %v13834, %v13690
    %v13836 = vadd.f32 %v13835, %v13691
    %13837 = vadd.xlane.f32.xlu0 %v13836
    %v13838 = vpop.xlane.xlu0 %13837
    %v13839 = vadd.f32 %v13692, %v13693
    %v13840 = vadd.f32 %v13839, %v13694
    %v13841 = vadd.f32 %v13840, %v13695
    %13842 = vadd.xlane.f32.xlu0 %v13841
    %v13843 = vpop.xlane.xlu0 %13842
    %v13844 = vadd.f32 %v13696, %v13697
    %v13845 = vadd.f32 %v13844, %v13698
    %v13846 = vadd.f32 %v13845, %v13699
    %13847 = vadd.xlane.f32.xlu0 %v13846
    %v13848 = vpop.xlane.xlu0 %13847
    %v13849 = vadd.f32 %v13700, %v13701
    %v13850 = vadd.f32 %v13849, %v13702
    %v13851 = vadd.f32 %v13850, %v13703
    %13852 = vadd.xlane.f32.xlu0 %v13851
    %v13853 = vpop.xlane.xlu0 %13852
    %v13854 = vadd.f32 %v13704, %v13705
    %v13855 = vadd.f32 %v13854, %v13706
    %v13856 = vadd.f32 %v13855, %v13707
    %13857 = vadd.xlane.f32.xlu0 %v13856
    %v13858 = vpop.xlane.xlu0 %13857
    %v13859 = vadd.f32 %v13708, %v13709
    %v13860 = vadd.f32 %v13859, %v13710
    %v13861 = vadd.f32 %v13860, %v13711
    %13862 = vadd.xlane.f32.xlu0 %v13861
    %v13863 = vpop.xlane.xlu0 %13862
    %v13864 = vadd.f32 %v13712, %v13713
    %v13865 = vadd.f32 %v13864, %v13714
    %v13866 = vadd.f32 %v13865, %v13715
    %13867 = vadd.xlane.f32.xlu0 %v13866
    %v13868 = vpop.xlane.xlu0 %13867
    %v13869 = vadd.f32 %v13716, %v13717
    %v13870 = vadd.f32 %v13869, %v13718
    %v13871 = vadd.f32 %v13870, %v13719
    %13872 = vadd.xlane.f32.xlu0 %v13871
    %v13873 = vpop.xlane.xlu0 %13872
    %v13874 = vadd.f32 %v13720, %v13721
    %v13875 = vadd.f32 %v13874, %v13722
    %v13876 = vadd.f32 %v13875, %v13723
    %13877 = vadd.xlane.f32.xlu0 %v13876
    %v13878 = vpop.xlane.xlu0 %13877
    %v13879 = vadd.f32 %v13724, %v13725
    %v13880 = vadd.f32 %v13879, %v13726
    %v13881 = vadd.f32 %v13880, %v13727
    %13882 = vadd.xlane.f32.xlu0 %v13881
    %v13883 = vpop.xlane.xlu0 %13882
    %v13884 = vadd.f32 %v13728, %v13729
    %v13885 = vadd.f32 %v13884, %v13730
    %v13886 = vadd.f32 %v13885, %v13731
    %13887 = vadd.xlane.f32.xlu0 %v13886
    %v13888 = vpop.xlane.xlu0 %13887
    %v13889 = vadd.f32 %v13732, %v13733
    %v13890 = vadd.f32 %v13889, %v13734
    %v13891 = vadd.f32 %v13890, %v13735
    %13892 = vadd.xlane.f32.xlu0 %v13891
    %v13893 = vpop.xlane.xlu0 %13892
    %v13894 = vadd.f32 %v13736, %v13737
    %v13895 = vadd.f32 %v13894, %v13738
    %v13896 = vadd.f32 %v13895, %v13739
    %13897 = vadd.xlane.f32.xlu0 %v13896
    %v13898 = vpop.xlane.xlu0 %13897
    %v13899 = vadd.f32 %v13740, %v13741
    %v13900 = vadd.f32 %v13899, %v13742
    %v13901 = vadd.f32 %v13900, %v13743
    %13902 = vadd.xlane.f32.xlu0 %v13901
    %v13903 = vpop.xlane.xlu0 %13902
    %v13904 = vmul.f32 %v13748, %v13455
    %v13905 = vmul.f32 %v13753, %v13455
    %v13906 = vmul.f32 %v13758, %v13455
    %v13907 = vmul.f32 %v13763, %v13455
    %v13908 = vmul.f32 %v13768, %v13455
    %v13909 = vmul.f32 %v13773, %v13455
    %v13910 = vmul.f32 %v13778, %v13455
    %v13911 = vmul.f32 %v13783, %v13455
    %v13912 = vmul.f32 %v13788, %v13455
    %v13913 = vmul.f32 %v13793, %v13455
    %v13914 = vmul.f32 %v13798, %v13455
    %v13915 = vmul.f32 %v13803, %v13455
    %v13916 = vmul.f32 %v13808, %v13455
    %v13917 = vmul.f32 %v13813, %v13455
    %v13918 = vmul.f32 %v13818, %v13455
    %v13919 = vmul.f32 %v13823, %v13455
    %v13920 = vmul.f32 %v13828, %v13455
    %v13921 = vmul.f32 %v13833, %v13455
    %v13922 = vmul.f32 %v13838, %v13455
    %v13923 = vmul.f32 %v13843, %v13455
    %v13924 = vmul.f32 %v13848, %v13455
    %v13925 = vmul.f32 %v13853, %v13455
    %v13926 = vmul.f32 %v13858, %v13455
    %v13927 = vmul.f32 %v13863, %v13455
    %v13928 = vmul.f32 %v13868, %v13455
    %v13929 = vmul.f32 %v13873, %v13455
    %v13930 = vmul.f32 %v13878, %v13455
    %v13931 = vmul.f32 %v13883, %v13455
    %v13932 = vmul.f32 %v13888, %v13455
    %v13933 = vmul.f32 %v13893, %v13455
    %v13934 = vmul.f32 %v13898, %v13455
    %v13935 = vmul.f32 %v13903, %v13455
    %v13936 = vadd.f32 %v13904, 1e-05
    %v13937 = vadd.f32 %v13905, 1e-05
    %v13938 = vadd.f32 %v13906, 1e-05
    %v13939 = vadd.f32 %v13907, 1e-05
    %v13940 = vadd.f32 %v13908, 1e-05
    %v13941 = vadd.f32 %v13909, 1e-05
    %v13942 = vadd.f32 %v13910, 1e-05
    %v13943 = vadd.f32 %v13911, 1e-05
    %v13944 = vadd.f32 %v13912, 1e-05
    %v13945 = vadd.f32 %v13913, 1e-05
    %v13946 = vadd.f32 %v13914, 1e-05
    %v13947 = vadd.f32 %v13915, 1e-05
    %v13948 = vadd.f32 %v13916, 1e-05
    %v13949 = vadd.f32 %v13917, 1e-05
    %v13950 = vadd.f32 %v13918, 1e-05
    %v13951 = vadd.f32 %v13919, 1e-05
    %v13952 = vadd.f32 %v13920, 1e-05
    %v13953 = vadd.f32 %v13921, 1e-05
    %v13954 = vadd.f32 %v13922, 1e-05
    %v13955 = vadd.f32 %v13923, 1e-05
    %v13956 = vadd.f32 %v13924, 1e-05
    %v13957 = vadd.f32 %v13925, 1e-05
    %v13958 = vadd.f32 %v13926, 1e-05
    %v13959 = vadd.f32 %v13927, 1e-05
    %v13960 = vadd.f32 %v13928, 1e-05
    %v13961 = vadd.f32 %v13929, 1e-05
    %v13962 = vadd.f32 %v13930, 1e-05
    %v13963 = vadd.f32 %v13931, 1e-05
    %v13964 = vadd.f32 %v13932, 1e-05
    %v13965 = vadd.f32 %v13933, 1e-05
    %v13966 = vadd.f32 %v13934, 1e-05
    %v13967 = vadd.f32 %v13935, 1e-05
    %v13968 = vrsqrt.pop %v13936
    %v13969 = vrsqrt.pop %v13937
    %v13970 = vrsqrt.pop %v13938
    %v13971 = vrsqrt.pop %v13939
    %v13972 = vrsqrt.pop %v13940
    %v13973 = vrsqrt.pop %v13941
    %v13974 = vrsqrt.pop %v13942
    %v13975 = vrsqrt.pop %v13943
    %v13976 = vrsqrt.pop %v13944
    %v13977 = vrsqrt.pop %v13945
    %v13978 = vrsqrt.pop %v13946
    %v13979 = vrsqrt.pop %v13947
    %v13980 = vrsqrt.pop %v13948
    %v13981 = vrsqrt.pop %v13949
    %v13982 = vrsqrt.pop %v13950
    %v13983 = vrsqrt.pop %v13951
    %v13984 = vrsqrt.pop %v13952
    %v13985 = vrsqrt.pop %v13953
    %v13986 = vrsqrt.pop %v13954
    %v13987 = vrsqrt.pop %v13955
    %v13988 = vrsqrt.pop %v13956
    %v13989 = vrsqrt.pop %v13957
    %v13990 = vrsqrt.pop %v13958
    %v13991 = vrsqrt.pop %v13959
    %v13992 = vrsqrt.pop %v13960
    %v13993 = vrsqrt.pop %v13961
    %v13994 = vrsqrt.pop %v13962
    %v13995 = vrsqrt.pop %v13963
    %v13996 = vrsqrt.pop %v13964
    %v13997 = vrsqrt.pop %v13965
    %v13998 = vrsqrt.pop %v13966
    %v13999 = vrsqrt.pop %v13967
    %v14000 = vmul.f32 %v13488, %v13968
    %v14001 = vmul.f32 %v13489, %v13968
    %v14002 = vmul.f32 %v13490, %v13968
    %v14003 = vmul.f32 %v13491, %v13968
    %v14004 = vmul.f32 %v13492, %v13969
    %v14005 = vmul.f32 %v13493, %v13969
    %v14006 = vmul.f32 %v13494, %v13969
    %v14007 = vmul.f32 %v13495, %v13969
    %v14008 = vmul.f32 %v13496, %v13970
    %v14009 = vmul.f32 %v13497, %v13970
    %v14010 = vmul.f32 %v13498, %v13970
    %v14011 = vmul.f32 %v13499, %v13970
    %v14012 = vmul.f32 %v13500, %v13971
    %v14013 = vmul.f32 %v13501, %v13971
    %v14014 = vmul.f32 %v13502, %v13971
    %v14015 = vmul.f32 %v13503, %v13971
    %v14016 = vmul.f32 %v13504, %v13972
    %v14017 = vmul.f32 %v13505, %v13972
    %v14018 = vmul.f32 %v13506, %v13972
    %v14019 = vmul.f32 %v13507, %v13972
    %v14020 = vmul.f32 %v13508, %v13973
    %v14021 = vmul.f32 %v13509, %v13973
    %v14022 = vmul.f32 %v13510, %v13973
    %v14023 = vmul.f32 %v13511, %v13973
    %v14024 = vmul.f32 %v13512, %v13974
    %v14025 = vmul.f32 %v13513, %v13974
    %v14026 = vmul.f32 %v13514, %v13974
    %v14027 = vmul.f32 %v13515, %v13974
    %v14028 = vmul.f32 %v13516, %v13975
    %v14029 = vmul.f32 %v13517, %v13975
    %v14030 = vmul.f32 %v13518, %v13975
    %v14031 = vmul.f32 %v13519, %v13975
    %v14032 = vmul.f32 %v13520, %v13976
    %v14033 = vmul.f32 %v13521, %v13976
    %v14034 = vmul.f32 %v13522, %v13976
    %v14035 = vmul.f32 %v13523, %v13976
    %v14036 = vmul.f32 %v13524, %v13977
    %v14037 = vmul.f32 %v13525, %v13977
    %v14038 = vmul.f32 %v13526, %v13977
    %v14039 = vmul.f32 %v13527, %v13977
    %v14040 = vmul.f32 %v13528, %v13978
    %v14041 = vmul.f32 %v13529, %v13978
    %v14042 = vmul.f32 %v13530, %v13978
    %v14043 = vmul.f32 %v13531, %v13978
    %v14044 = vmul.f32 %v13532, %v13979
    %v14045 = vmul.f32 %v13533, %v13979
    %v14046 = vmul.f32 %v13534, %v13979
    %v14047 = vmul.f32 %v13535, %v13979
    %v14048 = vmul.f32 %v13536, %v13980
    %v14049 = vmul.f32 %v13537, %v13980
    %v14050 = vmul.f32 %v13538, %v13980
    %v14051 = vmul.f32 %v13539, %v13980
    %v14052 = vmul.f32 %v13540, %v13981
    %v14053 = vmul.f32 %v13541, %v13981
    %v14054 = vmul.f32 %v13542, %v13981
    %v14055 = vmul.f32 %v13543, %v13981
    %v14056 = vmul.f32 %v13544, %v13982
    %v14057 = vmul.f32 %v13545, %v13982
    %v14058 = vmul.f32 %v13546, %v13982
    %v14059 = vmul.f32 %v13547, %v13982
    %v14060 = vmul.f32 %v13548, %v13983
    %v14061 = vmul.f32 %v13549, %v13983
    %v14062 = vmul.f32 %v13550, %v13983
    %v14063 = vmul.f32 %v13551, %v13983
    %v14064 = vmul.f32 %v13552, %v13984
    %v14065 = vmul.f32 %v13553, %v13984
    %v14066 = vmul.f32 %v13554, %v13984
    %v14067 = vmul.f32 %v13555, %v13984
    %v14068 = vmul.f32 %v13556, %v13985
    %v14069 = vmul.f32 %v13557, %v13985
    %v14070 = vmul.f32 %v13558, %v13985
    %v14071 = vmul.f32 %v13559, %v13985
    %v14072 = vmul.f32 %v13560, %v13986
    %v14073 = vmul.f32 %v13561, %v13986
    %v14074 = vmul.f32 %v13562, %v13986
    %v14075 = vmul.f32 %v13563, %v13986
    %v14076 = vmul.f32 %v13564, %v13987
    %v14077 = vmul.f32 %v13565, %v13987
    %v14078 = vmul.f32 %v13566, %v13987
    %v14079 = vmul.f32 %v13567, %v13987
    %v14080 = vmul.f32 %v13568, %v13988
    %v14081 = vmul.f32 %v13569, %v13988
    %v14082 = vmul.f32 %v13570, %v13988
    %v14083 = vmul.f32 %v13571, %v13988
    %v14084 = vmul.f32 %v13572, %v13989
    %v14085 = vmul.f32 %v13573, %v13989
    %v14086 = vmul.f32 %v13574, %v13989
    %v14087 = vmul.f32 %v13575, %v13989
    %v14088 = vmul.f32 %v13576, %v13990
    %v14089 = vmul.f32 %v13577, %v13990
    %v14090 = vmul.f32 %v13578, %v13990
    %v14091 = vmul.f32 %v13579, %v13990
    %v14092 = vmul.f32 %v13580, %v13991
    %v14093 = vmul.f32 %v13581, %v13991
    %v14094 = vmul.f32 %v13582, %v13991
    %v14095 = vmul.f32 %v13583, %v13991
    %v14096 = vmul.f32 %v13584, %v13992
    %v14097 = vmul.f32 %v13585, %v13992
    %v14098 = vmul.f32 %v13586, %v13992
    %v14099 = vmul.f32 %v13587, %v13992
    %v14100 = vmul.f32 %v13588, %v13993
    %v14101 = vmul.f32 %v13589, %v13993
    %v14102 = vmul.f32 %v13590, %v13993
    %v14103 = vmul.f32 %v13591, %v13993
    %v14104 = vmul.f32 %v13592, %v13994
    %v14105 = vmul.f32 %v13593, %v13994
    %v14106 = vmul.f32 %v13594, %v13994
    %v14107 = vmul.f32 %v13595, %v13994
    %v14108 = vmul.f32 %v13596, %v13995
    %v14109 = vmul.f32 %v13597, %v13995
    %v14110 = vmul.f32 %v13598, %v13995
    %v14111 = vmul.f32 %v13599, %v13995
    %v14112 = vmul.f32 %v13600, %v13996
    %v14113 = vmul.f32 %v13601, %v13996
    %v14114 = vmul.f32 %v13602, %v13996
    %v14115 = vmul.f32 %v13603, %v13996
    %v14116 = vmul.f32 %v13604, %v13997
    %v14117 = vmul.f32 %v13605, %v13997
    %v14118 = vmul.f32 %v13606, %v13997
    %v14119 = vmul.f32 %v13607, %v13997
    %v14120 = vmul.f32 %v13608, %v13998
    %v14121 = vmul.f32 %v13609, %v13998
    %v14122 = vmul.f32 %v13610, %v13998
    %v14123 = vmul.f32 %v13611, %v13998
    %v14124 = vmul.f32 %v13612, %v13999
    %v14125 = vmul.f32 %v13613, %v13999
    %v14126 = vmul.f32 %v13614, %v13999
    %v14127 = vmul.f32 %v13615, %v13999
    %14128 = vst [vmem:[#allocation2] sm:$0xff] %v14000
    %14129 = vst [vmem:[#allocation2 + $0x8] sm:$0xff] %v14001
    %14130 = vst [vmem:[#allocation2 + $0x10] sm:$0xff] %v14002
    %14131 = vst [vmem:[#allocation2 + $0x18] sm:$0xff] %v14003
    %14132 = vst [vmem:[#allocation2 + $0x20] sm:$0xff] %v14004
    %14133 = vst [vmem:[#allocation2 + $0x28] sm:$0xff] %v14005
    %14134 = vst [vmem:[#allocation2 + $0x30] sm:$0xff] %v14006
    %14135 = vst [vmem:[#allocation2 + $0x38] sm:$0xff] %v14007
    %14136 = vst [vmem:[#allocation2 + $0x40] sm:$0xff] %v14008
    %14137 = vst [vmem:[#allocation2 + $0x48] sm:$0xff] %v14009
    %14138 = vst [vmem:[#allocation2 + $0x50] sm:$0xff] %v14010
    %14139 = vst [vmem:[#allocation2 + $0x58] sm:$0xff] %v14011
    %14140 = vst [vmem:[#allocation2 + $0x60] sm:$0xff] %v14012
    %14141 = vst [vmem:[#allocation2 + $0x68] sm:$0xff] %v14013
    %14142 = vst [vmem:[#allocation2 + $0x70] sm:$0xff] %v14014
    %14143 = vst [vmem:[#allocation2 + $0x78] sm:$0xff] %v14015
    %14144 = vst [vmem:[#allocation2 + $0x80] sm:$0xff] %v14016
    %14145 = vst [vmem:[#allocation2 + $0x88] sm:$0xff] %v14017
    %14146 = vst [vmem:[#allocation2 + $0x90] sm:$0xff] %v14018
    %14147 = vst [vmem:[#allocation2 + $0x98] sm:$0xff] %v14019
    %14148 = vst [vmem:[#allocation2 + $0xa0] sm:$0xff] %v14020
    %14149 = vst [vmem:[#allocation2 + $0xa8] sm:$0xff] %v14021
    %14150 = vst [vmem:[#allocation2 + $0xb0] sm:$0xff] %v14022
    %14151 = vst [vmem:[#allocation2 + $0xb8] sm:$0xff] %v14023
    %14152 = vst [vmem:[#allocation2 + $0xc0] sm:$0xff] %v14024
    %14153 = vst [vmem:[#allocation2 + $0xc8] sm:$0xff] %v14025
    %14154 = vst [vmem:[#allocation2 + $0xd0] sm:$0xff] %v14026
    %14155 = vst [vmem:[#allocation2 + $0xd8] sm:$0xff] %v14027
    %14156 = vst [vmem:[#allocation2 + $0xe0] sm:$0xff] %v14028
    %14157 = vst [vmem:[#allocation2 + $0xe8] sm:$0xff] %v14029
    %14158 = vst [vmem:[#allocation2 + $0xf0] sm:$0xff] %v14030
    %14159 = vst [vmem:[#allocation2 + $0xf8] sm:$0xff] %v14031
    %14160 = vst [vmem:[#allocation2 + $0x100] sm:$0xff] %v14032
    %14161 = vst [vmem:[#allocation2 + $0x108] sm:$0xff] %v14033
    %14162 = vst [vmem:[#allocation2 + $0x110] sm:$0xff] %v14034
    %14163 = vst [vmem:[#allocation2 + $0x118] sm:$0xff] %v14035
    %14164 = vst [vmem:[#allocation2 + $0x120] sm:$0xff] %v14036
    %14165 = vst [vmem:[#allocation2 + $0x128] sm:$0xff] %v14037
    %14166 = vst [vmem:[#allocation2 + $0x130] sm:$0xff] %v14038
    %14167 = vst [vmem:[#allocation2 + $0x138] sm:$0xff] %v14039
    %14168 = vst [vmem:[#allocation2 + $0x140] sm:$0xff] %v14040
    %14169 = vst [vmem:[#allocation2 + $0x148] sm:$0xff] %v14041
    %14170 = vst [vmem:[#allocation2 + $0x150] sm:$0xff] %v14042
    %14171 = vst [vmem:[#allocation2 + $0x158] sm:$0xff] %v14043
    %14172 = vst [vmem:[#allocation2 + $0x160] sm:$0xff] %v14044
    %14173 = vst [vmem:[#allocation2 + $0x168] sm:$0xff] %v14045
    %14174 = vst [vmem:[#allocation2 + $0x170] sm:$0xff] %v14046
    %14175 = vst [vmem:[#allocation2 + $0x178] sm:$0xff] %v14047
    %14176 = vst [vmem:[#allocation2 + $0x180] sm:$0xff] %v14048
    %14177 = vst [vmem:[#allocation2 + $0x188] sm:$0xff] %v14049
    %14178 = vst [vmem:[#allocation2 + $0x190] sm:$0xff] %v14050
    %14179 = vst [vmem:[#allocation2 + $0x198] sm:$0xff] %v14051
    %14180 = vst [vmem:[#allocation2 + $0x1a0] sm:$0xff] %v14052
    %14181 = vst [vmem:[#allocation2 + $0x1a8] sm:$0xff] %v14053
    %14182 = vst [vmem:[#allocation2 + $0x1b0] sm:$0xff] %v14054
    %14183 = vst [vmem:[#allocation2 + $0x1b8] sm:$0xff] %v14055
    %14184 = vst [vmem:[#allocation2 + $0x1c0] sm:$0xff] %v14056
    %14185 = vst [vmem:[#allocation2 + $0x1c8] sm:$0xff] %v14057
    %14186 = vst [vmem:[#allocation2 + $0x1d0] sm:$0xff] %v14058
    %14187 = vst [vmem:[#allocation2 + $0x1d8] sm:$0xff] %v14059
    %14188 = vst [vmem:[#allocation2 + $0x1e0] sm:$0xff] %v14060
    %14189 = vst [vmem:[#allocation2 + $0x1e8] sm:$0xff] %v14061
    %14190 = vst [vmem:[#allocation2 + $0x1f0] sm:$0xff] %v14062
    %14191 = vst [vmem:[#allocation2 + $0x1f8] sm:$0xff] %v14063
    %14192 = vst [vmem:[#allocation2 + $0x200] sm:$0xff] %v14064
    %14193 = vst [vmem:[#allocation2 + $0x208] sm:$0xff] %v14065
    %14194 = vst [vmem:[#allocation2 + $0x210] sm:$0xff] %v14066
    %14195 = vst [vmem:[#allocation2 + $0x218] sm:$0xff] %v14067
    %14196 = vst [vmem:[#allocation2 + $0x220] sm:$0xff] %v14068
    %14197 = vst [vmem:[#allocation2 + $0x228] sm:$0xff] %v14069
    %14198 = vst [vmem:[#allocation2 + $0x230] sm:$0xff] %v14070
    %14199 = vst [vmem:[#allocation2 + $0x238] sm:$0xff] %v14071
    %14200 = vst [vmem:[#allocation2 + $0x240] sm:$0xff] %v14072
    %14201 = vst [vmem:[#allocation2 + $0x248] sm:$0xff] %v14073
    %14202 = vst [vmem:[#allocation2 + $0x250] sm:$0xff] %v14074
    %14203 = vst [vmem:[#allocation2 + $0x258] sm:$0xff] %v14075
    %14204 = vst [vmem:[#allocation2 + $0x260] sm:$0xff] %v14076
    %14205 = vst [vmem:[#allocation2 + $0x268] sm:$0xff] %v14077
    %14206 = vst [vmem:[#allocation2 + $0x270] sm:$0xff] %v14078
    %14207 = vst [vmem:[#allocation2 + $0x278] sm:$0xff] %v14079
    %14208 = vst [vmem:[#allocation2 + $0x280] sm:$0xff] %v14080
    %14209 = vst [vmem:[#allocation2 + $0x288] sm:$0xff] %v14081
    %14210 = vst [vmem:[#allocation2 + $0x290] sm:$0xff] %v14082
    %14211 = vst [vmem:[#allocation2 + $0x298] sm:$0xff] %v14083
    %14212 = vst [vmem:[#allocation2 + $0x2a0] sm:$0xff] %v14084
    %14213 = vst [vmem:[#allocation2 + $0x2a8] sm:$0xff] %v14085
    %14214 = vst [vmem:[#allocation2 + $0x2b0] sm:$0xff] %v14086
    %14215 = vst [vmem:[#allocation2 + $0x2b8] sm:$0xff] %v14087
    %14216 = vst [vmem:[#allocation2 + $0x2c0] sm:$0xff] %v14088
    %14217 = vst [vmem:[#allocation2 + $0x2c8] sm:$0xff] %v14089
    %14218 = vst [vmem:[#allocation2 + $0x2d0] sm:$0xff] %v14090
    %14219 = vst [vmem:[#allocation2 + $0x2d8] sm:$0xff] %v14091
    %14220 = vst [vmem:[#allocation2 + $0x2e0] sm:$0xff] %v14092
    %14221 = vst [vmem:[#allocation2 + $0x2e8] sm:$0xff] %v14093
    %14222 = vst [vmem:[#allocation2 + $0x2f0] sm:$0xff] %v14094
    %14223 = vst [vmem:[#allocation2 + $0x2f8] sm:$0xff] %v14095
    %14224 = vst [vmem:[#allocation2 + $0x300] sm:$0xff] %v14096
    %14225 = vst [vmem:[#allocation2 + $0x308] sm:$0xff] %v14097
    %14226 = vst [vmem:[#allocation2 + $0x310] sm:$0xff] %v14098
    %14227 = vst [vmem:[#allocation2 + $0x318] sm:$0xff] %v14099
    %14228 = vst [vmem:[#allocation2 + $0x320] sm:$0xff] %v14100
    %14229 = vst [vmem:[#allocation2 + $0x328] sm:$0xff] %v14101
    %14230 = vst [vmem:[#allocation2 + $0x330] sm:$0xff] %v14102
    %14231 = vst [vmem:[#allocation2 + $0x338] sm:$0xff] %v14103
    %14232 = vst [vmem:[#allocation2 + $0x340] sm:$0xff] %v14104
    %14233 = vst [vmem:[#allocation2 + $0x348] sm:$0xff] %v14105
    %14234 = vst [vmem:[#allocation2 + $0x350] sm:$0xff] %v14106
    %14235 = vst [vmem:[#allocation2 + $0x358] sm:$0xff] %v14107
    %14236 = vst [vmem:[#allocation2 + $0x360] sm:$0xff] %v14108
    %14237 = vst [vmem:[#allocation2 + $0x368] sm:$0xff] %v14109
    %14238 = vst [vmem:[#allocation2 + $0x370] sm:$0xff] %v14110
    %14239 = vst [vmem:[#allocation2 + $0x378] sm:$0xff] %v14111
    %14240 = vst [vmem:[#allocation2 + $0x380] sm:$0xff] %v14112
    %14241 = vst [vmem:[#allocation2 + $0x388] sm:$0xff] %v14113
    %14242 = vst [vmem:[#allocation2 + $0x390] sm:$0xff] %v14114
    %14243 = vst [vmem:[#allocation2 + $0x398] sm:$0xff] %v14115
    %14244 = vst [vmem:[#allocation2 + $0x3a0] sm:$0xff] %v14116
    %14245 = vst [vmem:[#allocation2 + $0x3a8] sm:$0xff] %v14117
    %14246 = vst [vmem:[#allocation2 + $0x3b0] sm:$0xff] %v14118
    %14247 = vst [vmem:[#allocation2 + $0x3b8] sm:$0xff] %v14119
    %14248 = vst [vmem:[#allocation2 + $0x3c0] sm:$0xff] %v14120
    %14249 = vst [vmem:[#allocation2 + $0x3c8] sm:$0xff] %v14121
    %14250 = vst [vmem:[#allocation2 + $0x3d0] sm:$0xff] %v14122
    %14251 = vst [vmem:[#allocation2 + $0x3d8] sm:$0xff] %v14123
    %14252 = vst [vmem:[#allocation2 + $0x3e0] sm:$0xff] %v14124
    %14253 = vst [vmem:[#allocation2 + $0x3e8] sm:$0xff] %v14125
    %14254 = vst [vmem:[#allocation2 + $0x3f0] sm:$0xff] %v14126
    %14255 = vst [vmem:[#allocation2 + $0x3f8] sm:$0xff] %v14127
    // Predicated region
    $region14: #{poswise_feed_forward.1} parent=1 // pred_check
      _
    $region15: #{poswise_feed_forward.1} parent=1 // pred_check_branch
      %14257 = sbr.rel (0) target = $region17
    $region16: #{poswise_feed_forward.1} parent=1 // pred_region
      %s14259 = ssub.s32 16384, 1024
      %14260 = vsyncadd [#allocation3], %s14259
      %s14261 = sshll.u32 [#allocation2], 4
      %s14262 = int_to_ptr.vmem [resolvable:$true] %s14261
      %14267 = dma.vmem_to_hbm [thread:$0]  %s14262, 1024, %s3, [#allocation3], 512, 512, 32
    $region17: #{poswise_feed_forward.1} parent=1 // pred_fallthru
      _
    // Predicated region
    $region18: #{poswise_feed_forward.1} parent=1 // pred_check
      _
    $region19: #{poswise_feed_forward.1} parent=1 // pred_check_branch
      %14269 = sbr.rel (0) target = $region21
    $region20: #{poswise_feed_forward.1} parent=1 // pred_region
      %14270 = dma.done [#allocation3], 16384
    $region21: #{poswise_feed_forward.1} parent=1 // pred_fallthru
      _
    %14271 = vsyncpa [#allocation3], 1

</llo_original>
